<compile_context>
chip_gen: v5e
topology: v5e:2x2
jax: 0.10.0
libtpu: 0.0.40
codegen_flags: <defaults>
</compile_context>

<pallas_src>
import math
import random
from functools import partial

import jax
import jax.numpy as jnp
from jax import lax
from jax.experimental import pallas as pl
from jax.experimental.pallas import tpu as pltpu


# ------------------------------- tiling helpers -------------------------------
def _row_tile(n, cap=512):
    """One block when small (fewest launches / grid steps); else largest
    multiple-of-8 divisor <= cap."""
    if n <= cap:
        return n
    for tm in (512, 256, 128, 64, 32, 16, 8):
        if n % tm == 0:
            return tm
    return n


def _time_chunk(s, cap=8):
    """Timesteps per encoder grid iteration (capped at 8: larger unrolls
    pressure the 64-vreg file)."""
    for tc in (cap, 4, 2):
        if s % tc == 0:
            return tc
    return 1


# ------------------------------- LayerNorm kernel -----------------------------
def _layernorm_kernel(x_ref, g_ref, b_ref, o_ref):
    x = x_ref[...].astype(jnp.float32)
    mu = jnp.mean(x, axis=-1, keepdims=True)
    var = jnp.mean((x - mu) ** 2, axis=-1, keepdims=True)
    y = (x - mu) * lax.rsqrt(var + 1e-5)
    o_ref[...] = (y * g_ref[...].astype(jnp.float32)
                  + b_ref[...].astype(jnp.float32)).astype(o_ref.dtype)


def layernorm(x2d, gamma, beta):
    N, D = x2d.shape
    tm = _row_tile(N)
    return pl.pallas_call(
        _layernorm_kernel,
        out_shape=jax.ShapeDtypeStruct((N, D), x2d.dtype),
        grid=(N // tm,),
        in_specs=[pl.BlockSpec((tm, D), lambda i: (i, 0)),
                  pl.BlockSpec((1, D), lambda i: (0, 0)),
                  pl.BlockSpec((1, D), lambda i: (0, 0))],
        out_specs=pl.BlockSpec((tm, D), lambda i: (i, 0)),
        compiler_params=pltpu.CompilerParams(dimension_semantics=("parallel",)),
    )(x2d, gamma.reshape(1, D), beta.reshape(1, D))


# -------------------------------- LSTM cell math ------------------------------
def _sigmoid(x):
    # sigmoid(x) == 0.5*tanh(0.5*x) + 0.5 : one EUP op (tanh) + VPU mul/add
    # instead of exp + reciprocal/divide on the single EUP slot.
    return 0.5 * jnp.tanh(0.5 * x) + 0.5


def _lstm_cell(gates, c_prev, H):
    # PyTorch gate order along the 4H axis: i, f, g, o.
    i_g = _sigmoid(gates[:, 0 * H:1 * H])
    f_g = _sigmoid(gates[:, 1 * H:2 * H])
    g_g = jnp.tanh(gates[:, 2 * H:3 * H])
    o_g = _sigmoid(gates[:, 3 * H:4 * H])
    c_new = f_g * c_prev + i_g * g_g
    h_new = o_g * jnp.tanh(c_new)
    return h_new, c_new


# --------------------- encoder: all layers fused, time-chunked ----------------
def _make_encoder_kernel(L, H, TC, B, D):
    H4 = 4 * H

    def kernel(x_ref,                      # (TC, B, D) f32 chunk of layernormed x
               wih0_ref, whh0_ref, b0_ref,  # layer-0: (D,4H) bf16, (H,4H) bf16, (1,4H) f32
               wcat_ref, bcat_ref,          # layers>=1: (L-1,2H,4H) bf16, (L-1,1,4H) f32
               hN_ref, cN_ref,              # out (L,B,H) f32 each
               h_sc, c_sc):                 # scratch (L,B,H) f32 (cross-chunk carry)
        t = pl.program_id(0)

        @pl.when(t == 0)
        def _():
            h_sc[...] = jnp.zeros_like(h_sc)
            c_sc[...] = jnp.zeros_like(c_sc)

        # Fused, hoisted layer-0 input projection for the whole chunk (bias folded):
        # one [TC*B, D] @ [D, 4H] GEMM instead of TC tiny GEMMs / a separate call.
        gx0 = (jnp.dot(x_ref[...].reshape(TC * B, D).astype(jnp.bfloat16),
                       wih0_ref[...], preferred_element_type=jnp.float32)
               + b0_ref[...]).reshape(TC, B, H4)

        # Hoist weight / bias loads out of the unrolled time loop.
        whh0 = whh0_ref[...]
        wcats = [wcat_ref[l] for l in range(L - 1)]
        bcats = [bcat_ref[l] for l in range(L - 1)]

        # Register-carried recurrent state; scratch touched once per chunk.
        hs = [h_sc[l] for l in range(L)]
        cs = [c_sc[l] for l in range(L)]

        # TODO(synk): train-mode inter-layer LSTM dropout omitted (eval identity).
        for i in range(TC):
            gates0 = gx0[i] + jnp.dot(hs[0].astype(jnp.bfloat16), whh0,
                                      preferred_element_type=jnp.float32)
            hs[0], cs[0] = _lstm_cell(gates0, cs[0], H)
            h_below = hs[0]
            for l in range(1, L):
                xin = jnp.concatenate([h_below, hs[l]], axis=-1).astype(jnp.bfloat16)
                gates = (jnp.dot(xin, wcats[l - 1],
                                 preferred_element_type=jnp.float32) + bcats[l - 1])
                hs[l], cs[l] = _lstm_cell(gates, cs[l], H)
                h_below = hs[l]

        # Persist carries once per chunk (not per timestep).
        for l in range(L):
            h_sc[l] = hs[l]
            c_sc[l] = cs[l]

        @pl.when(t == pl.num_programs(0) - 1)
        def _():
            hN_ref[...] = h_sc[...].astype(hN_ref.dtype)
            cN_ref[...] = c_sc[...].astype(cN_ref.dtype)

    return kernel


def encoder_forward(xn_tm, wih0, whh0, b0, wcat, bcat):
    """xn_tm: [S, B, D] f32 (time-major, layernormed). Returns (h, c): [L, B, H]."""
    S, B, D = xn_tm.shape
    L = wcat.shape[0] + 1
    H = whh0.shape[0]
    H4 = 4 * H
    TC = _time_chunk(S)

    kernel = _make_encoder_kernel(L, H, TC, B, D)
    # TODO(synk): on v7x a leading batch-split "parallel" axis would use the 2nd
    #             TensorCore; at B=8 the (8,128) block constraint forbids B/2=4.
    h_fin, c_fin = pl.pallas_call(
        kernel,
        out_shape=(jax.ShapeDtypeStruct((L, B, H), jnp.float32),
                   jax.ShapeDtypeStruct((L, B, H), jnp.float32)),
        grid=(S // TC,),
        in_specs=[pl.BlockSpec((TC, B, D), lambda t: (t, 0, 0)),
                  pl.BlockSpec((D, H4), lambda t: (0, 0)),
                  pl.BlockSpec((H, H4), lambda t: (0, 0)),
                  pl.BlockSpec((1, H4), lambda t: (0, 0)),
                  pl.BlockSpec((L - 1, 2 * H, H4), lambda t: (0, 0, 0)),
                  pl.BlockSpec((L - 1, 1, H4), lambda t: (0, 0, 0))],
        out_specs=(pl.BlockSpec((L, B, H), lambda t: (0, 0, 0)),
                   pl.BlockSpec((L, B, H), lambda t: (0, 0, 0))),
        scratch_shapes=[pltpu.VMEM((L, B, H), jnp.float32),
                        pltpu.VMEM((L, B, H), jnp.float32)],
        compiler_params=pltpu.CompilerParams(dimension_semantics=("arbitrary",)),
    )(xn_tm, wih0, whh0, b0, wcat, bcat)
    return h_fin, c_fin


# ------------------ decoder: whole target loop in ONE grid step ---------------
def _make_decoder_kernel(L, H, T):
    def kernel(tf_ref,                      # SMEM scalar-prefetch (T,) int32
               tfin_ref,                    # (T, B, H) f32 teacher/initial inputs
               h0_ref, c0_ref,              # (L, B, H) f32 encoder final states
               emb_w_ref, emb_b_ref,        # (H, H) bf16, (1, H) f32
               wcat_ref, b_ref,             # (L, 2H, 4H) bf16, (L, 1, 4H) f32
               feat_ref):                   # out (T, B, H) f32
        B = tfin_ref.shape[1]

        # Hoist weight / bias loads once for the whole target loop.
        emb_w = emb_w_ref[...]
        emb_b = emb_b_ref[...]
        wcats = [wcat_ref[l] for l in range(L)]
        biases = [b_ref[l] for l in range(L)]

        # Register-carried state: no VMEM scratch in the recurrence.
        hs = [h0_ref[l] for l in range(L)]
        cs = [c0_ref[l] for l in range(L)]
        prev_out = jnp.zeros((B, H), jnp.float32)

        # TODO(synk): decoder Dropout / inter-layer LSTM dropout are eval-mode
        #             identities here (train mode not implemented).
        for t in range(T):
            # Teacher-forced (or initial x[:, -1]) input vs. previous output.
            w_tf = (tf_ref[t] != 0).astype(jnp.float32)
            inp = w_tf * tfin_ref[t] + (1.0 - w_tf) * prev_out

            # Embedding Linear + ReLU.
            emb = jnp.maximum(
                jnp.dot(inp.astype(jnp.bfloat16), emb_w,
                        preferred_element_type=jnp.float32) + emb_b, 0.0)

            layer_in = emb
            for l in range(L):
                xin = jnp.concatenate([layer_in, hs[l]], axis=-1).astype(jnp.bfloat16)
                gates = (jnp.dot(xin, wcats[l], preferred_element_type=jnp.float32)
                         + biases[l])
                hs[l], cs[l] = _lstm_cell(gates, cs[l], H)
                layer_in = hs[l]

            prev_out = layer_in
            feat_ref[t] = layer_in.astype(feat_ref.dtype)

    return kernel


def decoder_forward(tf_flag, tf_in_tm, h0, c0, emb_w, emb_b, dec_wcat, dec_b):
    """tf_flag: [T] int32 (1 -> use tf_in_tm[t], 0 -> feed back previous output).
    tf_in_tm: [T, B, H] f32. h0/c0: [L, B, H] f32. Returns features [T, B, H]."""
    T, B, H = tf_in_tm.shape
    L = dec_wcat.shape[0]
    H4 = 4 * H
    kernel = _make_decoder_kernel(L, H, T)

    grid_spec = pltpu.PrefetchScalarGridSpec(
        num_scalar_prefetch=1,
        grid=(1,),
        in_specs=[pl.BlockSpec((T, B, H), lambda i, tf: (0, 0, 0)),
                  pl.BlockSpec((L, B, H), lambda i, tf: (0, 0, 0)),
                  pl.BlockSpec((L, B, H), lambda i, tf: (0, 0, 0)),
                  pl.BlockSpec((H, H), lambda i, tf: (0, 0)),
                  pl.BlockSpec((1, H), lambda i, tf: (0, 0)),
                  pl.BlockSpec((L, 2 * H, H4), lambda i, tf: (0, 0, 0)),
                  pl.BlockSpec((L, 1, H4), lambda i, tf: (0, 0, 0))],
        out_specs=pl.BlockSpec((T, B, H), lambda i, tf: (0, 0, 0)),
    )
    return pl.pallas_call(
        kernel,
        out_shape=jax.ShapeDtypeStruct((T, B, H), jnp.float32),
        grid_spec=grid_spec,
        compiler_params=pltpu.CompilerParams(dimension_semantics=("arbitrary",)),
    )(tf_flag, tf_in_tm, h0, c0, emb_w, emb_b, dec_wcat, dec_b)


# ----------------------- final Linear + log_softmax kernel --------------------
def _linear_logsoftmax_kernel(x_ref, w_ref, b_ref, o_ref):
    logits = (jnp.dot(x_ref[...].astype(jnp.bfloat16), w_ref[...],
                      preferred_element_type=jnp.float32)
              + b_ref[...].astype(jnp.float32))
    m = jnp.max(logits, axis=-1, keepdims=True)
    lse = jnp.log(jnp.sum(jnp.exp(logits - m), axis=-1, keepdims=True)) + m
    o_ref[...] = (logits - lse).astype(o_ref.dtype)


def linear_logsoftmax(x, w, b):
    """x: [N, Din], w: [Din, Vp] bf16 (vocab lane-padded), b: [1, Vp] f32."""
    # TODO(synk): for very large vocab (v7x 64 MiB VMEM) tile the vocab axis with
    #             an online max/logsumexp accumulation and raise vmem_limit_bytes.
    N, Din = x.shape
    Dout = w.shape[1]
    tm = _row_tile(N)
    return pl.pallas_call(
        _linear_logsoftmax_kernel,
        out_shape=jax.ShapeDtypeStruct((N, Dout), jnp.float32),
        grid=(N // tm,),
        in_specs=[pl.BlockSpec((tm, Din), lambda i: (i, 0)),
                  pl.BlockSpec((Din, Dout), lambda i: (0, 0)),
                  pl.BlockSpec((1, Dout), lambda i: (0, 0))],
        out_specs=pl.BlockSpec((tm, Dout), lambda i: (i, 0)),
        compiler_params=pltpu.CompilerParams(dimension_semantics=("parallel",)),
    )(x, w, b)


# ----------------------------- parameters & forward ---------------------------
def init_params(key, d_words, hidden, n_layers, vocab):
    # The PyTorch module implicitly requires d_words == hidden_size (its decoder
    # embedding Linear is hidden->hidden and is fed x[:, -1] with d_words feats).
    assert d_words == hidden, "Seq2SeqHead requires d_words == hidden_size"
    assert n_layers >= 2, "kernel layout assumes >= 2 LSTM layers"
    H = hidden
    vocab_p = ((vocab + 127) // 128) * 128     # lane-pad vocab for dense stores
    ks = iter(jax.random.split(key, 8 * n_layers + 8))

    def uni(shape, fan_in):
        s = 1.0 / math.sqrt(fan_in)
        return jax.random.uniform(next(ks), shape, jnp.float32, -s, s)

    def lstm_lists(input_size):
        wih = [uni((input_size if l == 0 else H, 4 * H), H) for l in range(n_layers)]
        whh = [uni((H, 4 * H), H) for _ in range(n_layers)]
        b = [uni((1, 4 * H), H) + uni((1, 4 * H), H)   # b_ih + b_hh
             for _ in range(n_layers)]
        return wih, whh, b

    p = {'ln_g': jnp.ones((d_words,), jnp.float32),
         'ln_b': jnp.zeros((d_words,), jnp.float32)}

    # Encoder: layer-0 weights kept separate (its x @ W_ih GEMM is fused into the
    # kernel); layers >= 1 use concatenated [W_ih; W_hh] -> [2H, 4H] (K=256 MXU).
    e_wih, e_whh, e_b = lstm_lists(d_words)
    p['enc_wih0'] = e_wih[0].astype(jnp.bfloat16)
    p['enc_whh0'] = e_whh[0].astype(jnp.bfloat16)
    p['enc_b0'] = e_b[0]
    p['enc_wcat'] = jnp.stack([jnp.concatenate([e_wih[l], e_whh[l]], axis=0)
                               for l in range(1, n_layers)]).astype(jnp.bfloat16)
    p['enc_bcat'] = jnp.stack([e_b[l] for l in range(1, n_layers)])

    # Decoder: every layer's input is H-wide -> concatenated weights for all.
    d_wih, d_whh, d_b = lstm_lists(H)
    p['dec_wcat'] = jnp.stack([jnp.concatenate([d_wih[l], d_whh[l]], axis=0)
                               for l in range(n_layers)]).astype(jnp.bfloat16)
    p['dec_b'] = jnp.stack(d_b)

    p['dec_emb_w'] = uni((H, H), H).astype(jnp.bfloat16)
    p['dec_emb_b'] = uni((1, H), H)

    out_w = uni((H, vocab), H)
    out_b = uni((1, vocab), H)
    p['out_w'] = jnp.pad(out_w, ((0, 0), (0, vocab_p - vocab))).astype(jnp.bfloat16)
    p['out_b'] = jnp.pad(out_b, ((0, 0), (0, vocab_p - vocab)),
                         constant_values=-1e30)   # padded logits ~ -inf
    return p


@partial(jax.jit, static_argnames=('n_vocab',))
def seq2seq_head_forward(params, x, y, tf_decisions, n_vocab):
    B, S, D = x.shape
    H = params['dec_emb_w'].shape[0]
    assert D == H
    T = tf_decisions.shape[0]

    # ---- ONE merged LayerNorm over x rows + the y rows actually consumed -----
    x_rows = x.reshape(B * S, D)
    if T > 1:
        y_rows = y[:, :T - 1, :].reshape(B * (T - 1), D)
        rows = jnp.concatenate([x_rows, y_rows], axis=0)
    else:
        rows = x_rows
    normed = layernorm(rows, params['ln_g'], params['ln_b'])
    xn = normed[:B * S].reshape(B, S, D)

    # ---- encoder: fused 2-layer LSTM (layer-0 GEMM fused in), zero init ------
    xn_tm = jnp.transpose(xn, (1, 0, 2))                      # [S, B, D]
    h_enc, c_enc = encoder_forward(xn_tm, params['enc_wih0'], params['enc_whh0'],
                                   params['enc_b0'], params['enc_wcat'],
                                   params['enc_bcat'])

    # ---- decoder: entire target loop in ONE pallas_call (grid=(1,)) ----------
    # Step t input: t==0 -> xn[:, -1]; else tf[t-1] ? yn[:, t-1] : previous output.
    x_last = xn[:, -1, :][None]                               # [1, B, D]
    if T > 1:
        yn_tm = jnp.transpose(normed[B * S:].reshape(B, T - 1, D), (1, 0, 2))
        tf_in = jnp.concatenate([x_last, yn_tm], axis=0)      # [T, B, D]
        tf_flag = jnp.concatenate([jnp.ones((1,), jnp.int32),
                                   tf_decisions[:T - 1].astype(jnp.int32)], axis=0)
    else:
        tf_in = x_last
        tf_flag = jnp.ones((1,), jnp.int32)

    feat_tm = decoder_forward(tf_flag, tf_in, h_enc, c_enc,
                              params['dec_emb_w'], params['dec_emb_b'],
                              params['dec_wcat'], params['dec_b'])
    feature = jnp.transpose(feat_tm, (1, 0, 2))               # [B, T, H]

    # ---- final Linear + log_softmax (lane-padded vocab, single row block) ----
    log_probs = linear_logsoftmax(feature.reshape(B * T, H),
                                  params['out_w'], params['out_b'])
    log_probs = log_probs.reshape(B, T, -1)[:, :, :n_vocab]
    return feature, log_probs


if __name__ == "__main__":
    B, S = 8, 8                 # batch, observed sequence length
    D = H = 128                 # d_words == hidden_size (module default is 512/512)
    L = 2                       # num LSTM layers
    V = 43                      # target vocab (padded to 128 lanes internally)
    target_len = 6
    teacher_forcing_ratio = 0.5

    key = jax.random.PRNGKey(0)
    kx, ky, kp = jax.random.split(key, 3)
    x = jax.random.normal(kx, (B, S, D), jnp.float32)
    y = jax.random.normal(ky, (B, max(S, target_len), D), jnp.float32)
    params = init_params(kp, D, H, L, V)

    random.seed(0)
    tf_decisions = jnp.asarray(
        [1 if random.random() < teacher_forcing_ratio else 0 for _ in range(target_len)],
        dtype=jnp.int32)

    feature, log_probs = seq2seq_head_forward(params, x, y, tf_decisions, n_vocab=V)
    jax.block_until_ready((feature, log_probs))

    assert feature.shape == (B, target_len, H)
    assert log_probs.shape == (B, target_len, V)
    # log_softmax rows should (approximately) exp-sum to 1
    assert jnp.allclose(jnp.sum(jnp.exp(log_probs), axis=-1), 1.0, atol=1e-4)
    print("KERNEL_OK")
</pallas_src>

<mosaic_0001>
module attributes {stable_mosaic.version = 11 : i64} {
  func.func @_layernorm_kernel(%arg0: i32, %arg1: memref<104x128xf32, #tpu.memory_space<vmem>>, %arg2: memref<1x128xf32, #tpu.memory_space<vmem>>, %arg3: memref<1x128xf32, #tpu.memory_space<vmem>>, %arg4: memref<104x128xf32, #tpu.memory_space<vmem>>) attributes {dimension_semantics = [#tpu.dimension_semantics<parallel>], iteration_bounds = array<i64: 1>, scalar_prefetch = 0 : i64, scratch_operands = 0 : i64, tpu.core_type = #tpu.core_type<tc>, window_params = [{transform_indices = @transform_0, window_bounds = array<i64: 104, 128>}, {pipeline_mode = #tpu.pipeline_mode<synchronous>, transform_indices = @transform_1, window_bounds = array<i64: 1, 128>}, {pipeline_mode = #tpu.pipeline_mode<synchronous>, transform_indices = @transform_2, window_bounds = array<i64: 1, 128>}, {transform_indices = @transform_3, window_bounds = array<i64: 104, 128>}]} {
    %c0 = arith.constant 0 : index
    %c0_0 = arith.constant 0 : index
    %0 = vector.load %arg1[%c0, %c0_0] : memref<104x128xf32, #tpu.memory_space<vmem>>, vector<104x128xf32>
    %cst = arith.constant dense<0.000000e+00> : vector<104xf32>
    %1 = vector.multi_reduction <add>, %0, %cst [1] : vector<104x128xf32> to vector<104xf32>
    %2 = vector.shape_cast %1 : vector<104xf32> to vector<104x1xf32>
    %cst_1 = arith.constant 1.280000e+02 : f32
    %3 = vector.broadcast %cst_1 : f32 to vector<104x1xf32>
    %4 = arith.divf %2, %3 : vector<104x1xf32>
    %5 = vector.broadcast %4 : vector<104x1xf32> to vector<104x128xf32>
    %6 = arith.subf %0, %5 : vector<104x128xf32>
    %7 = arith.mulf %6, %6 : vector<104x128xf32>
    %cst_2 = arith.constant dense<0.000000e+00> : vector<104xf32>
    %8 = vector.multi_reduction <add>, %7, %cst_2 [1] : vector<104x128xf32> to vector<104xf32>
    %9 = vector.shape_cast %8 : vector<104xf32> to vector<104x1xf32>
    %cst_3 = arith.constant 1.280000e+02 : f32
    %10 = vector.broadcast %cst_3 : f32 to vector<104x1xf32>
    %11 = arith.divf %9, %10 : vector<104x1xf32>
    %12 = vector.broadcast %4 : vector<104x1xf32> to vector<104x128xf32>
    %13 = arith.subf %0, %12 : vector<104x128xf32>
    %cst_4 = arith.constant 9.99999974E-6 : f32
    %14 = vector.broadcast %cst_4 : f32 to vector<104x1xf32>
    %15 = arith.addf %11, %14 : vector<104x1xf32>
    %16 = math.rsqrt %15 : vector<104x1xf32>
    %17 = vector.broadcast %16 : vector<104x1xf32> to vector<104x128xf32>
    %18 = arith.mulf %13, %17 : vector<104x128xf32>
    %c0_5 = arith.constant 0 : index
    %c0_6 = arith.constant 0 : index
    %19 = vector.load %arg2[%c0_5, %c0_6] : memref<1x128xf32, #tpu.memory_space<vmem>>, vector<1x128xf32>
    %20 = vector.broadcast %19 : vector<1x128xf32> to vector<104x128xf32>
    %21 = arith.mulf %18, %20 : vector<104x128xf32>
    %c0_7 = arith.constant 0 : index
    %c0_8 = arith.constant 0 : index
    %22 = vector.load %arg3[%c0_7, %c0_8] : memref<1x128xf32, #tpu.memory_space<vmem>>, vector<1x128xf32>
    %23 = vector.broadcast %22 : vector<1x128xf32> to vector<104x128xf32>
    %24 = arith.addf %21, %23 : vector<104x128xf32>
    %c0_9 = arith.constant 0 : index
    %c0_10 = arith.constant 0 : index
    %25 = vector.load %arg4[%c0_9, %c0_10] : memref<104x128xf32, #tpu.memory_space<vmem>>, vector<104x128xf32>
    tpu.vector_store %arg4[%c0_9, %c0_10], %24 {strides = array<i32>} : memref<104x128xf32, #tpu.memory_space<vmem>>, vector<104x128xf32>,
    return
  }
  func.func @transform_0(%arg0: i32) -> (i32, i32) {
    %c0_i32 = arith.constant 0 : i32
    %c0_i32_0 = arith.constant 0 : i32
    return %arg0, %c0_i32 : i32, i32
  }
  func.func @transform_1(%arg0: i32) -> (i32, i32) {
    %c0_i32 = arith.constant 0 : i32
    %c0_i32_0 = arith.constant 0 : i32
    %c0_i32_1 = arith.constant 0 : i32
    return %c0_i32, %c0_i32_0 : i32, i32
  }
  func.func @transform_2(%arg0: i32) -> (i32, i32) {
    %c0_i32 = arith.constant 0 : i32
    %c0_i32_0 = arith.constant 0 : i32
    %c0_i32_1 = arith.constant 0 : i32
    return %c0_i32, %c0_i32_0 : i32, i32
  }
  func.func @transform_3(%arg0: i32) -> (i32, i32) {
    %c0_i32 = arith.constant 0 : i32
    %c0_i32_0 = arith.constant 0 : i32
    return %arg0, %c0_i32 : i32, i32
  }
}

module attributes {stable_mosaic.version = 11 : i64} {
  func.func @_linear_logsoftmax_kernel(%arg0: i32, %arg1: memref<48x128xf32, #tpu.memory_space<vmem>>, %arg2: memref<128x128xbf16, #tpu.memory_space<vmem>>, %arg3: memref<1x128xf32, #tpu.memory_space<vmem>>, %arg4: memref<48x128xf32, #tpu.memory_space<vmem>>) attributes {dimension_semantics = [#tpu.dimension_semantics<parallel>], iteration_bounds = array<i64: 1>, scalar_prefetch = 0 : i64, scratch_operands = 0 : i64, tpu.core_type = #tpu.core_type<tc>, window_params = [{transform_indices = @transform_0, window_bounds = array<i64: 48, 128>}, {pipeline_mode = #tpu.pipeline_mode<synchronous>, transform_indices = @transform_1, window_bounds = array<i64: 128, 128>}, {pipeline_mode = #tpu.pipeline_mode<synchronous>, transform_indices = @transform_2, window_bounds = array<i64: 1, 128>}, {transform_indices = @transform_3, window_bounds = array<i64: 48, 128>}]} {
    %c0 = arith.constant 0 : index
    %c0_0 = arith.constant 0 : index
    %0 = vector.load %arg1[%c0, %c0_0] : memref<48x128xf32, #tpu.memory_space<vmem>>, vector<48x128xf32>
    %1 = arith.truncf %0 : vector<48x128xf32> to vector<48x128xbf16>
    %c0_1 = arith.constant 0 : index
    %c0_2 = arith.constant 0 : index
    %2 = vector.load %arg2[%c0_1, %c0_2] : memref<128x128xbf16, #tpu.memory_space<vmem>>, vector<128x128xbf16>
    %cst = arith.constant dense<0.000000e+00> : vector<48x128xf32>
    %3 = tpu.matmul %1, %2, %cst {dimension_numbers = #tpu.dot_dimension_numbers<[1], [0], [0], [1], [0, 0, 1, 1], [], []>} : vector<48x128xbf16>, vector<128x128xbf16>, vector<48x128xf32> -> vector<48x128xf32>
    %c0_3 = arith.constant 0 : index
    %c0_4 = arith.constant 0 : index
    %4 = vector.load %arg3[%c0_3, %c0_4] : memref<1x128xf32, #tpu.memory_space<vmem>>, vector<1x128xf32>
    %5 = vector.broadcast %4 : vector<1x128xf32> to vector<48x128xf32>
    %6 = arith.addf %3, %5 : vector<48x128xf32>
    %cst_5 = arith.constant dense<0xFF800000> : vector<48xf32>
    %7 = vector.multi_reduction <maximumf>, %6, %cst_5 [1] : vector<48x128xf32> to vector<48xf32>
    %8 = vector.shape_cast %7 : vector<48xf32> to vector<48x1xf32>
    %9 = vector.broadcast %8 : vector<48x1xf32> to vector<48x128xf32>
    %10 = arith.subf %6, %9 : vector<48x128xf32>
    %11 = math.exp %10 : vector<48x128xf32>
    %cst_6 = arith.constant dense<0.000000e+00> : vector<48xf32>
    %12 = vector.multi_reduction <add>, %11, %cst_6 [1] : vector<48x128xf32> to vector<48xf32>
    %13 = vector.shape_cast %12 : vector<48xf32> to vector<48x1xf32>
    %14 = math.log %13 : vector<48x1xf32>
    %15 = arith.addf %14, %8 : vector<48x1xf32>
    %16 = vector.broadcast %15 : vector<48x1xf32> to vector<48x128xf32>
    %17 = arith.subf %6, %16 : vector<48x128xf32>
    %c0_7 = arith.constant 0 : index
    %c0_8 = arith.constant 0 : index
    %18 = vector.load %arg4[%c0_7, %c0_8] : memref<48x128xf32, #tpu.memory_space<vmem>>, vector<48x128xf32>
    tpu.vector_store %arg4[%c0_7, %c0_8], %17 {strides = array<i32>} : memref<48x128xf32, #tpu.memory_space<vmem>>, vector<48x128xf32>,
    return
  }
  func.func @transform_0(%arg0: i32) -> (i32, i32) {
    %c0_i32 = arith.constant 0 : i32
    %c0_i32_0 = arith.constant 0 : i32
    return %arg0, %c0_i32 : i32, i32
  }
  func.func @transform_1(%arg0: i32) -> (i32, i32) {
    %c0_i32 = arith.constant 0 : i32
    %c0_i32_0 = arith.constant 0 : i32
    %c0_i32_1 = arith.constant 0 : i32
    return %c0_i32, %c0_i32_0 : i32, i32
  }
  func.func @transform_2(%arg0: i32) -> (i32, i32) {
    %c0_i32 = arith.constant 0 : i32
    %c0_i32_0 = arith.constant 0 : i32
    %c0_i32_1 = arith.constant 0 : i32
    return %c0_i32, %c0_i32_0 : i32, i32
  }
  func.func @transform_3(%arg0: i32) -> (i32, i32) {
    %c0_i32 = arith.constant 0 : i32
    %c0_i32_0 = arith.constant 0 : i32
    return %arg0, %c0_i32 : i32, i32
  }
}

module attributes {stable_mosaic.version = 11 : i64} {
  func.func @kernel(%arg0: i32, %arg1: memref<8x8x128xf32, #tpu.memory_space<vmem>>, %arg2: memref<128x512xbf16, #tpu.memory_space<vmem>>, %arg3: memref<128x512xbf16, #tpu.memory_space<vmem>>, %arg4: memref<1x512xf32, #tpu.memory_space<vmem>>, %arg5: memref<1x256x512xbf16, #tpu.memory_space<vmem>>, %arg6: memref<1x1x512xf32, #tpu.memory_space<vmem>>, %arg7: memref<2x8x128xf32, #tpu.memory_space<vmem>>, %arg8: memref<2x8x128xf32, #tpu.memory_space<vmem>>, %arg9: memref<2x8x128xf32, #tpu.memory_space<vmem>>, %arg10: memref<2x8x128xf32, #tpu.memory_space<vmem>>) attributes {dimension_semantics = [#tpu.dimension_semantics<arbitrary>], iteration_bounds = array<i64: 1>, scalar_prefetch = 0 : i64, scratch_operands = 2 : i64, tpu.core_type = #tpu.core_type<tc>, window_params = [{transform_indices = @transform_0, window_bounds = array<i64: 8, 8, 128>}, {pipeline_mode = #tpu.pipeline_mode<synchronous>, transform_indices = @transform_1, window_bounds = array<i64: 128, 512>}, {pipeline_mode = #tpu.pipeline_mode<synchronous>, transform_indices = @transform_2, window_bounds = array<i64: 128, 512>}, {pipeline_mode = #tpu.pipeline_mode<synchronous>, transform_indices = @transform_3, window_bounds = array<i64: 1, 512>}, {pipeline_mode = #tpu.pipeline_mode<synchronous>, transform_indices = @transform_4, window_bounds = array<i64: 1, 256, 512>}, {pipeline_mode = #tpu.pipeline_mode<synchronous>, transform_indices = @transform_5, window_bounds = array<i64: 1, 1, 512>}, {pipeline_mode = #tpu.pipeline_mode<synchronous>, transform_indices = @transform_6, window_bounds = array<i64: 2, 8, 128>}, {pipeline_mode = #tpu.pipeline_mode<synchronous>, transform_indices = @transform_7, window_bounds = array<i64: 2, 8, 128>}]} {
    %c0_i32 = arith.constant 0 : i32
    %0 = arith.cmpi eq, %arg0, %c0_i32 : i32
    %1 = arith.extui %0 : i1 to i32
    %c0_i32_0 = arith.constant 0 : i32
    %2 = arith.cmpi ne, %1, %c0_i32_0 : i32
    scf.if %2 {
      %cst_200 = arith.constant 0.000000e+00 : f32
      %616 = vector.broadcast %cst_200 : f32 to vector<2x8x128xf32>
      %c0_201 = arith.constant 0 : index
      %c0_202 = arith.constant 0 : index
      %c0_203 = arith.constant 0 : index
      %617 = vector.load %arg9[%c0_201, %c0_202, %c0_203] : memref<2x8x128xf32, #tpu.memory_space<vmem>>, vector<2x8x128xf32>
      tpu.vector_store %arg9[%c0_201, %c0_202, %c0_203], %616 {strides = array<i32>} : memref<2x8x128xf32, #tpu.memory_space<vmem>>, vector<2x8x128xf32>,
      %cst_204 = arith.constant 0.000000e+00 : f32
      %618 = vector.broadcast %cst_204 : f32 to vector<2x8x128xf32>
      %c0_205 = arith.constant 0 : index
      %c0_206 = arith.constant 0 : index
      %c0_207 = arith.constant 0 : index
      %619 = vector.load %arg10[%c0_205, %c0_206, %c0_207] : memref<2x8x128xf32, #tpu.memory_space<vmem>>, vector<2x8x128xf32>
      tpu.vector_store %arg10[%c0_205, %c0_206, %c0_207], %618 {strides = array<i32>} : memref<2x8x128xf32, #tpu.memory_space<vmem>>, vector<2x8x128xf32>,
    } else {
    }
    %c0 = arith.constant 0 : index
    %c0_1 = arith.constant 0 : index
    %c0_2 = arith.constant 0 : index
    %3 = vector.load %arg1[%c0, %c0_1, %c0_2] : memref<8x8x128xf32, #tpu.memory_space<vmem>>, vector<8x8x128xf32>
    %4 = vector.shape_cast %3 : vector<8x8x128xf32> to vector<64x128xf32>
    %5 = arith.truncf %4 : vector<64x128xf32> to vector<64x128xbf16>
    %c0_3 = arith.constant 0 : index
    %c0_4 = arith.constant 0 : index
    %6 = vector.load %arg2[%c0_3, %c0_4] : memref<128x512xbf16, #tpu.memory_space<vmem>>, vector<128x512xbf16>
    %cst = arith.constant dense<0.000000e+00> : vector<64x512xf32>
    %7 = tpu.matmul %5, %6, %cst {dimension_numbers = #tpu.dot_dimension_numbers<[1], [0], [0], [1], [0, 0, 1, 1], [], []>} : vector<64x128xbf16>, vector<128x512xbf16>, vector<64x512xf32> -> vector<64x512xf32>
    %c0_5 = arith.constant 0 : index
    %c0_6 = arith.constant 0 : index
    %8 = vector.load %arg4[%c0_5, %c0_6] : memref<1x512xf32, #tpu.memory_space<vmem>>, vector<1x512xf32>
    %9 = vector.broadcast %8 : vector<1x512xf32> to vector<64x512xf32>
    %10 = arith.addf %7, %9 : vector<64x512xf32>
    %11 = vector.shape_cast %10 : vector<64x512xf32> to vector<8x8x512xf32>
    %c0_7 = arith.constant 0 : index
    %c0_8 = arith.constant 0 : index
    %12 = vector.load %arg3[%c0_7, %c0_8] : memref<128x512xbf16, #tpu.memory_space<vmem>>, vector<128x512xbf16>
    %c0_9 = arith.constant 0 : index
    %c0_10 = arith.constant 0 : index
    %c0_11 = arith.constant 0 : index
    %13 = vector.load %arg5[%c0_9, %c0_10, %c0_11] : memref<1x256x512xbf16, #tpu.memory_space<vmem>>, vector<1x256x512xbf16>
    %14 = vector.shape_cast %13 : vector<1x256x512xbf16> to vector<256x512xbf16>
    %c0_12 = arith.constant 0 : index
    %c0_13 = arith.constant 0 : index
    %c0_14 = arith.constant 0 : index
    %15 = vector.load %arg6[%c0_12, %c0_13, %c0_14] : memref<1x1x512xf32, #tpu.memory_space<vmem>>, vector<1x1x512xf32>
    %16 = vector.shape_cast %15 : vector<1x1x512xf32> to vector<1x512xf32>
    %c0_15 = arith.constant 0 : index
    %c0_16 = arith.constant 0 : index
    %c0_17 = arith.constant 0 : index
    %17 = vector.load %arg9[%c0_15, %c0_16, %c0_17] : memref<2x8x128xf32, #tpu.memory_space<vmem>>, vector<1x8x128xf32>
    %18 = vector.shape_cast %17 : vector<1x8x128xf32> to vector<8x128xf32>
    %c1 = arith.constant 1 : index
    %c0_18 = arith.constant 0 : index
    %c0_19 = arith.constant 0 : index
    %19 = vector.load %arg9[%c1, %c0_18, %c0_19] : memref<2x8x128xf32, #tpu.memory_space<vmem>>, vector<1x8x128xf32>
    %20 = vector.shape_cast %19 : vector<1x8x128xf32> to vector<8x128xf32>
    %c0_20 = arith.constant 0 : index
    %c0_21 = arith.constant 0 : index
    %c0_22 = arith.constant 0 : index
    %21 = vector.load %arg10[%c0_20, %c0_21, %c0_22] : memref<2x8x128xf32, #tpu.memory_space<vmem>>, vector<1x8x128xf32>
    %22 = vector.shape_cast %21 : vector<1x8x128xf32> to vector<8x128xf32>
    %c1_23 = arith.constant 1 : index
    %c0_24 = arith.constant 0 : index
    %c0_25 = arith.constant 0 : index
    %23 = vector.load %arg10[%c1_23, %c0_24, %c0_25] : memref<2x8x128xf32, #tpu.memory_space<vmem>>, vector<1x8x128xf32>
    %24 = vector.shape_cast %23 : vector<1x8x128xf32> to vector<8x128xf32>
    %25 = vector.extract_strided_slice %11 {offsets = [0, 0, 0], sizes = [1, 8, 512], strides = [1, 1, 1]} : vector<8x8x512xf32> to vector<1x8x512xf32>
    %26 = vector.shape_cast %25 : vector<1x8x512xf32> to vector<8x512xf32>
    %27 = arith.truncf %18 : vector<8x128xf32> to vector<8x128xbf16>
    %cst_26 = arith.constant dense<0.000000e+00> : vector<8x512xf32>
    %28 = tpu.matmul %27, %12, %cst_26 {dimension_numbers = #tpu.dot_dimension_numbers<[1], [0], [0], [1], [0, 0, 1, 1], [], []>} : vector<8x128xbf16>, vector<128x512xbf16>, vector<8x512xf32> -> vector<8x512xf32>
    %29 = arith.addf %26, %28 : vector<8x512xf32>
    %30 = vector.extract_strided_slice %29 {offsets = [0, 0], sizes = [8, 128], strides = [1, 1]} : vector<8x512xf32> to vector<8x128xf32>
    %cst_27 = arith.constant 5.000000e-01 : f32
    %31 = vector.broadcast %cst_27 : f32 to vector<8x128xf32>
    %32 = arith.mulf %31, %30 : vector<8x128xf32>
    %33 = math.tanh %32 : vector<8x128xf32>
    %cst_28 = arith.constant 5.000000e-01 : f32
    %34 = vector.broadcast %cst_28 : f32 to vector<8x128xf32>
    %35 = arith.mulf %34, %33 : vector<8x128xf32>
    %cst_29 = arith.constant 5.000000e-01 : f32
    %36 = vector.broadcast %cst_29 : f32 to vector<8x128xf32>
    %37 = arith.addf %35, %36 : vector<8x128xf32>
    %38 = vector.extract_strided_slice %29 {offsets = [0, 128], sizes = [8, 128], strides = [1, 1]} : vector<8x512xf32> to vector<8x128xf32>
    %cst_30 = arith.constant 5.000000e-01 : f32
    %39 = vector.broadcast %cst_30 : f32 to vector<8x128xf32>
    %40 = arith.mulf %39, %38 : vector<8x128xf32>
    %41 = math.tanh %40 : vector<8x128xf32>
    %cst_31 = arith.constant 5.000000e-01 : f32
    %42 = vector.broadcast %cst_31 : f32 to vector<8x128xf32>
    %43 = arith.mulf %42, %41 : vector<8x128xf32>
    %cst_32 = arith.constant 5.000000e-01 : f32
    %44 = vector.broadcast %cst_32 : f32 to vector<8x128xf32>
    %45 = arith.addf %43, %44 : vector<8x128xf32>
    %46 = vector.extract_strided_slice %29 {offsets = [0, 256], sizes = [8, 128], strides = [1, 1]} : vector<8x512xf32> to vector<8x128xf32>
    %47 = math.tanh %46 : vector<8x128xf32>
    %48 = vector.extract_strided_slice %29 {offsets = [0, 384], sizes = [8, 128], strides = [1, 1]} : vector<8x512xf32> to vector<8x128xf32>
    %cst_33 = arith.constant 5.000000e-01 : f32
    %49 = vector.broadcast %cst_33 : f32 to vector<8x128xf32>
    %50 = arith.mulf %49, %48 : vector<8x128xf32>
    %51 = math.tanh %50 : vector<8x128xf32>
    %cst_34 = arith.constant 5.000000e-01 : f32
    %52 = vector.broadcast %cst_34 : f32 to vector<8x128xf32>
    %53 = arith.mulf %52, %51 : vector<8x128xf32>
    %cst_35 = arith.constant 5.000000e-01 : f32
    %54 = vector.broadcast %cst_35 : f32 to vector<8x128xf32>
    %55 = arith.addf %53, %54 : vector<8x128xf32>
    %56 = arith.mulf %45, %22 : vector<8x128xf32>
    %57 = arith.mulf %37, %47 : vector<8x128xf32>
    %58 = arith.addf %56, %57 : vector<8x128xf32>
    %59 = math.tanh %58 : vector<8x128xf32>
    %60 = arith.mulf %55, %59 : vector<8x128xf32>
    %61 = tpu.concatenate %60, %20 in 1 : vector<8x128xf32>, vector<8x128xf32> -> vector<8x256xf32>
    %62 = arith.truncf %61 : vector<8x256xf32> to vector<8x256xbf16>
    %cst_36 = arith.constant dense<0.000000e+00> : vector<8x512xf32>
    %63 = tpu.matmul %62, %14, %cst_36 {dimension_numbers = #tpu.dot_dimension_numbers<[1], [0], [0], [1], [0, 0, 1, 1], [], []>} : vector<8x256xbf16>, vector<256x512xbf16>, vector<8x512xf32> -> vector<8x512xf32>
    %64 = vector.broadcast %16 : vector<1x512xf32> to vector<8x512xf32>
    %65 = arith.addf %63, %64 : vector<8x512xf32>
    %66 = vector.extract_strided_slice %65 {offsets = [0, 0], sizes = [8, 128], strides = [1, 1]} : vector<8x512xf32> to vector<8x128xf32>
    %cst_37 = arith.constant 5.000000e-01 : f32
    %67 = vector.broadcast %cst_37 : f32 to vector<8x128xf32>
    %68 = arith.mulf %67, %66 : vector<8x128xf32>
    %69 = math.tanh %68 : vector<8x128xf32>
    %cst_38 = arith.constant 5.000000e-01 : f32
    %70 = vector.broadcast %cst_38 : f32 to vector<8x128xf32>
    %71 = arith.mulf %70, %69 : vector<8x128xf32>
    %cst_39 = arith.constant 5.000000e-01 : f32
    %72 = vector.broadcast %cst_39 : f32 to vector<8x128xf32>
    %73 = arith.addf %71, %72 : vector<8x128xf32>
    %74 = vector.extract_strided_slice %65 {offsets = [0, 128], sizes = [8, 128], strides = [1, 1]} : vector<8x512xf32> to vector<8x128xf32>
    %cst_40 = arith.constant 5.000000e-01 : f32
    %75 = vector.broadcast %cst_40 : f32 to vector<8x128xf32>
    %76 = arith.mulf %75, %74 : vector<8x128xf32>
    %77 = math.tanh %76 : vector<8x128xf32>
    %cst_41 = arith.constant 5.000000e-01 : f32
    %78 = vector.broadcast %cst_41 : f32 to vector<8x128xf32>
    %79 = arith.mulf %78, %77 : vector<8x128xf32>
    %cst_42 = arith.constant 5.000000e-01 : f32
    %80 = vector.broadcast %cst_42 : f32 to vector<8x128xf32>
    %81 = arith.addf %79, %80 : vector<8x128xf32>
    %82 = vector.extract_strided_slice %65 {offsets = [0, 256], sizes = [8, 128], strides = [1, 1]} : vector<8x512xf32> to vector<8x128xf32>
    %83 = math.tanh %82 : vector<8x128xf32>
    %84 = vector.extract_strided_slice %65 {offsets = [0, 384], sizes = [8, 128], strides = [1, 1]} : vector<8x512xf32> to vector<8x128xf32>
    %cst_43 = arith.constant 5.000000e-01 : f32
    %85 = vector.broadcast %cst_43 : f32 to vector<8x128xf32>
    %86 = arith.mulf %85, %84 : vector<8x128xf32>
    %87 = math.tanh %86 : vector<8x128xf32>
    %cst_44 = arith.constant 5.000000e-01 : f32
    %88 = vector.broadcast %cst_44 : f32 to vector<8x128xf32>
    %89 = arith.mulf %88, %87 : vector<8x128xf32>
    %cst_45 = arith.constant 5.000000e-01 : f32
    %90 = vector.broadcast %cst_45 : f32 to vector<8x128xf32>
    %91 = arith.addf %89, %90 : vector<8x128xf32>
    %92 = arith.mulf %81, %24 : vector<8x128xf32>
    %93 = arith.mulf %73, %83 : vector<8x128xf32>
    %94 = arith.addf %92, %93 : vector<8x128xf32>
    %95 = math.tanh %94 : vector<8x128xf32>
    %96 = arith.mulf %91, %95 : vector<8x128xf32>
    %97 = vector.extract_strided_slice %11 {offsets = [1, 0, 0], sizes = [1, 8, 512], strides = [1, 1, 1]} : vector<8x8x512xf32> to vector<1x8x512xf32>
    %98 = vector.shape_cast %97 : vector<1x8x512xf32> to vector<8x512xf32>
    %99 = arith.truncf %60 : vector<8x128xf32> to vector<8x128xbf16>
    %cst_46 = arith.constant dense<0.000000e+00> : vector<8x512xf32>
    %100 = tpu.matmul %99, %12, %cst_46 {dimension_numbers = #tpu.dot_dimension_numbers<[1], [0], [0], [1], [0, 0, 1, 1], [], []>} : vector<8x128xbf16>, vector<128x512xbf16>, vector<8x512xf32> -> vector<8x512xf32>
    %101 = arith.addf %98, %100 : vector<8x512xf32>
    %102 = vector.extract_strided_slice %101 {offsets = [0, 0], sizes = [8, 128], strides = [1, 1]} : vector<8x512xf32> to vector<8x128xf32>
    %cst_47 = arith.constant 5.000000e-01 : f32
    %103 = vector.broadcast %cst_47 : f32 to vector<8x128xf32>
    %104 = arith.mulf %103, %102 : vector<8x128xf32>
    %105 = math.tanh %104 : vector<8x128xf32>
    %cst_48 = arith.constant 5.000000e-01 : f32
    %106 = vector.broadcast %cst_48 : f32 to vector<8x128xf32>
    %107 = arith.mulf %106, %105 : vector<8x128xf32>
    %cst_49 = arith.constant 5.000000e-01 : f32
    %108 = vector.broadcast %cst_49 : f32 to vector<8x128xf32>
    %109 = arith.addf %107, %108 : vector<8x128xf32>
    %110 = vector.extract_strided_slice %101 {offsets = [0, 128], sizes = [8, 128], strides = [1, 1]} : vector<8x512xf32> to vector<8x128xf32>
    %cst_50 = arith.constant 5.000000e-01 : f32
    %111 = vector.broadcast %cst_50 : f32 to vector<8x128xf32>
    %112 = arith.mulf %111, %110 : vector<8x128xf32>
    %113 = math.tanh %112 : vector<8x128xf32>
    %cst_51 = arith.constant 5.000000e-01 : f32
    %114 = vector.broadcast %cst_51 : f32 to vector<8x128xf32>
    %115 = arith.mulf %114, %113 : vector<8x128xf32>
    %cst_52 = arith.constant 5.000000e-01 : f32
    %116 = vector.broadcast %cst_52 : f32 to vector<8x128xf32>
    %117 = arith.addf %115, %116 : vector<8x128xf32>
    %118 = vector.extract_strided_slice %101 {offsets = [0, 256], sizes = [8, 128], strides = [1, 1]} : vector<8x512xf32> to vector<8x128xf32>
    %119 = math.tanh %118 : vector<8x128xf32>
    %120 = vector.extract_strided_slice %101 {offsets = [0, 384], sizes = [8, 128], strides = [1, 1]} : vector<8x512xf32> to vector<8x128xf32>
    %cst_53 = arith.constant 5.000000e-01 : f32
    %121 = vector.broadcast %cst_53 : f32 to vector<8x128xf32>
    %122 = arith.mulf %121, %120 : vector<8x128xf32>
    %123 = math.tanh %122 : vector<8x128xf32>
    %cst_54 = arith.constant 5.000000e-01 : f32
    %124 = vector.broadcast %cst_54 : f32 to vector<8x128xf32>
    %125 = arith.mulf %124, %123 : vector<8x128xf32>
    %cst_55 = arith.constant 5.000000e-01 : f32
    %126 = vector.broadcast %cst_55 : f32 to vector<8x128xf32>
    %127 = arith.addf %125, %126 : vector<8x128xf32>
    %128 = arith.mulf %117, %58 : vector<8x128xf32>
    %129 = arith.mulf %109, %119 : vector<8x128xf32>
    %130 = arith.addf %128, %129 : vector<8x128xf32>
    %131 = math.tanh %130 : vector<8x128xf32>
    %132 = arith.mulf %127, %131 : vector<8x128xf32>
    %133 = tpu.concatenate %132, %96 in 1 : vector<8x128xf32>, vector<8x128xf32> -> vector<8x256xf32>
    %134 = arith.truncf %133 : vector<8x256xf32> to vector<8x256xbf16>
    %cst_56 = arith.constant dense<0.000000e+00> : vector<8x512xf32>
    %135 = tpu.matmul %134, %14, %cst_56 {dimension_numbers = #tpu.dot_dimension_numbers<[1], [0], [0], [1], [0, 0, 1, 1], [], []>} : vector<8x256xbf16>, vector<256x512xbf16>, vector<8x512xf32> -> vector<8x512xf32>
    %136 = vector.broadcast %16 : vector<1x512xf32> to vector<8x512xf32>
    %137 = arith.addf %135, %136 : vector<8x512xf32>
    %138 = vector.extract_strided_slice %137 {offsets = [0, 0], sizes = [8, 128], strides = [1, 1]} : vector<8x512xf32> to vector<8x128xf32>
    %cst_57 = arith.constant 5.000000e-01 : f32
    %139 = vector.broadcast %cst_57 : f32 to vector<8x128xf32>
    %140 = arith.mulf %139, %138 : vector<8x128xf32>
    %141 = math.tanh %140 : vector<8x128xf32>
    %cst_58 = arith.constant 5.000000e-01 : f32
    %142 = vector.broadcast %cst_58 : f32 to vector<8x128xf32>
    %143 = arith.mulf %142, %141 : vector<8x128xf32>
    %cst_59 = arith.constant 5.000000e-01 : f32
    %144 = vector.broadcast %cst_59 : f32 to vector<8x128xf32>
    %145 = arith.addf %143, %144 : vector<8x128xf32>
    %146 = vector.extract_strided_slice %137 {offsets = [0, 128], sizes = [8, 128], strides = [1, 1]} : vector<8x512xf32> to vector<8x128xf32>
    %cst_60 = arith.constant 5.000000e-01 : f32
    %147 = vector.broadcast %cst_60 : f32 to vector<8x128xf32>
    %148 = arith.mulf %147, %146 : vector<8x128xf32>
    %149 = math.tanh %148 : vector<8x128xf32>
    %cst_61 = arith.constant 5.000000e-01 : f32
    %150 = vector.broadcast %cst_61 : f32 to vector<8x128xf32>
    %151 = arith.mulf %150, %149 : vector<8x128xf32>
    %cst_62 = arith.constant 5.000000e-01 : f32
    %152 = vector.broadcast %cst_62 : f32 to vector<8x128xf32>
    %153 = arith.addf %151, %152 : vector<8x128xf32>
    %154 = vector.extract_strided_slice %137 {offsets = [0, 256], sizes = [8, 128], strides = [1, 1]} : vector<8x512xf32> to vector<8x128xf32>
    %155 = math.tanh %154 : vector<8x128xf32>
    %156 = vector.extract_strided_slice %137 {offsets = [0, 384], sizes = [8, 128], strides = [1, 1]} : vector<8x512xf32> to vector<8x128xf32>
    %cst_63 = arith.constant 5.000000e-01 : f32
    %157 = vector.broadcast %cst_63 : f32 to vector<8x128xf32>
    %158 = arith.mulf %157, %156 : vector<8x128xf32>
    %159 = math.tanh %158 : vector<8x128xf32>
    %cst_64 = arith.constant 5.000000e-01 : f32
    %160 = vector.broadcast %cst_64 : f32 to vector<8x128xf32>
    %161 = arith.mulf %160, %159 : vector<8x128xf32>
    %cst_65 = arith.constant 5.000000e-01 : f32
    %162 = vector.broadcast %cst_65 : f32 to vector<8x128xf32>
    %163 = arith.addf %161, %162 : vector<8x128xf32>
    %164 = arith.mulf %153, %94 : vector<8x128xf32>
    %165 = arith.mulf %145, %155 : vector<8x128xf32>
    %166 = arith.addf %164, %165 : vector<8x128xf32>
    %167 = math.tanh %166 : vector<8x128xf32>
    %168 = arith.mulf %163, %167 : vector<8x128xf32>
    %169 = vector.extract_strided_slice %11 {offsets = [2, 0, 0], sizes = [1, 8, 512], strides = [1, 1, 1]} : vector<8x8x512xf32> to vector<1x8x512xf32>
    %170 = vector.shape_cast %169 : vector<1x8x512xf32> to vector<8x512xf32>
    %171 = arith.truncf %132 : vector<8x128xf32> to vector<8x128xbf16>
    %cst_66 = arith.constant dense<0.000000e+00> : vector<8x512xf32>
    %172 = tpu.matmul %171, %12, %cst_66 {dimension_numbers = #tpu.dot_dimension_numbers<[1], [0], [0], [1], [0, 0, 1, 1], [], []>} : vector<8x128xbf16>, vector<128x512xbf16>, vector<8x512xf32> -> vector<8x512xf32>
    %173 = arith.addf %170, %172 : vector<8x512xf32>
    %174 = vector.extract_strided_slice %173 {offsets = [0, 0], sizes = [8, 128], strides = [1, 1]} : vector<8x512xf32> to vector<8x128xf32>
    %cst_67 = arith.constant 5.000000e-01 : f32
    %175 = vector.broadcast %cst_67 : f32 to vector<8x128xf32>
    %176 = arith.mulf %175, %174 : vector<8x128xf32>
    %177 = math.tanh %176 : vector<8x128xf32>
    %cst_68 = arith.constant 5.000000e-01 : f32
    %178 = vector.broadcast %cst_68 : f32 to vector<8x128xf32>
    %179 = arith.mulf %178, %177 : vector<8x128xf32>
    %cst_69 = arith.constant 5.000000e-01 : f32
    %180 = vector.broadcast %cst_69 : f32 to vector<8x128xf32>
    %181 = arith.addf %179, %180 : vector<8x128xf32>
    %182 = vector.extract_strided_slice %173 {offsets = [0, 128], sizes = [8, 128], strides = [1, 1]} : vector<8x512xf32> to vector<8x128xf32>
    %cst_70 = arith.constant 5.000000e-01 : f32
    %183 = vector.broadcast %cst_70 : f32 to vector<8x128xf32>
    %184 = arith.mulf %183, %182 : vector<8x128xf32>
    %185 = math.tanh %184 : vector<8x128xf32>
    %cst_71 = arith.constant 5.000000e-01 : f32
    %186 = vector.broadcast %cst_71 : f32 to vector<8x128xf32>
    %187 = arith.mulf %186, %185 : vector<8x128xf32>
    %cst_72 = arith.constant 5.000000e-01 : f32
    %188 = vector.broadcast %cst_72 : f32 to vector<8x128xf32>
    %189 = arith.addf %187, %188 : vector<8x128xf32>
    %190 = vector.extract_strided_slice %173 {offsets = [0, 256], sizes = [8, 128], strides = [1, 1]} : vector<8x512xf32> to vector<8x128xf32>
    %191 = math.tanh %190 : vector<8x128xf32>
    %192 = vector.extract_strided_slice %173 {offsets = [0, 384], sizes = [8, 128], strides = [1, 1]} : vector<8x512xf32> to vector<8x128xf32>
    %cst_73 = arith.constant 5.000000e-01 : f32
    %193 = vector.broadcast %cst_73 : f32 to vector<8x128xf32>
    %194 = arith.mulf %193, %192 : vector<8x128xf32>
    %195 = math.tanh %194 : vector<8x128xf32>
    %cst_74 = arith.constant 5.000000e-01 : f32
    %196 = vector.broadcast %cst_74 : f32 to vector<8x128xf32>
    %197 = arith.mulf %196, %195 : vector<8x128xf32>
    %cst_75 = arith.constant 5.000000e-01 : f32
    %198 = vector.broadcast %cst_75 : f32 to vector<8x128xf32>
    %199 = arith.addf %197, %198 : vector<8x128xf32>
    %200 = arith.mulf %189, %130 : vector<8x128xf32>
    %201 = arith.mulf %181, %191 : vector<8x128xf32>
    %202 = arith.addf %200, %201 : vector<8x128xf32>
    %203 = math.tanh %202 : vector<8x128xf32>
    %204 = arith.mulf %199, %203 : vector<8x128xf32>
    %205 = tpu.concatenate %204, %168 in 1 : vector<8x128xf32>, vector<8x128xf32> -> vector<8x256xf32>
    %206 = arith.truncf %205 : vector<8x256xf32> to vector<8x256xbf16>
    %cst_76 = arith.constant dense<0.000000e+00> : vector<8x512xf32>
    %207 = tpu.matmul %206, %14, %cst_76 {dimension_numbers = #tpu.dot_dimension_numbers<[1], [0], [0], [1], [0, 0, 1, 1], [], []>} : vector<8x256xbf16>, vector<256x512xbf16>, vector<8x512xf32> -> vector<8x512xf32>
    %208 = vector.broadcast %16 : vector<1x512xf32> to vector<8x512xf32>
    %209 = arith.addf %207, %208 : vector<8x512xf32>
    %210 = vector.extract_strided_slice %209 {offsets = [0, 0], sizes = [8, 128], strides = [1, 1]} : vector<8x512xf32> to vector<8x128xf32>
    %cst_77 = arith.constant 5.000000e-01 : f32
    %211 = vector.broadcast %cst_77 : f32 to vector<8x128xf32>
    %212 = arith.mulf %211, %210 : vector<8x128xf32>
    %213 = math.tanh %212 : vector<8x128xf32>
    %cst_78 = arith.constant 5.000000e-01 : f32
    %214 = vector.broadcast %cst_78 : f32 to vector<8x128xf32>
    %215 = arith.mulf %214, %213 : vector<8x128xf32>
    %cst_79 = arith.constant 5.000000e-01 : f32
    %216 = vector.broadcast %cst_79 : f32 to vector<8x128xf32>
    %217 = arith.addf %215, %216 : vector<8x128xf32>
    %218 = vector.extract_strided_slice %209 {offsets = [0, 128], sizes = [8, 128], strides = [1, 1]} : vector<8x512xf32> to vector<8x128xf32>
    %cst_80 = arith.constant 5.000000e-01 : f32
    %219 = vector.broadcast %cst_80 : f32 to vector<8x128xf32>
    %220 = arith.mulf %219, %218 : vector<8x128xf32>
    %221 = math.tanh %220 : vector<8x128xf32>
    %cst_81 = arith.constant 5.000000e-01 : f32
    %222 = vector.broadcast %cst_81 : f32 to vector<8x128xf32>
    %223 = arith.mulf %222, %221 : vector<8x128xf32>
    %cst_82 = arith.constant 5.000000e-01 : f32
    %224 = vector.broadcast %cst_82 : f32 to vector<8x128xf32>
    %225 = arith.addf %223, %224 : vector<8x128xf32>
    %226 = vector.extract_strided_slice %209 {offsets = [0, 256], sizes = [8, 128], strides = [1, 1]} : vector<8x512xf32> to vector<8x128xf32>
    %227 = math.tanh %226 : vector<8x128xf32>
    %228 = vector.extract_strided_slice %209 {offsets = [0, 384], sizes = [8, 128], strides = [1, 1]} : vector<8x512xf32> to vector<8x128xf32>
    %cst_83 = arith.constant 5.000000e-01 : f32
    %229 = vector.broadcast %cst_83 : f32 to vector<8x128xf32>
    %230 = arith.mulf %229, %228 : vector<8x128xf32>
    %231 = math.tanh %230 : vector<8x128xf32>
    %cst_84 = arith.constant 5.000000e-01 : f32
    %232 = vector.broadcast %cst_84 : f32 to vector<8x128xf32>
    %233 = arith.mulf %232, %231 : vector<8x128xf32>
    %cst_85 = arith.constant 5.000000e-01 : f32
    %234 = vector.broadcast %cst_85 : f32 to vector<8x128xf32>
    %235 = arith.addf %233, %234 : vector<8x128xf32>
    %236 = arith.mulf %225, %166 : vector<8x128xf32>
    %237 = arith.mulf %217, %227 : vector<8x128xf32>
    %238 = arith.addf %236, %237 : vector<8x128xf32>
    %239 = math.tanh %238 : vector<8x128xf32>
    %240 = arith.mulf %235, %239 : vector<8x128xf32>
    %241 = vector.extract_strided_slice %11 {offsets = [3, 0, 0], sizes = [1, 8, 512], strides = [1, 1, 1]} : vector<8x8x512xf32> to vector<1x8x512xf32>
    %242 = vector.shape_cast %241 : vector<1x8x512xf32> to vector<8x512xf32>
    %243 = arith.truncf %204 : vector<8x128xf32> to vector<8x128xbf16>
    %cst_86 = arith.constant dense<0.000000e+00> : vector<8x512xf32>
    %244 = tpu.matmul %243, %12, %cst_86 {dimension_numbers = #tpu.dot_dimension_numbers<[1], [0], [0], [1], [0, 0, 1, 1], [], []>} : vector<8x128xbf16>, vector<128x512xbf16>, vector<8x512xf32> -> vector<8x512xf32>
    %245 = arith.addf %242, %244 : vector<8x512xf32>
    %246 = vector.extract_strided_slice %245 {offsets = [0, 0], sizes = [8, 128], strides = [1, 1]} : vector<8x512xf32> to vector<8x128xf32>
    %cst_87 = arith.constant 5.000000e-01 : f32
    %247 = vector.broadcast %cst_87 : f32 to vector<8x128xf32>
    %248 = arith.mulf %247, %246 : vector<8x128xf32>
    %249 = math.tanh %248 : vector<8x128xf32>
    %cst_88 = arith.constant 5.000000e-01 : f32
    %250 = vector.broadcast %cst_88 : f32 to vector<8x128xf32>
    %251 = arith.mulf %250, %249 : vector<8x128xf32>
    %cst_89 = arith.constant 5.000000e-01 : f32
    %252 = vector.broadcast %cst_89 : f32 to vector<8x128xf32>
    %253 = arith.addf %251, %252 : vector<8x128xf32>
    %254 = vector.extract_strided_slice %245 {offsets = [0, 128], sizes = [8, 128], strides = [1, 1]} : vector<8x512xf32> to vector<8x128xf32>
    %cst_90 = arith.constant 5.000000e-01 : f32
    %255 = vector.broadcast %cst_90 : f32 to vector<8x128xf32>
    %256 = arith.mulf %255, %254 : vector<8x128xf32>
    %257 = math.tanh %256 : vector<8x128xf32>
    %cst_91 = arith.constant 5.000000e-01 : f32
    %258 = vector.broadcast %cst_91 : f32 to vector<8x128xf32>
    %259 = arith.mulf %258, %257 : vector<8x128xf32>
    %cst_92 = arith.constant 5.000000e-01 : f32
    %260 = vector.broadcast %cst_92 : f32 to vector<8x128xf32>
    %261 = arith.addf %259, %260 : vector<8x128xf32>
    %262 = vector.extract_strided_slice %245 {offsets = [0, 256], sizes = [8, 128], strides = [1, 1]} : vector<8x512xf32> to vector<8x128xf32>
    %263 = math.tanh %262 : vector<8x128xf32>
    %264 = vector.extract_strided_slice %245 {offsets = [0, 384], sizes = [8, 128], strides = [1, 1]} : vector<8x512xf32> to vector<8x128xf32>
    %cst_93 = arith.constant 5.000000e-01 : f32
    %265 = vector.broadcast %cst_93 : f32 to vector<8x128xf32>
    %266 = arith.mulf %265, %264 : vector<8x128xf32>
    %267 = math.tanh %266 : vector<8x128xf32>
    %cst_94 = arith.constant 5.000000e-01 : f32
    %268 = vector.broadcast %cst_94 : f32 to vector<8x128xf32>
    %269 = arith.mulf %268, %267 : vector<8x128xf32>
    %cst_95 = arith.constant 5.000000e-01 : f32
    %270 = vector.broadcast %cst_95 : f32 to vector<8x128xf32>
    %271 = arith.addf %269, %270 : vector<8x128xf32>
    %272 = arith.mulf %261, %202 : vector<8x128xf32>
    %273 = arith.mulf %253, %263 : vector<8x128xf32>
    %274 = arith.addf %272, %273 : vector<8x128xf32>
    %275 = math.tanh %274 : vector<8x128xf32>
    %276 = arith.mulf %271, %275 : vector<8x128xf32>
    %277 = tpu.concatenate %276, %240 in 1 : vector<8x128xf32>, vector<8x128xf32> -> vector<8x256xf32>
    %278 = arith.truncf %277 : vector<8x256xf32> to vector<8x256xbf16>
    %cst_96 = arith.constant dense<0.000000e+00> : vector<8x512xf32>
    %279 = tpu.matmul %278, %14, %cst_96 {dimension_numbers = #tpu.dot_dimension_numbers<[1], [0], [0], [1], [0, 0, 1, 1], [], []>} : vector<8x256xbf16>, vector<256x512xbf16>, vector<8x512xf32> -> vector<8x512xf32>
    %280 = vector.broadcast %16 : vector<1x512xf32> to vector<8x512xf32>
    %281 = arith.addf %279, %280 : vector<8x512xf32>
    %282 = vector.extract_strided_slice %281 {offsets = [0, 0], sizes = [8, 128], strides = [1, 1]} : vector<8x512xf32> to vector<8x128xf32>
    %cst_97 = arith.constant 5.000000e-01 : f32
    %283 = vector.broadcast %cst_97 : f32 to vector<8x128xf32>
    %284 = arith.mulf %283, %282 : vector<8x128xf32>
    %285 = math.tanh %284 : vector<8x128xf32>
    %cst_98 = arith.constant 5.000000e-01 : f32
    %286 = vector.broadcast %cst_98 : f32 to vector<8x128xf32>
    %287 = arith.mulf %286, %285 : vector<8x128xf32>
    %cst_99 = arith.constant 5.000000e-01 : f32
    %288 = vector.broadcast %cst_99 : f32 to vector<8x128xf32>
    %289 = arith.addf %287, %288 : vector<8x128xf32>
    %290 = vector.extract_strided_slice %281 {offsets = [0, 128], sizes = [8, 128], strides = [1, 1]} : vector<8x512xf32> to vector<8x128xf32>
    %cst_100 = arith.constant 5.000000e-01 : f32
    %291 = vector.broadcast %cst_100 : f32 to vector<8x128xf32>
    %292 = arith.mulf %291, %290 : vector<8x128xf32>
    %293 = math.tanh %292 : vector<8x128xf32>
    %cst_101 = arith.constant 5.000000e-01 : f32
    %294 = vector.broadcast %cst_101 : f32 to vector<8x128xf32>
    %295 = arith.mulf %294, %293 : vector<8x128xf32>
    %cst_102 = arith.constant 5.000000e-01 : f32
    %296 = vector.broadcast %cst_102 : f32 to vector<8x128xf32>
    %297 = arith.addf %295, %296 : vector<8x128xf32>
    %298 = vector.extract_strided_slice %281 {offsets = [0, 256], sizes = [8, 128], strides = [1, 1]} : vector<8x512xf32> to vector<8x128xf32>
    %299 = math.tanh %298 : vector<8x128xf32>
    %300 = vector.extract_strided_slice %281 {offsets = [0, 384], sizes = [8, 128], strides = [1, 1]} : vector<8x512xf32> to vector<8x128xf32>
    %cst_103 = arith.constant 5.000000e-01 : f32
    %301 = vector.broadcast %cst_103 : f32 to vector<8x128xf32>
    %302 = arith.mulf %301, %300 : vector<8x128xf32>
    %303 = math.tanh %302 : vector<8x128xf32>
    %cst_104 = arith.constant 5.000000e-01 : f32
    %304 = vector.broadcast %cst_104 : f32 to vector<8x128xf32>
    %305 = arith.mulf %304, %303 : vector<8x128xf32>
    %cst_105 = arith.constant 5.000000e-01 : f32
    %306 = vector.broadcast %cst_105 : f32 to vector<8x128xf32>
    %307 = arith.addf %305, %306 : vector<8x128xf32>
    %308 = arith.mulf %297, %238 : vector<8x128xf32>
    %309 = arith.mulf %289, %299 : vector<8x128xf32>
    %310 = arith.addf %308, %309 : vector<8x128xf32>
    %311 = math.tanh %310 : vector<8x128xf32>
    %312 = arith.mulf %307, %311 : vector<8x128xf32>
    %313 = vector.extract_strided_slice %11 {offsets = [4, 0, 0], sizes = [1, 8, 512], strides = [1, 1, 1]} : vector<8x8x512xf32> to vector<1x8x512xf32>
    %314 = vector.shape_cast %313 : vector<1x8x512xf32> to vector<8x512xf32>
    %315 = arith.truncf %276 : vector<8x128xf32> to vector<8x128xbf16>
    %cst_106 = arith.constant dense<0.000000e+00> : vector<8x512xf32>
    %316 = tpu.matmul %315, %12, %cst_106 {dimension_numbers = #tpu.dot_dimension_numbers<[1], [0], [0], [1], [0, 0, 1, 1], [], []>} : vector<8x128xbf16>, vector<128x512xbf16>, vector<8x512xf32> -> vector<8x512xf32>
    %317 = arith.addf %314, %316 : vector<8x512xf32>
    %318 = vector.extract_strided_slice %317 {offsets = [0, 0], sizes = [8, 128], strides = [1, 1]} : vector<8x512xf32> to vector<8x128xf32>
    %cst_107 = arith.constant 5.000000e-01 : f32
    %319 = vector.broadcast %cst_107 : f32 to vector<8x128xf32>
    %320 = arith.mulf %319, %318 : vector<8x128xf32>
    %321 = math.tanh %320 : vector<8x128xf32>
    %cst_108 = arith.constant 5.000000e-01 : f32
    %322 = vector.broadcast %cst_108 : f32 to vector<8x128xf32>
    %323 = arith.mulf %322, %321 : vector<8x128xf32>
    %cst_109 = arith.constant 5.000000e-01 : f32
    %324 = vector.broadcast %cst_109 : f32 to vector<8x128xf32>
    %325 = arith.addf %323, %324 : vector<8x128xf32>
    %326 = vector.extract_strided_slice %317 {offsets = [0, 128], sizes = [8, 128], strides = [1, 1]} : vector<8x512xf32> to vector<8x128xf32>
    %cst_110 = arith.constant 5.000000e-01 : f32
    %327 = vector.broadcast %cst_110 : f32 to vector<8x128xf32>
    %328 = arith.mulf %327, %326 : vector<8x128xf32>
    %329 = math.tanh %328 : vector<8x128xf32>
    %cst_111 = arith.constant 5.000000e-01 : f32
    %330 = vector.broadcast %cst_111 : f32 to vector<8x128xf32>
    %331 = arith.mulf %330, %329 : vector<8x128xf32>
    %cst_112 = arith.constant 5.000000e-01 : f32
    %332 = vector.broadcast %cst_112 : f32 to vector<8x128xf32>
    %333 = arith.addf %331, %332 : vector<8x128xf32>
    %334 = vector.extract_strided_slice %317 {offsets = [0, 256], sizes = [8, 128], strides = [1, 1]} : vector<8x512xf32> to vector<8x128xf32>
    %335 = math.tanh %334 : vector<8x128xf32>
    %336 = vector.extract_strided_slice %317 {offsets = [0, 384], sizes = [8, 128], strides = [1, 1]} : vector<8x512xf32> to vector<8x128xf32>
    %cst_113 = arith.constant 5.000000e-01 : f32
    %337 = vector.broadcast %cst_113 : f32 to vector<8x128xf32>
    %338 = arith.mulf %337, %336 : vector<8x128xf32>
    %339 = math.tanh %338 : vector<8x128xf32>
    %cst_114 = arith.constant 5.000000e-01 : f32
    %340 = vector.broadcast %cst_114 : f32 to vector<8x128xf32>
    %341 = arith.mulf %340, %339 : vector<8x128xf32>
    %cst_115 = arith.constant 5.000000e-01 : f32
    %342 = vector.broadcast %cst_115 : f32 to vector<8x128xf32>
    %343 = arith.addf %341, %342 : vector<8x128xf32>
    %344 = arith.mulf %333, %274 : vector<8x128xf32>
    %345 = arith.mulf %325, %335 : vector<8x128xf32>
    %346 = arith.addf %344, %345 : vector<8x128xf32>
    %347 = math.tanh %346 : vector<8x128xf32>
    %348 = arith.mulf %343, %347 : vector<8x128xf32>
    %349 = tpu.concatenate %348, %312 in 1 : vector<8x128xf32>, vector<8x128xf32> -> vector<8x256xf32>
    %350 = arith.truncf %349 : vector<8x256xf32> to vector<8x256xbf16>
    %cst_116 = arith.constant dense<0.000000e+00> : vector<8x512xf32>
    %351 = tpu.matmul %350, %14, %cst_116 {dimension_numbers = #tpu.dot_dimension_numbers<[1], [0], [0], [1], [0, 0, 1, 1], [], []>} : vector<8x256xbf16>, vector<256x512xbf16>, vector<8x512xf32> -> vector<8x512xf32>
    %352 = vector.broadcast %16 : vector<1x512xf32> to vector<8x512xf32>
    %353 = arith.addf %351, %352 : vector<8x512xf32>
    %354 = vector.extract_strided_slice %353 {offsets = [0, 0], sizes = [8, 128], strides = [1, 1]} : vector<8x512xf32> to vector<8x128xf32>
    %cst_117 = arith.constant 5.000000e-01 : f32
    %355 = vector.broadcast %cst_117 : f32 to vector<8x128xf32>
    %356 = arith.mulf %355, %354 : vector<8x128xf32>
    %357 = math.tanh %356 : vector<8x128xf32>
    %cst_118 = arith.constant 5.000000e-01 : f32
    %358 = vector.broadcast %cst_118 : f32 to vector<8x128xf32>
    %359 = arith.mulf %358, %357 : vector<8x128xf32>
    %cst_119 = arith.constant 5.000000e-01 : f32
    %360 = vector.broadcast %cst_119 : f32 to vector<8x128xf32>
    %361 = arith.addf %359, %360 : vector<8x128xf32>
    %362 = vector.extract_strided_slice %353 {offsets = [0, 128], sizes = [8, 128], strides = [1, 1]} : vector<8x512xf32> to vector<8x128xf32>
    %cst_120 = arith.constant 5.000000e-01 : f32
    %363 = vector.broadcast %cst_120 : f32 to vector<8x128xf32>
    %364 = arith.mulf %363, %362 : vector<8x128xf32>
    %365 = math.tanh %364 : vector<8x128xf32>
    %cst_121 = arith.constant 5.000000e-01 : f32
    %366 = vector.broadcast %cst_121 : f32 to vector<8x128xf32>
    %367 = arith.mulf %366, %365 : vector<8x128xf32>
    %cst_122 = arith.constant 5.000000e-01 : f32
    %368 = vector.broadcast %cst_122 : f32 to vector<8x128xf32>
    %369 = arith.addf %367, %368 : vector<8x128xf32>
    %370 = vector.extract_strided_slice %353 {offsets = [0, 256], sizes = [8, 128], strides = [1, 1]} : vector<8x512xf32> to vector<8x128xf32>
    %371 = math.tanh %370 : vector<8x128xf32>
    %372 = vector.extract_strided_slice %353 {offsets = [0, 384], sizes = [8, 128], strides = [1, 1]} : vector<8x512xf32> to vector<8x128xf32>
    %cst_123 = arith.constant 5.000000e-01 : f32
    %373 = vector.broadcast %cst_123 : f32 to vector<8x128xf32>
    %374 = arith.mulf %373, %372 : vector<8x128xf32>
    %375 = math.tanh %374 : vector<8x128xf32>
    %cst_124 = arith.constant 5.000000e-01 : f32
    %376 = vector.broadcast %cst_124 : f32 to vector<8x128xf32>
    %377 = arith.mulf %376, %375 : vector<8x128xf32>
    %cst_125 = arith.constant 5.000000e-01 : f32
    %378 = vector.broadcast %cst_125 : f32 to vector<8x128xf32>
    %379 = arith.addf %377, %378 : vector<8x128xf32>
    %380 = arith.mulf %369, %310 : vector<8x128xf32>
    %381 = arith.mulf %361, %371 : vector<8x128xf32>
    %382 = arith.addf %380, %381 : vector<8x128xf32>
    %383 = math.tanh %382 : vector<8x128xf32>
    %384 = arith.mulf %379, %383 : vector<8x128xf32>
    %385 = vector.extract_strided_slice %11 {offsets = [5, 0, 0], sizes = [1, 8, 512], strides = [1, 1, 1]} : vector<8x8x512xf32> to vector<1x8x512xf32>
    %386 = vector.shape_cast %385 : vector<1x8x512xf32> to vector<8x512xf32>
    %387 = arith.truncf %348 : vector<8x128xf32> to vector<8x128xbf16>
    %cst_126 = arith.constant dense<0.000000e+00> : vector<8x512xf32>
    %388 = tpu.matmul %387, %12, %cst_126 {dimension_numbers = #tpu.dot_dimension_numbers<[1], [0], [0], [1], [0, 0, 1, 1], [], []>} : vector<8x128xbf16>, vector<128x512xbf16>, vector<8x512xf32> -> vector<8x512xf32>
    %389 = arith.addf %386, %388 : vector<8x512xf32>
    %390 = vector.extract_strided_slice %389 {offsets = [0, 0], sizes = [8, 128], strides = [1, 1]} : vector<8x512xf32> to vector<8x128xf32>
    %cst_127 = arith.constant 5.000000e-01 : f32
    %391 = vector.broadcast %cst_127 : f32 to vector<8x128xf32>
    %392 = arith.mulf %391, %390 : vector<8x128xf32>
    %393 = math.tanh %392 : vector<8x128xf32>
    %cst_128 = arith.constant 5.000000e-01 : f32
    %394 = vector.broadcast %cst_128 : f32 to vector<8x128xf32>
    %395 = arith.mulf %394, %393 : vector<8x128xf32>
    %cst_129 = arith.constant 5.000000e-01 : f32
    %396 = vector.broadcast %cst_129 : f32 to vector<8x128xf32>
    %397 = arith.addf %395, %396 : vector<8x128xf32>
    %398 = vector.extract_strided_slice %389 {offsets = [0, 128], sizes = [8, 128], strides = [1, 1]} : vector<8x512xf32> to vector<8x128xf32>
    %cst_130 = arith.constant 5.000000e-01 : f32
    %399 = vector.broadcast %cst_130 : f32 to vector<8x128xf32>
    %400 = arith.mulf %399, %398 : vector<8x128xf32>
    %401 = math.tanh %400 : vector<8x128xf32>
    %cst_131 = arith.constant 5.000000e-01 : f32
    %402 = vector.broadcast %cst_131 : f32 to vector<8x128xf32>
    %403 = arith.mulf %402, %401 : vector<8x128xf32>
    %cst_132 = arith.constant 5.000000e-01 : f32
    %404 = vector.broadcast %cst_132 : f32 to vector<8x128xf32>
    %405 = arith.addf %403, %404 : vector<8x128xf32>
    %406 = vector.extract_strided_slice %389 {offsets = [0, 256], sizes = [8, 128], strides = [1, 1]} : vector<8x512xf32> to vector<8x128xf32>
    %407 = math.tanh %406 : vector<8x128xf32>
    %408 = vector.extract_strided_slice %389 {offsets = [0, 384], sizes = [8, 128], strides = [1, 1]} : vector<8x512xf32> to vector<8x128xf32>
    %cst_133 = arith.constant 5.000000e-01 : f32
    %409 = vector.broadcast %cst_133 : f32 to vector<8x128xf32>
    %410 = arith.mulf %409, %408 : vector<8x128xf32>
    %411 = math.tanh %410 : vector<8x128xf32>
    %cst_134 = arith.constant 5.000000e-01 : f32
    %412 = vector.broadcast %cst_134 : f32 to vector<8x128xf32>
    %413 = arith.mulf %412, %411 : vector<8x128xf32>
    %cst_135 = arith.constant 5.000000e-01 : f32
    %414 = vector.broadcast %cst_135 : f32 to vector<8x128xf32>
    %415 = arith.addf %413, %414 : vector<8x128xf32>
    %416 = arith.mulf %405, %346 : vector<8x128xf32>
    %417 = arith.mulf %397, %407 : vector<8x128xf32>
    %418 = arith.addf %416, %417 : vector<8x128xf32>
    %419 = math.tanh %418 : vector<8x128xf32>
    %420 = arith.mulf %415, %419 : vector<8x128xf32>
    %421 = tpu.concatenate %420, %384 in 1 : vector<8x128xf32>, vector<8x128xf32> -> vector<8x256xf32>
    %422 = arith.truncf %421 : vector<8x256xf32> to vector<8x256xbf16>
    %cst_136 = arith.constant dense<0.000000e+00> : vector<8x512xf32>
    %423 = tpu.matmul %422, %14, %cst_136 {dimension_numbers = #tpu.dot_dimension_numbers<[1], [0], [0], [1], [0, 0, 1, 1], [], []>} : vector<8x256xbf16>, vector<256x512xbf16>, vector<8x512xf32> -> vector<8x512xf32>
    %424 = vector.broadcast %16 : vector<1x512xf32> to vector<8x512xf32>
    %425 = arith.addf %423, %424 : vector<8x512xf32>
    %426 = vector.extract_strided_slice %425 {offsets = [0, 0], sizes = [8, 128], strides = [1, 1]} : vector<8x512xf32> to vector<8x128xf32>
    %cst_137 = arith.constant 5.000000e-01 : f32
    %427 = vector.broadcast %cst_137 : f32 to vector<8x128xf32>
    %428 = arith.mulf %427, %426 : vector<8x128xf32>
    %429 = math.tanh %428 : vector<8x128xf32>
    %cst_138 = arith.constant 5.000000e-01 : f32
    %430 = vector.broadcast %cst_138 : f32 to vector<8x128xf32>
    %431 = arith.mulf %430, %429 : vector<8x128xf32>
    %cst_139 = arith.constant 5.000000e-01 : f32
    %432 = vector.broadcast %cst_139 : f32 to vector<8x128xf32>
    %433 = arith.addf %431, %432 : vector<8x128xf32>
    %434 = vector.extract_strided_slice %425 {offsets = [0, 128], sizes = [8, 128], strides = [1, 1]} : vector<8x512xf32> to vector<8x128xf32>
    %cst_140 = arith.constant 5.000000e-01 : f32
    %435 = vector.broadcast %cst_140 : f32 to vector<8x128xf32>
    %436 = arith.mulf %435, %434 : vector<8x128xf32>
    %437 = math.tanh %436 : vector<8x128xf32>
    %cst_141 = arith.constant 5.000000e-01 : f32
    %438 = vector.broadcast %cst_141 : f32 to vector<8x128xf32>
    %439 = arith.mulf %438, %437 : vector<8x128xf32>
    %cst_142 = arith.constant 5.000000e-01 : f32
    %440 = vector.broadcast %cst_142 : f32 to vector<8x128xf32>
    %441 = arith.addf %439, %440 : vector<8x128xf32>
    %442 = vector.extract_strided_slice %425 {offsets = [0, 256], sizes = [8, 128], strides = [1, 1]} : vector<8x512xf32> to vector<8x128xf32>
    %443 = math.tanh %442 : vector<8x128xf32>
    %444 = vector.extract_strided_slice %425 {offsets = [0, 384], sizes = [8, 128], strides = [1, 1]} : vector<8x512xf32> to vector<8x128xf32>
    %cst_143 = arith.constant 5.000000e-01 : f32
    %445 = vector.broadcast %cst_143 : f32 to vector<8x128xf32>
    %446 = arith.mulf %445, %444 : vector<8x128xf32>
    %447 = math.tanh %446 : vector<8x128xf32>
    %cst_144 = arith.constant 5.000000e-01 : f32
    %448 = vector.broadcast %cst_144 : f32 to vector<8x128xf32>
    %449 = arith.mulf %448, %447 : vector<8x128xf32>
    %cst_145 = arith.constant 5.000000e-01 : f32
    %450 = vector.broadcast %cst_145 : f32 to vector<8x128xf32>
    %451 = arith.addf %449, %450 : vector<8x128xf32>
    %452 = arith.mulf %441, %382 : vector<8x128xf32>
    %453 = arith.mulf %433, %443 : vector<8x128xf32>
    %454 = arith.addf %452, %453 : vector<8x128xf32>
    %455 = math.tanh %454 : vector<8x128xf32>
    %456 = arith.mulf %451, %455 : vector<8x128xf32>
    %457 = vector.extract_strided_slice %11 {offsets = [6, 0, 0], sizes = [1, 8, 512], strides = [1, 1, 1]} : vector<8x8x512xf32> to vector<1x8x512xf32>
    %458 = vector.shape_cast %457 : vector<1x8x512xf32> to vector<8x512xf32>
    %459 = arith.truncf %420 : vector<8x128xf32> to vector<8x128xbf16>
    %cst_146 = arith.constant dense<0.000000e+00> : vector<8x512xf32>
    %460 = tpu.matmul %459, %12, %cst_146 {dimension_numbers = #tpu.dot_dimension_numbers<[1], [0], [0], [1], [0, 0, 1, 1], [], []>} : vector<8x128xbf16>, vector<128x512xbf16>, vector<8x512xf32> -> vector<8x512xf32>
    %461 = arith.addf %458, %460 : vector<8x512xf32>
    %462 = vector.extract_strided_slice %461 {offsets = [0, 0], sizes = [8, 128], strides = [1, 1]} : vector<8x512xf32> to vector<8x128xf32>
    %cst_147 = arith.constant 5.000000e-01 : f32
    %463 = vector.broadcast %cst_147 : f32 to vector<8x128xf32>
    %464 = arith.mulf %463, %462 : vector<8x128xf32>
    %465 = math.tanh %464 : vector<8x128xf32>
    %cst_148 = arith.constant 5.000000e-01 : f32
    %466 = vector.broadcast %cst_148 : f32 to vector<8x128xf32>
    %467 = arith.mulf %466, %465 : vector<8x128xf32>
    %cst_149 = arith.constant 5.000000e-01 : f32
    %468 = vector.broadcast %cst_149 : f32 to vector<8x128xf32>
    %469 = arith.addf %467, %468 : vector<8x128xf32>
    %470 = vector.extract_strided_slice %461 {offsets = [0, 128], sizes = [8, 128], strides = [1, 1]} : vector<8x512xf32> to vector<8x128xf32>
    %cst_150 = arith.constant 5.000000e-01 : f32
    %471 = vector.broadcast %cst_150 : f32 to vector<8x128xf32>
    %472 = arith.mulf %471, %470 : vector<8x128xf32>
    %473 = math.tanh %472 : vector<8x128xf32>
    %cst_151 = arith.constant 5.000000e-01 : f32
    %474 = vector.broadcast %cst_151 : f32 to vector<8x128xf32>
    %475 = arith.mulf %474, %473 : vector<8x128xf32>
    %cst_152 = arith.constant 5.000000e-01 : f32
    %476 = vector.broadcast %cst_152 : f32 to vector<8x128xf32>
    %477 = arith.addf %475, %476 : vector<8x128xf32>
    %478 = vector.extract_strided_slice %461 {offsets = [0, 256], sizes = [8, 128], strides = [1, 1]} : vector<8x512xf32> to vector<8x128xf32>
    %479 = math.tanh %478 : vector<8x128xf32>
    %480 = vector.extract_strided_slice %461 {offsets = [0, 384], sizes = [8, 128], strides = [1, 1]} : vector<8x512xf32> to vector<8x128xf32>
    %cst_153 = arith.constant 5.000000e-01 : f32
    %481 = vector.broadcast %cst_153 : f32 to vector<8x128xf32>
    %482 = arith.mulf %481, %480 : vector<8x128xf32>
    %483 = math.tanh %482 : vector<8x128xf32>
    %cst_154 = arith.constant 5.000000e-01 : f32
    %484 = vector.broadcast %cst_154 : f32 to vector<8x128xf32>
    %485 = arith.mulf %484, %483 : vector<8x128xf32>
    %cst_155 = arith.constant 5.000000e-01 : f32
    %486 = vector.broadcast %cst_155 : f32 to vector<8x128xf32>
    %487 = arith.addf %485, %486 : vector<8x128xf32>
    %488 = arith.mulf %477, %418 : vector<8x128xf32>
    %489 = arith.mulf %469, %479 : vector<8x128xf32>
    %490 = arith.addf %488, %489 : vector<8x128xf32>
    %491 = math.tanh %490 : vector<8x128xf32>
    %492 = arith.mulf %487, %491 : vector<8x128xf32>
    %493 = tpu.concatenate %492, %456 in 1 : vector<8x128xf32>, vector<8x128xf32> -> vector<8x256xf32>
    %494 = arith.truncf %493 : vector<8x256xf32> to vector<8x256xbf16>
    %cst_156 = arith.constant dense<0.000000e+00> : vector<8x512xf32>
    %495 = tpu.matmul %494, %14, %cst_156 {dimension_numbers = #tpu.dot_dimension_numbers<[1], [0], [0], [1], [0, 0, 1, 1], [], []>} : vector<8x256xbf16>, vector<256x512xbf16>, vector<8x512xf32> -> vector<8x512xf32>
    %496 = vector.broadcast %16 : vector<1x512xf32> to vector<8x512xf32>
    %497 = arith.addf %495, %496 : vector<8x512xf32>
    %498 = vector.extract_strided_slice %497 {offsets = [0, 0], sizes = [8, 128], strides = [1, 1]} : vector<8x512xf32> to vector<8x128xf32>
    %cst_157 = arith.constant 5.000000e-01 : f32
    %499 = vector.broadcast %cst_157 : f32 to vector<8x128xf32>
    %500 = arith.mulf %499, %498 : vector<8x128xf32>
    %501 = math.tanh %500 : vector<8x128xf32>
    %cst_158 = arith.constant 5.000000e-01 : f32
    %502 = vector.broadcast %cst_158 : f32 to vector<8x128xf32>
    %503 = arith.mulf %502, %501 : vector<8x128xf32>
    %cst_159 = arith.constant 5.000000e-01 : f32
    %504 = vector.broadcast %cst_159 : f32 to vector<8x128xf32>
    %505 = arith.addf %503, %504 : vector<8x128xf32>
    %506 = vector.extract_strided_slice %497 {offsets = [0, 128], sizes = [8, 128], strides = [1, 1]} : vector<8x512xf32> to vector<8x128xf32>
    %cst_160 = arith.constant 5.000000e-01 : f32
    %507 = vector.broadcast %cst_160 : f32 to vector<8x128xf32>
    %508 = arith.mulf %507, %506 : vector<8x128xf32>
    %509 = math.tanh %508 : vector<8x128xf32>
    %cst_161 = arith.constant 5.000000e-01 : f32
    %510 = vector.broadcast %cst_161 : f32 to vector<8x128xf32>
    %511 = arith.mulf %510, %509 : vector<8x128xf32>
    %cst_162 = arith.constant 5.000000e-01 : f32
    %512 = vector.broadcast %cst_162 : f32 to vector<8x128xf32>
    %513 = arith.addf %511, %512 : vector<8x128xf32>
    %514 = vector.extract_strided_slice %497 {offsets = [0, 256], sizes = [8, 128], strides = [1, 1]} : vector<8x512xf32> to vector<8x128xf32>
    %515 = math.tanh %514 : vector<8x128xf32>
    %516 = vector.extract_strided_slice %497 {offsets = [0, 384], sizes = [8, 128], strides = [1, 1]} : vector<8x512xf32> to vector<8x128xf32>
    %cst_163 = arith.constant 5.000000e-01 : f32
    %517 = vector.broadcast %cst_163 : f32 to vector<8x128xf32>
    %518 = arith.mulf %517, %516 : vector<8x128xf32>
    %519 = math.tanh %518 : vector<8x128xf32>
    %cst_164 = arith.constant 5.000000e-01 : f32
    %520 = vector.broadcast %cst_164 : f32 to vector<8x128xf32>
    %521 = arith.mulf %520, %519 : vector<8x128xf32>
    %cst_165 = arith.constant 5.000000e-01 : f32
    %522 = vector.broadcast %cst_165 : f32 to vector<8x128xf32>
    %523 = arith.addf %521, %522 : vector<8x128xf32>
    %524 = arith.mulf %513, %454 : vector<8x128xf32>
    %525 = arith.mulf %505, %515 : vector<8x128xf32>
    %526 = arith.addf %524, %525 : vector<8x128xf32>
    %527 = math.tanh %526 : vector<8x128xf32>
    %528 = arith.mulf %523, %527 : vector<8x128xf32>
    %529 = vector.extract_strided_slice %11 {offsets = [7, 0, 0], sizes = [1, 8, 512], strides = [1, 1, 1]} : vector<8x8x512xf32> to vector<1x8x512xf32>
    %530 = vector.shape_cast %529 : vector<1x8x512xf32> to vector<8x512xf32>
    %531 = arith.truncf %492 : vector<8x128xf32> to vector<8x128xbf16>
    %cst_166 = arith.constant dense<0.000000e+00> : vector<8x512xf32>
    %532 = tpu.matmul %531, %12, %cst_166 {dimension_numbers = #tpu.dot_dimension_numbers<[1], [0], [0], [1], [0, 0, 1, 1], [], []>} : vector<8x128xbf16>, vector<128x512xbf16>, vector<8x512xf32> -> vector<8x512xf32>
    %533 = arith.addf %530, %532 : vector<8x512xf32>
    %534 = vector.extract_strided_slice %533 {offsets = [0, 0], sizes = [8, 128], strides = [1, 1]} : vector<8x512xf32> to vector<8x128xf32>
    %cst_167 = arith.constant 5.000000e-01 : f32
    %535 = vector.broadcast %cst_167 : f32 to vector<8x128xf32>
    %536 = arith.mulf %535, %534 : vector<8x128xf32>
    %537 = math.tanh %536 : vector<8x128xf32>
    %cst_168 = arith.constant 5.000000e-01 : f32
    %538 = vector.broadcast %cst_168 : f32 to vector<8x128xf32>
    %539 = arith.mulf %538, %537 : vector<8x128xf32>
    %cst_169 = arith.constant 5.000000e-01 : f32
    %540 = vector.broadcast %cst_169 : f32 to vector<8x128xf32>
    %541 = arith.addf %539, %540 : vector<8x128xf32>
    %542 = vector.extract_strided_slice %533 {offsets = [0, 128], sizes = [8, 128], strides = [1, 1]} : vector<8x512xf32> to vector<8x128xf32>
    %cst_170 = arith.constant 5.000000e-01 : f32
    %543 = vector.broadcast %cst_170 : f32 to vector<8x128xf32>
    %544 = arith.mulf %543, %542 : vector<8x128xf32>
    %545 = math.tanh %544 : vector<8x128xf32>
    %cst_171 = arith.constant 5.000000e-01 : f32
    %546 = vector.broadcast %cst_171 : f32 to vector<8x128xf32>
    %547 = arith.mulf %546, %545 : vector<8x128xf32>
    %cst_172 = arith.constant 5.000000e-01 : f32
    %548 = vector.broadcast %cst_172 : f32 to vector<8x128xf32>
    %549 = arith.addf %547, %548 : vector<8x128xf32>
    %550 = vector.extract_strided_slice %533 {offsets = [0, 256], sizes = [8, 128], strides = [1, 1]} : vector<8x512xf32> to vector<8x128xf32>
    %551 = math.tanh %550 : vector<8x128xf32>
    %552 = vector.extract_strided_slice %533 {offsets = [0, 384], sizes = [8, 128], strides = [1, 1]} : vector<8x512xf32> to vector<8x128xf32>
    %cst_173 = arith.constant 5.000000e-01 : f32
    %553 = vector.broadcast %cst_173 : f32 to vector<8x128xf32>
    %554 = arith.mulf %553, %552 : vector<8x128xf32>
    %555 = math.tanh %554 : vector<8x128xf32>
    %cst_174 = arith.constant 5.000000e-01 : f32
    %556 = vector.broadcast %cst_174 : f32 to vector<8x128xf32>
    %557 = arith.mulf %556, %555 : vector<8x128xf32>
    %cst_175 = arith.constant 5.000000e-01 : f32
    %558 = vector.broadcast %cst_175 : f32 to vector<8x128xf32>
    %559 = arith.addf %557, %558 : vector<8x128xf32>
    %560 = arith.mulf %549, %490 : vector<8x128xf32>
    %561 = arith.mulf %541, %551 : vector<8x128xf32>
    %562 = arith.addf %560, %561 : vector<8x128xf32>
    %563 = math.tanh %562 : vector<8x128xf32>
    %564 = arith.mulf %559, %563 : vector<8x128xf32>
    %565 = tpu.concatenate %564, %528 in 1 : vector<8x128xf32>, vector<8x128xf32> -> vector<8x256xf32>
    %566 = arith.truncf %565 : vector<8x256xf32> to vector<8x256xbf16>
    %cst_176 = arith.constant dense<0.000000e+00> : vector<8x512xf32>
    %567 = tpu.matmul %566, %14, %cst_176 {dimension_numbers = #tpu.dot_dimension_numbers<[1], [0], [0], [1], [0, 0, 1, 1], [], []>} : vector<8x256xbf16>, vector<256x512xbf16>, vector<8x512xf32> -> vector<8x512xf32>
    %568 = vector.broadcast %16 : vector<1x512xf32> to vector<8x512xf32>
    %569 = arith.addf %567, %568 : vector<8x512xf32>
    %570 = vector.extract_strided_slice %569 {offsets = [0, 0], sizes = [8, 128], strides = [1, 1]} : vector<8x512xf32> to vector<8x128xf32>
    %cst_177 = arith.constant 5.000000e-01 : f32
    %571 = vector.broadcast %cst_177 : f32 to vector<8x128xf32>
    %572 = arith.mulf %571, %570 : vector<8x128xf32>
    %573 = math.tanh %572 : vector<8x128xf32>
    %cst_178 = arith.constant 5.000000e-01 : f32
    %574 = vector.broadcast %cst_178 : f32 to vector<8x128xf32>
    %575 = arith.mulf %574, %573 : vector<8x128xf32>
    %cst_179 = arith.constant 5.000000e-01 : f32
    %576 = vector.broadcast %cst_179 : f32 to vector<8x128xf32>
    %577 = arith.addf %575, %576 : vector<8x128xf32>
    %578 = vector.extract_strided_slice %569 {offsets = [0, 128], sizes = [8, 128], strides = [1, 1]} : vector<8x512xf32> to vector<8x128xf32>
    %cst_180 = arith.constant 5.000000e-01 : f32
    %579 = vector.broadcast %cst_180 : f32 to vector<8x128xf32>
    %580 = arith.mulf %579, %578 : vector<8x128xf32>
    %581 = math.tanh %580 : vector<8x128xf32>
    %cst_181 = arith.constant 5.000000e-01 : f32
    %582 = vector.broadcast %cst_181 : f32 to vector<8x128xf32>
    %583 = arith.mulf %582, %581 : vector<8x128xf32>
    %cst_182 = arith.constant 5.000000e-01 : f32
    %584 = vector.broadcast %cst_182 : f32 to vector<8x128xf32>
    %585 = arith.addf %583, %584 : vector<8x128xf32>
    %586 = vector.extract_strided_slice %569 {offsets = [0, 256], sizes = [8, 128], strides = [1, 1]} : vector<8x512xf32> to vector<8x128xf32>
    %587 = math.tanh %586 : vector<8x128xf32>
    %588 = vector.extract_strided_slice %569 {offsets = [0, 384], sizes = [8, 128], strides = [1, 1]} : vector<8x512xf32> to vector<8x128xf32>
    %cst_183 = arith.constant 5.000000e-01 : f32
    %589 = vector.broadcast %cst_183 : f32 to vector<8x128xf32>
    %590 = arith.mulf %589, %588 : vector<8x128xf32>
    %591 = math.tanh %590 : vector<8x128xf32>
    %cst_184 = arith.constant 5.000000e-01 : f32
    %592 = vector.broadcast %cst_184 : f32 to vector<8x128xf32>
    %593 = arith.mulf %592, %591 : vector<8x128xf32>
    %cst_185 = arith.constant 5.000000e-01 : f32
    %594 = vector.broadcast %cst_185 : f32 to vector<8x128xf32>
    %595 = arith.addf %593, %594 : vector<8x128xf32>
    %596 = arith.mulf %585, %526 : vector<8x128xf32>
    %597 = arith.mulf %577, %587 : vector<8x128xf32>
    %598 = arith.addf %596, %597 : vector<8x128xf32>
    %599 = math.tanh %598 : vector<8x128xf32>
    %600 = arith.mulf %595, %599 : vector<8x128xf32>
    %c0_186 = arith.constant 0 : index
    %c0_187 = arith.constant 0 : index
    %c0_188 = arith.constant 0 : index
    %601 = vector.load %arg9[%c0_186, %c0_187, %c0_188] : memref<2x8x128xf32, #tpu.memory_space<vmem>>, vector<1x8x128xf32>
    %602 = vector.shape_cast %601 : vector<1x8x128xf32> to vector<8x128xf32>
    %603 = vector.shape_cast %564 : vector<8x128xf32> to vector<1x8x128xf32>
    tpu.vector_store %arg9[%c0_186, %c0_187, %c0_188], %603 {strides = array<i32>} : memref<2x8x128xf32, #tpu.memory_space<vmem>>, vector<1x8x128xf32>,
    %c0_189 = arith.constant 0 : index
    %c0_190 = arith.constant 0 : index
    %c0_191 = arith.constant 0 : index
    %604 = vector.load %arg10[%c0_189, %c0_190, %c0_191] : memref<2x8x128xf32, #tpu.memory_space<vmem>>, vector<1x8x128xf32>
    %605 = vector.shape_cast %604 : vector<1x8x128xf32> to vector<8x128xf32>
    %606 = vector.shape_cast %562 : vector<8x128xf32> to vector<1x8x128xf32>
    tpu.vector_store %arg10[%c0_189, %c0_190, %c0_191], %606 {strides = array<i32>} : memref<2x8x128xf32, #tpu.memory_space<vmem>>, vector<1x8x128xf32>,
    %c1_192 = arith.constant 1 : index
    %c0_193 = arith.constant 0 : index
    %c0_194 = arith.constant 0 : index
    %607 = vector.load %arg9[%c1_192, %c0_193, %c0_194] : memref<2x8x128xf32, #tpu.memory_space<vmem>>, vector<1x8x128xf32>
    %608 = vector.shape_cast %607 : vector<1x8x128xf32> to vector<8x128xf32>
    %609 = vector.shape_cast %600 : vector<8x128xf32> to vector<1x8x128xf32>
    tpu.vector_store %arg9[%c1_192, %c0_193, %c0_194], %609 {strides = array<i32>} : memref<2x8x128xf32, #tpu.memory_space<vmem>>, vector<1x8x128xf32>,
    %c1_195 = arith.constant 1 : index
    %c0_196 = arith.constant 0 : index
    %c0_197 = arith.constant 0 : index
    %610 = vector.load %arg10[%c1_195, %c0_196, %c0_197] : memref<2x8x128xf32, #tpu.memory_space<vmem>>, vector<1x8x128xf32>
    %611 = vector.shape_cast %610 : vector<1x8x128xf32> to vector<8x128xf32>
    %612 = vector.shape_cast %598 : vector<8x128xf32> to vector<1x8x128xf32>
    tpu.vector_store %arg10[%c1_195, %c0_196, %c0_197], %612 {strides = array<i32>} : memref<2x8x128xf32, #tpu.memory_space<vmem>>, vector<1x8x128xf32>,
    %c0_i32_198 = arith.constant 0 : i32
    %613 = arith.cmpi eq, %arg0, %c0_i32_198 : i32
    %614 = arith.extui %613 : i1 to i32
    %c0_i32_199 = arith.constant 0 : i32
    %615 = arith.cmpi ne, %614, %c0_i32_199 : i32
    scf.if %615 {
      %c0_200 = arith.constant 0 : index
      %c0_201 = arith.constant 0 : index
      %c0_202 = arith.constant 0 : index
      %616 = vector.load %arg9[%c0_200, %c0_201, %c0_202] : memref<2x8x128xf32, #tpu.memory_space<vmem>>, vector<2x8x128xf32>
      %c0_203 = arith.constant 0 : index
      %c0_204 = arith.constant 0 : index
      %c0_205 = arith.constant 0 : index
      %617 = vector.load %arg7[%c0_203, %c0_204, %c0_205] : memref<2x8x128xf32, #tpu.memory_space<vmem>>, vector<2x8x128xf32>
      tpu.vector_store %arg7[%c0_203, %c0_204, %c0_205], %616 {strides = array<i32>} : memref<2x8x128xf32, #tpu.memory_space<vmem>>, vector<2x8x128xf32>,
      %c0_206 = arith.constant 0 : index
      %c0_207 = arith.constant 0 : index
      %c0_208 = arith.constant 0 : index
      %618 = vector.load %arg10[%c0_206, %c0_207, %c0_208] : memref<2x8x128xf32, #tpu.memory_space<vmem>>, vector<2x8x128xf32>
      %c0_209 = arith.constant 0 : index
      %c0_210 = arith.constant 0 : index
      %c0_211 = arith.constant 0 : index
      %619 = vector.load %arg8[%c0_209, %c0_210, %c0_211] : memref<2x8x128xf32, #tpu.memory_space<vmem>>, vector<2x8x128xf32>
      tpu.vector_store %arg8[%c0_209, %c0_210, %c0_211], %618 {strides = array<i32>} : memref<2x8x128xf32, #tpu.memory_space<vmem>>, vector<2x8x128xf32>,
    } else {
    }
    return
  }
  func.func @transform_0(%arg0: i32) -> (i32, i32, i32) {
    %c0_i32 = arith.constant 0 : i32
    %c0_i32_0 = arith.constant 0 : i32
    %c0_i32_1 = arith.constant 0 : i32
    return %arg0, %c0_i32, %c0_i32_0 : i32, i32, i32
  }
  func.func @transform_1(%arg0: i32) -> (i32, i32) {
    %c0_i32 = arith.constant 0 : i32
    %c0_i32_0 = arith.constant 0 : i32
    %c0_i32_1 = arith.constant 0 : i32
    return %c0_i32, %c0_i32_0 : i32, i32
  }
  func.func @transform_2(%arg0: i32) -> (i32, i32) {
    %c0_i32 = arith.constant 0 : i32
    %c0_i32_0 = arith.constant 0 : i32
    %c0_i32_1 = arith.constant 0 : i32
    return %c0_i32, %c0_i32_0 : i32, i32
  }
  func.func @transform_3(%arg0: i32) -> (i32, i32) {
    %c0_i32 = arith.constant 0 : i32
    %c0_i32_0 = arith.constant 0 : i32
    %c0_i32_1 = arith.constant 0 : i32
    return %c0_i32, %c0_i32_0 : i32, i32
  }
  func.func @transform_4(%arg0: i32) -> (i32, i32, i32) {
    %c0_i32 = arith.constant 0 : i32
    %c0_i32_0 = arith.constant 0 : i32
    %c0_i32_1 = arith.constant 0 : i32
    %c0_i32_2 = arith.constant 0 : i32
    return %c0_i32, %c0_i32_0, %c0_i32_1 : i32, i32, i32
  }
  func.func @transform_5(%arg0: i32) -> (i32, i32, i32) {
    %c0_i32 = arith.constant 0 : i32
    %c0_i32_0 = arith.constant 0 : i32
    %c0_i32_1 = arith.constant 0 : i32
    %c0_i32_2 = arith.constant 0 : i32
    return %c0_i32, %c0_i32_0, %c0_i32_1 : i32, i32, i32
  }
  func.func @transform_6(%arg0: i32) -> (i32, i32, i32) {
    %c0_i32 = arith.constant 0 : i32
    %c0_i32_0 = arith.constant 0 : i32
    %c0_i32_1 = arith.constant 0 : i32
    %c0_i32_2 = arith.constant 0 : i32
    return %c0_i32, %c0_i32_0, %c0_i32_1 : i32, i32, i32
  }
  func.func @transform_7(%arg0: i32) -> (i32, i32, i32) {
    %c0_i32 = arith.constant 0 : i32
    %c0_i32_0 = arith.constant 0 : i32
    %c0_i32_1 = arith.constant 0 : i32
    %c0_i32_2 = arith.constant 0 : i32
    return %c0_i32, %c0_i32_0, %c0_i32_1 : i32, i32, i32
  }
}

module attributes {stable_mosaic.version = 11 : i64} {
  func.func @kernel(%arg0: i32, %arg1: memref<6xi32, #tpu.memory_space<smem>>, %arg2: memref<6x8x128xf32, #tpu.memory_space<vmem>>, %arg3: memref<2x8x128xf32, #tpu.memory_space<vmem>>, %arg4: memref<2x8x128xf32, #tpu.memory_space<vmem>>, %arg5: memref<128x128xbf16, #tpu.memory_space<vmem>>, %arg6: memref<1x128xf32, #tpu.memory_space<vmem>>, %arg7: memref<2x256x512xbf16, #tpu.memory_space<vmem>>, %arg8: memref<2x1x512xf32, #tpu.memory_space<vmem>>, %arg9: memref<6x8x128xf32, #tpu.memory_space<vmem>>) attributes {dimension_semantics = [#tpu.dimension_semantics<arbitrary>], iteration_bounds = array<i64: 1>, scalar_prefetch = 1 : i64, scratch_operands = 0 : i64, tpu.core_type = #tpu.core_type<tc>, window_params = [{pipeline_mode = #tpu.pipeline_mode<synchronous>, transform_indices = @transform_0, window_bounds = array<i64: 6, 8, 128>}, {pipeline_mode = #tpu.pipeline_mode<synchronous>, transform_indices = @transform_1, window_bounds = array<i64: 2, 8, 128>}, {pipeline_mode = #tpu.pipeline_mode<synchronous>, transform_indices = @transform_2, window_bounds = array<i64: 2, 8, 128>}, {pipeline_mode = #tpu.pipeline_mode<synchronous>, transform_indices = @transform_3, window_bounds = array<i64: 128, 128>}, {pipeline_mode = #tpu.pipeline_mode<synchronous>, transform_indices = @transform_4, window_bounds = array<i64: 1, 128>}, {pipeline_mode = #tpu.pipeline_mode<synchronous>, transform_indices = @transform_5, window_bounds = array<i64: 2, 256, 512>}, {pipeline_mode = #tpu.pipeline_mode<synchronous>, transform_indices = @transform_6, window_bounds = array<i64: 2, 1, 512>}, {pipeline_mode = #tpu.pipeline_mode<synchronous>, transform_indices = @transform_7, window_bounds = array<i64: 6, 8, 128>}]} {
    %c0 = arith.constant 0 : index
    %c0_0 = arith.constant 0 : index
    %0 = vector.load %arg5[%c0, %c0_0] : memref<128x128xbf16, #tpu.memory_space<vmem>>, vector<128x128xbf16>
    %c0_1 = arith.constant 0 : index
    %c0_2 = arith.constant 0 : index
    %1 = vector.load %arg6[%c0_1, %c0_2] : memref<1x128xf32, #tpu.memory_space<vmem>>, vector<1x128xf32>
    %c0_3 = arith.constant 0 : index
    %c0_4 = arith.constant 0 : index
    %c0_5 = arith.constant 0 : index
    %2 = vector.load %arg7[%c0_3, %c0_4, %c0_5] : memref<2x256x512xbf16, #tpu.memory_space<vmem>>, vector<1x256x512xbf16>
    %3 = vector.shape_cast %2 : vector<1x256x512xbf16> to vector<256x512xbf16>
    %c1 = arith.constant 1 : index
    %c0_6 = arith.constant 0 : index
    %c0_7 = arith.constant 0 : index
    %4 = vector.load %arg7[%c1, %c0_6, %c0_7] : memref<2x256x512xbf16, #tpu.memory_space<vmem>>, vector<1x256x512xbf16>
    %5 = vector.shape_cast %4 : vector<1x256x512xbf16> to vector<256x512xbf16>
    %c0_8 = arith.constant 0 : index
    %c0_9 = arith.constant 0 : index
    %c0_10 = arith.constant 0 : index
    %6 = vector.load %arg8[%c0_8, %c0_9, %c0_10] : memref<2x1x512xf32, #tpu.memory_space<vmem>>, vector<1x1x512xf32>
    %7 = vector.shape_cast %6 : vector<1x1x512xf32> to vector<1x512xf32>
    %c1_11 = arith.constant 1 : index
    %c0_12 = arith.constant 0 : index
    %c0_13 = arith.constant 0 : index
    %8 = vector.load %arg8[%c1_11, %c0_12, %c0_13] : memref<2x1x512xf32, #tpu.memory_space<vmem>>, vector<1x1x512xf32>
    %9 = vector.shape_cast %8 : vector<1x1x512xf32> to vector<1x512xf32>
    %c0_14 = arith.constant 0 : index
    %c0_15 = arith.constant 0 : index
    %c0_16 = arith.constant 0 : index
    %10 = vector.load %arg3[%c0_14, %c0_15, %c0_16] : memref<2x8x128xf32, #tpu.memory_space<vmem>>, vector<1x8x128xf32>
    %11 = vector.shape_cast %10 : vector<1x8x128xf32> to vector<8x128xf32>
    %c1_17 = arith.constant 1 : index
    %c0_18 = arith.constant 0 : index
    %c0_19 = arith.constant 0 : index
    %12 = vector.load %arg3[%c1_17, %c0_18, %c0_19] : memref<2x8x128xf32, #tpu.memory_space<vmem>>, vector<1x8x128xf32>
    %13 = vector.shape_cast %12 : vector<1x8x128xf32> to vector<8x128xf32>
    %c0_20 = arith.constant 0 : index
    %c0_21 = arith.constant 0 : index
    %c0_22 = arith.constant 0 : index
    %14 = vector.load %arg4[%c0_20, %c0_21, %c0_22] : memref<2x8x128xf32, #tpu.memory_space<vmem>>, vector<1x8x128xf32>
    %15 = vector.shape_cast %14 : vector<1x8x128xf32> to vector<8x128xf32>
    %c1_23 = arith.constant 1 : index
    %c0_24 = arith.constant 0 : index
    %c0_25 = arith.constant 0 : index
    %16 = vector.load %arg4[%c1_23, %c0_24, %c0_25] : memref<2x8x128xf32, #tpu.memory_space<vmem>>, vector<1x8x128xf32>
    %17 = vector.shape_cast %16 : vector<1x8x128xf32> to vector<8x128xf32>
    %cst = arith.constant 0.000000e+00 : f32
    %18 = vector.broadcast %cst : f32 to vector<8x128xf32>
    %c0_26 = arith.constant 0 : index
    %19 = memref.load %arg1[%c0_26] : memref<6xi32, #tpu.memory_space<smem>>
    %c0_i32 = arith.constant 0 : i32
    %20 = arith.cmpi ne, %19, %c0_i32 : i32
    %21 = arith.extui %20 : i1 to i32
    %22 = arith.sitofp %21 : i32 to f32
    %c0_27 = arith.constant 0 : index
    %c0_28 = arith.constant 0 : index
    %c0_29 = arith.constant 0 : index
    %23 = vector.load %arg2[%c0_27, %c0_28, %c0_29] : memref<6x8x128xf32, #tpu.memory_space<vmem>>, vector<1x8x128xf32>
    %24 = vector.shape_cast %23 : vector<1x8x128xf32> to vector<8x128xf32>
    %25 = vector.broadcast %22 : f32 to vector<8x128xf32>
    %26 = arith.mulf %25, %24 : vector<8x128xf32>
    %cst_30 = arith.constant 1.000000e+00 : f32
    %27 = arith.subf %cst_30, %22 : f32
    %28 = vector.broadcast %27 : f32 to vector<8x128xf32>
    %29 = arith.mulf %28, %18 : vector<8x128xf32>
    %30 = arith.addf %26, %29 : vector<8x128xf32>
    %31 = arith.truncf %30 : vector<8x128xf32> to vector<8x128xbf16>
    %cst_31 = arith.constant dense<0.000000e+00> : vector<8x128xf32>
    %32 = tpu.matmul %31, %0, %cst_31 {dimension_numbers = #tpu.dot_dimension_numbers<[1], [0], [0], [1], [0, 0, 1, 1], [], []>} : vector<8x128xbf16>, vector<128x128xbf16>, vector<8x128xf32> -> vector<8x128xf32>
    %33 = vector.broadcast %1 : vector<1x128xf32> to vector<8x128xf32>
    %34 = arith.addf %32, %33 : vector<8x128xf32>
    %cst_32 = arith.constant 0.000000e+00 : f32
    %35 = vector.broadcast %cst_32 : f32 to vector<8x128xf32>
    %36 = arith.maximumf %34, %35 : vector<8x128xf32>
    %37 = tpu.concatenate %36, %11 in 1 : vector<8x128xf32>, vector<8x128xf32> -> vector<8x256xf32>
    %38 = arith.truncf %37 : vector<8x256xf32> to vector<8x256xbf16>
    %cst_33 = arith.constant dense<0.000000e+00> : vector<8x512xf32>
    %39 = tpu.matmul %38, %3, %cst_33 {dimension_numbers = #tpu.dot_dimension_numbers<[1], [0], [0], [1], [0, 0, 1, 1], [], []>} : vector<8x256xbf16>, vector<256x512xbf16>, vector<8x512xf32> -> vector<8x512xf32>
    %40 = vector.broadcast %7 : vector<1x512xf32> to vector<8x512xf32>
    %41 = arith.addf %39, %40 : vector<8x512xf32>
    %42 = vector.extract_strided_slice %41 {offsets = [0, 0], sizes = [8, 128], strides = [1, 1]} : vector<8x512xf32> to vector<8x128xf32>
    %cst_34 = arith.constant 5.000000e-01 : f32
    %43 = vector.broadcast %cst_34 : f32 to vector<8x128xf32>
    %44 = arith.mulf %43, %42 : vector<8x128xf32>
    %45 = math.tanh %44 : vector<8x128xf32>
    %cst_35 = arith.constant 5.000000e-01 : f32
    %46 = vector.broadcast %cst_35 : f32 to vector<8x128xf32>
    %47 = arith.mulf %46, %45 : vector<8x128xf32>
    %cst_36 = arith.constant 5.000000e-01 : f32
    %48 = vector.broadcast %cst_36 : f32 to vector<8x128xf32>
    %49 = arith.addf %47, %48 : vector<8x128xf32>
    %50 = vector.extract_strided_slice %41 {offsets = [0, 128], sizes = [8, 128], strides = [1, 1]} : vector<8x512xf32> to vector<8x128xf32>
    %cst_37 = arith.constant 5.000000e-01 : f32
    %51 = vector.broadcast %cst_37 : f32 to vector<8x128xf32>
    %52 = arith.mulf %51, %50 : vector<8x128xf32>
    %53 = math.tanh %52 : vector<8x128xf32>
    %cst_38 = arith.constant 5.000000e-01 : f32
    %54 = vector.broadcast %cst_38 : f32 to vector<8x128xf32>
    %55 = arith.mulf %54, %53 : vector<8x128xf32>
    %cst_39 = arith.constant 5.000000e-01 : f32
    %56 = vector.broadcast %cst_39 : f32 to vector<8x128xf32>
    %57 = arith.addf %55, %56 : vector<8x128xf32>
    %58 = vector.extract_strided_slice %41 {offsets = [0, 256], sizes = [8, 128], strides = [1, 1]} : vector<8x512xf32> to vector<8x128xf32>
    %59 = math.tanh %58 : vector<8x128xf32>
    %60 = vector.extract_strided_slice %41 {offsets = [0, 384], sizes = [8, 128], strides = [1, 1]} : vector<8x512xf32> to vector<8x128xf32>
    %cst_40 = arith.constant 5.000000e-01 : f32
    %61 = vector.broadcast %cst_40 : f32 to vector<8x128xf32>
    %62 = arith.mulf %61, %60 : vector<8x128xf32>
    %63 = math.tanh %62 : vector<8x128xf32>
    %cst_41 = arith.constant 5.000000e-01 : f32
    %64 = vector.broadcast %cst_41 : f32 to vector<8x128xf32>
    %65 = arith.mulf %64, %63 : vector<8x128xf32>
    %cst_42 = arith.constant 5.000000e-01 : f32
    %66 = vector.broadcast %cst_42 : f32 to vector<8x128xf32>
    %67 = arith.addf %65, %66 : vector<8x128xf32>
    %68 = arith.mulf %57, %15 : vector<8x128xf32>
    %69 = arith.mulf %49, %59 : vector<8x128xf32>
    %70 = arith.addf %68, %69 : vector<8x128xf32>
    %71 = math.tanh %70 : vector<8x128xf32>
    %72 = arith.mulf %67, %71 : vector<8x128xf32>
    %73 = tpu.concatenate %72, %13 in 1 : vector<8x128xf32>, vector<8x128xf32> -> vector<8x256xf32>
    %74 = arith.truncf %73 : vector<8x256xf32> to vector<8x256xbf16>
    %cst_43 = arith.constant dense<0.000000e+00> : vector<8x512xf32>
    %75 = tpu.matmul %74, %5, %cst_43 {dimension_numbers = #tpu.dot_dimension_numbers<[1], [0], [0], [1], [0, 0, 1, 1], [], []>} : vector<8x256xbf16>, vector<256x512xbf16>, vector<8x512xf32> -> vector<8x512xf32>
    %76 = vector.broadcast %9 : vector<1x512xf32> to vector<8x512xf32>
    %77 = arith.addf %75, %76 : vector<8x512xf32>
    %78 = vector.extract_strided_slice %77 {offsets = [0, 0], sizes = [8, 128], strides = [1, 1]} : vector<8x512xf32> to vector<8x128xf32>
    %cst_44 = arith.constant 5.000000e-01 : f32
    %79 = vector.broadcast %cst_44 : f32 to vector<8x128xf32>
    %80 = arith.mulf %79, %78 : vector<8x128xf32>
    %81 = math.tanh %80 : vector<8x128xf32>
    %cst_45 = arith.constant 5.000000e-01 : f32
    %82 = vector.broadcast %cst_45 : f32 to vector<8x128xf32>
    %83 = arith.mulf %82, %81 : vector<8x128xf32>
    %cst_46 = arith.constant 5.000000e-01 : f32
    %84 = vector.broadcast %cst_46 : f32 to vector<8x128xf32>
    %85 = arith.addf %83, %84 : vector<8x128xf32>
    %86 = vector.extract_strided_slice %77 {offsets = [0, 128], sizes = [8, 128], strides = [1, 1]} : vector<8x512xf32> to vector<8x128xf32>
    %cst_47 = arith.constant 5.000000e-01 : f32
    %87 = vector.broadcast %cst_47 : f32 to vector<8x128xf32>
    %88 = arith.mulf %87, %86 : vector<8x128xf32>
    %89 = math.tanh %88 : vector<8x128xf32>
    %cst_48 = arith.constant 5.000000e-01 : f32
    %90 = vector.broadcast %cst_48 : f32 to vector<8x128xf32>
    %91 = arith.mulf %90, %89 : vector<8x128xf32>
    %cst_49 = arith.constant 5.000000e-01 : f32
    %92 = vector.broadcast %cst_49 : f32 to vector<8x128xf32>
    %93 = arith.addf %91, %92 : vector<8x128xf32>
    %94 = vector.extract_strided_slice %77 {offsets = [0, 256], sizes = [8, 128], strides = [1, 1]} : vector<8x512xf32> to vector<8x128xf32>
    %95 = math.tanh %94 : vector<8x128xf32>
    %96 = vector.extract_strided_slice %77 {offsets = [0, 384], sizes = [8, 128], strides = [1, 1]} : vector<8x512xf32> to vector<8x128xf32>
    %cst_50 = arith.constant 5.000000e-01 : f32
    %97 = vector.broadcast %cst_50 : f32 to vector<8x128xf32>
    %98 = arith.mulf %97, %96 : vector<8x128xf32>
    %99 = math.tanh %98 : vector<8x128xf32>
    %cst_51 = arith.constant 5.000000e-01 : f32
    %100 = vector.broadcast %cst_51 : f32 to vector<8x128xf32>
    %101 = arith.mulf %100, %99 : vector<8x128xf32>
    %cst_52 = arith.constant 5.000000e-01 : f32
    %102 = vector.broadcast %cst_52 : f32 to vector<8x128xf32>
    %103 = arith.addf %101, %102 : vector<8x128xf32>
    %104 = arith.mulf %93, %17 : vector<8x128xf32>
    %105 = arith.mulf %85, %95 : vector<8x128xf32>
    %106 = arith.addf %104, %105 : vector<8x128xf32>
    %107 = math.tanh %106 : vector<8x128xf32>
    %108 = arith.mulf %103, %107 : vector<8x128xf32>
    %c0_53 = arith.constant 0 : index
    %c0_54 = arith.constant 0 : index
    %c0_55 = arith.constant 0 : index
    %109 = vector.load %arg9[%c0_53, %c0_54, %c0_55] : memref<6x8x128xf32, #tpu.memory_space<vmem>>, vector<1x8x128xf32>
    %110 = vector.shape_cast %109 : vector<1x8x128xf32> to vector<8x128xf32>
    %111 = vector.shape_cast %108 : vector<8x128xf32> to vector<1x8x128xf32>
    tpu.vector_store %arg9[%c0_53, %c0_54, %c0_55], %111 {strides = array<i32>} : memref<6x8x128xf32, #tpu.memory_space<vmem>>, vector<1x8x128xf32>,
    %c1_56 = arith.constant 1 : index
    %112 = memref.load %arg1[%c1_56] : memref<6xi32, #tpu.memory_space<smem>>
    %c0_i32_57 = arith.constant 0 : i32
    %113 = arith.cmpi ne, %112, %c0_i32_57 : i32
    %114 = arith.extui %113 : i1 to i32
    %115 = arith.sitofp %114 : i32 to f32
    %c1_58 = arith.constant 1 : index
    %c0_59 = arith.constant 0 : index
    %c0_60 = arith.constant 0 : index
    %116 = vector.load %arg2[%c1_58, %c0_59, %c0_60] : memref<6x8x128xf32, #tpu.memory_space<vmem>>, vector<1x8x128xf32>
    %117 = vector.shape_cast %116 : vector<1x8x128xf32> to vector<8x128xf32>
    %118 = vector.broadcast %115 : f32 to vector<8x128xf32>
    %119 = arith.mulf %118, %117 : vector<8x128xf32>
    %cst_61 = arith.constant 1.000000e+00 : f32
    %120 = arith.subf %cst_61, %115 : f32
    %121 = vector.broadcast %120 : f32 to vector<8x128xf32>
    %122 = arith.mulf %121, %108 : vector<8x128xf32>
    %123 = arith.addf %119, %122 : vector<8x128xf32>
    %124 = arith.truncf %123 : vector<8x128xf32> to vector<8x128xbf16>
    %cst_62 = arith.constant dense<0.000000e+00> : vector<8x128xf32>
    %125 = tpu.matmul %124, %0, %cst_62 {dimension_numbers = #tpu.dot_dimension_numbers<[1], [0], [0], [1], [0, 0, 1, 1], [], []>} : vector<8x128xbf16>, vector<128x128xbf16>, vector<8x128xf32> -> vector<8x128xf32>
    %126 = vector.broadcast %1 : vector<1x128xf32> to vector<8x128xf32>
    %127 = arith.addf %125, %126 : vector<8x128xf32>
    %cst_63 = arith.constant 0.000000e+00 : f32
    %128 = vector.broadcast %cst_63 : f32 to vector<8x128xf32>
    %129 = arith.maximumf %127, %128 : vector<8x128xf32>
    %130 = tpu.concatenate %129, %72 in 1 : vector<8x128xf32>, vector<8x128xf32> -> vector<8x256xf32>
    %131 = arith.truncf %130 : vector<8x256xf32> to vector<8x256xbf16>
    %cst_64 = arith.constant dense<0.000000e+00> : vector<8x512xf32>
    %132 = tpu.matmul %131, %3, %cst_64 {dimension_numbers = #tpu.dot_dimension_numbers<[1], [0], [0], [1], [0, 0, 1, 1], [], []>} : vector<8x256xbf16>, vector<256x512xbf16>, vector<8x512xf32> -> vector<8x512xf32>
    %133 = vector.broadcast %7 : vector<1x512xf32> to vector<8x512xf32>
    %134 = arith.addf %132, %133 : vector<8x512xf32>
    %135 = vector.extract_strided_slice %134 {offsets = [0, 0], sizes = [8, 128], strides = [1, 1]} : vector<8x512xf32> to vector<8x128xf32>
    %cst_65 = arith.constant 5.000000e-01 : f32
    %136 = vector.broadcast %cst_65 : f32 to vector<8x128xf32>
    %137 = arith.mulf %136, %135 : vector<8x128xf32>
    %138 = math.tanh %137 : vector<8x128xf32>
    %cst_66 = arith.constant 5.000000e-01 : f32
    %139 = vector.broadcast %cst_66 : f32 to vector<8x128xf32>
    %140 = arith.mulf %139, %138 : vector<8x128xf32>
    %cst_67 = arith.constant 5.000000e-01 : f32
    %141 = vector.broadcast %cst_67 : f32 to vector<8x128xf32>
    %142 = arith.addf %140, %141 : vector<8x128xf32>
    %143 = vector.extract_strided_slice %134 {offsets = [0, 128], sizes = [8, 128], strides = [1, 1]} : vector<8x512xf32> to vector<8x128xf32>
    %cst_68 = arith.constant 5.000000e-01 : f32
    %144 = vector.broadcast %cst_68 : f32 to vector<8x128xf32>
    %145 = arith.mulf %144, %143 : vector<8x128xf32>
    %146 = math.tanh %145 : vector<8x128xf32>
    %cst_69 = arith.constant 5.000000e-01 : f32
    %147 = vector.broadcast %cst_69 : f32 to vector<8x128xf32>
    %148 = arith.mulf %147, %146 : vector<8x128xf32>
    %cst_70 = arith.constant 5.000000e-01 : f32
    %149 = vector.broadcast %cst_70 : f32 to vector<8x128xf32>
    %150 = arith.addf %148, %149 : vector<8x128xf32>
    %151 = vector.extract_strided_slice %134 {offsets = [0, 256], sizes = [8, 128], strides = [1, 1]} : vector<8x512xf32> to vector<8x128xf32>
    %152 = math.tanh %151 : vector<8x128xf32>
    %153 = vector.extract_strided_slice %134 {offsets = [0, 384], sizes = [8, 128], strides = [1, 1]} : vector<8x512xf32> to vector<8x128xf32>
    %cst_71 = arith.constant 5.000000e-01 : f32
    %154 = vector.broadcast %cst_71 : f32 to vector<8x128xf32>
    %155 = arith.mulf %154, %153 : vector<8x128xf32>
    %156 = math.tanh %155 : vector<8x128xf32>
    %cst_72 = arith.constant 5.000000e-01 : f32
    %157 = vector.broadcast %cst_72 : f32 to vector<8x128xf32>
    %158 = arith.mulf %157, %156 : vector<8x128xf32>
    %cst_73 = arith.constant 5.000000e-01 : f32
    %159 = vector.broadcast %cst_73 : f32 to vector<8x128xf32>
    %160 = arith.addf %158, %159 : vector<8x128xf32>
    %161 = arith.mulf %150, %70 : vector<8x128xf32>
    %162 = arith.mulf %142, %152 : vector<8x128xf32>
    %163 = arith.addf %161, %162 : vector<8x128xf32>
    %164 = math.tanh %163 : vector<8x128xf32>
    %165 = arith.mulf %160, %164 : vector<8x128xf32>
    %166 = tpu.concatenate %165, %108 in 1 : vector<8x128xf32>, vector<8x128xf32> -> vector<8x256xf32>
    %167 = arith.truncf %166 : vector<8x256xf32> to vector<8x256xbf16>
    %cst_74 = arith.constant dense<0.000000e+00> : vector<8x512xf32>
    %168 = tpu.matmul %167, %5, %cst_74 {dimension_numbers = #tpu.dot_dimension_numbers<[1], [0], [0], [1], [0, 0, 1, 1], [], []>} : vector<8x256xbf16>, vector<256x512xbf16>, vector<8x512xf32> -> vector<8x512xf32>
    %169 = vector.broadcast %9 : vector<1x512xf32> to vector<8x512xf32>
    %170 = arith.addf %168, %169 : vector<8x512xf32>
    %171 = vector.extract_strided_slice %170 {offsets = [0, 0], sizes = [8, 128], strides = [1, 1]} : vector<8x512xf32> to vector<8x128xf32>
    %cst_75 = arith.constant 5.000000e-01 : f32
    %172 = vector.broadcast %cst_75 : f32 to vector<8x128xf32>
    %173 = arith.mulf %172, %171 : vector<8x128xf32>
    %174 = math.tanh %173 : vector<8x128xf32>
    %cst_76 = arith.constant 5.000000e-01 : f32
    %175 = vector.broadcast %cst_76 : f32 to vector<8x128xf32>
    %176 = arith.mulf %175, %174 : vector<8x128xf32>
    %cst_77 = arith.constant 5.000000e-01 : f32
    %177 = vector.broadcast %cst_77 : f32 to vector<8x128xf32>
    %178 = arith.addf %176, %177 : vector<8x128xf32>
    %179 = vector.extract_strided_slice %170 {offsets = [0, 128], sizes = [8, 128], strides = [1, 1]} : vector<8x512xf32> to vector<8x128xf32>
    %cst_78 = arith.constant 5.000000e-01 : f32
    %180 = vector.broadcast %cst_78 : f32 to vector<8x128xf32>
    %181 = arith.mulf %180, %179 : vector<8x128xf32>
    %182 = math.tanh %181 : vector<8x128xf32>
    %cst_79 = arith.constant 5.000000e-01 : f32
    %183 = vector.broadcast %cst_79 : f32 to vector<8x128xf32>
    %184 = arith.mulf %183, %182 : vector<8x128xf32>
    %cst_80 = arith.constant 5.000000e-01 : f32
    %185 = vector.broadcast %cst_80 : f32 to vector<8x128xf32>
    %186 = arith.addf %184, %185 : vector<8x128xf32>
    %187 = vector.extract_strided_slice %170 {offsets = [0, 256], sizes = [8, 128], strides = [1, 1]} : vector<8x512xf32> to vector<8x128xf32>
    %188 = math.tanh %187 : vector<8x128xf32>
    %189 = vector.extract_strided_slice %170 {offsets = [0, 384], sizes = [8, 128], strides = [1, 1]} : vector<8x512xf32> to vector<8x128xf32>
    %cst_81 = arith.constant 5.000000e-01 : f32
    %190 = vector.broadcast %cst_81 : f32 to vector<8x128xf32>
    %191 = arith.mulf %190, %189 : vector<8x128xf32>
    %192 = math.tanh %191 : vector<8x128xf32>
    %cst_82 = arith.constant 5.000000e-01 : f32
    %193 = vector.broadcast %cst_82 : f32 to vector<8x128xf32>
    %194 = arith.mulf %193, %192 : vector<8x128xf32>
    %cst_83 = arith.constant 5.000000e-01 : f32
    %195 = vector.broadcast %cst_83 : f32 to vector<8x128xf32>
    %196 = arith.addf %194, %195 : vector<8x128xf32>
    %197 = arith.mulf %186, %106 : vector<8x128xf32>
    %198 = arith.mulf %178, %188 : vector<8x128xf32>
    %199 = arith.addf %197, %198 : vector<8x128xf32>
    %200 = math.tanh %199 : vector<8x128xf32>
    %201 = arith.mulf %196, %200 : vector<8x128xf32>
    %c1_84 = arith.constant 1 : index
    %c0_85 = arith.constant 0 : index
    %c0_86 = arith.constant 0 : index
    %202 = vector.load %arg9[%c1_84, %c0_85, %c0_86] : memref<6x8x128xf32, #tpu.memory_space<vmem>>, vector<1x8x128xf32>
    %203 = vector.shape_cast %202 : vector<1x8x128xf32> to vector<8x128xf32>
    %204 = vector.shape_cast %201 : vector<8x128xf32> to vector<1x8x128xf32>
    tpu.vector_store %arg9[%c1_84, %c0_85, %c0_86], %204 {strides = array<i32>} : memref<6x8x128xf32, #tpu.memory_space<vmem>>, vector<1x8x128xf32>,
    %c2 = arith.constant 2 : index
    %205 = memref.load %arg1[%c2] : memref<6xi32, #tpu.memory_space<smem>>
    %c0_i32_87 = arith.constant 0 : i32
    %206 = arith.cmpi ne, %205, %c0_i32_87 : i32
    %207 = arith.extui %206 : i1 to i32
    %208 = arith.sitofp %207 : i32 to f32
    %c2_88 = arith.constant 2 : index
    %c0_89 = arith.constant 0 : index
    %c0_90 = arith.constant 0 : index
    %209 = vector.load %arg2[%c2_88, %c0_89, %c0_90] : memref<6x8x128xf32, #tpu.memory_space<vmem>>, vector<1x8x128xf32>
    %210 = vector.shape_cast %209 : vector<1x8x128xf32> to vector<8x128xf32>
    %211 = vector.broadcast %208 : f32 to vector<8x128xf32>
    %212 = arith.mulf %211, %210 : vector<8x128xf32>
    %cst_91 = arith.constant 1.000000e+00 : f32
    %213 = arith.subf %cst_91, %208 : f32
    %214 = vector.broadcast %213 : f32 to vector<8x128xf32>
    %215 = arith.mulf %214, %201 : vector<8x128xf32>
    %216 = arith.addf %212, %215 : vector<8x128xf32>
    %217 = arith.truncf %216 : vector<8x128xf32> to vector<8x128xbf16>
    %cst_92 = arith.constant dense<0.000000e+00> : vector<8x128xf32>
    %218 = tpu.matmul %217, %0, %cst_92 {dimension_numbers = #tpu.dot_dimension_numbers<[1], [0], [0], [1], [0, 0, 1, 1], [], []>} : vector<8x128xbf16>, vector<128x128xbf16>, vector<8x128xf32> -> vector<8x128xf32>
    %219 = vector.broadcast %1 : vector<1x128xf32> to vector<8x128xf32>
    %220 = arith.addf %218, %219 : vector<8x128xf32>
    %cst_93 = arith.constant 0.000000e+00 : f32
    %221 = vector.broadcast %cst_93 : f32 to vector<8x128xf32>
    %222 = arith.maximumf %220, %221 : vector<8x128xf32>
    %223 = tpu.concatenate %222, %165 in 1 : vector<8x128xf32>, vector<8x128xf32> -> vector<8x256xf32>
    %224 = arith.truncf %223 : vector<8x256xf32> to vector<8x256xbf16>
    %cst_94 = arith.constant dense<0.000000e+00> : vector<8x512xf32>
    %225 = tpu.matmul %224, %3, %cst_94 {dimension_numbers = #tpu.dot_dimension_numbers<[1], [0], [0], [1], [0, 0, 1, 1], [], []>} : vector<8x256xbf16>, vector<256x512xbf16>, vector<8x512xf32> -> vector<8x512xf32>
    %226 = vector.broadcast %7 : vector<1x512xf32> to vector<8x512xf32>
    %227 = arith.addf %225, %226 : vector<8x512xf32>
    %228 = vector.extract_strided_slice %227 {offsets = [0, 0], sizes = [8, 128], strides = [1, 1]} : vector<8x512xf32> to vector<8x128xf32>
    %cst_95 = arith.constant 5.000000e-01 : f32
    %229 = vector.broadcast %cst_95 : f32 to vector<8x128xf32>
    %230 = arith.mulf %229, %228 : vector<8x128xf32>
    %231 = math.tanh %230 : vector<8x128xf32>
    %cst_96 = arith.constant 5.000000e-01 : f32
    %232 = vector.broadcast %cst_96 : f32 to vector<8x128xf32>
    %233 = arith.mulf %232, %231 : vector<8x128xf32>
    %cst_97 = arith.constant 5.000000e-01 : f32
    %234 = vector.broadcast %cst_97 : f32 to vector<8x128xf32>
    %235 = arith.addf %233, %234 : vector<8x128xf32>
    %236 = vector.extract_strided_slice %227 {offsets = [0, 128], sizes = [8, 128], strides = [1, 1]} : vector<8x512xf32> to vector<8x128xf32>
    %cst_98 = arith.constant 5.000000e-01 : f32
    %237 = vector.broadcast %cst_98 : f32 to vector<8x128xf32>
    %238 = arith.mulf %237, %236 : vector<8x128xf32>
    %239 = math.tanh %238 : vector<8x128xf32>
    %cst_99 = arith.constant 5.000000e-01 : f32
    %240 = vector.broadcast %cst_99 : f32 to vector<8x128xf32>
    %241 = arith.mulf %240, %239 : vector<8x128xf32>
    %cst_100 = arith.constant 5.000000e-01 : f32
    %242 = vector.broadcast %cst_100 : f32 to vector<8x128xf32>
    %243 = arith.addf %241, %242 : vector<8x128xf32>
    %244 = vector.extract_strided_slice %227 {offsets = [0, 256], sizes = [8, 128], strides = [1, 1]} : vector<8x512xf32> to vector<8x128xf32>
    %245 = math.tanh %244 : vector<8x128xf32>
    %246 = vector.extract_strided_slice %227 {offsets = [0, 384], sizes = [8, 128], strides = [1, 1]} : vector<8x512xf32> to vector<8x128xf32>
    %cst_101 = arith.constant 5.000000e-01 : f32
    %247 = vector.broadcast %cst_101 : f32 to vector<8x128xf32>
    %248 = arith.mulf %247, %246 : vector<8x128xf32>
    %249 = math.tanh %248 : vector<8x128xf32>
    %cst_102 = arith.constant 5.000000e-01 : f32
    %250 = vector.broadcast %cst_102 : f32 to vector<8x128xf32>
    %251 = arith.mulf %250, %249 : vector<8x128xf32>
    %cst_103 = arith.constant 5.000000e-01 : f32
    %252 = vector.broadcast %cst_103 : f32 to vector<8x128xf32>
    %253 = arith.addf %251, %252 : vector<8x128xf32>
    %254 = arith.mulf %243, %163 : vector<8x128xf32>
    %255 = arith.mulf %235, %245 : vector<8x128xf32>
    %256 = arith.addf %254, %255 : vector<8x128xf32>
    %257 = math.tanh %256 : vector<8x128xf32>
    %258 = arith.mulf %253, %257 : vector<8x128xf32>
    %259 = tpu.concatenate %258, %201 in 1 : vector<8x128xf32>, vector<8x128xf32> -> vector<8x256xf32>
    %260 = arith.truncf %259 : vector<8x256xf32> to vector<8x256xbf16>
    %cst_104 = arith.constant dense<0.000000e+00> : vector<8x512xf32>
    %261 = tpu.matmul %260, %5, %cst_104 {dimension_numbers = #tpu.dot_dimension_numbers<[1], [0], [0], [1], [0, 0, 1, 1], [], []>} : vector<8x256xbf16>, vector<256x512xbf16>, vector<8x512xf32> -> vector<8x512xf32>
    %262 = vector.broadcast %9 : vector<1x512xf32> to vector<8x512xf32>
    %263 = arith.addf %261, %262 : vector<8x512xf32>
    %264 = vector.extract_strided_slice %263 {offsets = [0, 0], sizes = [8, 128], strides = [1, 1]} : vector<8x512xf32> to vector<8x128xf32>
    %cst_105 = arith.constant 5.000000e-01 : f32
    %265 = vector.broadcast %cst_105 : f32 to vector<8x128xf32>
    %266 = arith.mulf %265, %264 : vector<8x128xf32>
    %267 = math.tanh %266 : vector<8x128xf32>
    %cst_106 = arith.constant 5.000000e-01 : f32
    %268 = vector.broadcast %cst_106 : f32 to vector<8x128xf32>
    %269 = arith.mulf %268, %267 : vector<8x128xf32>
    %cst_107 = arith.constant 5.000000e-01 : f32
    %270 = vector.broadcast %cst_107 : f32 to vector<8x128xf32>
    %271 = arith.addf %269, %270 : vector<8x128xf32>
    %272 = vector.extract_strided_slice %263 {offsets = [0, 128], sizes = [8, 128], strides = [1, 1]} : vector<8x512xf32> to vector<8x128xf32>
    %cst_108 = arith.constant 5.000000e-01 : f32
    %273 = vector.broadcast %cst_108 : f32 to vector<8x128xf32>
    %274 = arith.mulf %273, %272 : vector<8x128xf32>
    %275 = math.tanh %274 : vector<8x128xf32>
    %cst_109 = arith.constant 5.000000e-01 : f32
    %276 = vector.broadcast %cst_109 : f32 to vector<8x128xf32>
    %277 = arith.mulf %276, %275 : vector<8x128xf32>
    %cst_110 = arith.constant 5.000000e-01 : f32
    %278 = vector.broadcast %cst_110 : f32 to vector<8x128xf32>
    %279 = arith.addf %277, %278 : vector<8x128xf32>
    %280 = vector.extract_strided_slice %263 {offsets = [0, 256], sizes = [8, 128], strides = [1, 1]} : vector<8x512xf32> to vector<8x128xf32>
    %281 = math.tanh %280 : vector<8x128xf32>
    %282 = vector.extract_strided_slice %263 {offsets = [0, 384], sizes = [8, 128], strides = [1, 1]} : vector<8x512xf32> to vector<8x128xf32>
    %cst_111 = arith.constant 5.000000e-01 : f32
    %283 = vector.broadcast %cst_111 : f32 to vector<8x128xf32>
    %284 = arith.mulf %283, %282 : vector<8x128xf32>
    %285 = math.tanh %284 : vector<8x128xf32>
    %cst_112 = arith.constant 5.000000e-01 : f32
    %286 = vector.broadcast %cst_112 : f32 to vector<8x128xf32>
    %287 = arith.mulf %286, %285 : vector<8x128xf32>
    %cst_113 = arith.constant 5.000000e-01 : f32
    %288 = vector.broadcast %cst_113 : f32 to vector<8x128xf32>
    %289 = arith.addf %287, %288 : vector<8x128xf32>
    %290 = arith.mulf %279, %199 : vector<8x128xf32>
    %291 = arith.mulf %271, %281 : vector<8x128xf32>
    %292 = arith.addf %290, %291 : vector<8x128xf32>
    %293 = math.tanh %292 : vector<8x128xf32>
    %294 = arith.mulf %289, %293 : vector<8x128xf32>
    %c2_114 = arith.constant 2 : index
    %c0_115 = arith.constant 0 : index
    %c0_116 = arith.constant 0 : index
    %295 = vector.load %arg9[%c2_114, %c0_115, %c0_116] : memref<6x8x128xf32, #tpu.memory_space<vmem>>, vector<1x8x128xf32>
    %296 = vector.shape_cast %295 : vector<1x8x128xf32> to vector<8x128xf32>
    %297 = vector.shape_cast %294 : vector<8x128xf32> to vector<1x8x128xf32>
    tpu.vector_store %arg9[%c2_114, %c0_115, %c0_116], %297 {strides = array<i32>} : memref<6x8x128xf32, #tpu.memory_space<vmem>>, vector<1x8x128xf32>,
    %c3 = arith.constant 3 : index
    %298 = memref.load %arg1[%c3] : memref<6xi32, #tpu.memory_space<smem>>
    %c0_i32_117 = arith.constant 0 : i32
    %299 = arith.cmpi ne, %298, %c0_i32_117 : i32
    %300 = arith.extui %299 : i1 to i32
    %301 = arith.sitofp %300 : i32 to f32
    %c3_118 = arith.constant 3 : index
    %c0_119 = arith.constant 0 : index
    %c0_120 = arith.constant 0 : index
    %302 = vector.load %arg2[%c3_118, %c0_119, %c0_120] : memref<6x8x128xf32, #tpu.memory_space<vmem>>, vector<1x8x128xf32>
    %303 = vector.shape_cast %302 : vector<1x8x128xf32> to vector<8x128xf32>
    %304 = vector.broadcast %301 : f32 to vector<8x128xf32>
    %305 = arith.mulf %304, %303 : vector<8x128xf32>
    %cst_121 = arith.constant 1.000000e+00 : f32
    %306 = arith.subf %cst_121, %301 : f32
    %307 = vector.broadcast %306 : f32 to vector<8x128xf32>
    %308 = arith.mulf %307, %294 : vector<8x128xf32>
    %309 = arith.addf %305, %308 : vector<8x128xf32>
    %310 = arith.truncf %309 : vector<8x128xf32> to vector<8x128xbf16>
    %cst_122 = arith.constant dense<0.000000e+00> : vector<8x128xf32>
    %311 = tpu.matmul %310, %0, %cst_122 {dimension_numbers = #tpu.dot_dimension_numbers<[1], [0], [0], [1], [0, 0, 1, 1], [], []>} : vector<8x128xbf16>, vector<128x128xbf16>, vector<8x128xf32> -> vector<8x128xf32>
    %312 = vector.broadcast %1 : vector<1x128xf32> to vector<8x128xf32>
    %313 = arith.addf %311, %312 : vector<8x128xf32>
    %cst_123 = arith.constant 0.000000e+00 : f32
    %314 = vector.broadcast %cst_123 : f32 to vector<8x128xf32>
    %315 = arith.maximumf %313, %314 : vector<8x128xf32>
    %316 = tpu.concatenate %315, %258 in 1 : vector<8x128xf32>, vector<8x128xf32> -> vector<8x256xf32>
    %317 = arith.truncf %316 : vector<8x256xf32> to vector<8x256xbf16>
    %cst_124 = arith.constant dense<0.000000e+00> : vector<8x512xf32>
    %318 = tpu.matmul %317, %3, %cst_124 {dimension_numbers = #tpu.dot_dimension_numbers<[1], [0], [0], [1], [0, 0, 1, 1], [], []>} : vector<8x256xbf16>, vector<256x512xbf16>, vector<8x512xf32> -> vector<8x512xf32>
    %319 = vector.broadcast %7 : vector<1x512xf32> to vector<8x512xf32>
    %320 = arith.addf %318, %319 : vector<8x512xf32>
    %321 = vector.extract_strided_slice %320 {offsets = [0, 0], sizes = [8, 128], strides = [1, 1]} : vector<8x512xf32> to vector<8x128xf32>
    %cst_125 = arith.constant 5.000000e-01 : f32
    %322 = vector.broadcast %cst_125 : f32 to vector<8x128xf32>
    %323 = arith.mulf %322, %321 : vector<8x128xf32>
    %324 = math.tanh %323 : vector<8x128xf32>
    %cst_126 = arith.constant 5.000000e-01 : f32
    %325 = vector.broadcast %cst_126 : f32 to vector<8x128xf32>
    %326 = arith.mulf %325, %324 : vector<8x128xf32>
    %cst_127 = arith.constant 5.000000e-01 : f32
    %327 = vector.broadcast %cst_127 : f32 to vector<8x128xf32>
    %328 = arith.addf %326, %327 : vector<8x128xf32>
    %329 = vector.extract_strided_slice %320 {offsets = [0, 128], sizes = [8, 128], strides = [1, 1]} : vector<8x512xf32> to vector<8x128xf32>
    %cst_128 = arith.constant 5.000000e-01 : f32
    %330 = vector.broadcast %cst_128 : f32 to vector<8x128xf32>
    %331 = arith.mulf %330, %329 : vector<8x128xf32>
    %332 = math.tanh %331 : vector<8x128xf32>
    %cst_129 = arith.constant 5.000000e-01 : f32
    %333 = vector.broadcast %cst_129 : f32 to vector<8x128xf32>
    %334 = arith.mulf %333, %332 : vector<8x128xf32>
    %cst_130 = arith.constant 5.000000e-01 : f32
    %335 = vector.broadcast %cst_130 : f32 to vector<8x128xf32>
    %336 = arith.addf %334, %335 : vector<8x128xf32>
    %337 = vector.extract_strided_slice %320 {offsets = [0, 256], sizes = [8, 128], strides = [1, 1]} : vector<8x512xf32> to vector<8x128xf32>
    %338 = math.tanh %337 : vector<8x128xf32>
    %339 = vector.extract_strided_slice %320 {offsets = [0, 384], sizes = [8, 128], strides = [1, 1]} : vector<8x512xf32> to vector<8x128xf32>
    %cst_131 = arith.constant 5.000000e-01 : f32
    %340 = vector.broadcast %cst_131 : f32 to vector<8x128xf32>
    %341 = arith.mulf %340, %339 : vector<8x128xf32>
    %342 = math.tanh %341 : vector<8x128xf32>
    %cst_132 = arith.constant 5.000000e-01 : f32
    %343 = vector.broadcast %cst_132 : f32 to vector<8x128xf32>
    %344 = arith.mulf %343, %342 : vector<8x128xf32>
    %cst_133 = arith.constant 5.000000e-01 : f32
    %345 = vector.broadcast %cst_133 : f32 to vector<8x128xf32>
    %346 = arith.addf %344, %345 : vector<8x128xf32>
    %347 = arith.mulf %336, %256 : vector<8x128xf32>
    %348 = arith.mulf %328, %338 : vector<8x128xf32>
    %349 = arith.addf %347, %348 : vector<8x128xf32>
    %350 = math.tanh %349 : vector<8x128xf32>
    %351 = arith.mulf %346, %350 : vector<8x128xf32>
    %352 = tpu.concatenate %351, %294 in 1 : vector<8x128xf32>, vector<8x128xf32> -> vector<8x256xf32>
    %353 = arith.truncf %352 : vector<8x256xf32> to vector<8x256xbf16>
    %cst_134 = arith.constant dense<0.000000e+00> : vector<8x512xf32>
    %354 = tpu.matmul %353, %5, %cst_134 {dimension_numbers = #tpu.dot_dimension_numbers<[1], [0], [0], [1], [0, 0, 1, 1], [], []>} : vector<8x256xbf16>, vector<256x512xbf16>, vector<8x512xf32> -> vector<8x512xf32>
    %355 = vector.broadcast %9 : vector<1x512xf32> to vector<8x512xf32>
    %356 = arith.addf %354, %355 : vector<8x512xf32>
    %357 = vector.extract_strided_slice %356 {offsets = [0, 0], sizes = [8, 128], strides = [1, 1]} : vector<8x512xf32> to vector<8x128xf32>
    %cst_135 = arith.constant 5.000000e-01 : f32
    %358 = vector.broadcast %cst_135 : f32 to vector<8x128xf32>
    %359 = arith.mulf %358, %357 : vector<8x128xf32>
    %360 = math.tanh %359 : vector<8x128xf32>
    %cst_136 = arith.constant 5.000000e-01 : f32
    %361 = vector.broadcast %cst_136 : f32 to vector<8x128xf32>
    %362 = arith.mulf %361, %360 : vector<8x128xf32>
    %cst_137 = arith.constant 5.000000e-01 : f32
    %363 = vector.broadcast %cst_137 : f32 to vector<8x128xf32>
    %364 = arith.addf %362, %363 : vector<8x128xf32>
    %365 = vector.extract_strided_slice %356 {offsets = [0, 128], sizes = [8, 128], strides = [1, 1]} : vector<8x512xf32> to vector<8x128xf32>
    %cst_138 = arith.constant 5.000000e-01 : f32
    %366 = vector.broadcast %cst_138 : f32 to vector<8x128xf32>
    %367 = arith.mulf %366, %365 : vector<8x128xf32>
    %368 = math.tanh %367 : vector<8x128xf32>
    %cst_139 = arith.constant 5.000000e-01 : f32
    %369 = vector.broadcast %cst_139 : f32 to vector<8x128xf32>
    %370 = arith.mulf %369, %368 : vector<8x128xf32>
    %cst_140 = arith.constant 5.000000e-01 : f32
    %371 = vector.broadcast %cst_140 : f32 to vector<8x128xf32>
    %372 = arith.addf %370, %371 : vector<8x128xf32>
    %373 = vector.extract_strided_slice %356 {offsets = [0, 256], sizes = [8, 128], strides = [1, 1]} : vector<8x512xf32> to vector<8x128xf32>
    %374 = math.tanh %373 : vector<8x128xf32>
    %375 = vector.extract_strided_slice %356 {offsets = [0, 384], sizes = [8, 128], strides = [1, 1]} : vector<8x512xf32> to vector<8x128xf32>
    %cst_141 = arith.constant 5.000000e-01 : f32
    %376 = vector.broadcast %cst_141 : f32 to vector<8x128xf32>
    %377 = arith.mulf %376, %375 : vector<8x128xf32>
    %378 = math.tanh %377 : vector<8x128xf32>
    %cst_142 = arith.constant 5.000000e-01 : f32
    %379 = vector.broadcast %cst_142 : f32 to vector<8x128xf32>
    %380 = arith.mulf %379, %378 : vector<8x128xf32>
    %cst_143 = arith.constant 5.000000e-01 : f32
    %381 = vector.broadcast %cst_143 : f32 to vector<8x128xf32>
    %382 = arith.addf %380, %381 : vector<8x128xf32>
    %383 = arith.mulf %372, %292 : vector<8x128xf32>
    %384 = arith.mulf %364, %374 : vector<8x128xf32>
    %385 = arith.addf %383, %384 : vector<8x128xf32>
    %386 = math.tanh %385 : vector<8x128xf32>
    %387 = arith.mulf %382, %386 : vector<8x128xf32>
    %c3_144 = arith.constant 3 : index
    %c0_145 = arith.constant 0 : index
    %c0_146 = arith.constant 0 : index
    %388 = vector.load %arg9[%c3_144, %c0_145, %c0_146] : memref<6x8x128xf32, #tpu.memory_space<vmem>>, vector<1x8x128xf32>
    %389 = vector.shape_cast %388 : vector<1x8x128xf32> to vector<8x128xf32>
    %390 = vector.shape_cast %387 : vector<8x128xf32> to vector<1x8x128xf32>
    tpu.vector_store %arg9[%c3_144, %c0_145, %c0_146], %390 {strides = array<i32>} : memref<6x8x128xf32, #tpu.memory_space<vmem>>, vector<1x8x128xf32>,
    %c4 = arith.constant 4 : index
    %391 = memref.load %arg1[%c4] : memref<6xi32, #tpu.memory_space<smem>>
    %c0_i32_147 = arith.constant 0 : i32
    %392 = arith.cmpi ne, %391, %c0_i32_147 : i32
    %393 = arith.extui %392 : i1 to i32
    %394 = arith.sitofp %393 : i32 to f32
    %c4_148 = arith.constant 4 : index
    %c0_149 = arith.constant 0 : index
    %c0_150 = arith.constant 0 : index
    %395 = vector.load %arg2[%c4_148, %c0_149, %c0_150] : memref<6x8x128xf32, #tpu.memory_space<vmem>>, vector<1x8x128xf32>
    %396 = vector.shape_cast %395 : vector<1x8x128xf32> to vector<8x128xf32>
    %397 = vector.broadcast %394 : f32 to vector<8x128xf32>
    %398 = arith.mulf %397, %396 : vector<8x128xf32>
    %cst_151 = arith.constant 1.000000e+00 : f32
    %399 = arith.subf %cst_151, %394 : f32
    %400 = vector.broadcast %399 : f32 to vector<8x128xf32>
    %401 = arith.mulf %400, %387 : vector<8x128xf32>
    %402 = arith.addf %398, %401 : vector<8x128xf32>
    %403 = arith.truncf %402 : vector<8x128xf32> to vector<8x128xbf16>
    %cst_152 = arith.constant dense<0.000000e+00> : vector<8x128xf32>
    %404 = tpu.matmul %403, %0, %cst_152 {dimension_numbers = #tpu.dot_dimension_numbers<[1], [0], [0], [1], [0, 0, 1, 1], [], []>} : vector<8x128xbf16>, vector<128x128xbf16>, vector<8x128xf32> -> vector<8x128xf32>
    %405 = vector.broadcast %1 : vector<1x128xf32> to vector<8x128xf32>
    %406 = arith.addf %404, %405 : vector<8x128xf32>
    %cst_153 = arith.constant 0.000000e+00 : f32
    %407 = vector.broadcast %cst_153 : f32 to vector<8x128xf32>
    %408 = arith.maximumf %406, %407 : vector<8x128xf32>
    %409 = tpu.concatenate %408, %351 in 1 : vector<8x128xf32>, vector<8x128xf32> -> vector<8x256xf32>
    %410 = arith.truncf %409 : vector<8x256xf32> to vector<8x256xbf16>
    %cst_154 = arith.constant dense<0.000000e+00> : vector<8x512xf32>
    %411 = tpu.matmul %410, %3, %cst_154 {dimension_numbers = #tpu.dot_dimension_numbers<[1], [0], [0], [1], [0, 0, 1, 1], [], []>} : vector<8x256xbf16>, vector<256x512xbf16>, vector<8x512xf32> -> vector<8x512xf32>
    %412 = vector.broadcast %7 : vector<1x512xf32> to vector<8x512xf32>
    %413 = arith.addf %411, %412 : vector<8x512xf32>
    %414 = vector.extract_strided_slice %413 {offsets = [0, 0], sizes = [8, 128], strides = [1, 1]} : vector<8x512xf32> to vector<8x128xf32>
    %cst_155 = arith.constant 5.000000e-01 : f32
    %415 = vector.broadcast %cst_155 : f32 to vector<8x128xf32>
    %416 = arith.mulf %415, %414 : vector<8x128xf32>
    %417 = math.tanh %416 : vector<8x128xf32>
    %cst_156 = arith.constant 5.000000e-01 : f32
    %418 = vector.broadcast %cst_156 : f32 to vector<8x128xf32>
    %419 = arith.mulf %418, %417 : vector<8x128xf32>
    %cst_157 = arith.constant 5.000000e-01 : f32
    %420 = vector.broadcast %cst_157 : f32 to vector<8x128xf32>
    %421 = arith.addf %419, %420 : vector<8x128xf32>
    %422 = vector.extract_strided_slice %413 {offsets = [0, 128], sizes = [8, 128], strides = [1, 1]} : vector<8x512xf32> to vector<8x128xf32>
    %cst_158 = arith.constant 5.000000e-01 : f32
    %423 = vector.broadcast %cst_158 : f32 to vector<8x128xf32>
    %424 = arith.mulf %423, %422 : vector<8x128xf32>
    %425 = math.tanh %424 : vector<8x128xf32>
    %cst_159 = arith.constant 5.000000e-01 : f32
    %426 = vector.broadcast %cst_159 : f32 to vector<8x128xf32>
    %427 = arith.mulf %426, %425 : vector<8x128xf32>
    %cst_160 = arith.constant 5.000000e-01 : f32
    %428 = vector.broadcast %cst_160 : f32 to vector<8x128xf32>
    %429 = arith.addf %427, %428 : vector<8x128xf32>
    %430 = vector.extract_strided_slice %413 {offsets = [0, 256], sizes = [8, 128], strides = [1, 1]} : vector<8x512xf32> to vector<8x128xf32>
    %431 = math.tanh %430 : vector<8x128xf32>
    %432 = vector.extract_strided_slice %413 {offsets = [0, 384], sizes = [8, 128], strides = [1, 1]} : vector<8x512xf32> to vector<8x128xf32>
    %cst_161 = arith.constant 5.000000e-01 : f32
    %433 = vector.broadcast %cst_161 : f32 to vector<8x128xf32>
    %434 = arith.mulf %433, %432 : vector<8x128xf32>
    %435 = math.tanh %434 : vector<8x128xf32>
    %cst_162 = arith.constant 5.000000e-01 : f32
    %436 = vector.broadcast %cst_162 : f32 to vector<8x128xf32>
    %437 = arith.mulf %436, %435 : vector<8x128xf32>
    %cst_163 = arith.constant 5.000000e-01 : f32
    %438 = vector.broadcast %cst_163 : f32 to vector<8x128xf32>
    %439 = arith.addf %437, %438 : vector<8x128xf32>
    %440 = arith.mulf %429, %349 : vector<8x128xf32>
    %441 = arith.mulf %421, %431 : vector<8x128xf32>
    %442 = arith.addf %440, %441 : vector<8x128xf32>
    %443 = math.tanh %442 : vector<8x128xf32>
    %444 = arith.mulf %439, %443 : vector<8x128xf32>
    %445 = tpu.concatenate %444, %387 in 1 : vector<8x128xf32>, vector<8x128xf32> -> vector<8x256xf32>
    %446 = arith.truncf %445 : vector<8x256xf32> to vector<8x256xbf16>
    %cst_164 = arith.constant dense<0.000000e+00> : vector<8x512xf32>
    %447 = tpu.matmul %446, %5, %cst_164 {dimension_numbers = #tpu.dot_dimension_numbers<[1], [0], [0], [1], [0, 0, 1, 1], [], []>} : vector<8x256xbf16>, vector<256x512xbf16>, vector<8x512xf32> -> vector<8x512xf32>
    %448 = vector.broadcast %9 : vector<1x512xf32> to vector<8x512xf32>
    %449 = arith.addf %447, %448 : vector<8x512xf32>
    %450 = vector.extract_strided_slice %449 {offsets = [0, 0], sizes = [8, 128], strides = [1, 1]} : vector<8x512xf32> to vector<8x128xf32>
    %cst_165 = arith.constant 5.000000e-01 : f32
    %451 = vector.broadcast %cst_165 : f32 to vector<8x128xf32>
    %452 = arith.mulf %451, %450 : vector<8x128xf32>
    %453 = math.tanh %452 : vector<8x128xf32>
    %cst_166 = arith.constant 5.000000e-01 : f32
    %454 = vector.broadcast %cst_166 : f32 to vector<8x128xf32>
    %455 = arith.mulf %454, %453 : vector<8x128xf32>
    %cst_167 = arith.constant 5.000000e-01 : f32
    %456 = vector.broadcast %cst_167 : f32 to vector<8x128xf32>
    %457 = arith.addf %455, %456 : vector<8x128xf32>
    %458 = vector.extract_strided_slice %449 {offsets = [0, 128], sizes = [8, 128], strides = [1, 1]} : vector<8x512xf32> to vector<8x128xf32>
    %cst_168 = arith.constant 5.000000e-01 : f32
    %459 = vector.broadcast %cst_168 : f32 to vector<8x128xf32>
    %460 = arith.mulf %459, %458 : vector<8x128xf32>
    %461 = math.tanh %460 : vector<8x128xf32>
    %cst_169 = arith.constant 5.000000e-01 : f32
    %462 = vector.broadcast %cst_169 : f32 to vector<8x128xf32>
    %463 = arith.mulf %462, %461 : vector<8x128xf32>
    %cst_170 = arith.constant 5.000000e-01 : f32
    %464 = vector.broadcast %cst_170 : f32 to vector<8x128xf32>
    %465 = arith.addf %463, %464 : vector<8x128xf32>
    %466 = vector.extract_strided_slice %449 {offsets = [0, 256], sizes = [8, 128], strides = [1, 1]} : vector<8x512xf32> to vector<8x128xf32>
    %467 = math.tanh %466 : vector<8x128xf32>
    %468 = vector.extract_strided_slice %449 {offsets = [0, 384], sizes = [8, 128], strides = [1, 1]} : vector<8x512xf32> to vector<8x128xf32>
    %cst_171 = arith.constant 5.000000e-01 : f32
    %469 = vector.broadcast %cst_171 : f32 to vector<8x128xf32>
    %470 = arith.mulf %469, %468 : vector<8x128xf32>
    %471 = math.tanh %470 : vector<8x128xf32>
    %cst_172 = arith.constant 5.000000e-01 : f32
    %472 = vector.broadcast %cst_172 : f32 to vector<8x128xf32>
    %473 = arith.mulf %472, %471 : vector<8x128xf32>
    %cst_173 = arith.constant 5.000000e-01 : f32
    %474 = vector.broadcast %cst_173 : f32 to vector<8x128xf32>
    %475 = arith.addf %473, %474 : vector<8x128xf32>
    %476 = arith.mulf %465, %385 : vector<8x128xf32>
    %477 = arith.mulf %457, %467 : vector<8x128xf32>
    %478 = arith.addf %476, %477 : vector<8x128xf32>
    %479 = math.tanh %478 : vector<8x128xf32>
    %480 = arith.mulf %475, %479 : vector<8x128xf32>
    %c4_174 = arith.constant 4 : index
    %c0_175 = arith.constant 0 : index
    %c0_176 = arith.constant 0 : index
    %481 = vector.load %arg9[%c4_174, %c0_175, %c0_176] : memref<6x8x128xf32, #tpu.memory_space<vmem>>, vector<1x8x128xf32>
    %482 = vector.shape_cast %481 : vector<1x8x128xf32> to vector<8x128xf32>
    %483 = vector.shape_cast %480 : vector<8x128xf32> to vector<1x8x128xf32>
    tpu.vector_store %arg9[%c4_174, %c0_175, %c0_176], %483 {strides = array<i32>} : memref<6x8x128xf32, #tpu.memory_space<vmem>>, vector<1x8x128xf32>,
    %c5 = arith.constant 5 : index
    %484 = memref.load %arg1[%c5] : memref<6xi32, #tpu.memory_space<smem>>
    %c0_i32_177 = arith.constant 0 : i32
    %485 = arith.cmpi ne, %484, %c0_i32_177 : i32
    %486 = arith.extui %485 : i1 to i32
    %487 = arith.sitofp %486 : i32 to f32
    %c5_178 = arith.constant 5 : index
    %c0_179 = arith.constant 0 : index
    %c0_180 = arith.constant 0 : index
    %488 = vector.load %arg2[%c5_178, %c0_179, %c0_180] : memref<6x8x128xf32, #tpu.memory_space<vmem>>, vector<1x8x128xf32>
    %489 = vector.shape_cast %488 : vector<1x8x128xf32> to vector<8x128xf32>
    %490 = vector.broadcast %487 : f32 to vector<8x128xf32>
    %491 = arith.mulf %490, %489 : vector<8x128xf32>
    %cst_181 = arith.constant 1.000000e+00 : f32
    %492 = arith.subf %cst_181, %487 : f32
    %493 = vector.broadcast %492 : f32 to vector<8x128xf32>
    %494 = arith.mulf %493, %480 : vector<8x128xf32>
    %495 = arith.addf %491, %494 : vector<8x128xf32>
    %496 = arith.truncf %495 : vector<8x128xf32> to vector<8x128xbf16>
    %cst_182 = arith.constant dense<0.000000e+00> : vector<8x128xf32>
    %497 = tpu.matmul %496, %0, %cst_182 {dimension_numbers = #tpu.dot_dimension_numbers<[1], [0], [0], [1], [0, 0, 1, 1], [], []>} : vector<8x128xbf16>, vector<128x128xbf16>, vector<8x128xf32> -> vector<8x128xf32>
    %498 = vector.broadcast %1 : vector<1x128xf32> to vector<8x128xf32>
    %499 = arith.addf %497, %498 : vector<8x128xf32>
    %cst_183 = arith.constant 0.000000e+00 : f32
    %500 = vector.broadcast %cst_183 : f32 to vector<8x128xf32>
    %501 = arith.maximumf %499, %500 : vector<8x128xf32>
    %502 = tpu.concatenate %501, %444 in 1 : vector<8x128xf32>, vector<8x128xf32> -> vector<8x256xf32>
    %503 = arith.truncf %502 : vector<8x256xf32> to vector<8x256xbf16>
    %cst_184 = arith.constant dense<0.000000e+00> : vector<8x512xf32>
    %504 = tpu.matmul %503, %3, %cst_184 {dimension_numbers = #tpu.dot_dimension_numbers<[1], [0], [0], [1], [0, 0, 1, 1], [], []>} : vector<8x256xbf16>, vector<256x512xbf16>, vector<8x512xf32> -> vector<8x512xf32>
    %505 = vector.broadcast %7 : vector<1x512xf32> to vector<8x512xf32>
    %506 = arith.addf %504, %505 : vector<8x512xf32>
    %507 = vector.extract_strided_slice %506 {offsets = [0, 0], sizes = [8, 128], strides = [1, 1]} : vector<8x512xf32> to vector<8x128xf32>
    %cst_185 = arith.constant 5.000000e-01 : f32
    %508 = vector.broadcast %cst_185 : f32 to vector<8x128xf32>
    %509 = arith.mulf %508, %507 : vector<8x128xf32>
    %510 = math.tanh %509 : vector<8x128xf32>
    %cst_186 = arith.constant 5.000000e-01 : f32
    %511 = vector.broadcast %cst_186 : f32 to vector<8x128xf32>
    %512 = arith.mulf %511, %510 : vector<8x128xf32>
    %cst_187 = arith.constant 5.000000e-01 : f32
    %513 = vector.broadcast %cst_187 : f32 to vector<8x128xf32>
    %514 = arith.addf %512, %513 : vector<8x128xf32>
    %515 = vector.extract_strided_slice %506 {offsets = [0, 128], sizes = [8, 128], strides = [1, 1]} : vector<8x512xf32> to vector<8x128xf32>
    %cst_188 = arith.constant 5.000000e-01 : f32
    %516 = vector.broadcast %cst_188 : f32 to vector<8x128xf32>
    %517 = arith.mulf %516, %515 : vector<8x128xf32>
    %518 = math.tanh %517 : vector<8x128xf32>
    %cst_189 = arith.constant 5.000000e-01 : f32
    %519 = vector.broadcast %cst_189 : f32 to vector<8x128xf32>
    %520 = arith.mulf %519, %518 : vector<8x128xf32>
    %cst_190 = arith.constant 5.000000e-01 : f32
    %521 = vector.broadcast %cst_190 : f32 to vector<8x128xf32>
    %522 = arith.addf %520, %521 : vector<8x128xf32>
    %523 = vector.extract_strided_slice %506 {offsets = [0, 256], sizes = [8, 128], strides = [1, 1]} : vector<8x512xf32> to vector<8x128xf32>
    %524 = math.tanh %523 : vector<8x128xf32>
    %525 = vector.extract_strided_slice %506 {offsets = [0, 384], sizes = [8, 128], strides = [1, 1]} : vector<8x512xf32> to vector<8x128xf32>
    %cst_191 = arith.constant 5.000000e-01 : f32
    %526 = vector.broadcast %cst_191 : f32 to vector<8x128xf32>
    %527 = arith.mulf %526, %525 : vector<8x128xf32>
    %528 = math.tanh %527 : vector<8x128xf32>
    %cst_192 = arith.constant 5.000000e-01 : f32
    %529 = vector.broadcast %cst_192 : f32 to vector<8x128xf32>
    %530 = arith.mulf %529, %528 : vector<8x128xf32>
    %cst_193 = arith.constant 5.000000e-01 : f32
    %531 = vector.broadcast %cst_193 : f32 to vector<8x128xf32>
    %532 = arith.addf %530, %531 : vector<8x128xf32>
    %533 = arith.mulf %522, %442 : vector<8x128xf32>
    %534 = arith.mulf %514, %524 : vector<8x128xf32>
    %535 = arith.addf %533, %534 : vector<8x128xf32>
    %536 = math.tanh %535 : vector<8x128xf32>
    %537 = arith.mulf %532, %536 : vector<8x128xf32>
    %538 = tpu.concatenate %537, %480 in 1 : vector<8x128xf32>, vector<8x128xf32> -> vector<8x256xf32>
    %539 = arith.truncf %538 : vector<8x256xf32> to vector<8x256xbf16>
    %cst_194 = arith.constant dense<0.000000e+00> : vector<8x512xf32>
    %540 = tpu.matmul %539, %5, %cst_194 {dimension_numbers = #tpu.dot_dimension_numbers<[1], [0], [0], [1], [0, 0, 1, 1], [], []>} : vector<8x256xbf16>, vector<256x512xbf16>, vector<8x512xf32> -> vector<8x512xf32>
    %541 = vector.broadcast %9 : vector<1x512xf32> to vector<8x512xf32>
    %542 = arith.addf %540, %541 : vector<8x512xf32>
    %543 = vector.extract_strided_slice %542 {offsets = [0, 0], sizes = [8, 128], strides = [1, 1]} : vector<8x512xf32> to vector<8x128xf32>
    %cst_195 = arith.constant 5.000000e-01 : f32
    %544 = vector.broadcast %cst_195 : f32 to vector<8x128xf32>
    %545 = arith.mulf %544, %543 : vector<8x128xf32>
    %546 = math.tanh %545 : vector<8x128xf32>
    %cst_196 = arith.constant 5.000000e-01 : f32
    %547 = vector.broadcast %cst_196 : f32 to vector<8x128xf32>
    %548 = arith.mulf %547, %546 : vector<8x128xf32>
    %cst_197 = arith.constant 5.000000e-01 : f32
    %549 = vector.broadcast %cst_197 : f32 to vector<8x128xf32>
    %550 = arith.addf %548, %549 : vector<8x128xf32>
    %551 = vector.extract_strided_slice %542 {offsets = [0, 128], sizes = [8, 128], strides = [1, 1]} : vector<8x512xf32> to vector<8x128xf32>
    %cst_198 = arith.constant 5.000000e-01 : f32
    %552 = vector.broadcast %cst_198 : f32 to vector<8x128xf32>
    %553 = arith.mulf %552, %551 : vector<8x128xf32>
    %554 = math.tanh %553 : vector<8x128xf32>
    %cst_199 = arith.constant 5.000000e-01 : f32
    %555 = vector.broadcast %cst_199 : f32 to vector<8x128xf32>
    %556 = arith.mulf %555, %554 : vector<8x128xf32>
    %cst_200 = arith.constant 5.000000e-01 : f32
    %557 = vector.broadcast %cst_200 : f32 to vector<8x128xf32>
    %558 = arith.addf %556, %557 : vector<8x128xf32>
    %559 = vector.extract_strided_slice %542 {offsets = [0, 256], sizes = [8, 128], strides = [1, 1]} : vector<8x512xf32> to vector<8x128xf32>
    %560 = math.tanh %559 : vector<8x128xf32>
    %561 = vector.extract_strided_slice %542 {offsets = [0, 384], sizes = [8, 128], strides = [1, 1]} : vector<8x512xf32> to vector<8x128xf32>
    %cst_201 = arith.constant 5.000000e-01 : f32
    %562 = vector.broadcast %cst_201 : f32 to vector<8x128xf32>
    %563 = arith.mulf %562, %561 : vector<8x128xf32>
    %564 = math.tanh %563 : vector<8x128xf32>
    %cst_202 = arith.constant 5.000000e-01 : f32
    %565 = vector.broadcast %cst_202 : f32 to vector<8x128xf32>
    %566 = arith.mulf %565, %564 : vector<8x128xf32>
    %cst_203 = arith.constant 5.000000e-01 : f32
    %567 = vector.broadcast %cst_203 : f32 to vector<8x128xf32>
    %568 = arith.addf %566, %567 : vector<8x128xf32>
    %569 = arith.mulf %558, %478 : vector<8x128xf32>
    %570 = arith.mulf %550, %560 : vector<8x128xf32>
    %571 = arith.addf %569, %570 : vector<8x128xf32>
    %572 = math.tanh %571 : vector<8x128xf32>
    %573 = arith.mulf %568, %572 : vector<8x128xf32>
    %c5_204 = arith.constant 5 : index
    %c0_205 = arith.constant 0 : index
    %c0_206 = arith.constant 0 : index
    %574 = vector.load %arg9[%c5_204, %c0_205, %c0_206] : memref<6x8x128xf32, #tpu.memory_space<vmem>>, vector<1x8x128xf32>
    %575 = vector.shape_cast %574 : vector<1x8x128xf32> to vector<8x128xf32>
    %576 = vector.shape_cast %573 : vector<8x128xf32> to vector<1x8x128xf32>
    tpu.vector_store %arg9[%c5_204, %c0_205, %c0_206], %576 {strides = array<i32>} : memref<6x8x128xf32, #tpu.memory_space<vmem>>, vector<1x8x128xf32>,
    return
  }
  func.func @transform_0(%arg0: i32, %arg1: memref<6xi32, #tpu.memory_space<smem>>) -> (i32, i32, i32) {
    %c0_i32 = arith.constant 0 : i32
    %c0_i32_0 = arith.constant 0 : i32
    %c0_i32_1 = arith.constant 0 : i32
    %c0_i32_2 = arith.constant 0 : i32
    return %c0_i32, %c0_i32_0, %c0_i32_1 : i32, i32, i32
  }
  func.func @transform_1(%arg0: i32, %arg1: memref<6xi32, #tpu.memory_space<smem>>) -> (i32, i32, i32) {
    %c0_i32 = arith.constant 0 : i32
    %c0_i32_0 = arith.constant 0 : i32
    %c0_i32_1 = arith.constant 0 : i32
    %c0_i32_2 = arith.constant 0 : i32
    return %c0_i32, %c0_i32_0, %c0_i32_1 : i32, i32, i32
  }
  func.func @transform_2(%arg0: i32, %arg1: memref<6xi32, #tpu.memory_space<smem>>) -> (i32, i32, i32) {
    %c0_i32 = arith.constant 0 : i32
    %c0_i32_0 = arith.constant 0 : i32
    %c0_i32_1 = arith.constant 0 : i32
    %c0_i32_2 = arith.constant 0 : i32
    return %c0_i32, %c0_i32_0, %c0_i32_1 : i32, i32, i32
  }
  func.func @transform_3(%arg0: i32, %arg1: memref<6xi32, #tpu.memory_space<smem>>) -> (i32, i32) {
    %c0_i32 = arith.constant 0 : i32
    %c0_i32_0 = arith.constant 0 : i32
    %c0_i32_1 = arith.constant 0 : i32
    return %c0_i32, %c0_i32_0 : i32, i32
  }
  func.func @transform_4(%arg0: i32, %arg1: memref<6xi32, #tpu.memory_space<smem>>) -> (i32, i32) {
    %c0_i32 = arith.constant 0 : i32
    %c0_i32_0 = arith.constant 0 : i32
    %c0_i32_1 = arith.constant 0 : i32
    return %c0_i32, %c0_i32_0 : i32, i32
  }
  func.func @transform_5(%arg0: i32, %arg1: memref<6xi32, #tpu.memory_space<smem>>) -> (i32, i32, i32) {
    %c0_i32 = arith.constant 0 : i32
    %c0_i32_0 = arith.constant 0 : i32
    %c0_i32_1 = arith.constant 0 : i32
    %c0_i32_2 = arith.constant 0 : i32
    return %c0_i32, %c0_i32_0, %c0_i32_1 : i32, i32, i32
  }
  func.func @transform_6(%arg0: i32, %arg1: memref<6xi32, #tpu.memory_space<smem>>) -> (i32, i32, i32) {
    %c0_i32 = arith.constant 0 : i32
    %c0_i32_0 = arith.constant 0 : i32
    %c0_i32_1 = arith.constant 0 : i32
    %c0_i32_2 = arith.constant 0 : i32
    return %c0_i32, %c0_i32_0, %c0_i32_1 : i32, i32, i32
  }
  func.func @transform_7(%arg0: i32, %arg1: memref<6xi32, #tpu.memory_space<smem>>) -> (i32, i32, i32) {
    %c0_i32 = arith.constant 0 : i32
    %c0_i32_0 = arith.constant 0 : i32
    %c0_i32_1 = arith.constant 0 : i32
    %c0_i32_2 = arith.constant 0 : i32
    return %c0_i32, %c0_i32_0, %c0_i32_1 : i32, i32, i32
  }
}

</mosaic_0001>

<llo_original>
// kernel: seq2seq_head_forward.4
$region0: #{seq2seq_head_forward.4}
  #allocation0 [shape = 'u32[]', space=smem, size = 0x4, offset = 0x4, fixed_abs, tag = 'smem constant byte address 0x4 - core index']
  #allocation1 [shape = 'u32[72,128]{1,0:T(1,128)}', space=vmem, size = 0x9000, scoped, tag = 'internal scratch']
  %s0 = inlined_call_operand.vmem [shape: f32[104,128], index: 0, kind: input, shape index: {}]
  %s1 = inlined_call_operand.vmem [shape: f32[1,128], index: 1, kind: input, shape index: {}]
  %s2 = inlined_call_operand.vmem [shape: f32[1,128], index: 2, kind: input, shape index: {}]
  %s3 = inlined_call_operand.vmem [shape: f32[104,128], index: 3, kind: output, shape index: {}]
  %s4 = sld [smem:[#allocation0]]
  $region22: #{seq2seq_head_forward.4} parent=0
    _
  %s6 = ssub.s32 1, %s4
  %s7 = scalar_select 0, %s6, %s4
  // Predicated region
  $region2: #{seq2seq_head_forward.4} parent=0 // pred_check
    _
  $region3: #{seq2seq_head_forward.4} parent=0 // pred_check_branch
    %9 = sbr.rel (0) target = $region5
  $region4: #{seq2seq_head_forward.4} parent=0 // pred_region
    _
  $region5: #{seq2seq_head_forward.4} parent=0 // pred_fallthru
    _
  // Predicated region
  $region6: #{seq2seq_head_forward.4} parent=0 // pred_check
    _
  $region7: #{seq2seq_head_forward.4} parent=0 // pred_check_branch
    %11 = sbr.rel (0) target = $region9
  $region8: #{seq2seq_head_forward.4} parent=0 // pred_region
    _
  $region9: #{seq2seq_head_forward.4} parent=0 // pred_fallthru
    _
  // Predicated region
  $region10: #{seq2seq_head_forward.4} parent=0 // pred_check
    _
  $region11: #{seq2seq_head_forward.4} parent=0 // pred_check_branch
    %13 = sbr.rel (0) target = $region13
  $region12: #{seq2seq_head_forward.4} parent=0 // pred_region
    _
  $region13: #{seq2seq_head_forward.4} parent=0 // pred_fallthru
    _
  %v14 = vld [vmem:[%s0] sm:$0xff]
  %v15 = vld [vmem:[%s0 + $0x8] sm:$0xff]
  %v16 = vld [vmem:[%s0 + $0x10] sm:$0xff]
  %v17 = vld [vmem:[%s0 + $0x18] sm:$0xff]
  %v18 = vld [vmem:[%s0 + $0x20] sm:$0xff]
  %v19 = vld [vmem:[%s0 + $0x28] sm:$0xff]
  %v20 = vld [vmem:[%s0 + $0x30] sm:$0xff]
  %v21 = vld [vmem:[%s0 + $0x38] sm:$0xff]
  %v22 = vld [vmem:[%s0 + $0x40] sm:$0xff]
  %v23 = vld [vmem:[%s0 + $0x48] sm:$0xff]
  %v24 = vld [vmem:[%s0 + $0x50] sm:$0xff]
  %v25 = vld [vmem:[%s0 + $0x58] sm:$0xff]
  %v26 = vld [vmem:[%s0 + $0x60] sm:$0xff]
  %27 = vadd.xlane.f32.xlu0 %v14
  %v28 = vpop.xlane.xlu0 %27
  %29 = vadd.xlane.f32.xlu0 %v15
  %v30 = vpop.xlane.xlu0 %29
  %31 = vadd.xlane.f32.xlu0 %v16
  %v32 = vpop.xlane.xlu0 %31
  %33 = vadd.xlane.f32.xlu0 %v17
  %v34 = vpop.xlane.xlu0 %33
  %35 = vadd.xlane.f32.xlu0 %v18
  %v36 = vpop.xlane.xlu0 %35
  %37 = vadd.xlane.f32.xlu0 %v19
  %v38 = vpop.xlane.xlu0 %37
  %39 = vadd.xlane.f32.xlu0 %v20
  %v40 = vpop.xlane.xlu0 %39
  %41 = vadd.xlane.f32.xlu0 %v21
  %v42 = vpop.xlane.xlu0 %41
  %43 = vadd.xlane.f32.xlu0 %v22
  %v44 = vpop.xlane.xlu0 %43
  %45 = vadd.xlane.f32.xlu0 %v23
  %v46 = vpop.xlane.xlu0 %45
  %47 = vadd.xlane.f32.xlu0 %v24
  %v48 = vpop.xlane.xlu0 %47
  %49 = vadd.xlane.f32.xlu0 %v25
  %v50 = vpop.xlane.xlu0 %49
  %51 = vadd.xlane.f32.xlu0 %v26
  %v52 = vpop.xlane.xlu0 %51
  %v53 = vrcp.pop 128.0
  %v54 = vmul.f32 128.0, %v53
  %v55 = vsub.f32 1.0, %v54
  %v56 = vmul.f32 %v53, %v55
  %v57 = vadd.f32 %v53, %v56
  %vm58 = vweird.f32 %v53
  %v59 = vsel %vm58, %v53, %v57
  %v60 = vmul.f32 %v28, %v59
  %v61 = vmul.f32 %v30, %v59
  %v62 = vmul.f32 %v32, %v59
  %v63 = vmul.f32 %v34, %v59
  %v64 = vmul.f32 %v36, %v59
  %v65 = vmul.f32 %v38, %v59
  %v66 = vmul.f32 %v40, %v59
  %v67 = vmul.f32 %v42, %v59
  %v68 = vmul.f32 %v44, %v59
  %v69 = vmul.f32 %v46, %v59
  %v70 = vmul.f32 %v48, %v59
  %v71 = vmul.f32 %v50, %v59
  %v72 = vmul.f32 %v52, %v59
  %v73 = vsub.f32 %v14, %v60
  %v74 = vsub.f32 %v15, %v61
  %v75 = vsub.f32 %v16, %v62
  %v76 = vsub.f32 %v17, %v63
  %v77 = vsub.f32 %v18, %v64
  %v78 = vsub.f32 %v19, %v65
  %v79 = vsub.f32 %v20, %v66
  %v80 = vsub.f32 %v21, %v67
  %v81 = vsub.f32 %v22, %v68
  %v82 = vsub.f32 %v23, %v69
  %v83 = vsub.f32 %v24, %v70
  %v84 = vsub.f32 %v25, %v71
  %v85 = vsub.f32 %v26, %v72
  %v86 = vmul.f32 %v73, %v73
  %v87 = vmul.f32 %v74, %v74
  %v88 = vmul.f32 %v75, %v75
  %v89 = vmul.f32 %v76, %v76
  %v90 = vmul.f32 %v77, %v77
  %v91 = vmul.f32 %v78, %v78
  %v92 = vmul.f32 %v79, %v79
  %v93 = vmul.f32 %v80, %v80
  %v94 = vmul.f32 %v81, %v81
  %v95 = vmul.f32 %v82, %v82
  %v96 = vmul.f32 %v83, %v83
  %v97 = vmul.f32 %v84, %v84
  %v98 = vmul.f32 %v85, %v85
  %99 = vadd.xlane.f32.xlu0 %v86
  %v100 = vpop.xlane.xlu0 %99
  %101 = vadd.xlane.f32.xlu0 %v87
  %v102 = vpop.xlane.xlu0 %101
  %103 = vadd.xlane.f32.xlu0 %v88
  %v104 = vpop.xlane.xlu0 %103
  %105 = vadd.xlane.f32.xlu0 %v89
  %v106 = vpop.xlane.xlu0 %105
  %107 = vadd.xlane.f32.xlu0 %v90
  %v108 = vpop.xlane.xlu0 %107
  %109 = vadd.xlane.f32.xlu0 %v91
  %v110 = vpop.xlane.xlu0 %109
  %111 = vadd.xlane.f32.xlu0 %v92
  %v112 = vpop.xlane.xlu0 %111
  %113 = vadd.xlane.f32.xlu0 %v93
  %v114 = vpop.xlane.xlu0 %113
  %115 = vadd.xlane.f32.xlu0 %v94
  %v116 = vpop.xlane.xlu0 %115
  %117 = vadd.xlane.f32.xlu0 %v95
  %v118 = vpop.xlane.xlu0 %117
  %119 = vadd.xlane.f32.xlu0 %v96
  %v120 = vpop.xlane.xlu0 %119
  %121 = vadd.xlane.f32.xlu0 %v97
  %v122 = vpop.xlane.xlu0 %121
  %123 = vadd.xlane.f32.xlu0 %v98
  %v124 = vpop.xlane.xlu0 %123
  %v125 = vmul.f32 %v100, %v59
  %v126 = vmul.f32 %v102, %v59
  %v127 = vmul.f32 %v104, %v59
  %v128 = vmul.f32 %v106, %v59
  %v129 = vmul.f32 %v108, %v59
  %v130 = vmul.f32 %v110, %v59
  %v131 = vmul.f32 %v112, %v59
  %v132 = vmul.f32 %v114, %v59
  %v133 = vmul.f32 %v116, %v59
  %v134 = vmul.f32 %v118, %v59
  %v135 = vmul.f32 %v120, %v59
  %v136 = vmul.f32 %v122, %v59
  %v137 = vmul.f32 %v124, %v59
  %v138 = vadd.f32 %v125, 1e-05
  %v139 = vadd.f32 %v126, 1e-05
  %v140 = vadd.f32 %v127, 1e-05
  %v141 = vadd.f32 %v128, 1e-05
  %v142 = vadd.f32 %v129, 1e-05
  %v143 = vadd.f32 %v130, 1e-05
  %v144 = vadd.f32 %v131, 1e-05
  %v145 = vadd.f32 %v132, 1e-05
  %v146 = vadd.f32 %v133, 1e-05
  %v147 = vadd.f32 %v134, 1e-05
  %v148 = vadd.f32 %v135, 1e-05
  %v149 = vadd.f32 %v136, 1e-05
  %v150 = vadd.f32 %v137, 1e-05
  %v151 = vrsqrt.pop %v138
  %v152 = vmul.f32 %v151, %v138
  %v153 = vmul.f32 %v152, %v151
  %v154 = vmul.f32 0.5, %v153
  %v155 = vsub.f32 1.5, %v154
  %v156 = vmul.f32 %v151, %v155
  %vm157 = vweird.f32 %v138
  %vm158 = vweird.f32 %v151
  %vm159 = vmor %vm157, %vm158
  %v160 = vsel %vm159, %v151, %v156
  %v161 = vrsqrt.pop %v139
  %v162 = vmul.f32 %v161, %v139
  %v163 = vmul.f32 %v162, %v161
  %v164 = vmul.f32 0.5, %v163
  %v165 = vsub.f32 1.5, %v164
  %v166 = vmul.f32 %v161, %v165
  %vm167 = vweird.f32 %v139
  %vm168 = vweird.f32 %v161
  %vm169 = vmor %vm167, %vm168
  %v170 = vsel %vm169, %v161, %v166
  %v171 = vrsqrt.pop %v140
  %v172 = vmul.f32 %v171, %v140
  %v173 = vmul.f32 %v172, %v171
  %v174 = vmul.f32 0.5, %v173
  %v175 = vsub.f32 1.5, %v174
  %v176 = vmul.f32 %v171, %v175
  %vm177 = vweird.f32 %v140
  %vm178 = vweird.f32 %v171
  %vm179 = vmor %vm177, %vm178
  %v180 = vsel %vm179, %v171, %v176
  %v181 = vrsqrt.pop %v141
  %v182 = vmul.f32 %v181, %v141
  %v183 = vmul.f32 %v182, %v181
  %v184 = vmul.f32 0.5, %v183
  %v185 = vsub.f32 1.5, %v184
  %v186 = vmul.f32 %v181, %v185
  %vm187 = vweird.f32 %v141
  %vm188 = vweird.f32 %v181
  %vm189 = vmor %vm187, %vm188
  %v190 = vsel %vm189, %v181, %v186
  %v191 = vrsqrt.pop %v142
  %v192 = vmul.f32 %v191, %v142
  %v193 = vmul.f32 %v192, %v191
  %v194 = vmul.f32 0.5, %v193
  %v195 = vsub.f32 1.5, %v194
  %v196 = vmul.f32 %v191, %v195
  %vm197 = vweird.f32 %v142
  %vm198 = vweird.f32 %v191
  %vm199 = vmor %vm197, %vm198
  %v200 = vsel %vm199, %v191, %v196
  %v201 = vrsqrt.pop %v143
  %v202 = vmul.f32 %v201, %v143
  %v203 = vmul.f32 %v202, %v201
  %v204 = vmul.f32 0.5, %v203
  %v205 = vsub.f32 1.5, %v204
  %v206 = vmul.f32 %v201, %v205
  %vm207 = vweird.f32 %v143
  %vm208 = vweird.f32 %v201
  %vm209 = vmor %vm207, %vm208
  %v210 = vsel %vm209, %v201, %v206
  %v211 = vrsqrt.pop %v144
  %v212 = vmul.f32 %v211, %v144
  %v213 = vmul.f32 %v212, %v211
  %v214 = vmul.f32 0.5, %v213
  %v215 = vsub.f32 1.5, %v214
  %v216 = vmul.f32 %v211, %v215
  %vm217 = vweird.f32 %v144
  %vm218 = vweird.f32 %v211
  %vm219 = vmor %vm217, %vm218
  %v220 = vsel %vm219, %v211, %v216
  %v221 = vrsqrt.pop %v145
  %v222 = vmul.f32 %v221, %v145
  %v223 = vmul.f32 %v222, %v221
  %v224 = vmul.f32 0.5, %v223
  %v225 = vsub.f32 1.5, %v224
  %v226 = vmul.f32 %v221, %v225
  %vm227 = vweird.f32 %v145
  %vm228 = vweird.f32 %v221
  %vm229 = vmor %vm227, %vm228
  %v230 = vsel %vm229, %v221, %v226
  %v231 = vrsqrt.pop %v146
  %v232 = vmul.f32 %v231, %v146
  %v233 = vmul.f32 %v232, %v231
  %v234 = vmul.f32 0.5, %v233
  %v235 = vsub.f32 1.5, %v234
  %v236 = vmul.f32 %v231, %v235
  %vm237 = vweird.f32 %v146
  %vm238 = vweird.f32 %v231
  %vm239 = vmor %vm237, %vm238
  %v240 = vsel %vm239, %v231, %v236
  %v241 = vrsqrt.pop %v147
  %v242 = vmul.f32 %v241, %v147
  %v243 = vmul.f32 %v242, %v241
  %v244 = vmul.f32 0.5, %v243
  %v245 = vsub.f32 1.5, %v244
  %v246 = vmul.f32 %v241, %v245
  %vm247 = vweird.f32 %v147
  %vm248 = vweird.f32 %v241
  %vm249 = vmor %vm247, %vm248
  %v250 = vsel %vm249, %v241, %v246
  %v251 = vrsqrt.pop %v148
  %v252 = vmul.f32 %v251, %v148
  %v253 = vmul.f32 %v252, %v251
  %v254 = vmul.f32 0.5, %v253
  %v255 = vsub.f32 1.5, %v254
  %v256 = vmul.f32 %v251, %v255
  %vm257 = vweird.f32 %v148
  %vm258 = vweird.f32 %v251
  %vm259 = vmor %vm257, %vm258
  %v260 = vsel %vm259, %v251, %v256
  %v261 = vrsqrt.pop %v149
  %v262 = vmul.f32 %v261, %v149
  %v263 = vmul.f32 %v262, %v261
  %v264 = vmul.f32 0.5, %v263
  %v265 = vsub.f32 1.5, %v264
  %v266 = vmul.f32 %v261, %v265
  %vm267 = vweird.f32 %v149
  %vm268 = vweird.f32 %v261
  %vm269 = vmor %vm267, %vm268
  %v270 = vsel %vm269, %v261, %v266
  %v271 = vrsqrt.pop %v150
  %v272 = vmul.f32 %v271, %v150
  %v273 = vmul.f32 %v272, %v271
  %v274 = vmul.f32 0.5, %v273
  %v275 = vsub.f32 1.5, %v274
  %v276 = vmul.f32 %v271, %v275
  %vm277 = vweird.f32 %v150
  %vm278 = vweird.f32 %v271
  %vm279 = vmor %vm277, %vm278
  %v280 = vsel %vm279, %v271, %v276
  %v281 = vmul.f32 %v73, %v160
  %v282 = vmul.f32 %v74, %v170
  %v283 = vmul.f32 %v75, %v180
  %v284 = vmul.f32 %v76, %v190
  %v285 = vmul.f32 %v77, %v200
  %v286 = vmul.f32 %v78, %v210
  %v287 = vmul.f32 %v79, %v220
  %v288 = vmul.f32 %v80, %v230
  %v289 = vmul.f32 %v81, %v240
  %v290 = vmul.f32 %v82, %v250
  %v291 = vmul.f32 %v83, %v260
  %v292 = vmul.f32 %v84, %v270
  %v293 = vmul.f32 %v85, %v280
  %v294 = vld [vmem:[%s1] sm:$0x1]
  %v296 = vperm.slane %v294, 0
  %v298 = vmul.f32 %v281, %v296
  %v299 = vmul.f32 %v282, %v296
  %v300 = vmul.f32 %v283, %v296
  %v301 = vmul.f32 %v284, %v296
  %v302 = vmul.f32 %v285, %v296
  %v303 = vmul.f32 %v286, %v296
  %v304 = vmul.f32 %v287, %v296
  %v305 = vmul.f32 %v288, %v296
  %v306 = vmul.f32 %v289, %v296
  %v307 = vmul.f32 %v290, %v296
  %v308 = vmul.f32 %v291, %v296
  %v309 = vmul.f32 %v292, %v296
  %v310 = vmul.f32 %v293, %v296
  %v311 = vld [vmem:[%s2] sm:$0x1]
  %v313 = vperm.slane %v311, 0
  %v315 = vadd.f32 %v298, %v313
  %v316 = vadd.f32 %v299, %v313
  %v317 = vadd.f32 %v300, %v313
  %v318 = vadd.f32 %v301, %v313
  %v319 = vadd.f32 %v302, %v313
  %v320 = vadd.f32 %v303, %v313
  %v321 = vadd.f32 %v304, %v313
  %v322 = vadd.f32 %v305, %v313
  %v323 = vadd.f32 %v306, %v313
  %v324 = vadd.f32 %v307, %v313
  %v325 = vadd.f32 %v308, %v313
  %v326 = vadd.f32 %v309, %v313
  %v327 = vadd.f32 %v310, %v313
  %328 = vst [vmem:[%s3] sm:$0xff] %v315
  %329 = vst [vmem:[%s3 + $0x8] sm:$0xff] %v316
  %330 = vst [vmem:[%s3 + $0x10] sm:$0xff] %v317
  %331 = vst [vmem:[%s3 + $0x18] sm:$0xff] %v318
  %332 = vst [vmem:[%s3 + $0x20] sm:$0xff] %v319
  %333 = vst [vmem:[%s3 + $0x28] sm:$0xff] %v320
  %334 = vst [vmem:[%s3 + $0x30] sm:$0xff] %v321
  %335 = vst [vmem:[%s3 + $0x38] sm:$0xff] %v322
  %336 = vst [vmem:[%s3 + $0x40] sm:$0xff] %v323
  %337 = vst [vmem:[%s3 + $0x48] sm:$0xff] %v324
  %338 = vst [vmem:[%s3 + $0x50] sm:$0xff] %v325
  %339 = vst [vmem:[%s3 + $0x58] sm:$0xff] %v326
  %340 = vst [vmem:[%s3 + $0x60] sm:$0xff] %v327
  // Predicated region
  $region14: #{seq2seq_head_forward.4} parent=0 // pred_check
    _
  $region15: #{seq2seq_head_forward.4} parent=0 // pred_check_branch
    %342 = sbr.rel (0) target = $region17
  $region16: #{seq2seq_head_forward.4} parent=0 // pred_region
    _
  $region17: #{seq2seq_head_forward.4} parent=0 // pred_fallthru
    _
  // Predicated region
  $region18: #{seq2seq_head_forward.4} parent=0 // pred_check
    _
  $region19: #{seq2seq_head_forward.4} parent=0 // pred_check_branch
    %344 = sbr.rel (0) target = $region21
  $region20: #{seq2seq_head_forward.4} parent=0 // pred_region
    _
  $region21: #{seq2seq_head_forward.4} parent=0 // pred_fallthru
    _

// kernel: seq2seq_head_forward.7
$region0: #{seq2seq_head_forward.7}
  #allocation0 [shape = 'u32[]', space=smem, size = 0x4, offset = 0x4, fixed_abs, tag = 'smem constant byte address 0x4 - core index']
  #allocation1 [shape = 'u32[72,128]{1,0:T(1,128)}', space=vmem, size = 0x9000, scoped, tag = 'internal scratch']
  %s0 = inlined_call_operand.vmem [shape: f32[48,128], index: 0, kind: input, shape index: {}]
  %s1 = inlined_call_operand.vmem [shape: bf16[128,128], index: 1, kind: input, shape index: {}]
  %s2 = inlined_call_operand.vmem [shape: f32[1,128], index: 2, kind: input, shape index: {}]
  %s3 = inlined_call_operand.vmem [shape: f32[48,128], index: 3, kind: output, shape index: {}]
  %s4 = sld [smem:[#allocation0]]
  $region22: #{seq2seq_head_forward.7} parent=0
    _
  %s6 = ssub.s32 1, %s4
  %s7 = scalar_select 0, %s6, %s4
  // Predicated region
  $region2: #{seq2seq_head_forward.7} parent=0 // pred_check
    _
  $region3: #{seq2seq_head_forward.7} parent=0 // pred_check_branch
    %9 = sbr.rel (0) target = $region5
  $region4: #{seq2seq_head_forward.7} parent=0 // pred_region
    _
  $region5: #{seq2seq_head_forward.7} parent=0 // pred_fallthru
    _
  // Predicated region
  $region6: #{seq2seq_head_forward.7} parent=0 // pred_check
    _
  $region7: #{seq2seq_head_forward.7} parent=0 // pred_check_branch
    %11 = sbr.rel (0) target = $region9
  $region8: #{seq2seq_head_forward.7} parent=0 // pred_region
    _
  $region9: #{seq2seq_head_forward.7} parent=0 // pred_fallthru
    _
  // Predicated region
  $region10: #{seq2seq_head_forward.7} parent=0 // pred_check
    _
  $region11: #{seq2seq_head_forward.7} parent=0 // pred_check_branch
    %13 = sbr.rel (0) target = $region13
  $region12: #{seq2seq_head_forward.7} parent=0 // pred_region
    _
  $region13: #{seq2seq_head_forward.7} parent=0 // pred_fallthru
    _
  %v14 = vld [vmem:[%s0] sm:$0xff]
  %v15 = vld [vmem:[%s0 + $0x8] sm:$0xff]
  %v16 = vld [vmem:[%s0 + $0x10] sm:$0xff]
  %v17 = vld [vmem:[%s0 + $0x18] sm:$0xff]
  %v18 = vld [vmem:[%s0 + $0x20] sm:$0xff]
  %v19 = vld [vmem:[%s0 + $0x28] sm:$0xff]
  %v20 = vpack.c.bf16 %v15, %v14
  %v21 = vpack.c.bf16 %v17, %v16
  %v22 = vpack.c.bf16 %v19, %v18
  %v23 = vld [vmem:[%s1] sm:$0xf]
  %v24 = vld [vmem:[%s1 + $0x4] sm:$0xf]
  %v25 = vld [vmem:[%s1 + $0x8] sm:$0xf]
  %v26 = vld [vmem:[%s1 + $0xc] sm:$0xf]
  %v27 = vld [vmem:[%s1 + $0x10] sm:$0xf]
  %v28 = vld [vmem:[%s1 + $0x14] sm:$0xf]
  %v29 = vld [vmem:[%s1 + $0x18] sm:$0xf]
  %v30 = vld [vmem:[%s1 + $0x1c] sm:$0xf]
  %v31 = vld [vmem:[%s1 + $0x20] sm:$0xf]
  %v32 = vld [vmem:[%s1 + $0x24] sm:$0xf]
  %v33 = vld [vmem:[%s1 + $0x28] sm:$0xf]
  %v34 = vld [vmem:[%s1 + $0x2c] sm:$0xf]
  %v35 = vld [vmem:[%s1 + $0x30] sm:$0xf]
  %v36 = vld [vmem:[%s1 + $0x34] sm:$0xf]
  %v37 = vld [vmem:[%s1 + $0x38] sm:$0xf]
  %v38 = vld [vmem:[%s1 + $0x3c] sm:$0xf]
  %v39 = vld [vmem:[%s2] sm:$0x1]
  %v41 = vperm.slane %v39, 0
  %v59 = vunpack.c.l.b16 %v23
  %v60 = vunpack.c.l.b16 %v24
  %v61 = vunpack.c.l.b16 %v25
  %v62 = vunpack.c.l.b16 %v26
  %v63 = vunpack.c.l.b16 %v27
  %v64 = vunpack.c.l.b16 %v28
  %v65 = vunpack.c.l.b16 %v29
  %v66 = vunpack.c.l.b16 %v30
  %v67 = vunpack.c.l.b16 %v31
  %v68 = vunpack.c.l.b16 %v32
  %v69 = vunpack.c.l.b16 %v33
  %v70 = vunpack.c.l.b16 %v34
  %v71 = vunpack.c.l.b16 %v35
  %v72 = vunpack.c.l.b16 %v36
  %v73 = vunpack.c.l.b16 %v37
  %v74 = vunpack.c.l.b16 %v38
  %v75 = vpack.c.b16 %v60, %v59
  %v76 = vpack.c.b16 %v62, %v61
  %v77 = vpack.c.b16 %v64, %v63
  %v78 = vpack.c.b16 %v66, %v65
  %v79 = vpack.c.b16 %v68, %v67
  %v80 = vpack.c.b16 %v70, %v69
  %v81 = vpack.c.b16 %v72, %v71
  %v82 = vpack.c.b16 %v74, %v73
  %91 = vmatpush.bf16.msra.mxu0 %v82
  %92 = vmatpush.bf16.msra.mxu0 %v81
  %93 = vmatpush.bf16.msra.mxu0 %v80
  %94 = vmatpush.bf16.msra.mxu0 %v79
  %95 = vmatpush.bf16.msra.mxu0 %v78
  %96 = vmatpush.bf16.msra.mxu0 %v77
  %97 = vmatpush.bf16.msra.mxu0 %v76
  %98 = vmatpush.bf16.msra.mxu0 %v75
  %99 = vmatmul.bf16.gmra.mxu0 %v20
  %v100 = vpop.f32.mrf.mxu0
  %v101 = vadd.f32 %v41, %v100
  %v102 = vpop.f32.mrf.mxu0
  %v103 = vadd.f32 %v41, %v102
  %104 = vmatmul.bf16.gmra.mxu0 %v21
  %v105 = vpop.f32.mrf.mxu0
  %v106 = vadd.f32 %v41, %v105
  %v107 = vpop.f32.mrf.mxu0
  %v108 = vadd.f32 %v41, %v107
  %109 = vmatmul.bf16.gmra.mxu0 %v22
  %v110 = vpop.f32.mrf.mxu0
  %v111 = vadd.f32 %v41, %v110
  %v112 = vpop.f32.mrf.mxu0
  %v113 = vadd.f32 %v41, %v112
  %114 = vdwg.mxu0
  %115 = vmax.xlane.f32.xlu0 %v101
  %v116 = vpop.xlane.xlu0 %115
  %117 = vmax.xlane.f32.xlu0 %v103
  %v118 = vpop.xlane.xlu0 %117
  %119 = vmax.xlane.f32.xlu0 %v106
  %v120 = vpop.xlane.xlu0 %119
  %121 = vmax.xlane.f32.xlu0 %v108
  %v122 = vpop.xlane.xlu0 %121
  %123 = vmax.xlane.f32.xlu0 %v111
  %v124 = vpop.xlane.xlu0 %123
  %125 = vmax.xlane.f32.xlu0 %v113
  %v126 = vpop.xlane.xlu0 %125
  %v127 = vsub.f32 %v101, %v116
  %v128 = vsub.f32 %v103, %v118
  %v129 = vsub.f32 %v106, %v120
  %v130 = vsub.f32 %v108, %v122
  %v131 = vsub.f32 %v111, %v124
  %v132 = vsub.f32 %v113, %v126
  %v133 = vmul.f32 %v127, 1.442695
  %v134 = vpow.pop %v133
  %v135 = vmul.f32 %v128, 1.442695
  %v136 = vpow.pop %v135
  %v137 = vmul.f32 %v129, 1.442695
  %v138 = vpow.pop %v137
  %v139 = vmul.f32 %v130, 1.442695
  %v140 = vpow.pop %v139
  %v141 = vmul.f32 %v131, 1.442695
  %v142 = vpow.pop %v141
  %v143 = vmul.f32 %v132, 1.442695
  %v144 = vpow.pop %v143
  %145 = vadd.xlane.f32.xlu0 %v134
  %v146 = vpop.xlane.xlu0 %145
  %147 = vadd.xlane.f32.xlu0 %v136
  %v148 = vpop.xlane.xlu0 %147
  %149 = vadd.xlane.f32.xlu0 %v138
  %v150 = vpop.xlane.xlu0 %149
  %151 = vadd.xlane.f32.xlu0 %v140
  %v152 = vpop.xlane.xlu0 %151
  %153 = vadd.xlane.f32.xlu0 %v142
  %v154 = vpop.xlane.xlu0 %153
  %155 = vadd.xlane.f32.xlu0 %v144
  %v156 = vpop.xlane.xlu0 %155
  %v157 = vlog2.pop %v146
  %v158 = vmul.f32 %v157, 0.6931472
  %v159 = vlog2.pop %v148
  %v160 = vmul.f32 %v159, 0.6931472
  %v161 = vlog2.pop %v150
  %v162 = vmul.f32 %v161, 0.6931472
  %v163 = vlog2.pop %v152
  %v164 = vmul.f32 %v163, 0.6931472
  %v165 = vlog2.pop %v154
  %v166 = vmul.f32 %v165, 0.6931472
  %v167 = vlog2.pop %v156
  %v168 = vmul.f32 %v167, 0.6931472
  %v169 = vadd.f32 %v158, %v116
  %v170 = vadd.f32 %v160, %v118
  %v171 = vadd.f32 %v162, %v120
  %v172 = vadd.f32 %v164, %v122
  %v173 = vadd.f32 %v166, %v124
  %v174 = vadd.f32 %v168, %v126
  %v175 = vsub.f32 %v101, %v169
  %v176 = vsub.f32 %v103, %v170
  %v177 = vsub.f32 %v106, %v171
  %v178 = vsub.f32 %v108, %v172
  %v179 = vsub.f32 %v111, %v173
  %v180 = vsub.f32 %v113, %v174
  %181 = vst [vmem:[%s3] sm:$0xff] %v175
  %182 = vst [vmem:[%s3 + $0x8] sm:$0xff] %v176
  %183 = vst [vmem:[%s3 + $0x10] sm:$0xff] %v177
  %184 = vst [vmem:[%s3 + $0x18] sm:$0xff] %v178
  %185 = vst [vmem:[%s3 + $0x20] sm:$0xff] %v179
  %186 = vst [vmem:[%s3 + $0x28] sm:$0xff] %v180
  // Predicated region
  $region14: #{seq2seq_head_forward.7} parent=0 // pred_check
    _
  $region15: #{seq2seq_head_forward.7} parent=0 // pred_check_branch
    %188 = sbr.rel (0) target = $region17
  $region16: #{seq2seq_head_forward.7} parent=0 // pred_region
    _
  $region17: #{seq2seq_head_forward.7} parent=0 // pred_fallthru
    _
  // Predicated region
  $region18: #{seq2seq_head_forward.7} parent=0 // pred_check
    _
  $region19: #{seq2seq_head_forward.7} parent=0 // pred_check_branch
    %190 = sbr.rel (0) target = $region21
  $region20: #{seq2seq_head_forward.7} parent=0 // pred_region
    _
  $region21: #{seq2seq_head_forward.7} parent=0 // pred_fallthru
    _

// kernel: seq2seq_head_forward.5
$region0: #{seq2seq_head_forward.5}
  #allocation0 [shape = 'u32[]', space=smem, size = 0x4, offset = 0x4, fixed_abs, tag = 'smem constant byte address 0x4 - core index']
  #allocation1 [shape = 'u32[72,128]{1,0:T(1,128)}', space=vmem, size = 0x9000, scoped, tag = 'internal scratch']
  #allocation2 [shape = 'f32[2,8,128]{2,1,0:T(8,128)}', space=vmem, size = 0x2000, scoped, tag = 'scratch operand']
  #allocation3 [shape = 'f32[2,8,128]{2,1,0:T(8,128)}', space=vmem, size = 0x2000, scoped, tag = 'scratch operand']
  %s0 = inlined_call_operand.vmem [shape: f32[8,8,128], index: 0, kind: input, shape index: {}]
  %s1 = inlined_call_operand.vmem [shape: bf16[128,512], index: 1, kind: input, shape index: {}]
  %s2 = inlined_call_operand.hbm [shape: bf16[128,512], index: 2, kind: input, shape index: {}]
  %s3 = inlined_call_operand.vmem [shape: f32[1,512], index: 3, kind: input, shape index: {}]
  %s4 = inlined_call_operand.vmem [shape: bf16[1,256,512], index: 4, kind: input, shape index: {}]
  %s5 = inlined_call_operand.vmem [shape: f32[1,1,512], index: 5, kind: input, shape index: {}]
  %s6 = inlined_call_operand.vmem [shape: f32[2,8,128], index: 6, kind: output, shape index: {0}]
  %s7 = inlined_call_operand.vmem [shape: f32[2,8,128], index: 7, kind: output, shape index: {1}]
  %8 = xla_tuple %s6, %s7
  %s9 = sld [smem:[#allocation0]]
  $region54: #{seq2seq_head_forward.5} parent=0
    _
  %s11 = ssub.s32 1, %s9
  %s12 = scalar_select 0, %s11, %s9
  $region1: #{seq2seq_head_forward.5} parent=0
    #allocation4 [shape = 'u8[131072]{0}', space=vmem, size = 0x20000, scoped, tag = 'input window, operand 2, single buffered']
    #allocation5 [shape = 's32[1]{0}', space=sflag, size = 0x4, scoped, tag = 'scoped memory for seq2seq_head_forward.5']
    %13 = vsyncpa [#allocation5], 0
    // Predicated region
    $region2: #{seq2seq_head_forward.5} parent=1 // pred_check
      _
    $region3: #{seq2seq_head_forward.5} parent=1 // pred_check_branch
      %15 = sbr.rel (0) target = $region5
    $region4: #{seq2seq_head_forward.5} parent=1 // pred_region
      _
    $region5: #{seq2seq_head_forward.5} parent=1 // pred_fallthru
      _
    // Predicated region
    $region6: #{seq2seq_head_forward.5} parent=1 // pred_check
      _
    $region7: #{seq2seq_head_forward.5} parent=1 // pred_check_branch
      %17 = sbr.rel (0) target = $region9
    $region8: #{seq2seq_head_forward.5} parent=1 // pred_region
      _
    $region9: #{seq2seq_head_forward.5} parent=1 // pred_fallthru
      _
    // Predicated region
    $region10: #{seq2seq_head_forward.5} parent=1 // pred_check
      _
    $region11: #{seq2seq_head_forward.5} parent=1 // pred_check_branch
      %19 = sbr.rel (0) target = $region13
    $region12: #{seq2seq_head_forward.5} parent=1 // pred_region
      %21 = vsyncadd [#allocation5], 0
      %s22 = sshll.u32 %s2, 4
      %s23 = int_to_ptr.hbm [resolvable:$true] %s22
      %s24 = sshll.u32 [#allocation4], 4
      %s25 = int_to_ptr.vmem [resolvable:$true] %s24
      %30 = dma.hbm_to_vmem [thread:$0]  %s23, 4096, %s25, [#allocation5], 256, 256, 16
    $region13: #{seq2seq_head_forward.5} parent=1 // pred_fallthru
      _
    // Predicated region
    $region14: #{seq2seq_head_forward.5} parent=1 // pred_check
      _
    $region15: #{seq2seq_head_forward.5} parent=1 // pred_check_branch
      %32 = sbr.rel (0) target = $region17
    $region16: #{seq2seq_head_forward.5} parent=1 // pred_region
      _
    $region17: #{seq2seq_head_forward.5} parent=1 // pred_fallthru
      _
    // Predicated region
    $region18: #{seq2seq_head_forward.5} parent=1 // pred_check
      _
    $region19: #{seq2seq_head_forward.5} parent=1 // pred_check_branch
      %34 = sbr.rel (0) target = $region21
    $region20: #{seq2seq_head_forward.5} parent=1 // pred_region
      _
    $region21: #{seq2seq_head_forward.5} parent=1 // pred_fallthru
      _
    // Predicated region
    $region22: #{seq2seq_head_forward.5} parent=1 // pred_check
      _
    $region23: #{seq2seq_head_forward.5} parent=1 // pred_check_branch
      %36 = sbr.rel (0) target = $region25
    $region24: #{seq2seq_head_forward.5} parent=1 // pred_region
      _
    $region25: #{seq2seq_head_forward.5} parent=1 // pred_fallthru
      _
    // Predicated region
    $region26: #{seq2seq_head_forward.5} parent=1 // pred_check
      _
    $region27: #{seq2seq_head_forward.5} parent=1 // pred_check_branch
      %38 = sbr.rel (0) target = $region29
    $region28: #{seq2seq_head_forward.5} parent=1 // pred_region
      %40 = dma.done [#allocation5], 4096
    $region29: #{seq2seq_head_forward.5} parent=1 // pred_fallthru
      _
    %p41 = scmp.eq.s32.totalorder 0, 0
    // Predicated region
    $region30: #{seq2seq_head_forward.5} parent=1 // pred_check
      %p42 = pneg %p41
    $region31: #{seq2seq_head_forward.5} parent=1 // pred_check_branch
      %44 = sbr.rel (%p42) target = $region33
    $region32: #{seq2seq_head_forward.5} parent=1 // pred_region
      %45 = vst [vmem:[#allocation2] sm:$0xff] 0.0
      %46 = vst [vmem:[#allocation2 + $0x8] sm:$0xff] 0.0
      %47 = vst [vmem:[#allocation3] sm:$0xff] 0.0
      %48 = vst [vmem:[#allocation3 + $0x8] sm:$0xff] 0.0
    $region33: #{seq2seq_head_forward.5} parent=1 // pred_fallthru
      _
    %v49 = vld [vmem:[%s0] sm:$0xff]
    %v50 = vld [vmem:[%s0 + $0x8] sm:$0xff]
    %v51 = vld [vmem:[%s0 + $0x10] sm:$0xff]
    %v52 = vld [vmem:[%s0 + $0x18] sm:$0xff]
    %v53 = vld [vmem:[%s0 + $0x20] sm:$0xff]
    %v54 = vld [vmem:[%s0 + $0x28] sm:$0xff]
    %v55 = vld [vmem:[%s0 + $0x30] sm:$0xff]
    %v56 = vld [vmem:[%s0 + $0x38] sm:$0xff]
    %v57 = vpack.c.bf16 %v50, %v49
    %v58 = vpack.c.bf16 %v52, %v51
    %v59 = vpack.c.bf16 %v54, %v53
    %v60 = vpack.c.bf16 %v56, %v55
    %v61 = vld [vmem:[%s1] sm:$0xff]
    %v62 = vld [vmem:[%s1 + $0x8] sm:$0xff]
    %v63 = vld [vmem:[%s1 + $0x10] sm:$0xff]
    %v64 = vld [vmem:[%s1 + $0x18] sm:$0xff]
    %v65 = vld [vmem:[%s1 + $0x20] sm:$0xff]
    %v66 = vld [vmem:[%s1 + $0x28] sm:$0xff]
    %v67 = vld [vmem:[%s1 + $0x30] sm:$0xff]
    %v68 = vld [vmem:[%s1 + $0x38] sm:$0xff]
    %v69 = vld [vmem:[%s1 + $0x40] sm:$0xff]
    %v70 = vld [vmem:[%s1 + $0x48] sm:$0xff]
    %v71 = vld [vmem:[%s1 + $0x50] sm:$0xff]
    %v72 = vld [vmem:[%s1 + $0x58] sm:$0xff]
    %v73 = vld [vmem:[%s1 + $0x60] sm:$0xff]
    %v74 = vld [vmem:[%s1 + $0x68] sm:$0xff]
    %v75 = vld [vmem:[%s1 + $0x70] sm:$0xff]
    %v76 = vld [vmem:[%s1 + $0x78] sm:$0xff]
    %v77 = vld [vmem:[%s1 + $0x80] sm:$0xff]
    %v78 = vld [vmem:[%s1 + $0x88] sm:$0xff]
    %v79 = vld [vmem:[%s1 + $0x90] sm:$0xff]
    %v80 = vld [vmem:[%s1 + $0x98] sm:$0xff]
    %v81 = vld [vmem:[%s1 + $0xa0] sm:$0xff]
    %v82 = vld [vmem:[%s1 + $0xa8] sm:$0xff]
    %v83 = vld [vmem:[%s1 + $0xb0] sm:$0xff]
    %v84 = vld [vmem:[%s1 + $0xb8] sm:$0xff]
    %v85 = vld [vmem:[%s1 + $0xc0] sm:$0xff]
    %v86 = vld [vmem:[%s1 + $0xc8] sm:$0xff]
    %v87 = vld [vmem:[%s1 + $0xd0] sm:$0xff]
    %v88 = vld [vmem:[%s1 + $0xd8] sm:$0xff]
    %v89 = vld [vmem:[%s1 + $0xe0] sm:$0xff]
    %v90 = vld [vmem:[%s1 + $0xe8] sm:$0xff]
    %v91 = vld [vmem:[%s1 + $0xf0] sm:$0xff]
    %v92 = vld [vmem:[%s1 + $0xf8] sm:$0xff]
    %v93 = vld [vmem:[%s3] sm:$0xf]
    %v95 = vperm.slane %v93, 0
    %v96 = vperm.slane %v93, 1
    %v97 = vperm.slane %v93, 2
    %v98 = vperm.slane %v93, 3
    %v135 = vunpack.c.l.b16 %v61
    %v136 = vunpack.c.h.b16 %v61
    %v137 = vunpack.c.l.b16 %v62
    %v138 = vunpack.c.h.b16 %v62
    %v139 = vunpack.c.l.b16 %v63
    %v140 = vunpack.c.h.b16 %v63
    %v141 = vunpack.c.l.b16 %v64
    %v142 = vunpack.c.h.b16 %v64
    %v143 = vunpack.c.l.b16 %v65
    %v144 = vunpack.c.h.b16 %v65
    %v145 = vunpack.c.l.b16 %v66
    %v146 = vunpack.c.h.b16 %v66
    %v147 = vunpack.c.l.b16 %v67
    %v148 = vunpack.c.h.b16 %v67
    %v149 = vunpack.c.l.b16 %v68
    %v150 = vunpack.c.h.b16 %v68
    %v151 = vunpack.c.l.b16 %v69
    %v152 = vunpack.c.h.b16 %v69
    %v153 = vunpack.c.l.b16 %v70
    %v154 = vunpack.c.h.b16 %v70
    %v155 = vunpack.c.l.b16 %v71
    %v156 = vunpack.c.h.b16 %v71
    %v157 = vunpack.c.l.b16 %v72
    %v158 = vunpack.c.h.b16 %v72
    %v159 = vunpack.c.l.b16 %v73
    %v160 = vunpack.c.h.b16 %v73
    %v161 = vunpack.c.l.b16 %v74
    %v162 = vunpack.c.h.b16 %v74
    %v163 = vunpack.c.l.b16 %v75
    %v164 = vunpack.c.h.b16 %v75
    %v165 = vunpack.c.l.b16 %v76
    %v166 = vunpack.c.h.b16 %v76
    %v167 = vunpack.c.l.b16 %v77
    %v168 = vunpack.c.h.b16 %v77
    %v169 = vunpack.c.l.b16 %v78
    %v170 = vunpack.c.h.b16 %v78
    %v171 = vunpack.c.l.b16 %v79
    %v172 = vunpack.c.h.b16 %v79
    %v173 = vunpack.c.l.b16 %v80
    %v174 = vunpack.c.h.b16 %v80
    %v175 = vunpack.c.l.b16 %v81
    %v176 = vunpack.c.h.b16 %v81
    %v177 = vunpack.c.l.b16 %v82
    %v178 = vunpack.c.h.b16 %v82
    %v179 = vunpack.c.l.b16 %v83
    %v180 = vunpack.c.h.b16 %v83
    %v181 = vunpack.c.l.b16 %v84
    %v182 = vunpack.c.h.b16 %v84
    %v183 = vunpack.c.l.b16 %v85
    %v184 = vunpack.c.h.b16 %v85
    %v185 = vunpack.c.l.b16 %v86
    %v186 = vunpack.c.h.b16 %v86
    %v187 = vunpack.c.l.b16 %v87
    %v188 = vunpack.c.h.b16 %v87
    %v189 = vunpack.c.l.b16 %v88
    %v190 = vunpack.c.h.b16 %v88
    %v191 = vunpack.c.l.b16 %v89
    %v192 = vunpack.c.h.b16 %v89
    %v193 = vunpack.c.l.b16 %v90
    %v194 = vunpack.c.h.b16 %v90
    %v195 = vunpack.c.l.b16 %v91
    %v196 = vunpack.c.h.b16 %v91
    %v197 = vunpack.c.l.b16 %v92
    %v198 = vunpack.c.h.b16 %v92
    %v199 = vpack.c.b16 %v139, %v135
    %v200 = vpack.c.b16 %v140, %v136
    %v201 = vpack.c.b16 %v141, %v137
    %v202 = vpack.c.b16 %v142, %v138
    %v203 = vpack.c.b16 %v147, %v143
    %v204 = vpack.c.b16 %v148, %v144
    %v205 = vpack.c.b16 %v149, %v145
    %v206 = vpack.c.b16 %v150, %v146
    %v207 = vpack.c.b16 %v155, %v151
    %v208 = vpack.c.b16 %v156, %v152
    %v209 = vpack.c.b16 %v157, %v153
    %v210 = vpack.c.b16 %v158, %v154
    %v211 = vpack.c.b16 %v163, %v159
    %v212 = vpack.c.b16 %v164, %v160
    %v213 = vpack.c.b16 %v165, %v161
    %v214 = vpack.c.b16 %v166, %v162
    %v215 = vpack.c.b16 %v171, %v167
    %v216 = vpack.c.b16 %v172, %v168
    %v217 = vpack.c.b16 %v173, %v169
    %v218 = vpack.c.b16 %v174, %v170
    %v219 = vpack.c.b16 %v179, %v175
    %v220 = vpack.c.b16 %v180, %v176
    %v221 = vpack.c.b16 %v181, %v177
    %v222 = vpack.c.b16 %v182, %v178
    %v223 = vpack.c.b16 %v187, %v183
    %v224 = vpack.c.b16 %v188, %v184
    %v225 = vpack.c.b16 %v189, %v185
    %v226 = vpack.c.b16 %v190, %v186
    %v227 = vpack.c.b16 %v195, %v191
    %v228 = vpack.c.b16 %v196, %v192
    %v229 = vpack.c.b16 %v197, %v193
    %v230 = vpack.c.b16 %v198, %v194
    %263 = vmatpush.bf16.msra.mxu0 %v227
    %264 = vmatpush.bf16.msra.mxu0 %v223
    %265 = vmatpush.bf16.msra.mxu0 %v219
    %266 = vmatpush.bf16.msra.mxu0 %v215
    %267 = vmatpush.bf16.msra.mxu0 %v211
    %268 = vmatpush.bf16.msra.mxu0 %v207
    %269 = vmatpush.bf16.msra.mxu0 %v203
    %270 = vmatpush.bf16.msra.mxu0 %v199
    %271 = vmatmul.bf16.gmra.mxu0 %v57
    %v272 = vpop.f32.mrf.mxu0
    %v273 = vadd.f32 %v95, %v272
    %v274 = vpop.f32.mrf.mxu0
    %v275 = vadd.f32 %v95, %v274
    %276 = vmatmul.bf16.gmra.mxu0 %v58
    %v277 = vpop.f32.mrf.mxu0
    %v278 = vadd.f32 %v95, %v277
    %v279 = vpop.f32.mrf.mxu0
    %v280 = vadd.f32 %v95, %v279
    %281 = vmatmul.bf16.gmra.mxu0 %v59
    %v282 = vpop.f32.mrf.mxu0
    %v283 = vadd.f32 %v95, %v282
    %v284 = vpop.f32.mrf.mxu0
    %v285 = vadd.f32 %v95, %v284
    %286 = vmatmul.bf16.gmra.mxu0 %v60
    %v287 = vpop.f32.mrf.mxu0
    %v288 = vadd.f32 %v95, %v287
    %v289 = vpop.f32.mrf.mxu0
    %v290 = vadd.f32 %v95, %v289
    %291 = vdwg.mxu0
    %292 = vmatpush.bf16.msra.mxu0 %v228
    %293 = vmatpush.bf16.msra.mxu0 %v224
    %294 = vmatpush.bf16.msra.mxu0 %v220
    %295 = vmatpush.bf16.msra.mxu0 %v216
    %296 = vmatpush.bf16.msra.mxu0 %v212
    %297 = vmatpush.bf16.msra.mxu0 %v208
    %298 = vmatpush.bf16.msra.mxu0 %v204
    %299 = vmatpush.bf16.msra.mxu0 %v200
    %300 = vmatmul.bf16.gmra.mxu0 %v57
    %v301 = vpop.f32.mrf.mxu0
    %v302 = vadd.f32 %v96, %v301
    %v303 = vpop.f32.mrf.mxu0
    %v304 = vadd.f32 %v96, %v303
    %305 = vmatmul.bf16.gmra.mxu0 %v58
    %v306 = vpop.f32.mrf.mxu0
    %v307 = vadd.f32 %v96, %v306
    %v308 = vpop.f32.mrf.mxu0
    %v309 = vadd.f32 %v96, %v308
    %310 = vmatmul.bf16.gmra.mxu0 %v59
    %v311 = vpop.f32.mrf.mxu0
    %v312 = vadd.f32 %v96, %v311
    %v313 = vpop.f32.mrf.mxu0
    %v314 = vadd.f32 %v96, %v313
    %315 = vmatmul.bf16.gmra.mxu0 %v60
    %v316 = vpop.f32.mrf.mxu0
    %v317 = vadd.f32 %v96, %v316
    %v318 = vpop.f32.mrf.mxu0
    %v319 = vadd.f32 %v96, %v318
    %320 = vdwg.mxu0
    %321 = vmatpush.bf16.msra.mxu0 %v229
    %322 = vmatpush.bf16.msra.mxu0 %v225
    %323 = vmatpush.bf16.msra.mxu0 %v221
    %324 = vmatpush.bf16.msra.mxu0 %v217
    %325 = vmatpush.bf16.msra.mxu0 %v213
    %326 = vmatpush.bf16.msra.mxu0 %v209
    %327 = vmatpush.bf16.msra.mxu0 %v205
    %328 = vmatpush.bf16.msra.mxu0 %v201
    %329 = vmatmul.bf16.gmra.mxu0 %v57
    %v330 = vpop.f32.mrf.mxu0
    %v331 = vadd.f32 %v97, %v330
    %v332 = vpop.f32.mrf.mxu0
    %v333 = vadd.f32 %v97, %v332
    %334 = vmatmul.bf16.gmra.mxu0 %v58
    %v335 = vpop.f32.mrf.mxu0
    %v336 = vadd.f32 %v97, %v335
    %v337 = vpop.f32.mrf.mxu0
    %v338 = vadd.f32 %v97, %v337
    %339 = vmatmul.bf16.gmra.mxu0 %v59
    %v340 = vpop.f32.mrf.mxu0
    %v341 = vadd.f32 %v97, %v340
    %v342 = vpop.f32.mrf.mxu0
    %v343 = vadd.f32 %v97, %v342
    %344 = vmatmul.bf16.gmra.mxu0 %v60
    %v345 = vpop.f32.mrf.mxu0
    %v346 = vadd.f32 %v97, %v345
    %v347 = vpop.f32.mrf.mxu0
    %v348 = vadd.f32 %v97, %v347
    %349 = vdwg.mxu0
    %350 = vmatpush.bf16.msra.mxu0 %v230
    %351 = vmatpush.bf16.msra.mxu0 %v226
    %352 = vmatpush.bf16.msra.mxu0 %v222
    %353 = vmatpush.bf16.msra.mxu0 %v218
    %354 = vmatpush.bf16.msra.mxu0 %v214
    %355 = vmatpush.bf16.msra.mxu0 %v210
    %356 = vmatpush.bf16.msra.mxu0 %v206
    %357 = vmatpush.bf16.msra.mxu0 %v202
    %358 = vmatmul.bf16.gmra.mxu0 %v57
    %v359 = vpop.f32.mrf.mxu0
    %v360 = vadd.f32 %v98, %v359
    %v361 = vpop.f32.mrf.mxu0
    %v362 = vadd.f32 %v98, %v361
    %363 = vmatmul.bf16.gmra.mxu0 %v58
    %v364 = vpop.f32.mrf.mxu0
    %v365 = vadd.f32 %v98, %v364
    %v366 = vpop.f32.mrf.mxu0
    %v367 = vadd.f32 %v98, %v366
    %368 = vmatmul.bf16.gmra.mxu0 %v59
    %v369 = vpop.f32.mrf.mxu0
    %v370 = vadd.f32 %v98, %v369
    %v371 = vpop.f32.mrf.mxu0
    %v372 = vadd.f32 %v98, %v371
    %373 = vmatmul.bf16.gmra.mxu0 %v60
    %v374 = vpop.f32.mrf.mxu0
    %v375 = vadd.f32 %v98, %v374
    %v376 = vpop.f32.mrf.mxu0
    %v377 = vadd.f32 %v98, %v376
    %378 = vdwg.mxu0
    %v379 = vld [vmem:[#allocation4] sm:$0xff]
    %v380 = vld [vmem:[#allocation4 + $0x8] sm:$0xff]
    %v381 = vld [vmem:[#allocation4 + $0x10] sm:$0xff]
    %v382 = vld [vmem:[#allocation4 + $0x18] sm:$0xff]
    %v383 = vld [vmem:[#allocation4 + $0x20] sm:$0xff]
    %v384 = vld [vmem:[#allocation4 + $0x28] sm:$0xff]
    %v385 = vld [vmem:[#allocation4 + $0x30] sm:$0xff]
    %v386 = vld [vmem:[#allocation4 + $0x38] sm:$0xff]
    %v387 = vld [vmem:[#allocation4 + $0x40] sm:$0xff]
    %v388 = vld [vmem:[#allocation4 + $0x48] sm:$0xff]
    %v389 = vld [vmem:[#allocation4 + $0x50] sm:$0xff]
    %v390 = vld [vmem:[#allocation4 + $0x58] sm:$0xff]
    %v391 = vld [vmem:[#allocation4 + $0x60] sm:$0xff]
    %v392 = vld [vmem:[#allocation4 + $0x68] sm:$0xff]
    %v393 = vld [vmem:[#allocation4 + $0x70] sm:$0xff]
    %v394 = vld [vmem:[#allocation4 + $0x78] sm:$0xff]
    %v395 = vld [vmem:[#allocation4 + $0x80] sm:$0xff]
    %v396 = vld [vmem:[#allocation4 + $0x88] sm:$0xff]
    %v397 = vld [vmem:[#allocation4 + $0x90] sm:$0xff]
    %v398 = vld [vmem:[#allocation4 + $0x98] sm:$0xff]
    %v399 = vld [vmem:[#allocation4 + $0xa0] sm:$0xff]
    %v400 = vld [vmem:[#allocation4 + $0xa8] sm:$0xff]
    %v401 = vld [vmem:[#allocation4 + $0xb0] sm:$0xff]
    %v402 = vld [vmem:[#allocation4 + $0xb8] sm:$0xff]
    %v403 = vld [vmem:[#allocation4 + $0xc0] sm:$0xff]
    %v404 = vld [vmem:[#allocation4 + $0xc8] sm:$0xff]
    %v405 = vld [vmem:[#allocation4 + $0xd0] sm:$0xff]
    %v406 = vld [vmem:[#allocation4 + $0xd8] sm:$0xff]
    %v407 = vld [vmem:[#allocation4 + $0xe0] sm:$0xff]
    %v408 = vld [vmem:[#allocation4 + $0xe8] sm:$0xff]
    %v409 = vld [vmem:[#allocation4 + $0xf0] sm:$0xff]
    %v410 = vld [vmem:[#allocation4 + $0xf8] sm:$0xff]
    %v411 = vld [vmem:[%s4] sm:$0xff]
    %v412 = vld [vmem:[%s4 + $0x8] sm:$0xff]
    %v413 = vld [vmem:[%s4 + $0x10] sm:$0xff]
    %v414 = vld [vmem:[%s4 + $0x18] sm:$0xff]
    %v415 = vld [vmem:[%s4 + $0x20] sm:$0xff]
    %v416 = vld [vmem:[%s4 + $0x28] sm:$0xff]
    %v417 = vld [vmem:[%s4 + $0x30] sm:$0xff]
    %v418 = vld [vmem:[%s4 + $0x38] sm:$0xff]
    %v419 = vld [vmem:[%s4 + $0x40] sm:$0xff]
    %v420 = vld [vmem:[%s4 + $0x48] sm:$0xff]
    %v421 = vld [vmem:[%s4 + $0x50] sm:$0xff]
    %v422 = vld [vmem:[%s4 + $0x58] sm:$0xff]
    %v423 = vld [vmem:[%s4 + $0x60] sm:$0xff]
    %v424 = vld [vmem:[%s4 + $0x68] sm:$0xff]
    %v425 = vld [vmem:[%s4 + $0x70] sm:$0xff]
    %v426 = vld [vmem:[%s4 + $0x78] sm:$0xff]
    %v427 = vld [vmem:[%s4 + $0x80] sm:$0xff]
    %v428 = vld [vmem:[%s4 + $0x88] sm:$0xff]
    %v429 = vld [vmem:[%s4 + $0x90] sm:$0xff]
    %v430 = vld [vmem:[%s4 + $0x98] sm:$0xff]
    %v431 = vld [vmem:[%s4 + $0xa0] sm:$0xff]
    %v432 = vld [vmem:[%s4 + $0xa8] sm:$0xff]
    %v433 = vld [vmem:[%s4 + $0xb0] sm:$0xff]
    %v434 = vld [vmem:[%s4 + $0xb8] sm:$0xff]
    %v435 = vld [vmem:[%s4 + $0xc0] sm:$0xff]
    %v436 = vld [vmem:[%s4 + $0xc8] sm:$0xff]
    %v437 = vld [vmem:[%s4 + $0xd0] sm:$0xff]
    %v438 = vld [vmem:[%s4 + $0xd8] sm:$0xff]
    %v439 = vld [vmem:[%s4 + $0xe0] sm:$0xff]
    %v440 = vld [vmem:[%s4 + $0xe8] sm:$0xff]
    %v441 = vld [vmem:[%s4 + $0xf0] sm:$0xff]
    %v442 = vld [vmem:[%s4 + $0xf8] sm:$0xff]
    %v443 = vld [vmem:[%s4 + $0x100] sm:$0xff]
    %v444 = vld [vmem:[%s4 + $0x108] sm:$0xff]
    %v445 = vld [vmem:[%s4 + $0x110] sm:$0xff]
    %v446 = vld [vmem:[%s4 + $0x118] sm:$0xff]
    %v447 = vld [vmem:[%s4 + $0x120] sm:$0xff]
    %v448 = vld [vmem:[%s4 + $0x128] sm:$0xff]
    %v449 = vld [vmem:[%s4 + $0x130] sm:$0xff]
    %v450 = vld [vmem:[%s4 + $0x138] sm:$0xff]
    %v451 = vld [vmem:[%s4 + $0x140] sm:$0xff]
    %v452 = vld [vmem:[%s4 + $0x148] sm:$0xff]
    %v453 = vld [vmem:[%s4 + $0x150] sm:$0xff]
    %v454 = vld [vmem:[%s4 + $0x158] sm:$0xff]
    %v455 = vld [vmem:[%s4 + $0x160] sm:$0xff]
    %v456 = vld [vmem:[%s4 + $0x168] sm:$0xff]
    %v457 = vld [vmem:[%s4 + $0x170] sm:$0xff]
    %v458 = vld [vmem:[%s4 + $0x178] sm:$0xff]
    %v459 = vld [vmem:[%s4 + $0x180] sm:$0xff]
    %v460 = vld [vmem:[%s4 + $0x188] sm:$0xff]
    %v461 = vld [vmem:[%s4 + $0x190] sm:$0xff]
    %v462 = vld [vmem:[%s4 + $0x198] sm:$0xff]
    %v463 = vld [vmem:[%s4 + $0x1a0] sm:$0xff]
    %v464 = vld [vmem:[%s4 + $0x1a8] sm:$0xff]
    %v465 = vld [vmem:[%s4 + $0x1b0] sm:$0xff]
    %v466 = vld [vmem:[%s4 + $0x1b8] sm:$0xff]
    %v467 = vld [vmem:[%s4 + $0x1c0] sm:$0xff]
    %v468 = vld [vmem:[%s4 + $0x1c8] sm:$0xff]
    %v469 = vld [vmem:[%s4 + $0x1d0] sm:$0xff]
    %v470 = vld [vmem:[%s4 + $0x1d8] sm:$0xff]
    %v471 = vld [vmem:[%s4 + $0x1e0] sm:$0xff]
    %v472 = vld [vmem:[%s4 + $0x1e8] sm:$0xff]
    %v473 = vld [vmem:[%s4 + $0x1f0] sm:$0xff]
    %v474 = vld [vmem:[%s4 + $0x1f8] sm:$0xff]
    %v475 = vld [vmem:[%s5] sm:$0xf]
    %v476 = vld [vmem:[#allocation2] sm:$0xff]
    %s477 = scalar_lea.vmem [#allocation2], 8
    %v478 = vld [vmem:[%s477] sm:$0xff]
    %v479 = vld [vmem:[#allocation3] sm:$0xff]
    %s480 = scalar_lea.vmem [#allocation3], 8
    %v481 = vld [vmem:[%s480] sm:$0xff]
    %v482 = vpack.c.bf16 %v476, %v476
    %v515 = vunpack.c.l.b16 %v379
    %v516 = vunpack.c.h.b16 %v379
    %v517 = vunpack.c.l.b16 %v380
    %v518 = vunpack.c.h.b16 %v380
    %v519 = vunpack.c.l.b16 %v381
    %v520 = vunpack.c.h.b16 %v381
    %v521 = vunpack.c.l.b16 %v382
    %v522 = vunpack.c.h.b16 %v382
    %v523 = vunpack.c.l.b16 %v383
    %v524 = vunpack.c.h.b16 %v383
    %v525 = vunpack.c.l.b16 %v384
    %v526 = vunpack.c.h.b16 %v384
    %v527 = vunpack.c.l.b16 %v385
    %v528 = vunpack.c.h.b16 %v385
    %v529 = vunpack.c.l.b16 %v386
    %v530 = vunpack.c.h.b16 %v386
    %v531 = vunpack.c.l.b16 %v387
    %v532 = vunpack.c.h.b16 %v387
    %v533 = vunpack.c.l.b16 %v388
    %v534 = vunpack.c.h.b16 %v388
    %v535 = vunpack.c.l.b16 %v389
    %v536 = vunpack.c.h.b16 %v389
    %v537 = vunpack.c.l.b16 %v390
    %v538 = vunpack.c.h.b16 %v390
    %v539 = vunpack.c.l.b16 %v391
    %v540 = vunpack.c.h.b16 %v391
    %v541 = vunpack.c.l.b16 %v392
    %v542 = vunpack.c.h.b16 %v392
    %v543 = vunpack.c.l.b16 %v393
    %v544 = vunpack.c.h.b16 %v393
    %v545 = vunpack.c.l.b16 %v394
    %v546 = vunpack.c.h.b16 %v394
    %v547 = vunpack.c.l.b16 %v395
    %v548 = vunpack.c.h.b16 %v395
    %v549 = vunpack.c.l.b16 %v396
    %v550 = vunpack.c.h.b16 %v396
    %v551 = vunpack.c.l.b16 %v397
    %v552 = vunpack.c.h.b16 %v397
    %v553 = vunpack.c.l.b16 %v398
    %v554 = vunpack.c.h.b16 %v398
    %v555 = vunpack.c.l.b16 %v399
    %v556 = vunpack.c.h.b16 %v399
    %v557 = vunpack.c.l.b16 %v400
    %v558 = vunpack.c.h.b16 %v400
    %v559 = vunpack.c.l.b16 %v401
    %v560 = vunpack.c.h.b16 %v401
    %v561 = vunpack.c.l.b16 %v402
    %v562 = vunpack.c.h.b16 %v402
    %v563 = vunpack.c.l.b16 %v403
    %v564 = vunpack.c.h.b16 %v403
    %v565 = vunpack.c.l.b16 %v404
    %v566 = vunpack.c.h.b16 %v404
    %v567 = vunpack.c.l.b16 %v405
    %v568 = vunpack.c.h.b16 %v405
    %v569 = vunpack.c.l.b16 %v406
    %v570 = vunpack.c.h.b16 %v406
    %v571 = vunpack.c.l.b16 %v407
    %v572 = vunpack.c.h.b16 %v407
    %v573 = vunpack.c.l.b16 %v408
    %v574 = vunpack.c.h.b16 %v408
    %v575 = vunpack.c.l.b16 %v409
    %v576 = vunpack.c.h.b16 %v409
    %v577 = vunpack.c.l.b16 %v410
    %v578 = vunpack.c.h.b16 %v410
    %v579 = vpack.c.b16 %v519, %v515
    %v580 = vpack.c.b16 %v520, %v516
    %v581 = vpack.c.b16 %v521, %v517
    %v582 = vpack.c.b16 %v522, %v518
    %v583 = vpack.c.b16 %v527, %v523
    %v584 = vpack.c.b16 %v528, %v524
    %v585 = vpack.c.b16 %v529, %v525
    %v586 = vpack.c.b16 %v530, %v526
    %v587 = vpack.c.b16 %v535, %v531
    %v588 = vpack.c.b16 %v536, %v532
    %v589 = vpack.c.b16 %v537, %v533
    %v590 = vpack.c.b16 %v538, %v534
    %v591 = vpack.c.b16 %v543, %v539
    %v592 = vpack.c.b16 %v544, %v540
    %v593 = vpack.c.b16 %v545, %v541
    %v594 = vpack.c.b16 %v546, %v542
    %v595 = vpack.c.b16 %v551, %v547
    %v596 = vpack.c.b16 %v552, %v548
    %v597 = vpack.c.b16 %v553, %v549
    %v598 = vpack.c.b16 %v554, %v550
    %v599 = vpack.c.b16 %v559, %v555
    %v600 = vpack.c.b16 %v560, %v556
    %v601 = vpack.c.b16 %v561, %v557
    %v602 = vpack.c.b16 %v562, %v558
    %v603 = vpack.c.b16 %v567, %v563
    %v604 = vpack.c.b16 %v568, %v564
    %v605 = vpack.c.b16 %v569, %v565
    %v606 = vpack.c.b16 %v570, %v566
    %v607 = vpack.c.b16 %v575, %v571
    %v608 = vpack.c.b16 %v576, %v572
    %v609 = vpack.c.b16 %v577, %v573
    %v610 = vpack.c.b16 %v578, %v574
    %643 = vmatpush.bf16.msra.mxu0 %v607
    %644 = vmatpush.bf16.msra.mxu0 %v603
    %645 = vmatpush.bf16.msra.mxu0 %v599
    %646 = vmatpush.bf16.msra.mxu0 %v595
    %647 = vmatpush.bf16.msra.mxu0 %v591
    %648 = vmatpush.bf16.msra.mxu0 %v587
    %649 = vmatpush.bf16.msra.mxu0 %v583
    %650 = vmatpush.bf16.msra.mxu0 %v579
    %651 = vmatmul.bf16.gmra.mxu0 %v482
    %v652 = vpop.f32.mrf.mxu0
    %v653 = vadd.f32 0.0, %v652
    %v654 = vpop.f32.mrf.mxu0
    %655 = vdwg.mxu0
    %656 = vmatpush.bf16.msra.mxu0 %v608
    %657 = vmatpush.bf16.msra.mxu0 %v604
    %658 = vmatpush.bf16.msra.mxu0 %v600
    %659 = vmatpush.bf16.msra.mxu0 %v596
    %660 = vmatpush.bf16.msra.mxu0 %v592
    %661 = vmatpush.bf16.msra.mxu0 %v588
    %662 = vmatpush.bf16.msra.mxu0 %v584
    %663 = vmatpush.bf16.msra.mxu0 %v580
    %664 = vmatmul.bf16.gmra.mxu0 %v482
    %v665 = vpop.f32.mrf.mxu0
    %v666 = vadd.f32 0.0, %v665
    %v667 = vpop.f32.mrf.mxu0
    %668 = vdwg.mxu0
    %669 = vmatpush.bf16.msra.mxu0 %v609
    %670 = vmatpush.bf16.msra.mxu0 %v605
    %671 = vmatpush.bf16.msra.mxu0 %v601
    %672 = vmatpush.bf16.msra.mxu0 %v597
    %673 = vmatpush.bf16.msra.mxu0 %v593
    %674 = vmatpush.bf16.msra.mxu0 %v589
    %675 = vmatpush.bf16.msra.mxu0 %v585
    %676 = vmatpush.bf16.msra.mxu0 %v581
    %677 = vmatmul.bf16.gmra.mxu0 %v482
    %v678 = vpop.f32.mrf.mxu0
    %v679 = vadd.f32 0.0, %v678
    %v680 = vpop.f32.mrf.mxu0
    %681 = vdwg.mxu0
    %682 = vmatpush.bf16.msra.mxu0 %v610
    %683 = vmatpush.bf16.msra.mxu0 %v606
    %684 = vmatpush.bf16.msra.mxu0 %v602
    %685 = vmatpush.bf16.msra.mxu0 %v598
    %686 = vmatpush.bf16.msra.mxu0 %v594
    %687 = vmatpush.bf16.msra.mxu0 %v590
    %688 = vmatpush.bf16.msra.mxu0 %v586
    %689 = vmatpush.bf16.msra.mxu0 %v582
    %690 = vmatmul.bf16.gmra.mxu0 %v482
    %v691 = vpop.f32.mrf.mxu0
    %v692 = vadd.f32 0.0, %v691
    %v693 = vpop.f32.mrf.mxu0
    %694 = vdwg.mxu0
    %v695 = vadd.f32 %v273, %v653
    %v696 = vadd.f32 %v302, %v666
    %v697 = vadd.f32 %v331, %v679
    %v698 = vadd.f32 %v360, %v692
    %v699 = vmul.f32 %v695, 0.5
    %v700 = vtanh.pop %v699
    %v701 = vmul.f32 %v700, 0.5
    %v702 = vadd.f32 %v701, 0.5
    %v703 = vmul.f32 %v696, 0.5
    %v704 = vtanh.pop %v703
    %v705 = vmul.f32 %v704, 0.5
    %v706 = vadd.f32 %v705, 0.5
    %v707 = vtanh.pop %v697
    %v708 = vmul.f32 %v698, 0.5
    %v709 = vtanh.pop %v708
    %v710 = vmul.f32 %v709, 0.5
    %v711 = vadd.f32 %v710, 0.5
    %v712 = vmul.f32 %v706, %v479
    %v713 = vmul.f32 %v702, %v707
    %v714 = vadd.f32 %v712, %v713
    %v715 = vtanh.pop %v714
    %v716 = vmul.f32 %v711, %v715
    %v717 = vpack.c.bf16 %v716, %v716
    %v718 = vpack.c.bf16 %v478, %v478
    %v720 = vperm.slane %v475, 0
    %v721 = vperm.slane %v475, 1
    %v722 = vperm.slane %v475, 2
    %v723 = vperm.slane %v475, 3
    %v792 = vunpack.c.l.b16 %v411
    %v793 = vunpack.c.h.b16 %v411
    %v794 = vunpack.c.l.b16 %v412
    %v795 = vunpack.c.h.b16 %v412
    %v796 = vunpack.c.l.b16 %v413
    %v797 = vunpack.c.h.b16 %v413
    %v798 = vunpack.c.l.b16 %v414
    %v799 = vunpack.c.h.b16 %v414
    %v800 = vunpack.c.l.b16 %v415
    %v801 = vunpack.c.h.b16 %v415
    %v802 = vunpack.c.l.b16 %v416
    %v803 = vunpack.c.h.b16 %v416
    %v804 = vunpack.c.l.b16 %v417
    %v805 = vunpack.c.h.b16 %v417
    %v806 = vunpack.c.l.b16 %v418
    %v807 = vunpack.c.h.b16 %v418
    %v808 = vunpack.c.l.b16 %v419
    %v809 = vunpack.c.h.b16 %v419
    %v810 = vunpack.c.l.b16 %v420
    %v811 = vunpack.c.h.b16 %v420
    %v812 = vunpack.c.l.b16 %v421
    %v813 = vunpack.c.h.b16 %v421
    %v814 = vunpack.c.l.b16 %v422
    %v815 = vunpack.c.h.b16 %v422
    %v816 = vunpack.c.l.b16 %v423
    %v817 = vunpack.c.h.b16 %v423
    %v818 = vunpack.c.l.b16 %v424
    %v819 = vunpack.c.h.b16 %v424
    %v820 = vunpack.c.l.b16 %v425
    %v821 = vunpack.c.h.b16 %v425
    %v822 = vunpack.c.l.b16 %v426
    %v823 = vunpack.c.h.b16 %v426
    %v824 = vunpack.c.l.b16 %v427
    %v825 = vunpack.c.h.b16 %v427
    %v826 = vunpack.c.l.b16 %v428
    %v827 = vunpack.c.h.b16 %v428
    %v828 = vunpack.c.l.b16 %v429
    %v829 = vunpack.c.h.b16 %v429
    %v830 = vunpack.c.l.b16 %v430
    %v831 = vunpack.c.h.b16 %v430
    %v832 = vunpack.c.l.b16 %v431
    %v833 = vunpack.c.h.b16 %v431
    %v834 = vunpack.c.l.b16 %v432
    %v835 = vunpack.c.h.b16 %v432
    %v836 = vunpack.c.l.b16 %v433
    %v837 = vunpack.c.h.b16 %v433
    %v838 = vunpack.c.l.b16 %v434
    %v839 = vunpack.c.h.b16 %v434
    %v840 = vunpack.c.l.b16 %v435
    %v841 = vunpack.c.h.b16 %v435
    %v842 = vunpack.c.l.b16 %v436
    %v843 = vunpack.c.h.b16 %v436
    %v844 = vunpack.c.l.b16 %v437
    %v845 = vunpack.c.h.b16 %v437
    %v846 = vunpack.c.l.b16 %v438
    %v847 = vunpack.c.h.b16 %v438
    %v848 = vunpack.c.l.b16 %v439
    %v849 = vunpack.c.h.b16 %v439
    %v850 = vunpack.c.l.b16 %v440
    %v851 = vunpack.c.h.b16 %v440
    %v852 = vunpack.c.l.b16 %v441
    %v853 = vunpack.c.h.b16 %v441
    %v854 = vunpack.c.l.b16 %v442
    %v855 = vunpack.c.h.b16 %v442
    %v856 = vunpack.c.l.b16 %v443
    %v857 = vunpack.c.h.b16 %v443
    %v858 = vunpack.c.l.b16 %v444
    %v859 = vunpack.c.h.b16 %v444
    %v860 = vunpack.c.l.b16 %v445
    %v861 = vunpack.c.h.b16 %v445
    %v862 = vunpack.c.l.b16 %v446
    %v863 = vunpack.c.h.b16 %v446
    %v864 = vunpack.c.l.b16 %v447
    %v865 = vunpack.c.h.b16 %v447
    %v866 = vunpack.c.l.b16 %v448
    %v867 = vunpack.c.h.b16 %v448
    %v868 = vunpack.c.l.b16 %v449
    %v869 = vunpack.c.h.b16 %v449
    %v870 = vunpack.c.l.b16 %v450
    %v871 = vunpack.c.h.b16 %v450
    %v872 = vunpack.c.l.b16 %v451
    %v873 = vunpack.c.h.b16 %v451
    %v874 = vunpack.c.l.b16 %v452
    %v875 = vunpack.c.h.b16 %v452
    %v876 = vunpack.c.l.b16 %v453
    %v877 = vunpack.c.h.b16 %v453
    %v878 = vunpack.c.l.b16 %v454
    %v879 = vunpack.c.h.b16 %v454
    %v880 = vunpack.c.l.b16 %v455
    %v881 = vunpack.c.h.b16 %v455
    %v882 = vunpack.c.l.b16 %v456
    %v883 = vunpack.c.h.b16 %v456
    %v884 = vunpack.c.l.b16 %v457
    %v885 = vunpack.c.h.b16 %v457
    %v886 = vunpack.c.l.b16 %v458
    %v887 = vunpack.c.h.b16 %v458
    %v888 = vunpack.c.l.b16 %v459
    %v889 = vunpack.c.h.b16 %v459
    %v890 = vunpack.c.l.b16 %v460
    %v891 = vunpack.c.h.b16 %v460
    %v892 = vunpack.c.l.b16 %v461
    %v893 = vunpack.c.h.b16 %v461
    %v894 = vunpack.c.l.b16 %v462
    %v895 = vunpack.c.h.b16 %v462
    %v896 = vunpack.c.l.b16 %v463
    %v897 = vunpack.c.h.b16 %v463
    %v898 = vunpack.c.l.b16 %v464
    %v899 = vunpack.c.h.b16 %v464
    %v900 = vunpack.c.l.b16 %v465
    %v901 = vunpack.c.h.b16 %v465
    %v902 = vunpack.c.l.b16 %v466
    %v903 = vunpack.c.h.b16 %v466
    %v904 = vunpack.c.l.b16 %v467
    %v905 = vunpack.c.h.b16 %v467
    %v906 = vunpack.c.l.b16 %v468
    %v907 = vunpack.c.h.b16 %v468
    %v908 = vunpack.c.l.b16 %v469
    %v909 = vunpack.c.h.b16 %v469
    %v910 = vunpack.c.l.b16 %v470
    %v911 = vunpack.c.h.b16 %v470
    %v912 = vunpack.c.l.b16 %v471
    %v913 = vunpack.c.h.b16 %v471
    %v914 = vunpack.c.l.b16 %v472
    %v915 = vunpack.c.h.b16 %v472
    %v916 = vunpack.c.l.b16 %v473
    %v917 = vunpack.c.h.b16 %v473
    %v918 = vunpack.c.l.b16 %v474
    %v919 = vunpack.c.h.b16 %v474
    %v920 = vpack.c.b16 %v796, %v792
    %v921 = vpack.c.b16 %v797, %v793
    %v922 = vpack.c.b16 %v798, %v794
    %v923 = vpack.c.b16 %v799, %v795
    %v924 = vpack.c.b16 %v804, %v800
    %v925 = vpack.c.b16 %v805, %v801
    %v926 = vpack.c.b16 %v806, %v802
    %v927 = vpack.c.b16 %v807, %v803
    %v928 = vpack.c.b16 %v812, %v808
    %v929 = vpack.c.b16 %v813, %v809
    %v930 = vpack.c.b16 %v814, %v810
    %v931 = vpack.c.b16 %v815, %v811
    %v932 = vpack.c.b16 %v820, %v816
    %v933 = vpack.c.b16 %v821, %v817
    %v934 = vpack.c.b16 %v822, %v818
    %v935 = vpack.c.b16 %v823, %v819
    %v936 = vpack.c.b16 %v828, %v824
    %v937 = vpack.c.b16 %v829, %v825
    %v938 = vpack.c.b16 %v830, %v826
    %v939 = vpack.c.b16 %v831, %v827
    %v940 = vpack.c.b16 %v836, %v832
    %v941 = vpack.c.b16 %v837, %v833
    %v942 = vpack.c.b16 %v838, %v834
    %v943 = vpack.c.b16 %v839, %v835
    %v944 = vpack.c.b16 %v844, %v840
    %v945 = vpack.c.b16 %v845, %v841
    %v946 = vpack.c.b16 %v846, %v842
    %v947 = vpack.c.b16 %v847, %v843
    %v948 = vpack.c.b16 %v852, %v848
    %v949 = vpack.c.b16 %v853, %v849
    %v950 = vpack.c.b16 %v854, %v850
    %v951 = vpack.c.b16 %v855, %v851
    %v952 = vpack.c.b16 %v860, %v856
    %v953 = vpack.c.b16 %v861, %v857
    %v954 = vpack.c.b16 %v862, %v858
    %v955 = vpack.c.b16 %v863, %v859
    %v956 = vpack.c.b16 %v868, %v864
    %v957 = vpack.c.b16 %v869, %v865
    %v958 = vpack.c.b16 %v870, %v866
    %v959 = vpack.c.b16 %v871, %v867
    %v960 = vpack.c.b16 %v876, %v872
    %v961 = vpack.c.b16 %v877, %v873
    %v962 = vpack.c.b16 %v878, %v874
    %v963 = vpack.c.b16 %v879, %v875
    %v964 = vpack.c.b16 %v884, %v880
    %v965 = vpack.c.b16 %v885, %v881
    %v966 = vpack.c.b16 %v886, %v882
    %v967 = vpack.c.b16 %v887, %v883
    %v968 = vpack.c.b16 %v892, %v888
    %v969 = vpack.c.b16 %v893, %v889
    %v970 = vpack.c.b16 %v894, %v890
    %v971 = vpack.c.b16 %v895, %v891
    %v972 = vpack.c.b16 %v900, %v896
    %v973 = vpack.c.b16 %v901, %v897
    %v974 = vpack.c.b16 %v902, %v898
    %v975 = vpack.c.b16 %v903, %v899
    %v976 = vpack.c.b16 %v908, %v904
    %v977 = vpack.c.b16 %v909, %v905
    %v978 = vpack.c.b16 %v910, %v906
    %v979 = vpack.c.b16 %v911, %v907
    %v980 = vpack.c.b16 %v916, %v912
    %v981 = vpack.c.b16 %v917, %v913
    %v982 = vpack.c.b16 %v918, %v914
    %v983 = vpack.c.b16 %v919, %v915
    %1048 = vmatpush.bf16.msra.mxu0 %v948
    %1049 = vmatpush.bf16.msra.mxu0 %v944
    %1050 = vmatpush.bf16.msra.mxu0 %v940
    %1051 = vmatpush.bf16.msra.mxu0 %v936
    %1052 = vmatpush.bf16.msra.mxu0 %v932
    %1053 = vmatpush.bf16.msra.mxu0 %v928
    %1054 = vmatpush.bf16.msra.mxu0 %v924
    %1055 = vmatpush.bf16.msra.mxu0 %v920
    %1056 = vmatmul.bf16.gmra.mxu0 %v717
    %v1057 = vpop.f32.mrf.mxu0
    %v1058 = vadd.f32 %v720, %v1057
    %v1059 = vpop.f32.mrf.mxu0
    %1060 = vdwg.mxu0
    %1061 = vmatpush.bf16.msra.mxu0 %v980
    %1062 = vmatpush.bf16.msra.mxu0 %v976
    %1063 = vmatpush.bf16.msra.mxu0 %v972
    %1064 = vmatpush.bf16.msra.mxu0 %v968
    %1065 = vmatpush.bf16.msra.mxu0 %v964
    %1066 = vmatpush.bf16.msra.mxu0 %v960
    %1067 = vmatpush.bf16.msra.mxu0 %v956
    %1068 = vmatpush.bf16.msra.mxu0 %v952
    %1069 = vmatmul.bf16.gmra.mxu0 %v718
    %v1070 = vpop.f32.mrf.mxu0
    %v1071 = vadd.f32 %v1058, %v1070
    %v1072 = vpop.f32.mrf.mxu0
    %1073 = vdwg.mxu0
    %1074 = vmatpush.bf16.msra.mxu0 %v949
    %1075 = vmatpush.bf16.msra.mxu0 %v945
    %1076 = vmatpush.bf16.msra.mxu0 %v941
    %1077 = vmatpush.bf16.msra.mxu0 %v937
    %1078 = vmatpush.bf16.msra.mxu0 %v933
    %1079 = vmatpush.bf16.msra.mxu0 %v929
    %1080 = vmatpush.bf16.msra.mxu0 %v925
    %1081 = vmatpush.bf16.msra.mxu0 %v921
    %1082 = vmatmul.bf16.gmra.mxu0 %v717
    %v1083 = vpop.f32.mrf.mxu0
    %v1084 = vadd.f32 %v721, %v1083
    %v1085 = vpop.f32.mrf.mxu0
    %1086 = vdwg.mxu0
    %1087 = vmatpush.bf16.msra.mxu0 %v981
    %1088 = vmatpush.bf16.msra.mxu0 %v977
    %1089 = vmatpush.bf16.msra.mxu0 %v973
    %1090 = vmatpush.bf16.msra.mxu0 %v969
    %1091 = vmatpush.bf16.msra.mxu0 %v965
    %1092 = vmatpush.bf16.msra.mxu0 %v961
    %1093 = vmatpush.bf16.msra.mxu0 %v957
    %1094 = vmatpush.bf16.msra.mxu0 %v953
    %1095 = vmatmul.bf16.gmra.mxu0 %v718
    %v1096 = vpop.f32.mrf.mxu0
    %v1097 = vadd.f32 %v1084, %v1096
    %v1098 = vpop.f32.mrf.mxu0
    %1099 = vdwg.mxu0
    %1100 = vmatpush.bf16.msra.mxu0 %v950
    %1101 = vmatpush.bf16.msra.mxu0 %v946
    %1102 = vmatpush.bf16.msra.mxu0 %v942
    %1103 = vmatpush.bf16.msra.mxu0 %v938
    %1104 = vmatpush.bf16.msra.mxu0 %v934
    %1105 = vmatpush.bf16.msra.mxu0 %v930
    %1106 = vmatpush.bf16.msra.mxu0 %v926
    %1107 = vmatpush.bf16.msra.mxu0 %v922
    %1108 = vmatmul.bf16.gmra.mxu0 %v717
    %v1109 = vpop.f32.mrf.mxu0
    %v1110 = vadd.f32 %v722, %v1109
    %v1111 = vpop.f32.mrf.mxu0
    %1112 = vdwg.mxu0
    %1113 = vmatpush.bf16.msra.mxu0 %v982
    %1114 = vmatpush.bf16.msra.mxu0 %v978
    %1115 = vmatpush.bf16.msra.mxu0 %v974
    %1116 = vmatpush.bf16.msra.mxu0 %v970
    %1117 = vmatpush.bf16.msra.mxu0 %v966
    %1118 = vmatpush.bf16.msra.mxu0 %v962
    %1119 = vmatpush.bf16.msra.mxu0 %v958
    %1120 = vmatpush.bf16.msra.mxu0 %v954
    %1121 = vmatmul.bf16.gmra.mxu0 %v718
    %v1122 = vpop.f32.mrf.mxu0
    %v1123 = vadd.f32 %v1110, %v1122
    %v1124 = vpop.f32.mrf.mxu0
    %1125 = vdwg.mxu0
    %1126 = vmatpush.bf16.msra.mxu0 %v951
    %1127 = vmatpush.bf16.msra.mxu0 %v947
    %1128 = vmatpush.bf16.msra.mxu0 %v943
    %1129 = vmatpush.bf16.msra.mxu0 %v939
    %1130 = vmatpush.bf16.msra.mxu0 %v935
    %1131 = vmatpush.bf16.msra.mxu0 %v931
    %1132 = vmatpush.bf16.msra.mxu0 %v927
    %1133 = vmatpush.bf16.msra.mxu0 %v923
    %1134 = vmatmul.bf16.gmra.mxu0 %v717
    %v1135 = vpop.f32.mrf.mxu0
    %v1136 = vadd.f32 %v723, %v1135
    %v1137 = vpop.f32.mrf.mxu0
    %1138 = vdwg.mxu0
    %1139 = vmatpush.bf16.msra.mxu0 %v983
    %1140 = vmatpush.bf16.msra.mxu0 %v979
    %1141 = vmatpush.bf16.msra.mxu0 %v975
    %1142 = vmatpush.bf16.msra.mxu0 %v971
    %1143 = vmatpush.bf16.msra.mxu0 %v967
    %1144 = vmatpush.bf16.msra.mxu0 %v963
    %1145 = vmatpush.bf16.msra.mxu0 %v959
    %1146 = vmatpush.bf16.msra.mxu0 %v955
    %1147 = vmatmul.bf16.gmra.mxu0 %v718
    %v1148 = vpop.f32.mrf.mxu0
    %v1149 = vadd.f32 %v1136, %v1148
    %v1150 = vpop.f32.mrf.mxu0
    %1151 = vdwg.mxu0
    %v1152 = vmul.f32 %v1071, 0.5
    %v1153 = vtanh.pop %v1152
    %v1154 = vmul.f32 %v1153, 0.5
    %v1155 = vadd.f32 %v1154, 0.5
    %v1156 = vmul.f32 %v1097, 0.5
    %v1157 = vtanh.pop %v1156
    %v1158 = vmul.f32 %v1157, 0.5
    %v1159 = vadd.f32 %v1158, 0.5
    %v1160 = vtanh.pop %v1123
    %v1161 = vmul.f32 %v1149, 0.5
    %v1162 = vtanh.pop %v1161
    %v1163 = vmul.f32 %v1162, 0.5
    %v1164 = vadd.f32 %v1163, 0.5
    %v1165 = vmul.f32 %v1159, %v481
    %v1166 = vmul.f32 %v1155, %v1160
    %v1167 = vadd.f32 %v1165, %v1166
    %v1168 = vtanh.pop %v1167
    %v1169 = vmul.f32 %v1164, %v1168
    %1170 = vmatpush.bf16.msra.mxu0 %v607
    %1171 = vmatpush.bf16.msra.mxu0 %v603
    %1172 = vmatpush.bf16.msra.mxu0 %v599
    %1173 = vmatpush.bf16.msra.mxu0 %v595
    %1174 = vmatpush.bf16.msra.mxu0 %v591
    %1175 = vmatpush.bf16.msra.mxu0 %v587
    %1176 = vmatpush.bf16.msra.mxu0 %v583
    %1177 = vmatpush.bf16.msra.mxu0 %v579
    %1178 = vmatmul.bf16.gmra.mxu0 %v717
    %v1179 = vpop.f32.mrf.mxu0
    %v1180 = vadd.f32 0.0, %v1179
    %v1181 = vpop.f32.mrf.mxu0
    %1182 = vdwg.mxu0
    %1183 = vmatpush.bf16.msra.mxu0 %v608
    %1184 = vmatpush.bf16.msra.mxu0 %v604
    %1185 = vmatpush.bf16.msra.mxu0 %v600
    %1186 = vmatpush.bf16.msra.mxu0 %v596
    %1187 = vmatpush.bf16.msra.mxu0 %v592
    %1188 = vmatpush.bf16.msra.mxu0 %v588
    %1189 = vmatpush.bf16.msra.mxu0 %v584
    %1190 = vmatpush.bf16.msra.mxu0 %v580
    %1191 = vmatmul.bf16.gmra.mxu0 %v717
    %v1192 = vpop.f32.mrf.mxu0
    %v1193 = vadd.f32 0.0, %v1192
    %v1194 = vpop.f32.mrf.mxu0
    %1195 = vdwg.mxu0
    %1196 = vmatpush.bf16.msra.mxu0 %v609
    %1197 = vmatpush.bf16.msra.mxu0 %v605
    %1198 = vmatpush.bf16.msra.mxu0 %v601
    %1199 = vmatpush.bf16.msra.mxu0 %v597
    %1200 = vmatpush.bf16.msra.mxu0 %v593
    %1201 = vmatpush.bf16.msra.mxu0 %v589
    %1202 = vmatpush.bf16.msra.mxu0 %v585
    %1203 = vmatpush.bf16.msra.mxu0 %v581
    %1204 = vmatmul.bf16.gmra.mxu0 %v717
    %v1205 = vpop.f32.mrf.mxu0
    %v1206 = vadd.f32 0.0, %v1205
    %v1207 = vpop.f32.mrf.mxu0
    %1208 = vdwg.mxu0
    %1209 = vmatpush.bf16.msra.mxu0 %v610
    %1210 = vmatpush.bf16.msra.mxu0 %v606
    %1211 = vmatpush.bf16.msra.mxu0 %v602
    %1212 = vmatpush.bf16.msra.mxu0 %v598
    %1213 = vmatpush.bf16.msra.mxu0 %v594
    %1214 = vmatpush.bf16.msra.mxu0 %v590
    %1215 = vmatpush.bf16.msra.mxu0 %v586
    %1216 = vmatpush.bf16.msra.mxu0 %v582
    %1217 = vmatmul.bf16.gmra.mxu0 %v717
    %v1218 = vpop.f32.mrf.mxu0
    %v1219 = vadd.f32 0.0, %v1218
    %v1220 = vpop.f32.mrf.mxu0
    %1221 = vdwg.mxu0
    %v1222 = vadd.f32 %v275, %v1180
    %v1223 = vadd.f32 %v304, %v1193
    %v1224 = vadd.f32 %v333, %v1206
    %v1225 = vadd.f32 %v362, %v1219
    %v1226 = vmul.f32 %v1222, 0.5
    %v1227 = vtanh.pop %v1226
    %v1228 = vmul.f32 %v1227, 0.5
    %v1229 = vadd.f32 %v1228, 0.5
    %v1230 = vmul.f32 %v1223, 0.5
    %v1231 = vtanh.pop %v1230
    %v1232 = vmul.f32 %v1231, 0.5
    %v1233 = vadd.f32 %v1232, 0.5
    %v1234 = vtanh.pop %v1224
    %v1235 = vmul.f32 %v1225, 0.5
    %v1236 = vtanh.pop %v1235
    %v1237 = vmul.f32 %v1236, 0.5
    %v1238 = vadd.f32 %v1237, 0.5
    %v1239 = vmul.f32 %v1233, %v714
    %v1240 = vmul.f32 %v1229, %v1234
    %v1241 = vadd.f32 %v1239, %v1240
    %v1242 = vtanh.pop %v1241
    %v1243 = vmul.f32 %v1238, %v1242
    %v1244 = vpack.c.bf16 %v1243, %v1243
    %v1245 = vpack.c.bf16 %v1169, %v1169
    %1246 = vmatpush.bf16.msra.mxu0 %v948
    %1247 = vmatpush.bf16.msra.mxu0 %v944
    %1248 = vmatpush.bf16.msra.mxu0 %v940
    %1249 = vmatpush.bf16.msra.mxu0 %v936
    %1250 = vmatpush.bf16.msra.mxu0 %v932
    %1251 = vmatpush.bf16.msra.mxu0 %v928
    %1252 = vmatpush.bf16.msra.mxu0 %v924
    %1253 = vmatpush.bf16.msra.mxu0 %v920
    %1254 = vmatmul.bf16.gmra.mxu0 %v1244
    %v1255 = vpop.f32.mrf.mxu0
    %v1256 = vadd.f32 %v720, %v1255
    %v1257 = vpop.f32.mrf.mxu0
    %1258 = vdwg.mxu0
    %1259 = vmatpush.bf16.msra.mxu0 %v980
    %1260 = vmatpush.bf16.msra.mxu0 %v976
    %1261 = vmatpush.bf16.msra.mxu0 %v972
    %1262 = vmatpush.bf16.msra.mxu0 %v968
    %1263 = vmatpush.bf16.msra.mxu0 %v964
    %1264 = vmatpush.bf16.msra.mxu0 %v960
    %1265 = vmatpush.bf16.msra.mxu0 %v956
    %1266 = vmatpush.bf16.msra.mxu0 %v952
    %1267 = vmatmul.bf16.gmra.mxu0 %v1245
    %v1268 = vpop.f32.mrf.mxu0
    %v1269 = vadd.f32 %v1256, %v1268
    %v1270 = vpop.f32.mrf.mxu0
    %1271 = vdwg.mxu0
    %1272 = vmatpush.bf16.msra.mxu0 %v949
    %1273 = vmatpush.bf16.msra.mxu0 %v945
    %1274 = vmatpush.bf16.msra.mxu0 %v941
    %1275 = vmatpush.bf16.msra.mxu0 %v937
    %1276 = vmatpush.bf16.msra.mxu0 %v933
    %1277 = vmatpush.bf16.msra.mxu0 %v929
    %1278 = vmatpush.bf16.msra.mxu0 %v925
    %1279 = vmatpush.bf16.msra.mxu0 %v921
    %1280 = vmatmul.bf16.gmra.mxu0 %v1244
    %v1281 = vpop.f32.mrf.mxu0
    %v1282 = vadd.f32 %v721, %v1281
    %v1283 = vpop.f32.mrf.mxu0
    %1284 = vdwg.mxu0
    %1285 = vmatpush.bf16.msra.mxu0 %v981
    %1286 = vmatpush.bf16.msra.mxu0 %v977
    %1287 = vmatpush.bf16.msra.mxu0 %v973
    %1288 = vmatpush.bf16.msra.mxu0 %v969
    %1289 = vmatpush.bf16.msra.mxu0 %v965
    %1290 = vmatpush.bf16.msra.mxu0 %v961
    %1291 = vmatpush.bf16.msra.mxu0 %v957
    %1292 = vmatpush.bf16.msra.mxu0 %v953
    %1293 = vmatmul.bf16.gmra.mxu0 %v1245
    %v1294 = vpop.f32.mrf.mxu0
    %v1295 = vadd.f32 %v1282, %v1294
    %v1296 = vpop.f32.mrf.mxu0
    %1297 = vdwg.mxu0
    %1298 = vmatpush.bf16.msra.mxu0 %v950
    %1299 = vmatpush.bf16.msra.mxu0 %v946
    %1300 = vmatpush.bf16.msra.mxu0 %v942
    %1301 = vmatpush.bf16.msra.mxu0 %v938
    %1302 = vmatpush.bf16.msra.mxu0 %v934
    %1303 = vmatpush.bf16.msra.mxu0 %v930
    %1304 = vmatpush.bf16.msra.mxu0 %v926
    %1305 = vmatpush.bf16.msra.mxu0 %v922
    %1306 = vmatmul.bf16.gmra.mxu0 %v1244
    %v1307 = vpop.f32.mrf.mxu0
    %v1308 = vadd.f32 %v722, %v1307
    %v1309 = vpop.f32.mrf.mxu0
    %1310 = vdwg.mxu0
    %1311 = vmatpush.bf16.msra.mxu0 %v982
    %1312 = vmatpush.bf16.msra.mxu0 %v978
    %1313 = vmatpush.bf16.msra.mxu0 %v974
    %1314 = vmatpush.bf16.msra.mxu0 %v970
    %1315 = vmatpush.bf16.msra.mxu0 %v966
    %1316 = vmatpush.bf16.msra.mxu0 %v962
    %1317 = vmatpush.bf16.msra.mxu0 %v958
    %1318 = vmatpush.bf16.msra.mxu0 %v954
    %1319 = vmatmul.bf16.gmra.mxu0 %v1245
    %v1320 = vpop.f32.mrf.mxu0
    %v1321 = vadd.f32 %v1308, %v1320
    %v1322 = vpop.f32.mrf.mxu0
    %1323 = vdwg.mxu0
    %1324 = vmatpush.bf16.msra.mxu0 %v951
    %1325 = vmatpush.bf16.msra.mxu0 %v947
    %1326 = vmatpush.bf16.msra.mxu0 %v943
    %1327 = vmatpush.bf16.msra.mxu0 %v939
    %1328 = vmatpush.bf16.msra.mxu0 %v935
    %1329 = vmatpush.bf16.msra.mxu0 %v931
    %1330 = vmatpush.bf16.msra.mxu0 %v927
    %1331 = vmatpush.bf16.msra.mxu0 %v923
    %1332 = vmatmul.bf16.gmra.mxu0 %v1244
    %v1333 = vpop.f32.mrf.mxu0
    %v1334 = vadd.f32 %v723, %v1333
    %v1335 = vpop.f32.mrf.mxu0
    %1336 = vdwg.mxu0
    %1337 = vmatpush.bf16.msra.mxu0 %v983
    %1338 = vmatpush.bf16.msra.mxu0 %v979
    %1339 = vmatpush.bf16.msra.mxu0 %v975
    %1340 = vmatpush.bf16.msra.mxu0 %v971
    %1341 = vmatpush.bf16.msra.mxu0 %v967
    %1342 = vmatpush.bf16.msra.mxu0 %v963
    %1343 = vmatpush.bf16.msra.mxu0 %v959
    %1344 = vmatpush.bf16.msra.mxu0 %v955
    %1345 = vmatmul.bf16.gmra.mxu0 %v1245
    %v1346 = vpop.f32.mrf.mxu0
    %v1347 = vadd.f32 %v1334, %v1346
    %v1348 = vpop.f32.mrf.mxu0
    %1349 = vdwg.mxu0
    %v1350 = vmul.f32 %v1269, 0.5
    %v1351 = vtanh.pop %v1350
    %v1352 = vmul.f32 %v1351, 0.5
    %v1353 = vadd.f32 %v1352, 0.5
    %v1354 = vmul.f32 %v1295, 0.5
    %v1355 = vtanh.pop %v1354
    %v1356 = vmul.f32 %v1355, 0.5
    %v1357 = vadd.f32 %v1356, 0.5
    %v1358 = vtanh.pop %v1321
    %v1359 = vmul.f32 %v1347, 0.5
    %v1360 = vtanh.pop %v1359
    %v1361 = vmul.f32 %v1360, 0.5
    %v1362 = vadd.f32 %v1361, 0.5
    %v1363 = vmul.f32 %v1357, %v1167
    %v1364 = vmul.f32 %v1353, %v1358
    %v1365 = vadd.f32 %v1363, %v1364
    %v1366 = vtanh.pop %v1365
    %v1367 = vmul.f32 %v1362, %v1366
    %1368 = vmatpush.bf16.msra.mxu0 %v607
    %1369 = vmatpush.bf16.msra.mxu0 %v603
    %1370 = vmatpush.bf16.msra.mxu0 %v599
    %1371 = vmatpush.bf16.msra.mxu0 %v595
    %1372 = vmatpush.bf16.msra.mxu0 %v591
    %1373 = vmatpush.bf16.msra.mxu0 %v587
    %1374 = vmatpush.bf16.msra.mxu0 %v583
    %1375 = vmatpush.bf16.msra.mxu0 %v579
    %1376 = vmatmul.bf16.gmra.mxu0 %v1244
    %v1377 = vpop.f32.mrf.mxu0
    %v1378 = vadd.f32 0.0, %v1377
    %v1379 = vpop.f32.mrf.mxu0
    %1380 = vdwg.mxu0
    %1381 = vmatpush.bf16.msra.mxu0 %v608
    %1382 = vmatpush.bf16.msra.mxu0 %v604
    %1383 = vmatpush.bf16.msra.mxu0 %v600
    %1384 = vmatpush.bf16.msra.mxu0 %v596
    %1385 = vmatpush.bf16.msra.mxu0 %v592
    %1386 = vmatpush.bf16.msra.mxu0 %v588
    %1387 = vmatpush.bf16.msra.mxu0 %v584
    %1388 = vmatpush.bf16.msra.mxu0 %v580
    %1389 = vmatmul.bf16.gmra.mxu0 %v1244
    %v1390 = vpop.f32.mrf.mxu0
    %v1391 = vadd.f32 0.0, %v1390
    %v1392 = vpop.f32.mrf.mxu0
    %1393 = vdwg.mxu0
    %1394 = vmatpush.bf16.msra.mxu0 %v609
    %1395 = vmatpush.bf16.msra.mxu0 %v605
    %1396 = vmatpush.bf16.msra.mxu0 %v601
    %1397 = vmatpush.bf16.msra.mxu0 %v597
    %1398 = vmatpush.bf16.msra.mxu0 %v593
    %1399 = vmatpush.bf16.msra.mxu0 %v589
    %1400 = vmatpush.bf16.msra.mxu0 %v585
    %1401 = vmatpush.bf16.msra.mxu0 %v581
    %1402 = vmatmul.bf16.gmra.mxu0 %v1244
    %v1403 = vpop.f32.mrf.mxu0
    %v1404 = vadd.f32 0.0, %v1403
    %v1405 = vpop.f32.mrf.mxu0
    %1406 = vdwg.mxu0
    %1407 = vmatpush.bf16.msra.mxu0 %v610
    %1408 = vmatpush.bf16.msra.mxu0 %v606
    %1409 = vmatpush.bf16.msra.mxu0 %v602
    %1410 = vmatpush.bf16.msra.mxu0 %v598
    %1411 = vmatpush.bf16.msra.mxu0 %v594
    %1412 = vmatpush.bf16.msra.mxu0 %v590
    %1413 = vmatpush.bf16.msra.mxu0 %v586
    %1414 = vmatpush.bf16.msra.mxu0 %v582
    %1415 = vmatmul.bf16.gmra.mxu0 %v1244
    %v1416 = vpop.f32.mrf.mxu0
    %v1417 = vadd.f32 0.0, %v1416
    %v1418 = vpop.f32.mrf.mxu0
    %1419 = vdwg.mxu0
    %v1420 = vadd.f32 %v278, %v1378
    %v1421 = vadd.f32 %v307, %v1391
    %v1422 = vadd.f32 %v336, %v1404
    %v1423 = vadd.f32 %v365, %v1417
    %v1424 = vmul.f32 %v1420, 0.5
    %v1425 = vtanh.pop %v1424
    %v1426 = vmul.f32 %v1425, 0.5
    %v1427 = vadd.f32 %v1426, 0.5
    %v1428 = vmul.f32 %v1421, 0.5
    %v1429 = vtanh.pop %v1428
    %v1430 = vmul.f32 %v1429, 0.5
    %v1431 = vadd.f32 %v1430, 0.5
    %v1432 = vtanh.pop %v1422
    %v1433 = vmul.f32 %v1423, 0.5
    %v1434 = vtanh.pop %v1433
    %v1435 = vmul.f32 %v1434, 0.5
    %v1436 = vadd.f32 %v1435, 0.5
    %v1437 = vmul.f32 %v1431, %v1241
    %v1438 = vmul.f32 %v1427, %v1432
    %v1439 = vadd.f32 %v1437, %v1438
    %v1440 = vtanh.pop %v1439
    %v1441 = vmul.f32 %v1436, %v1440
    %v1442 = vpack.c.bf16 %v1441, %v1441
    %v1443 = vpack.c.bf16 %v1367, %v1367
    %1444 = vmatpush.bf16.msra.mxu0 %v948
    %1445 = vmatpush.bf16.msra.mxu0 %v944
    %1446 = vmatpush.bf16.msra.mxu0 %v940
    %1447 = vmatpush.bf16.msra.mxu0 %v936
    %1448 = vmatpush.bf16.msra.mxu0 %v932
    %1449 = vmatpush.bf16.msra.mxu0 %v928
    %1450 = vmatpush.bf16.msra.mxu0 %v924
    %1451 = vmatpush.bf16.msra.mxu0 %v920
    %1452 = vmatmul.bf16.gmra.mxu0 %v1442
    %v1453 = vpop.f32.mrf.mxu0
    %v1454 = vadd.f32 %v720, %v1453
    %v1455 = vpop.f32.mrf.mxu0
    %1456 = vdwg.mxu0
    %1457 = vmatpush.bf16.msra.mxu0 %v980
    %1458 = vmatpush.bf16.msra.mxu0 %v976
    %1459 = vmatpush.bf16.msra.mxu0 %v972
    %1460 = vmatpush.bf16.msra.mxu0 %v968
    %1461 = vmatpush.bf16.msra.mxu0 %v964
    %1462 = vmatpush.bf16.msra.mxu0 %v960
    %1463 = vmatpush.bf16.msra.mxu0 %v956
    %1464 = vmatpush.bf16.msra.mxu0 %v952
    %1465 = vmatmul.bf16.gmra.mxu0 %v1443
    %v1466 = vpop.f32.mrf.mxu0
    %v1467 = vadd.f32 %v1454, %v1466
    %v1468 = vpop.f32.mrf.mxu0
    %1469 = vdwg.mxu0
    %1470 = vmatpush.bf16.msra.mxu0 %v949
    %1471 = vmatpush.bf16.msra.mxu0 %v945
    %1472 = vmatpush.bf16.msra.mxu0 %v941
    %1473 = vmatpush.bf16.msra.mxu0 %v937
    %1474 = vmatpush.bf16.msra.mxu0 %v933
    %1475 = vmatpush.bf16.msra.mxu0 %v929
    %1476 = vmatpush.bf16.msra.mxu0 %v925
    %1477 = vmatpush.bf16.msra.mxu0 %v921
    %1478 = vmatmul.bf16.gmra.mxu0 %v1442
    %v1479 = vpop.f32.mrf.mxu0
    %v1480 = vadd.f32 %v721, %v1479
    %v1481 = vpop.f32.mrf.mxu0
    %1482 = vdwg.mxu0
    %1483 = vmatpush.bf16.msra.mxu0 %v981
    %1484 = vmatpush.bf16.msra.mxu0 %v977
    %1485 = vmatpush.bf16.msra.mxu0 %v973
    %1486 = vmatpush.bf16.msra.mxu0 %v969
    %1487 = vmatpush.bf16.msra.mxu0 %v965
    %1488 = vmatpush.bf16.msra.mxu0 %v961
    %1489 = vmatpush.bf16.msra.mxu0 %v957
    %1490 = vmatpush.bf16.msra.mxu0 %v953
    %1491 = vmatmul.bf16.gmra.mxu0 %v1443
    %v1492 = vpop.f32.mrf.mxu0
    %v1493 = vadd.f32 %v1480, %v1492
    %v1494 = vpop.f32.mrf.mxu0
    %1495 = vdwg.mxu0
    %1496 = vmatpush.bf16.msra.mxu0 %v950
    %1497 = vmatpush.bf16.msra.mxu0 %v946
    %1498 = vmatpush.bf16.msra.mxu0 %v942
    %1499 = vmatpush.bf16.msra.mxu0 %v938
    %1500 = vmatpush.bf16.msra.mxu0 %v934
    %1501 = vmatpush.bf16.msra.mxu0 %v930
    %1502 = vmatpush.bf16.msra.mxu0 %v926
    %1503 = vmatpush.bf16.msra.mxu0 %v922
    %1504 = vmatmul.bf16.gmra.mxu0 %v1442
    %v1505 = vpop.f32.mrf.mxu0
    %v1506 = vadd.f32 %v722, %v1505
    %v1507 = vpop.f32.mrf.mxu0
    %1508 = vdwg.mxu0
    %1509 = vmatpush.bf16.msra.mxu0 %v982
    %1510 = vmatpush.bf16.msra.mxu0 %v978
    %1511 = vmatpush.bf16.msra.mxu0 %v974
    %1512 = vmatpush.bf16.msra.mxu0 %v970
    %1513 = vmatpush.bf16.msra.mxu0 %v966
    %1514 = vmatpush.bf16.msra.mxu0 %v962
    %1515 = vmatpush.bf16.msra.mxu0 %v958
    %1516 = vmatpush.bf16.msra.mxu0 %v954
    %1517 = vmatmul.bf16.gmra.mxu0 %v1443
    %v1518 = vpop.f32.mrf.mxu0
    %v1519 = vadd.f32 %v1506, %v1518
    %v1520 = vpop.f32.mrf.mxu0
    %1521 = vdwg.mxu0
    %1522 = vmatpush.bf16.msra.mxu0 %v951
    %1523 = vmatpush.bf16.msra.mxu0 %v947
    %1524 = vmatpush.bf16.msra.mxu0 %v943
    %1525 = vmatpush.bf16.msra.mxu0 %v939
    %1526 = vmatpush.bf16.msra.mxu0 %v935
    %1527 = vmatpush.bf16.msra.mxu0 %v931
    %1528 = vmatpush.bf16.msra.mxu0 %v927
    %1529 = vmatpush.bf16.msra.mxu0 %v923
    %1530 = vmatmul.bf16.gmra.mxu0 %v1442
    %v1531 = vpop.f32.mrf.mxu0
    %v1532 = vadd.f32 %v723, %v1531
    %v1533 = vpop.f32.mrf.mxu0
    %1534 = vdwg.mxu0
    %1535 = vmatpush.bf16.msra.mxu0 %v983
    %1536 = vmatpush.bf16.msra.mxu0 %v979
    %1537 = vmatpush.bf16.msra.mxu0 %v975
    %1538 = vmatpush.bf16.msra.mxu0 %v971
    %1539 = vmatpush.bf16.msra.mxu0 %v967
    %1540 = vmatpush.bf16.msra.mxu0 %v963
    %1541 = vmatpush.bf16.msra.mxu0 %v959
    %1542 = vmatpush.bf16.msra.mxu0 %v955
    %1543 = vmatmul.bf16.gmra.mxu0 %v1443
    %v1544 = vpop.f32.mrf.mxu0
    %v1545 = vadd.f32 %v1532, %v1544
    %v1546 = vpop.f32.mrf.mxu0
    %1547 = vdwg.mxu0
    %v1548 = vmul.f32 %v1467, 0.5
    %v1549 = vtanh.pop %v1548
    %v1550 = vmul.f32 %v1549, 0.5
    %v1551 = vadd.f32 %v1550, 0.5
    %v1552 = vmul.f32 %v1493, 0.5
    %v1553 = vtanh.pop %v1552
    %v1554 = vmul.f32 %v1553, 0.5
    %v1555 = vadd.f32 %v1554, 0.5
    %v1556 = vtanh.pop %v1519
    %v1557 = vmul.f32 %v1545, 0.5
    %v1558 = vtanh.pop %v1557
    %v1559 = vmul.f32 %v1558, 0.5
    %v1560 = vadd.f32 %v1559, 0.5
    %v1561 = vmul.f32 %v1555, %v1365
    %v1562 = vmul.f32 %v1551, %v1556
    %v1563 = vadd.f32 %v1561, %v1562
    %v1564 = vtanh.pop %v1563
    %v1565 = vmul.f32 %v1560, %v1564
    %1566 = vmatpush.bf16.msra.mxu0 %v607
    %1567 = vmatpush.bf16.msra.mxu0 %v603
    %1568 = vmatpush.bf16.msra.mxu0 %v599
    %1569 = vmatpush.bf16.msra.mxu0 %v595
    %1570 = vmatpush.bf16.msra.mxu0 %v591
    %1571 = vmatpush.bf16.msra.mxu0 %v587
    %1572 = vmatpush.bf16.msra.mxu0 %v583
    %1573 = vmatpush.bf16.msra.mxu0 %v579
    %1574 = vmatmul.bf16.gmra.mxu0 %v1442
    %v1575 = vpop.f32.mrf.mxu0
    %v1576 = vadd.f32 0.0, %v1575
    %v1577 = vpop.f32.mrf.mxu0
    %1578 = vdwg.mxu0
    %1579 = vmatpush.bf16.msra.mxu0 %v608
    %1580 = vmatpush.bf16.msra.mxu0 %v604
    %1581 = vmatpush.bf16.msra.mxu0 %v600
    %1582 = vmatpush.bf16.msra.mxu0 %v596
    %1583 = vmatpush.bf16.msra.mxu0 %v592
    %1584 = vmatpush.bf16.msra.mxu0 %v588
    %1585 = vmatpush.bf16.msra.mxu0 %v584
    %1586 = vmatpush.bf16.msra.mxu0 %v580
    %1587 = vmatmul.bf16.gmra.mxu0 %v1442
    %v1588 = vpop.f32.mrf.mxu0
    %v1589 = vadd.f32 0.0, %v1588
    %v1590 = vpop.f32.mrf.mxu0
    %1591 = vdwg.mxu0
    %1592 = vmatpush.bf16.msra.mxu0 %v609
    %1593 = vmatpush.bf16.msra.mxu0 %v605
    %1594 = vmatpush.bf16.msra.mxu0 %v601
    %1595 = vmatpush.bf16.msra.mxu0 %v597
    %1596 = vmatpush.bf16.msra.mxu0 %v593
    %1597 = vmatpush.bf16.msra.mxu0 %v589
    %1598 = vmatpush.bf16.msra.mxu0 %v585
    %1599 = vmatpush.bf16.msra.mxu0 %v581
    %1600 = vmatmul.bf16.gmra.mxu0 %v1442
    %v1601 = vpop.f32.mrf.mxu0
    %v1602 = vadd.f32 0.0, %v1601
    %v1603 = vpop.f32.mrf.mxu0
    %1604 = vdwg.mxu0
    %1605 = vmatpush.bf16.msra.mxu0 %v610
    %1606 = vmatpush.bf16.msra.mxu0 %v606
    %1607 = vmatpush.bf16.msra.mxu0 %v602
    %1608 = vmatpush.bf16.msra.mxu0 %v598
    %1609 = vmatpush.bf16.msra.mxu0 %v594
    %1610 = vmatpush.bf16.msra.mxu0 %v590
    %1611 = vmatpush.bf16.msra.mxu0 %v586
    %1612 = vmatpush.bf16.msra.mxu0 %v582
    %1613 = vmatmul.bf16.gmra.mxu0 %v1442
    %v1614 = vpop.f32.mrf.mxu0
    %v1615 = vadd.f32 0.0, %v1614
    %v1616 = vpop.f32.mrf.mxu0
    %1617 = vdwg.mxu0
    %v1618 = vadd.f32 %v280, %v1576
    %v1619 = vadd.f32 %v309, %v1589
    %v1620 = vadd.f32 %v338, %v1602
    %v1621 = vadd.f32 %v367, %v1615
    %v1622 = vmul.f32 %v1618, 0.5
    %v1623 = vtanh.pop %v1622
    %v1624 = vmul.f32 %v1623, 0.5
    %v1625 = vadd.f32 %v1624, 0.5
    %v1626 = vmul.f32 %v1619, 0.5
    %v1627 = vtanh.pop %v1626
    %v1628 = vmul.f32 %v1627, 0.5
    %v1629 = vadd.f32 %v1628, 0.5
    %v1630 = vtanh.pop %v1620
    %v1631 = vmul.f32 %v1621, 0.5
    %v1632 = vtanh.pop %v1631
    %v1633 = vmul.f32 %v1632, 0.5
    %v1634 = vadd.f32 %v1633, 0.5
    %v1635 = vmul.f32 %v1629, %v1439
    %v1636 = vmul.f32 %v1625, %v1630
    %v1637 = vadd.f32 %v1635, %v1636
    %v1638 = vtanh.pop %v1637
    %v1639 = vmul.f32 %v1634, %v1638
    %v1640 = vpack.c.bf16 %v1639, %v1639
    %v1641 = vpack.c.bf16 %v1565, %v1565
    %1642 = vmatpush.bf16.msra.mxu0 %v948
    %1643 = vmatpush.bf16.msra.mxu0 %v944
    %1644 = vmatpush.bf16.msra.mxu0 %v940
    %1645 = vmatpush.bf16.msra.mxu0 %v936
    %1646 = vmatpush.bf16.msra.mxu0 %v932
    %1647 = vmatpush.bf16.msra.mxu0 %v928
    %1648 = vmatpush.bf16.msra.mxu0 %v924
    %1649 = vmatpush.bf16.msra.mxu0 %v920
    %1650 = vmatmul.bf16.gmra.mxu0 %v1640
    %v1651 = vpop.f32.mrf.mxu0
    %v1652 = vadd.f32 %v720, %v1651
    %v1653 = vpop.f32.mrf.mxu0
    %1654 = vdwg.mxu0
    %1655 = vmatpush.bf16.msra.mxu0 %v980
    %1656 = vmatpush.bf16.msra.mxu0 %v976
    %1657 = vmatpush.bf16.msra.mxu0 %v972
    %1658 = vmatpush.bf16.msra.mxu0 %v968
    %1659 = vmatpush.bf16.msra.mxu0 %v964
    %1660 = vmatpush.bf16.msra.mxu0 %v960
    %1661 = vmatpush.bf16.msra.mxu0 %v956
    %1662 = vmatpush.bf16.msra.mxu0 %v952
    %1663 = vmatmul.bf16.gmra.mxu0 %v1641
    %v1664 = vpop.f32.mrf.mxu0
    %v1665 = vadd.f32 %v1652, %v1664
    %v1666 = vpop.f32.mrf.mxu0
    %1667 = vdwg.mxu0
    %1668 = vmatpush.bf16.msra.mxu0 %v949
    %1669 = vmatpush.bf16.msra.mxu0 %v945
    %1670 = vmatpush.bf16.msra.mxu0 %v941
    %1671 = vmatpush.bf16.msra.mxu0 %v937
    %1672 = vmatpush.bf16.msra.mxu0 %v933
    %1673 = vmatpush.bf16.msra.mxu0 %v929
    %1674 = vmatpush.bf16.msra.mxu0 %v925
    %1675 = vmatpush.bf16.msra.mxu0 %v921
    %1676 = vmatmul.bf16.gmra.mxu0 %v1640
    %v1677 = vpop.f32.mrf.mxu0
    %v1678 = vadd.f32 %v721, %v1677
    %v1679 = vpop.f32.mrf.mxu0
    %1680 = vdwg.mxu0
    %1681 = vmatpush.bf16.msra.mxu0 %v981
    %1682 = vmatpush.bf16.msra.mxu0 %v977
    %1683 = vmatpush.bf16.msra.mxu0 %v973
    %1684 = vmatpush.bf16.msra.mxu0 %v969
    %1685 = vmatpush.bf16.msra.mxu0 %v965
    %1686 = vmatpush.bf16.msra.mxu0 %v961
    %1687 = vmatpush.bf16.msra.mxu0 %v957
    %1688 = vmatpush.bf16.msra.mxu0 %v953
    %1689 = vmatmul.bf16.gmra.mxu0 %v1641
    %v1690 = vpop.f32.mrf.mxu0
    %v1691 = vadd.f32 %v1678, %v1690
    %v1692 = vpop.f32.mrf.mxu0
    %1693 = vdwg.mxu0
    %1694 = vmatpush.bf16.msra.mxu0 %v950
    %1695 = vmatpush.bf16.msra.mxu0 %v946
    %1696 = vmatpush.bf16.msra.mxu0 %v942
    %1697 = vmatpush.bf16.msra.mxu0 %v938
    %1698 = vmatpush.bf16.msra.mxu0 %v934
    %1699 = vmatpush.bf16.msra.mxu0 %v930
    %1700 = vmatpush.bf16.msra.mxu0 %v926
    %1701 = vmatpush.bf16.msra.mxu0 %v922
    %1702 = vmatmul.bf16.gmra.mxu0 %v1640
    %v1703 = vpop.f32.mrf.mxu0
    %v1704 = vadd.f32 %v722, %v1703
    %v1705 = vpop.f32.mrf.mxu0
    %1706 = vdwg.mxu0
    %1707 = vmatpush.bf16.msra.mxu0 %v982
    %1708 = vmatpush.bf16.msra.mxu0 %v978
    %1709 = vmatpush.bf16.msra.mxu0 %v974
    %1710 = vmatpush.bf16.msra.mxu0 %v970
    %1711 = vmatpush.bf16.msra.mxu0 %v966
    %1712 = vmatpush.bf16.msra.mxu0 %v962
    %1713 = vmatpush.bf16.msra.mxu0 %v958
    %1714 = vmatpush.bf16.msra.mxu0 %v954
    %1715 = vmatmul.bf16.gmra.mxu0 %v1641
    %v1716 = vpop.f32.mrf.mxu0
    %v1717 = vadd.f32 %v1704, %v1716
    %v1718 = vpop.f32.mrf.mxu0
    %1719 = vdwg.mxu0
    %1720 = vmatpush.bf16.msra.mxu0 %v951
    %1721 = vmatpush.bf16.msra.mxu0 %v947
    %1722 = vmatpush.bf16.msra.mxu0 %v943
    %1723 = vmatpush.bf16.msra.mxu0 %v939
    %1724 = vmatpush.bf16.msra.mxu0 %v935
    %1725 = vmatpush.bf16.msra.mxu0 %v931
    %1726 = vmatpush.bf16.msra.mxu0 %v927
    %1727 = vmatpush.bf16.msra.mxu0 %v923
    %1728 = vmatmul.bf16.gmra.mxu0 %v1640
    %v1729 = vpop.f32.mrf.mxu0
    %v1730 = vadd.f32 %v723, %v1729
    %v1731 = vpop.f32.mrf.mxu0
    %1732 = vdwg.mxu0
    %1733 = vmatpush.bf16.msra.mxu0 %v983
    %1734 = vmatpush.bf16.msra.mxu0 %v979
    %1735 = vmatpush.bf16.msra.mxu0 %v975
    %1736 = vmatpush.bf16.msra.mxu0 %v971
    %1737 = vmatpush.bf16.msra.mxu0 %v967
    %1738 = vmatpush.bf16.msra.mxu0 %v963
    %1739 = vmatpush.bf16.msra.mxu0 %v959
    %1740 = vmatpush.bf16.msra.mxu0 %v955
    %1741 = vmatmul.bf16.gmra.mxu0 %v1641
    %v1742 = vpop.f32.mrf.mxu0
    %v1743 = vadd.f32 %v1730, %v1742
    %v1744 = vpop.f32.mrf.mxu0
    %1745 = vdwg.mxu0
    %v1746 = vmul.f32 %v1665, 0.5
    %v1747 = vtanh.pop %v1746
    %v1748 = vmul.f32 %v1747, 0.5
    %v1749 = vadd.f32 %v1748, 0.5
    %v1750 = vmul.f32 %v1691, 0.5
    %v1751 = vtanh.pop %v1750
    %v1752 = vmul.f32 %v1751, 0.5
    %v1753 = vadd.f32 %v1752, 0.5
    %v1754 = vtanh.pop %v1717
    %v1755 = vmul.f32 %v1743, 0.5
    %v1756 = vtanh.pop %v1755
    %v1757 = vmul.f32 %v1756, 0.5
    %v1758 = vadd.f32 %v1757, 0.5
    %v1759 = vmul.f32 %v1753, %v1563
    %v1760 = vmul.f32 %v1749, %v1754
    %v1761 = vadd.f32 %v1759, %v1760
    %v1762 = vtanh.pop %v1761
    %v1763 = vmul.f32 %v1758, %v1762
    %1764 = vmatpush.bf16.msra.mxu0 %v607
    %1765 = vmatpush.bf16.msra.mxu0 %v603
    %1766 = vmatpush.bf16.msra.mxu0 %v599
    %1767 = vmatpush.bf16.msra.mxu0 %v595
    %1768 = vmatpush.bf16.msra.mxu0 %v591
    %1769 = vmatpush.bf16.msra.mxu0 %v587
    %1770 = vmatpush.bf16.msra.mxu0 %v583
    %1771 = vmatpush.bf16.msra.mxu0 %v579
    %1772 = vmatmul.bf16.gmra.mxu0 %v1640
    %v1773 = vpop.f32.mrf.mxu0
    %v1774 = vadd.f32 0.0, %v1773
    %v1775 = vpop.f32.mrf.mxu0
    %1776 = vdwg.mxu0
    %1777 = vmatpush.bf16.msra.mxu0 %v608
    %1778 = vmatpush.bf16.msra.mxu0 %v604
    %1779 = vmatpush.bf16.msra.mxu0 %v600
    %1780 = vmatpush.bf16.msra.mxu0 %v596
    %1781 = vmatpush.bf16.msra.mxu0 %v592
    %1782 = vmatpush.bf16.msra.mxu0 %v588
    %1783 = vmatpush.bf16.msra.mxu0 %v584
    %1784 = vmatpush.bf16.msra.mxu0 %v580
    %1785 = vmatmul.bf16.gmra.mxu0 %v1640
    %v1786 = vpop.f32.mrf.mxu0
    %v1787 = vadd.f32 0.0, %v1786
    %v1788 = vpop.f32.mrf.mxu0
    %1789 = vdwg.mxu0
    %1790 = vmatpush.bf16.msra.mxu0 %v609
    %1791 = vmatpush.bf16.msra.mxu0 %v605
    %1792 = vmatpush.bf16.msra.mxu0 %v601
    %1793 = vmatpush.bf16.msra.mxu0 %v597
    %1794 = vmatpush.bf16.msra.mxu0 %v593
    %1795 = vmatpush.bf16.msra.mxu0 %v589
    %1796 = vmatpush.bf16.msra.mxu0 %v585
    %1797 = vmatpush.bf16.msra.mxu0 %v581
    %1798 = vmatmul.bf16.gmra.mxu0 %v1640
    %v1799 = vpop.f32.mrf.mxu0
    %v1800 = vadd.f32 0.0, %v1799
    %v1801 = vpop.f32.mrf.mxu0
    %1802 = vdwg.mxu0
    %1803 = vmatpush.bf16.msra.mxu0 %v610
    %1804 = vmatpush.bf16.msra.mxu0 %v606
    %1805 = vmatpush.bf16.msra.mxu0 %v602
    %1806 = vmatpush.bf16.msra.mxu0 %v598
    %1807 = vmatpush.bf16.msra.mxu0 %v594
    %1808 = vmatpush.bf16.msra.mxu0 %v590
    %1809 = vmatpush.bf16.msra.mxu0 %v586
    %1810 = vmatpush.bf16.msra.mxu0 %v582
    %1811 = vmatmul.bf16.gmra.mxu0 %v1640
    %v1812 = vpop.f32.mrf.mxu0
    %v1813 = vadd.f32 0.0, %v1812
    %v1814 = vpop.f32.mrf.mxu0
    %1815 = vdwg.mxu0
    %v1816 = vadd.f32 %v283, %v1774
    %v1817 = vadd.f32 %v312, %v1787
    %v1818 = vadd.f32 %v341, %v1800
    %v1819 = vadd.f32 %v370, %v1813
    %v1820 = vmul.f32 %v1816, 0.5
    %v1821 = vtanh.pop %v1820
    %v1822 = vmul.f32 %v1821, 0.5
    %v1823 = vadd.f32 %v1822, 0.5
    %v1824 = vmul.f32 %v1817, 0.5
    %v1825 = vtanh.pop %v1824
    %v1826 = vmul.f32 %v1825, 0.5
    %v1827 = vadd.f32 %v1826, 0.5
    %v1828 = vtanh.pop %v1818
    %v1829 = vmul.f32 %v1819, 0.5
    %v1830 = vtanh.pop %v1829
    %v1831 = vmul.f32 %v1830, 0.5
    %v1832 = vadd.f32 %v1831, 0.5
    %v1833 = vmul.f32 %v1827, %v1637
    %v1834 = vmul.f32 %v1823, %v1828
    %v1835 = vadd.f32 %v1833, %v1834
    %v1836 = vtanh.pop %v1835
    %v1837 = vmul.f32 %v1832, %v1836
    %v1838 = vpack.c.bf16 %v1837, %v1837
    %v1839 = vpack.c.bf16 %v1763, %v1763
    %1840 = vmatpush.bf16.msra.mxu0 %v948
    %1841 = vmatpush.bf16.msra.mxu0 %v944
    %1842 = vmatpush.bf16.msra.mxu0 %v940
    %1843 = vmatpush.bf16.msra.mxu0 %v936
    %1844 = vmatpush.bf16.msra.mxu0 %v932
    %1845 = vmatpush.bf16.msra.mxu0 %v928
    %1846 = vmatpush.bf16.msra.mxu0 %v924
    %1847 = vmatpush.bf16.msra.mxu0 %v920
    %1848 = vmatmul.bf16.gmra.mxu0 %v1838
    %v1849 = vpop.f32.mrf.mxu0
    %v1850 = vadd.f32 %v720, %v1849
    %v1851 = vpop.f32.mrf.mxu0
    %1852 = vdwg.mxu0
    %1853 = vmatpush.bf16.msra.mxu0 %v980
    %1854 = vmatpush.bf16.msra.mxu0 %v976
    %1855 = vmatpush.bf16.msra.mxu0 %v972
    %1856 = vmatpush.bf16.msra.mxu0 %v968
    %1857 = vmatpush.bf16.msra.mxu0 %v964
    %1858 = vmatpush.bf16.msra.mxu0 %v960
    %1859 = vmatpush.bf16.msra.mxu0 %v956
    %1860 = vmatpush.bf16.msra.mxu0 %v952
    %1861 = vmatmul.bf16.gmra.mxu0 %v1839
    %v1862 = vpop.f32.mrf.mxu0
    %v1863 = vadd.f32 %v1850, %v1862
    %v1864 = vpop.f32.mrf.mxu0
    %1865 = vdwg.mxu0
    %1866 = vmatpush.bf16.msra.mxu0 %v949
    %1867 = vmatpush.bf16.msra.mxu0 %v945
    %1868 = vmatpush.bf16.msra.mxu0 %v941
    %1869 = vmatpush.bf16.msra.mxu0 %v937
    %1870 = vmatpush.bf16.msra.mxu0 %v933
    %1871 = vmatpush.bf16.msra.mxu0 %v929
    %1872 = vmatpush.bf16.msra.mxu0 %v925
    %1873 = vmatpush.bf16.msra.mxu0 %v921
    %1874 = vmatmul.bf16.gmra.mxu0 %v1838
    %v1875 = vpop.f32.mrf.mxu0
    %v1876 = vadd.f32 %v721, %v1875
    %v1877 = vpop.f32.mrf.mxu0
    %1878 = vdwg.mxu0
    %1879 = vmatpush.bf16.msra.mxu0 %v981
    %1880 = vmatpush.bf16.msra.mxu0 %v977
    %1881 = vmatpush.bf16.msra.mxu0 %v973
    %1882 = vmatpush.bf16.msra.mxu0 %v969
    %1883 = vmatpush.bf16.msra.mxu0 %v965
    %1884 = vmatpush.bf16.msra.mxu0 %v961
    %1885 = vmatpush.bf16.msra.mxu0 %v957
    %1886 = vmatpush.bf16.msra.mxu0 %v953
    %1887 = vmatmul.bf16.gmra.mxu0 %v1839
    %v1888 = vpop.f32.mrf.mxu0
    %v1889 = vadd.f32 %v1876, %v1888
    %v1890 = vpop.f32.mrf.mxu0
    %1891 = vdwg.mxu0
    %1892 = vmatpush.bf16.msra.mxu0 %v950
    %1893 = vmatpush.bf16.msra.mxu0 %v946
    %1894 = vmatpush.bf16.msra.mxu0 %v942
    %1895 = vmatpush.bf16.msra.mxu0 %v938
    %1896 = vmatpush.bf16.msra.mxu0 %v934
    %1897 = vmatpush.bf16.msra.mxu0 %v930
    %1898 = vmatpush.bf16.msra.mxu0 %v926
    %1899 = vmatpush.bf16.msra.mxu0 %v922
    %1900 = vmatmul.bf16.gmra.mxu0 %v1838
    %v1901 = vpop.f32.mrf.mxu0
    %v1902 = vadd.f32 %v722, %v1901
    %v1903 = vpop.f32.mrf.mxu0
    %1904 = vdwg.mxu0
    %1905 = vmatpush.bf16.msra.mxu0 %v982
    %1906 = vmatpush.bf16.msra.mxu0 %v978
    %1907 = vmatpush.bf16.msra.mxu0 %v974
    %1908 = vmatpush.bf16.msra.mxu0 %v970
    %1909 = vmatpush.bf16.msra.mxu0 %v966
    %1910 = vmatpush.bf16.msra.mxu0 %v962
    %1911 = vmatpush.bf16.msra.mxu0 %v958
    %1912 = vmatpush.bf16.msra.mxu0 %v954
    %1913 = vmatmul.bf16.gmra.mxu0 %v1839
    %v1914 = vpop.f32.mrf.mxu0
    %v1915 = vadd.f32 %v1902, %v1914
    %v1916 = vpop.f32.mrf.mxu0
    %1917 = vdwg.mxu0
    %1918 = vmatpush.bf16.msra.mxu0 %v951
    %1919 = vmatpush.bf16.msra.mxu0 %v947
    %1920 = vmatpush.bf16.msra.mxu0 %v943
    %1921 = vmatpush.bf16.msra.mxu0 %v939
    %1922 = vmatpush.bf16.msra.mxu0 %v935
    %1923 = vmatpush.bf16.msra.mxu0 %v931
    %1924 = vmatpush.bf16.msra.mxu0 %v927
    %1925 = vmatpush.bf16.msra.mxu0 %v923
    %1926 = vmatmul.bf16.gmra.mxu0 %v1838
    %v1927 = vpop.f32.mrf.mxu0
    %v1928 = vadd.f32 %v723, %v1927
    %v1929 = vpop.f32.mrf.mxu0
    %1930 = vdwg.mxu0
    %1931 = vmatpush.bf16.msra.mxu0 %v983
    %1932 = vmatpush.bf16.msra.mxu0 %v979
    %1933 = vmatpush.bf16.msra.mxu0 %v975
    %1934 = vmatpush.bf16.msra.mxu0 %v971
    %1935 = vmatpush.bf16.msra.mxu0 %v967
    %1936 = vmatpush.bf16.msra.mxu0 %v963
    %1937 = vmatpush.bf16.msra.mxu0 %v959
    %1938 = vmatpush.bf16.msra.mxu0 %v955
    %1939 = vmatmul.bf16.gmra.mxu0 %v1839
    %v1940 = vpop.f32.mrf.mxu0
    %v1941 = vadd.f32 %v1928, %v1940
    %v1942 = vpop.f32.mrf.mxu0
    %1943 = vdwg.mxu0
    %v1944 = vmul.f32 %v1863, 0.5
    %v1945 = vtanh.pop %v1944
    %v1946 = vmul.f32 %v1945, 0.5
    %v1947 = vadd.f32 %v1946, 0.5
    %v1948 = vmul.f32 %v1889, 0.5
    %v1949 = vtanh.pop %v1948
    %v1950 = vmul.f32 %v1949, 0.5
    %v1951 = vadd.f32 %v1950, 0.5
    %v1952 = vtanh.pop %v1915
    %v1953 = vmul.f32 %v1941, 0.5
    %v1954 = vtanh.pop %v1953
    %v1955 = vmul.f32 %v1954, 0.5
    %v1956 = vadd.f32 %v1955, 0.5
    %v1957 = vmul.f32 %v1951, %v1761
    %v1958 = vmul.f32 %v1947, %v1952
    %v1959 = vadd.f32 %v1957, %v1958
    %v1960 = vtanh.pop %v1959
    %v1961 = vmul.f32 %v1956, %v1960
    %1962 = vmatpush.bf16.msra.mxu0 %v607
    %1963 = vmatpush.bf16.msra.mxu0 %v603
    %1964 = vmatpush.bf16.msra.mxu0 %v599
    %1965 = vmatpush.bf16.msra.mxu0 %v595
    %1966 = vmatpush.bf16.msra.mxu0 %v591
    %1967 = vmatpush.bf16.msra.mxu0 %v587
    %1968 = vmatpush.bf16.msra.mxu0 %v583
    %1969 = vmatpush.bf16.msra.mxu0 %v579
    %1970 = vmatmul.bf16.gmra.mxu0 %v1838
    %v1971 = vpop.f32.mrf.mxu0
    %v1972 = vadd.f32 0.0, %v1971
    %v1973 = vpop.f32.mrf.mxu0
    %1974 = vdwg.mxu0
    %1975 = vmatpush.bf16.msra.mxu0 %v608
    %1976 = vmatpush.bf16.msra.mxu0 %v604
    %1977 = vmatpush.bf16.msra.mxu0 %v600
    %1978 = vmatpush.bf16.msra.mxu0 %v596
    %1979 = vmatpush.bf16.msra.mxu0 %v592
    %1980 = vmatpush.bf16.msra.mxu0 %v588
    %1981 = vmatpush.bf16.msra.mxu0 %v584
    %1982 = vmatpush.bf16.msra.mxu0 %v580
    %1983 = vmatmul.bf16.gmra.mxu0 %v1838
    %v1984 = vpop.f32.mrf.mxu0
    %v1985 = vadd.f32 0.0, %v1984
    %v1986 = vpop.f32.mrf.mxu0
    %1987 = vdwg.mxu0
    %1988 = vmatpush.bf16.msra.mxu0 %v609
    %1989 = vmatpush.bf16.msra.mxu0 %v605
    %1990 = vmatpush.bf16.msra.mxu0 %v601
    %1991 = vmatpush.bf16.msra.mxu0 %v597
    %1992 = vmatpush.bf16.msra.mxu0 %v593
    %1993 = vmatpush.bf16.msra.mxu0 %v589
    %1994 = vmatpush.bf16.msra.mxu0 %v585
    %1995 = vmatpush.bf16.msra.mxu0 %v581
    %1996 = vmatmul.bf16.gmra.mxu0 %v1838
    %v1997 = vpop.f32.mrf.mxu0
    %v1998 = vadd.f32 0.0, %v1997
    %v1999 = vpop.f32.mrf.mxu0
    %2000 = vdwg.mxu0
    %2001 = vmatpush.bf16.msra.mxu0 %v610
    %2002 = vmatpush.bf16.msra.mxu0 %v606
    %2003 = vmatpush.bf16.msra.mxu0 %v602
    %2004 = vmatpush.bf16.msra.mxu0 %v598
    %2005 = vmatpush.bf16.msra.mxu0 %v594
    %2006 = vmatpush.bf16.msra.mxu0 %v590
    %2007 = vmatpush.bf16.msra.mxu0 %v586
    %2008 = vmatpush.bf16.msra.mxu0 %v582
    %2009 = vmatmul.bf16.gmra.mxu0 %v1838
    %v2010 = vpop.f32.mrf.mxu0
    %v2011 = vadd.f32 0.0, %v2010
    %v2012 = vpop.f32.mrf.mxu0
    %2013 = vdwg.mxu0
    %v2014 = vadd.f32 %v285, %v1972
    %v2015 = vadd.f32 %v314, %v1985
    %v2016 = vadd.f32 %v343, %v1998
    %v2017 = vadd.f32 %v372, %v2011
    %v2018 = vmul.f32 %v2014, 0.5
    %v2019 = vtanh.pop %v2018
    %v2020 = vmul.f32 %v2019, 0.5
    %v2021 = vadd.f32 %v2020, 0.5
    %v2022 = vmul.f32 %v2015, 0.5
    %v2023 = vtanh.pop %v2022
    %v2024 = vmul.f32 %v2023, 0.5
    %v2025 = vadd.f32 %v2024, 0.5
    %v2026 = vtanh.pop %v2016
    %v2027 = vmul.f32 %v2017, 0.5
    %v2028 = vtanh.pop %v2027
    %v2029 = vmul.f32 %v2028, 0.5
    %v2030 = vadd.f32 %v2029, 0.5
    %v2031 = vmul.f32 %v2025, %v1835
    %v2032 = vmul.f32 %v2021, %v2026
    %v2033 = vadd.f32 %v2031, %v2032
    %v2034 = vtanh.pop %v2033
    %v2035 = vmul.f32 %v2030, %v2034
    %v2036 = vpack.c.bf16 %v2035, %v2035
    %v2037 = vpack.c.bf16 %v1961, %v1961
    %2038 = vmatpush.bf16.msra.mxu0 %v948
    %2039 = vmatpush.bf16.msra.mxu0 %v944
    %2040 = vmatpush.bf16.msra.mxu0 %v940
    %2041 = vmatpush.bf16.msra.mxu0 %v936
    %2042 = vmatpush.bf16.msra.mxu0 %v932
    %2043 = vmatpush.bf16.msra.mxu0 %v928
    %2044 = vmatpush.bf16.msra.mxu0 %v924
    %2045 = vmatpush.bf16.msra.mxu0 %v920
    %2046 = vmatmul.bf16.gmra.mxu0 %v2036
    %v2047 = vpop.f32.mrf.mxu0
    %v2048 = vadd.f32 %v720, %v2047
    %v2049 = vpop.f32.mrf.mxu0
    %2050 = vdwg.mxu0
    %2051 = vmatpush.bf16.msra.mxu0 %v980
    %2052 = vmatpush.bf16.msra.mxu0 %v976
    %2053 = vmatpush.bf16.msra.mxu0 %v972
    %2054 = vmatpush.bf16.msra.mxu0 %v968
    %2055 = vmatpush.bf16.msra.mxu0 %v964
    %2056 = vmatpush.bf16.msra.mxu0 %v960
    %2057 = vmatpush.bf16.msra.mxu0 %v956
    %2058 = vmatpush.bf16.msra.mxu0 %v952
    %2059 = vmatmul.bf16.gmra.mxu0 %v2037
    %v2060 = vpop.f32.mrf.mxu0
    %v2061 = vadd.f32 %v2048, %v2060
    %v2062 = vpop.f32.mrf.mxu0
    %2063 = vdwg.mxu0
    %2064 = vmatpush.bf16.msra.mxu0 %v949
    %2065 = vmatpush.bf16.msra.mxu0 %v945
    %2066 = vmatpush.bf16.msra.mxu0 %v941
    %2067 = vmatpush.bf16.msra.mxu0 %v937
    %2068 = vmatpush.bf16.msra.mxu0 %v933
    %2069 = vmatpush.bf16.msra.mxu0 %v929
    %2070 = vmatpush.bf16.msra.mxu0 %v925
    %2071 = vmatpush.bf16.msra.mxu0 %v921
    %2072 = vmatmul.bf16.gmra.mxu0 %v2036
    %v2073 = vpop.f32.mrf.mxu0
    %v2074 = vadd.f32 %v721, %v2073
    %v2075 = vpop.f32.mrf.mxu0
    %2076 = vdwg.mxu0
    %2077 = vmatpush.bf16.msra.mxu0 %v981
    %2078 = vmatpush.bf16.msra.mxu0 %v977
    %2079 = vmatpush.bf16.msra.mxu0 %v973
    %2080 = vmatpush.bf16.msra.mxu0 %v969
    %2081 = vmatpush.bf16.msra.mxu0 %v965
    %2082 = vmatpush.bf16.msra.mxu0 %v961
    %2083 = vmatpush.bf16.msra.mxu0 %v957
    %2084 = vmatpush.bf16.msra.mxu0 %v953
    %2085 = vmatmul.bf16.gmra.mxu0 %v2037
    %v2086 = vpop.f32.mrf.mxu0
    %v2087 = vadd.f32 %v2074, %v2086
    %v2088 = vpop.f32.mrf.mxu0
    %2089 = vdwg.mxu0
    %2090 = vmatpush.bf16.msra.mxu0 %v950
    %2091 = vmatpush.bf16.msra.mxu0 %v946
    %2092 = vmatpush.bf16.msra.mxu0 %v942
    %2093 = vmatpush.bf16.msra.mxu0 %v938
    %2094 = vmatpush.bf16.msra.mxu0 %v934
    %2095 = vmatpush.bf16.msra.mxu0 %v930
    %2096 = vmatpush.bf16.msra.mxu0 %v926
    %2097 = vmatpush.bf16.msra.mxu0 %v922
    %2098 = vmatmul.bf16.gmra.mxu0 %v2036
    %v2099 = vpop.f32.mrf.mxu0
    %v2100 = vadd.f32 %v722, %v2099
    %v2101 = vpop.f32.mrf.mxu0
    %2102 = vdwg.mxu0
    %2103 = vmatpush.bf16.msra.mxu0 %v982
    %2104 = vmatpush.bf16.msra.mxu0 %v978
    %2105 = vmatpush.bf16.msra.mxu0 %v974
    %2106 = vmatpush.bf16.msra.mxu0 %v970
    %2107 = vmatpush.bf16.msra.mxu0 %v966
    %2108 = vmatpush.bf16.msra.mxu0 %v962
    %2109 = vmatpush.bf16.msra.mxu0 %v958
    %2110 = vmatpush.bf16.msra.mxu0 %v954
    %2111 = vmatmul.bf16.gmra.mxu0 %v2037
    %v2112 = vpop.f32.mrf.mxu0
    %v2113 = vadd.f32 %v2100, %v2112
    %v2114 = vpop.f32.mrf.mxu0
    %2115 = vdwg.mxu0
    %2116 = vmatpush.bf16.msra.mxu0 %v951
    %2117 = vmatpush.bf16.msra.mxu0 %v947
    %2118 = vmatpush.bf16.msra.mxu0 %v943
    %2119 = vmatpush.bf16.msra.mxu0 %v939
    %2120 = vmatpush.bf16.msra.mxu0 %v935
    %2121 = vmatpush.bf16.msra.mxu0 %v931
    %2122 = vmatpush.bf16.msra.mxu0 %v927
    %2123 = vmatpush.bf16.msra.mxu0 %v923
    %2124 = vmatmul.bf16.gmra.mxu0 %v2036
    %v2125 = vpop.f32.mrf.mxu0
    %v2126 = vadd.f32 %v723, %v2125
    %v2127 = vpop.f32.mrf.mxu0
    %2128 = vdwg.mxu0
    %2129 = vmatpush.bf16.msra.mxu0 %v983
    %2130 = vmatpush.bf16.msra.mxu0 %v979
    %2131 = vmatpush.bf16.msra.mxu0 %v975
    %2132 = vmatpush.bf16.msra.mxu0 %v971
    %2133 = vmatpush.bf16.msra.mxu0 %v967
    %2134 = vmatpush.bf16.msra.mxu0 %v963
    %2135 = vmatpush.bf16.msra.mxu0 %v959
    %2136 = vmatpush.bf16.msra.mxu0 %v955
    %2137 = vmatmul.bf16.gmra.mxu0 %v2037
    %v2138 = vpop.f32.mrf.mxu0
    %v2139 = vadd.f32 %v2126, %v2138
    %v2140 = vpop.f32.mrf.mxu0
    %2141 = vdwg.mxu0
    %v2142 = vmul.f32 %v2061, 0.5
    %v2143 = vtanh.pop %v2142
    %v2144 = vmul.f32 %v2143, 0.5
    %v2145 = vadd.f32 %v2144, 0.5
    %v2146 = vmul.f32 %v2087, 0.5
    %v2147 = vtanh.pop %v2146
    %v2148 = vmul.f32 %v2147, 0.5
    %v2149 = vadd.f32 %v2148, 0.5
    %v2150 = vtanh.pop %v2113
    %v2151 = vmul.f32 %v2139, 0.5
    %v2152 = vtanh.pop %v2151
    %v2153 = vmul.f32 %v2152, 0.5
    %v2154 = vadd.f32 %v2153, 0.5
    %v2155 = vmul.f32 %v2149, %v1959
    %v2156 = vmul.f32 %v2145, %v2150
    %v2157 = vadd.f32 %v2155, %v2156
    %v2158 = vtanh.pop %v2157
    %v2159 = vmul.f32 %v2154, %v2158
    %2160 = vmatpush.bf16.msra.mxu0 %v607
    %2161 = vmatpush.bf16.msra.mxu0 %v603
    %2162 = vmatpush.bf16.msra.mxu0 %v599
    %2163 = vmatpush.bf16.msra.mxu0 %v595
    %2164 = vmatpush.bf16.msra.mxu0 %v591
    %2165 = vmatpush.bf16.msra.mxu0 %v587
    %2166 = vmatpush.bf16.msra.mxu0 %v583
    %2167 = vmatpush.bf16.msra.mxu0 %v579
    %2168 = vmatmul.bf16.gmra.mxu0 %v2036
    %v2169 = vpop.f32.mrf.mxu0
    %v2170 = vadd.f32 0.0, %v2169
    %v2171 = vpop.f32.mrf.mxu0
    %2172 = vdwg.mxu0
    %2173 = vmatpush.bf16.msra.mxu0 %v608
    %2174 = vmatpush.bf16.msra.mxu0 %v604
    %2175 = vmatpush.bf16.msra.mxu0 %v600
    %2176 = vmatpush.bf16.msra.mxu0 %v596
    %2177 = vmatpush.bf16.msra.mxu0 %v592
    %2178 = vmatpush.bf16.msra.mxu0 %v588
    %2179 = vmatpush.bf16.msra.mxu0 %v584
    %2180 = vmatpush.bf16.msra.mxu0 %v580
    %2181 = vmatmul.bf16.gmra.mxu0 %v2036
    %v2182 = vpop.f32.mrf.mxu0
    %v2183 = vadd.f32 0.0, %v2182
    %v2184 = vpop.f32.mrf.mxu0
    %2185 = vdwg.mxu0
    %2186 = vmatpush.bf16.msra.mxu0 %v609
    %2187 = vmatpush.bf16.msra.mxu0 %v605
    %2188 = vmatpush.bf16.msra.mxu0 %v601
    %2189 = vmatpush.bf16.msra.mxu0 %v597
    %2190 = vmatpush.bf16.msra.mxu0 %v593
    %2191 = vmatpush.bf16.msra.mxu0 %v589
    %2192 = vmatpush.bf16.msra.mxu0 %v585
    %2193 = vmatpush.bf16.msra.mxu0 %v581
    %2194 = vmatmul.bf16.gmra.mxu0 %v2036
    %v2195 = vpop.f32.mrf.mxu0
    %v2196 = vadd.f32 0.0, %v2195
    %v2197 = vpop.f32.mrf.mxu0
    %2198 = vdwg.mxu0
    %2199 = vmatpush.bf16.msra.mxu0 %v610
    %2200 = vmatpush.bf16.msra.mxu0 %v606
    %2201 = vmatpush.bf16.msra.mxu0 %v602
    %2202 = vmatpush.bf16.msra.mxu0 %v598
    %2203 = vmatpush.bf16.msra.mxu0 %v594
    %2204 = vmatpush.bf16.msra.mxu0 %v590
    %2205 = vmatpush.bf16.msra.mxu0 %v586
    %2206 = vmatpush.bf16.msra.mxu0 %v582
    %2207 = vmatmul.bf16.gmra.mxu0 %v2036
    %v2208 = vpop.f32.mrf.mxu0
    %v2209 = vadd.f32 0.0, %v2208
    %v2210 = vpop.f32.mrf.mxu0
    %2211 = vdwg.mxu0
    %v2212 = vadd.f32 %v288, %v2170
    %v2213 = vadd.f32 %v317, %v2183
    %v2214 = vadd.f32 %v346, %v2196
    %v2215 = vadd.f32 %v375, %v2209
    %v2216 = vmul.f32 %v2212, 0.5
    %v2217 = vtanh.pop %v2216
    %v2218 = vmul.f32 %v2217, 0.5
    %v2219 = vadd.f32 %v2218, 0.5
    %v2220 = vmul.f32 %v2213, 0.5
    %v2221 = vtanh.pop %v2220
    %v2222 = vmul.f32 %v2221, 0.5
    %v2223 = vadd.f32 %v2222, 0.5
    %v2224 = vtanh.pop %v2214
    %v2225 = vmul.f32 %v2215, 0.5
    %v2226 = vtanh.pop %v2225
    %v2227 = vmul.f32 %v2226, 0.5
    %v2228 = vadd.f32 %v2227, 0.5
    %v2229 = vmul.f32 %v2223, %v2033
    %v2230 = vmul.f32 %v2219, %v2224
    %v2231 = vadd.f32 %v2229, %v2230
    %v2232 = vtanh.pop %v2231
    %v2233 = vmul.f32 %v2228, %v2232
    %v2234 = vpack.c.bf16 %v2233, %v2233
    %v2235 = vpack.c.bf16 %v2159, %v2159
    %2236 = vmatpush.bf16.msra.mxu0 %v948
    %2237 = vmatpush.bf16.msra.mxu0 %v944
    %2238 = vmatpush.bf16.msra.mxu0 %v940
    %2239 = vmatpush.bf16.msra.mxu0 %v936
    %2240 = vmatpush.bf16.msra.mxu0 %v932
    %2241 = vmatpush.bf16.msra.mxu0 %v928
    %2242 = vmatpush.bf16.msra.mxu0 %v924
    %2243 = vmatpush.bf16.msra.mxu0 %v920
    %2244 = vmatmul.bf16.gmra.mxu0 %v2234
    %v2245 = vpop.f32.mrf.mxu0
    %v2246 = vadd.f32 %v720, %v2245
    %v2247 = vpop.f32.mrf.mxu0
    %2248 = vdwg.mxu0
    %2249 = vmatpush.bf16.msra.mxu0 %v980
    %2250 = vmatpush.bf16.msra.mxu0 %v976
    %2251 = vmatpush.bf16.msra.mxu0 %v972
    %2252 = vmatpush.bf16.msra.mxu0 %v968
    %2253 = vmatpush.bf16.msra.mxu0 %v964
    %2254 = vmatpush.bf16.msra.mxu0 %v960
    %2255 = vmatpush.bf16.msra.mxu0 %v956
    %2256 = vmatpush.bf16.msra.mxu0 %v952
    %2257 = vmatmul.bf16.gmra.mxu0 %v2235
    %v2258 = vpop.f32.mrf.mxu0
    %v2259 = vadd.f32 %v2246, %v2258
    %v2260 = vpop.f32.mrf.mxu0
    %2261 = vdwg.mxu0
    %2262 = vmatpush.bf16.msra.mxu0 %v949
    %2263 = vmatpush.bf16.msra.mxu0 %v945
    %2264 = vmatpush.bf16.msra.mxu0 %v941
    %2265 = vmatpush.bf16.msra.mxu0 %v937
    %2266 = vmatpush.bf16.msra.mxu0 %v933
    %2267 = vmatpush.bf16.msra.mxu0 %v929
    %2268 = vmatpush.bf16.msra.mxu0 %v925
    %2269 = vmatpush.bf16.msra.mxu0 %v921
    %2270 = vmatmul.bf16.gmra.mxu0 %v2234
    %v2271 = vpop.f32.mrf.mxu0
    %v2272 = vadd.f32 %v721, %v2271
    %v2273 = vpop.f32.mrf.mxu0
    %2274 = vdwg.mxu0
    %2275 = vmatpush.bf16.msra.mxu0 %v981
    %2276 = vmatpush.bf16.msra.mxu0 %v977
    %2277 = vmatpush.bf16.msra.mxu0 %v973
    %2278 = vmatpush.bf16.msra.mxu0 %v969
    %2279 = vmatpush.bf16.msra.mxu0 %v965
    %2280 = vmatpush.bf16.msra.mxu0 %v961
    %2281 = vmatpush.bf16.msra.mxu0 %v957
    %2282 = vmatpush.bf16.msra.mxu0 %v953
    %2283 = vmatmul.bf16.gmra.mxu0 %v2235
    %v2284 = vpop.f32.mrf.mxu0
    %v2285 = vadd.f32 %v2272, %v2284
    %v2286 = vpop.f32.mrf.mxu0
    %2287 = vdwg.mxu0
    %2288 = vmatpush.bf16.msra.mxu0 %v950
    %2289 = vmatpush.bf16.msra.mxu0 %v946
    %2290 = vmatpush.bf16.msra.mxu0 %v942
    %2291 = vmatpush.bf16.msra.mxu0 %v938
    %2292 = vmatpush.bf16.msra.mxu0 %v934
    %2293 = vmatpush.bf16.msra.mxu0 %v930
    %2294 = vmatpush.bf16.msra.mxu0 %v926
    %2295 = vmatpush.bf16.msra.mxu0 %v922
    %2296 = vmatmul.bf16.gmra.mxu0 %v2234
    %v2297 = vpop.f32.mrf.mxu0
    %v2298 = vadd.f32 %v722, %v2297
    %v2299 = vpop.f32.mrf.mxu0
    %2300 = vdwg.mxu0
    %2301 = vmatpush.bf16.msra.mxu0 %v982
    %2302 = vmatpush.bf16.msra.mxu0 %v978
    %2303 = vmatpush.bf16.msra.mxu0 %v974
    %2304 = vmatpush.bf16.msra.mxu0 %v970
    %2305 = vmatpush.bf16.msra.mxu0 %v966
    %2306 = vmatpush.bf16.msra.mxu0 %v962
    %2307 = vmatpush.bf16.msra.mxu0 %v958
    %2308 = vmatpush.bf16.msra.mxu0 %v954
    %2309 = vmatmul.bf16.gmra.mxu0 %v2235
    %v2310 = vpop.f32.mrf.mxu0
    %v2311 = vadd.f32 %v2298, %v2310
    %v2312 = vpop.f32.mrf.mxu0
    %2313 = vdwg.mxu0
    %2314 = vmatpush.bf16.msra.mxu0 %v951
    %2315 = vmatpush.bf16.msra.mxu0 %v947
    %2316 = vmatpush.bf16.msra.mxu0 %v943
    %2317 = vmatpush.bf16.msra.mxu0 %v939
    %2318 = vmatpush.bf16.msra.mxu0 %v935
    %2319 = vmatpush.bf16.msra.mxu0 %v931
    %2320 = vmatpush.bf16.msra.mxu0 %v927
    %2321 = vmatpush.bf16.msra.mxu0 %v923
    %2322 = vmatmul.bf16.gmra.mxu0 %v2234
    %v2323 = vpop.f32.mrf.mxu0
    %v2324 = vadd.f32 %v723, %v2323
    %v2325 = vpop.f32.mrf.mxu0
    %2326 = vdwg.mxu0
    %2327 = vmatpush.bf16.msra.mxu0 %v983
    %2328 = vmatpush.bf16.msra.mxu0 %v979
    %2329 = vmatpush.bf16.msra.mxu0 %v975
    %2330 = vmatpush.bf16.msra.mxu0 %v971
    %2331 = vmatpush.bf16.msra.mxu0 %v967
    %2332 = vmatpush.bf16.msra.mxu0 %v963
    %2333 = vmatpush.bf16.msra.mxu0 %v959
    %2334 = vmatpush.bf16.msra.mxu0 %v955
    %2335 = vmatmul.bf16.gmra.mxu0 %v2235
    %v2336 = vpop.f32.mrf.mxu0
    %v2337 = vadd.f32 %v2324, %v2336
    %v2338 = vpop.f32.mrf.mxu0
    %2339 = vdwg.mxu0
    %v2340 = vmul.f32 %v2259, 0.5
    %v2341 = vtanh.pop %v2340
    %v2342 = vmul.f32 %v2341, 0.5
    %v2343 = vadd.f32 %v2342, 0.5
    %v2344 = vmul.f32 %v2285, 0.5
    %v2345 = vtanh.pop %v2344
    %v2346 = vmul.f32 %v2345, 0.5
    %v2347 = vadd.f32 %v2346, 0.5
    %v2348 = vtanh.pop %v2311
    %v2349 = vmul.f32 %v2337, 0.5
    %v2350 = vtanh.pop %v2349
    %v2351 = vmul.f32 %v2350, 0.5
    %v2352 = vadd.f32 %v2351, 0.5
    %v2353 = vmul.f32 %v2347, %v2157
    %v2354 = vmul.f32 %v2343, %v2348
    %v2355 = vadd.f32 %v2353, %v2354
    %v2356 = vtanh.pop %v2355
    %v2357 = vmul.f32 %v2352, %v2356
    %2358 = vmatpush.bf16.msra.mxu0 %v607
    %2359 = vmatpush.bf16.msra.mxu0 %v603
    %2360 = vmatpush.bf16.msra.mxu0 %v599
    %2361 = vmatpush.bf16.msra.mxu0 %v595
    %2362 = vmatpush.bf16.msra.mxu0 %v591
    %2363 = vmatpush.bf16.msra.mxu0 %v587
    %2364 = vmatpush.bf16.msra.mxu0 %v583
    %2365 = vmatpush.bf16.msra.mxu0 %v579
    %2366 = vmatmul.bf16.gmra.mxu0 %v2234
    %v2367 = vpop.f32.mrf.mxu0
    %v2368 = vadd.f32 0.0, %v2367
    %v2369 = vpop.f32.mrf.mxu0
    %2370 = vdwg.mxu0
    %2371 = vmatpush.bf16.msra.mxu0 %v608
    %2372 = vmatpush.bf16.msra.mxu0 %v604
    %2373 = vmatpush.bf16.msra.mxu0 %v600
    %2374 = vmatpush.bf16.msra.mxu0 %v596
    %2375 = vmatpush.bf16.msra.mxu0 %v592
    %2376 = vmatpush.bf16.msra.mxu0 %v588
    %2377 = vmatpush.bf16.msra.mxu0 %v584
    %2378 = vmatpush.bf16.msra.mxu0 %v580
    %2379 = vmatmul.bf16.gmra.mxu0 %v2234
    %v2380 = vpop.f32.mrf.mxu0
    %v2381 = vadd.f32 0.0, %v2380
    %v2382 = vpop.f32.mrf.mxu0
    %2383 = vdwg.mxu0
    %2384 = vmatpush.bf16.msra.mxu0 %v609
    %2385 = vmatpush.bf16.msra.mxu0 %v605
    %2386 = vmatpush.bf16.msra.mxu0 %v601
    %2387 = vmatpush.bf16.msra.mxu0 %v597
    %2388 = vmatpush.bf16.msra.mxu0 %v593
    %2389 = vmatpush.bf16.msra.mxu0 %v589
    %2390 = vmatpush.bf16.msra.mxu0 %v585
    %2391 = vmatpush.bf16.msra.mxu0 %v581
    %2392 = vmatmul.bf16.gmra.mxu0 %v2234
    %v2393 = vpop.f32.mrf.mxu0
    %v2394 = vadd.f32 0.0, %v2393
    %v2395 = vpop.f32.mrf.mxu0
    %2396 = vdwg.mxu0
    %2397 = vmatpush.bf16.msra.mxu0 %v610
    %2398 = vmatpush.bf16.msra.mxu0 %v606
    %2399 = vmatpush.bf16.msra.mxu0 %v602
    %2400 = vmatpush.bf16.msra.mxu0 %v598
    %2401 = vmatpush.bf16.msra.mxu0 %v594
    %2402 = vmatpush.bf16.msra.mxu0 %v590
    %2403 = vmatpush.bf16.msra.mxu0 %v586
    %2404 = vmatpush.bf16.msra.mxu0 %v582
    %2405 = vmatmul.bf16.gmra.mxu0 %v2234
    %v2406 = vpop.f32.mrf.mxu0
    %v2407 = vadd.f32 0.0, %v2406
    %v2408 = vpop.f32.mrf.mxu0
    %2409 = vdwg.mxu0
    %v2410 = vadd.f32 %v290, %v2368
    %v2411 = vadd.f32 %v319, %v2381
    %v2412 = vadd.f32 %v348, %v2394
    %v2413 = vadd.f32 %v377, %v2407
    %v2414 = vmul.f32 %v2410, 0.5
    %v2415 = vtanh.pop %v2414
    %v2416 = vmul.f32 %v2415, 0.5
    %v2417 = vadd.f32 %v2416, 0.5
    %v2418 = vmul.f32 %v2411, 0.5
    %v2419 = vtanh.pop %v2418
    %v2420 = vmul.f32 %v2419, 0.5
    %v2421 = vadd.f32 %v2420, 0.5
    %v2422 = vtanh.pop %v2412
    %v2423 = vmul.f32 %v2413, 0.5
    %v2424 = vtanh.pop %v2423
    %v2425 = vmul.f32 %v2424, 0.5
    %v2426 = vadd.f32 %v2425, 0.5
    %v2427 = vmul.f32 %v2421, %v2231
    %v2428 = vmul.f32 %v2417, %v2422
    %v2429 = vadd.f32 %v2427, %v2428
    %v2430 = vtanh.pop %v2429
    %v2431 = vmul.f32 %v2426, %v2430
    %v2432 = vpack.c.bf16 %v2431, %v2431
    %v2433 = vpack.c.bf16 %v2357, %v2357
    %2434 = vmatpush.bf16.msra.mxu0 %v948
    %2435 = vmatpush.bf16.msra.mxu0 %v944
    %2436 = vmatpush.bf16.msra.mxu0 %v940
    %2437 = vmatpush.bf16.msra.mxu0 %v936
    %2438 = vmatpush.bf16.msra.mxu0 %v932
    %2439 = vmatpush.bf16.msra.mxu0 %v928
    %2440 = vmatpush.bf16.msra.mxu0 %v924
    %2441 = vmatpush.bf16.msra.mxu0 %v920
    %2442 = vmatmul.bf16.gmra.mxu0 %v2432
    %v2443 = vpop.f32.mrf.mxu0
    %v2444 = vadd.f32 %v720, %v2443
    %v2445 = vpop.f32.mrf.mxu0
    %2446 = vdwg.mxu0
    %2447 = vmatpush.bf16.msra.mxu0 %v980
    %2448 = vmatpush.bf16.msra.mxu0 %v976
    %2449 = vmatpush.bf16.msra.mxu0 %v972
    %2450 = vmatpush.bf16.msra.mxu0 %v968
    %2451 = vmatpush.bf16.msra.mxu0 %v964
    %2452 = vmatpush.bf16.msra.mxu0 %v960
    %2453 = vmatpush.bf16.msra.mxu0 %v956
    %2454 = vmatpush.bf16.msra.mxu0 %v952
    %2455 = vmatmul.bf16.gmra.mxu0 %v2433
    %v2456 = vpop.f32.mrf.mxu0
    %v2457 = vadd.f32 %v2444, %v2456
    %v2458 = vpop.f32.mrf.mxu0
    %2459 = vdwg.mxu0
    %2460 = vmatpush.bf16.msra.mxu0 %v949
    %2461 = vmatpush.bf16.msra.mxu0 %v945
    %2462 = vmatpush.bf16.msra.mxu0 %v941
    %2463 = vmatpush.bf16.msra.mxu0 %v937
    %2464 = vmatpush.bf16.msra.mxu0 %v933
    %2465 = vmatpush.bf16.msra.mxu0 %v929
    %2466 = vmatpush.bf16.msra.mxu0 %v925
    %2467 = vmatpush.bf16.msra.mxu0 %v921
    %2468 = vmatmul.bf16.gmra.mxu0 %v2432
    %v2469 = vpop.f32.mrf.mxu0
    %v2470 = vadd.f32 %v721, %v2469
    %v2471 = vpop.f32.mrf.mxu0
    %2472 = vdwg.mxu0
    %2473 = vmatpush.bf16.msra.mxu0 %v981
    %2474 = vmatpush.bf16.msra.mxu0 %v977
    %2475 = vmatpush.bf16.msra.mxu0 %v973
    %2476 = vmatpush.bf16.msra.mxu0 %v969
    %2477 = vmatpush.bf16.msra.mxu0 %v965
    %2478 = vmatpush.bf16.msra.mxu0 %v961
    %2479 = vmatpush.bf16.msra.mxu0 %v957
    %2480 = vmatpush.bf16.msra.mxu0 %v953
    %2481 = vmatmul.bf16.gmra.mxu0 %v2433
    %v2482 = vpop.f32.mrf.mxu0
    %v2483 = vadd.f32 %v2470, %v2482
    %v2484 = vpop.f32.mrf.mxu0
    %2485 = vdwg.mxu0
    %2486 = vmatpush.bf16.msra.mxu0 %v950
    %2487 = vmatpush.bf16.msra.mxu0 %v946
    %2488 = vmatpush.bf16.msra.mxu0 %v942
    %2489 = vmatpush.bf16.msra.mxu0 %v938
    %2490 = vmatpush.bf16.msra.mxu0 %v934
    %2491 = vmatpush.bf16.msra.mxu0 %v930
    %2492 = vmatpush.bf16.msra.mxu0 %v926
    %2493 = vmatpush.bf16.msra.mxu0 %v922
    %2494 = vmatmul.bf16.gmra.mxu0 %v2432
    %v2495 = vpop.f32.mrf.mxu0
    %v2496 = vadd.f32 %v722, %v2495
    %v2497 = vpop.f32.mrf.mxu0
    %2498 = vdwg.mxu0
    %2499 = vmatpush.bf16.msra.mxu0 %v982
    %2500 = vmatpush.bf16.msra.mxu0 %v978
    %2501 = vmatpush.bf16.msra.mxu0 %v974
    %2502 = vmatpush.bf16.msra.mxu0 %v970
    %2503 = vmatpush.bf16.msra.mxu0 %v966
    %2504 = vmatpush.bf16.msra.mxu0 %v962
    %2505 = vmatpush.bf16.msra.mxu0 %v958
    %2506 = vmatpush.bf16.msra.mxu0 %v954
    %2507 = vmatmul.bf16.gmra.mxu0 %v2433
    %v2508 = vpop.f32.mrf.mxu0
    %v2509 = vadd.f32 %v2496, %v2508
    %v2510 = vpop.f32.mrf.mxu0
    %2511 = vdwg.mxu0
    %2512 = vmatpush.bf16.msra.mxu0 %v951
    %2513 = vmatpush.bf16.msra.mxu0 %v947
    %2514 = vmatpush.bf16.msra.mxu0 %v943
    %2515 = vmatpush.bf16.msra.mxu0 %v939
    %2516 = vmatpush.bf16.msra.mxu0 %v935
    %2517 = vmatpush.bf16.msra.mxu0 %v931
    %2518 = vmatpush.bf16.msra.mxu0 %v927
    %2519 = vmatpush.bf16.msra.mxu0 %v923
    %2520 = vmatmul.bf16.gmra.mxu0 %v2432
    %v2521 = vpop.f32.mrf.mxu0
    %v2522 = vadd.f32 %v723, %v2521
    %v2523 = vpop.f32.mrf.mxu0
    %2524 = vdwg.mxu0
    %2525 = vmatpush.bf16.msra.mxu0 %v983
    %2526 = vmatpush.bf16.msra.mxu0 %v979
    %2527 = vmatpush.bf16.msra.mxu0 %v975
    %2528 = vmatpush.bf16.msra.mxu0 %v971
    %2529 = vmatpush.bf16.msra.mxu0 %v967
    %2530 = vmatpush.bf16.msra.mxu0 %v963
    %2531 = vmatpush.bf16.msra.mxu0 %v959
    %2532 = vmatpush.bf16.msra.mxu0 %v955
    %2533 = vmatmul.bf16.gmra.mxu0 %v2433
    %v2534 = vpop.f32.mrf.mxu0
    %v2535 = vadd.f32 %v2522, %v2534
    %v2536 = vpop.f32.mrf.mxu0
    %2537 = vdwg.mxu0
    %v2538 = vmul.f32 %v2457, 0.5
    %v2539 = vtanh.pop %v2538
    %v2540 = vmul.f32 %v2539, 0.5
    %v2541 = vadd.f32 %v2540, 0.5
    %v2542 = vmul.f32 %v2483, 0.5
    %v2543 = vtanh.pop %v2542
    %v2544 = vmul.f32 %v2543, 0.5
    %v2545 = vadd.f32 %v2544, 0.5
    %v2546 = vtanh.pop %v2509
    %v2547 = vmul.f32 %v2535, 0.5
    %v2548 = vtanh.pop %v2547
    %v2549 = vmul.f32 %v2548, 0.5
    %v2550 = vadd.f32 %v2549, 0.5
    %v2551 = vmul.f32 %v2545, %v2355
    %v2552 = vmul.f32 %v2541, %v2546
    %v2553 = vadd.f32 %v2551, %v2552
    %v2554 = vtanh.pop %v2553
    %v2555 = vmul.f32 %v2550, %v2554
    %2556 = vst [vmem:[#allocation2] sm:$0xff] %v2431
    %2557 = vst [vmem:[#allocation3] sm:$0xff] %v2429
    %2558 = vst [vmem:[%s477] sm:$0xff] %v2555
    %2559 = vst [vmem:[%s480] sm:$0xff] %v2553
    // Predicated region
    $region34: #{seq2seq_head_forward.5} parent=1 // pred_check
      %p2560 = pneg %p41
    $region35: #{seq2seq_head_forward.5} parent=1 // pred_check_branch
      %2562 = sbr.rel (%p2560) target = $region37
    $region36: #{seq2seq_head_forward.5} parent=1 // pred_region
      %v2563 = vld [vmem:[#allocation2] sm:$0xff]
      %v2564 = vld [vmem:[#allocation2 + $0x8] sm:$0xff]
      %2565 = vst [vmem:[%s6] sm:$0xff] %v2563
      %2566 = vst [vmem:[%s6 + $0x8] sm:$0xff] %v2564
      %v2567 = vld [vmem:[#allocation3] sm:$0xff]
      %v2568 = vld [vmem:[#allocation3 + $0x8] sm:$0xff]
      %2569 = vst [vmem:[%s7] sm:$0xff] %v2567
      %2570 = vst [vmem:[%s7 + $0x8] sm:$0xff] %v2568
    $region37: #{seq2seq_head_forward.5} parent=1 // pred_fallthru
      _
    // Predicated region
    $region38: #{seq2seq_head_forward.5} parent=1 // pred_check
      _
    $region39: #{seq2seq_head_forward.5} parent=1 // pred_check_branch
      %2572 = sbr.rel (0) target = $region41
    $region40: #{seq2seq_head_forward.5} parent=1 // pred_region
      _
    $region41: #{seq2seq_head_forward.5} parent=1 // pred_fallthru
      _
    // Predicated region
    $region42: #{seq2seq_head_forward.5} parent=1 // pred_check
      _
    $region43: #{seq2seq_head_forward.5} parent=1 // pred_check_branch
      %2574 = sbr.rel (0) target = $region45
    $region44: #{seq2seq_head_forward.5} parent=1 // pred_region
      _
    $region45: #{seq2seq_head_forward.5} parent=1 // pred_fallthru
      _
    // Predicated region
    $region46: #{seq2seq_head_forward.5} parent=1 // pred_check
      _
    $region47: #{seq2seq_head_forward.5} parent=1 // pred_check_branch
      %2576 = sbr.rel (0) target = $region49
    $region48: #{seq2seq_head_forward.5} parent=1 // pred_region
      _
    $region49: #{seq2seq_head_forward.5} parent=1 // pred_fallthru
      _
    // Predicated region
    $region50: #{seq2seq_head_forward.5} parent=1 // pred_check
      _
    $region51: #{seq2seq_head_forward.5} parent=1 // pred_check_branch
      %2578 = sbr.rel (0) target = $region53
    $region52: #{seq2seq_head_forward.5} parent=1 // pred_region
      _
    $region53: #{seq2seq_head_forward.5} parent=1 // pred_fallthru
      _
    %2579 = vsyncpa [#allocation5], 1

// kernel: seq2seq_head_forward.6
$region0: #{seq2seq_head_forward.6}
  #allocation0 [shape = 'u32[]', space=smem, size = 0x4, offset = 0x4, fixed_abs, tag = 'smem constant byte address 0x4 - core index']
  #allocation1 [shape = 'u32[72,128]{1,0:T(1,128)}', space=vmem, size = 0x9000, scoped, tag = 'internal scratch']
  #allocation2 [shape = 's32[1]{0}', space=sflag, size = 0x4, scoped, tag = 'scoped memory for seq2seq_head_forward.6']
  #allocation3 [shape = 'u8[512]{0}', space=smem, size = 0x200, scoped, tag = 'prefetched SMEM operand 0']
  %s0 = inlined_call_operand.vmem [shape: s32[6], index: 0, kind: input, shape index: {}]
  %s1 = inlined_call_operand.vmem [shape: f32[6,8,128], index: 1, kind: input, shape index: {}]
  %s2 = inlined_call_operand.vmem [shape: f32[2,8,128], index: 2, kind: input, shape index: {}]
  %s3 = inlined_call_operand.vmem [shape: f32[2,8,128], index: 3, kind: input, shape index: {}]
  %s4 = inlined_call_operand.vmem [shape: bf16[128,128], index: 4, kind: input, shape index: {}]
  %s5 = inlined_call_operand.vmem [shape: f32[1,128], index: 5, kind: input, shape index: {}]
  %s6 = inlined_call_operand.hbm [shape: bf16[2,256,512], index: 6, kind: input, shape index: {}]
  %s7 = inlined_call_operand.vmem [shape: f32[2,1,512], index: 7, kind: input, shape index: {}]
  %s8 = inlined_call_operand.vmem [shape: f32[6,8,128], index: 8, kind: output, shape index: {}]
  %s9 = sld [smem:[#allocation0]]
  $region42: #{seq2seq_head_forward.6} parent=0
    _
  %s11 = ssub.s32 1, %s9
  %s12 = scalar_select 0, %s11, %s9
  %s14 = sshll.u32 %s0, 4
  %s15 = int_to_ptr.vmem [resolvable:$true] %s14
  %17 = dma.vmem_to_smem %s15, 16, [#allocation3], [#allocation2]
  %19 = dma.done [#allocation2], 16
  %20 = sfence
  $region1: #{seq2seq_head_forward.6} parent=0
    #allocation4 [shape = 'u8[524288]{0}', space=vmem, size = 0x80000, scoped, tag = 'input window, operand 6, single buffered']
    #allocation5 [shape = 's32[1]{0}', space=sflag, size = 0x4, scoped, tag = 'scoped memory for seq2seq_head_forward.6']
    %21 = vsyncpa [#allocation5], 0
    // Predicated region
    $region2: #{seq2seq_head_forward.6} parent=1 // pred_check
      _
    $region3: #{seq2seq_head_forward.6} parent=1 // pred_check_branch
      %23 = sbr.rel (0) target = $region5
    $region4: #{seq2seq_head_forward.6} parent=1 // pred_region
      _
    $region5: #{seq2seq_head_forward.6} parent=1 // pred_fallthru
      _
    // Predicated region
    $region6: #{seq2seq_head_forward.6} parent=1 // pred_check
      _
    $region7: #{seq2seq_head_forward.6} parent=1 // pred_check_branch
      %25 = sbr.rel (0) target = $region9
    $region8: #{seq2seq_head_forward.6} parent=1 // pred_region
      _
    $region9: #{seq2seq_head_forward.6} parent=1 // pred_fallthru
      _
    // Predicated region
    $region10: #{seq2seq_head_forward.6} parent=1 // pred_check
      _
    $region11: #{seq2seq_head_forward.6} parent=1 // pred_check_branch
      %27 = sbr.rel (0) target = $region13
    $region12: #{seq2seq_head_forward.6} parent=1 // pred_region
      _
    $region13: #{seq2seq_head_forward.6} parent=1 // pred_fallthru
      _
    // Predicated region
    $region14: #{seq2seq_head_forward.6} parent=1 // pred_check
      _
    $region15: #{seq2seq_head_forward.6} parent=1 // pred_check_branch
      %29 = sbr.rel (0) target = $region17
    $region16: #{seq2seq_head_forward.6} parent=1 // pred_region
      _
    $region17: #{seq2seq_head_forward.6} parent=1 // pred_fallthru
      _
    // Predicated region
    $region18: #{seq2seq_head_forward.6} parent=1 // pred_check
      _
    $region19: #{seq2seq_head_forward.6} parent=1 // pred_check_branch
      %31 = sbr.rel (0) target = $region21
    $region20: #{seq2seq_head_forward.6} parent=1 // pred_region
      _
    $region21: #{seq2seq_head_forward.6} parent=1 // pred_fallthru
      _
    // Predicated region
    $region22: #{seq2seq_head_forward.6} parent=1 // pred_check
      _
    $region23: #{seq2seq_head_forward.6} parent=1 // pred_check_branch
      %33 = sbr.rel (0) target = $region25
    $region24: #{seq2seq_head_forward.6} parent=1 // pred_region
      %35 = vsyncadd [#allocation5], 0
      %s36 = sshll.u32 %s6, 4
      %s37 = int_to_ptr.hbm [resolvable:$true] %s36
      %s38 = sshll.u32 [#allocation4], 4
      %s39 = int_to_ptr.vmem [resolvable:$true] %s38
      %44 = dma.hbm_to_vmem [thread:$0]  %s37, 16384, %s39, [#allocation5], 256, 256, 16
    $region25: #{seq2seq_head_forward.6} parent=1 // pred_fallthru
      _
    // Predicated region
    $region26: #{seq2seq_head_forward.6} parent=1 // pred_check
      _
    $region27: #{seq2seq_head_forward.6} parent=1 // pred_check_branch
      %46 = sbr.rel (0) target = $region29
    $region28: #{seq2seq_head_forward.6} parent=1 // pred_region
      _
    $region29: #{seq2seq_head_forward.6} parent=1 // pred_fallthru
      _
    // Predicated region
    $region30: #{seq2seq_head_forward.6} parent=1 // pred_check
      _
    $region31: #{seq2seq_head_forward.6} parent=1 // pred_check_branch
      %48 = sbr.rel (0) target = $region33
    $region32: #{seq2seq_head_forward.6} parent=1 // pred_region
      %50 = dma.done [#allocation5], 16384
    $region33: #{seq2seq_head_forward.6} parent=1 // pred_fallthru
      _
    %v51 = vld [vmem:[%s4] sm:$0xf]
    %v52 = vld [vmem:[%s4 + $0x4] sm:$0xf]
    %v53 = vld [vmem:[%s4 + $0x8] sm:$0xf]
    %v54 = vld [vmem:[%s4 + $0xc] sm:$0xf]
    %v55 = vld [vmem:[%s4 + $0x10] sm:$0xf]
    %v56 = vld [vmem:[%s4 + $0x14] sm:$0xf]
    %v57 = vld [vmem:[%s4 + $0x18] sm:$0xf]
    %v58 = vld [vmem:[%s4 + $0x1c] sm:$0xf]
    %v59 = vld [vmem:[%s4 + $0x20] sm:$0xf]
    %v60 = vld [vmem:[%s4 + $0x24] sm:$0xf]
    %v61 = vld [vmem:[%s4 + $0x28] sm:$0xf]
    %v62 = vld [vmem:[%s4 + $0x2c] sm:$0xf]
    %v63 = vld [vmem:[%s4 + $0x30] sm:$0xf]
    %v64 = vld [vmem:[%s4 + $0x34] sm:$0xf]
    %v65 = vld [vmem:[%s4 + $0x38] sm:$0xf]
    %v66 = vld [vmem:[%s4 + $0x3c] sm:$0xf]
    %v67 = vld [vmem:[%s5] sm:$0x1]
    %v68 = vld [vmem:[#allocation4] sm:$0xff]
    %v69 = vld [vmem:[#allocation4 + $0x8] sm:$0xff]
    %v70 = vld [vmem:[#allocation4 + $0x10] sm:$0xff]
    %v71 = vld [vmem:[#allocation4 + $0x18] sm:$0xff]
    %v72 = vld [vmem:[#allocation4 + $0x20] sm:$0xff]
    %v73 = vld [vmem:[#allocation4 + $0x28] sm:$0xff]
    %v74 = vld [vmem:[#allocation4 + $0x30] sm:$0xff]
    %v75 = vld [vmem:[#allocation4 + $0x38] sm:$0xff]
    %v76 = vld [vmem:[#allocation4 + $0x40] sm:$0xff]
    %v77 = vld [vmem:[#allocation4 + $0x48] sm:$0xff]
    %v78 = vld [vmem:[#allocation4 + $0x50] sm:$0xff]
    %v79 = vld [vmem:[#allocation4 + $0x58] sm:$0xff]
    %v80 = vld [vmem:[#allocation4 + $0x60] sm:$0xff]
    %v81 = vld [vmem:[#allocation4 + $0x68] sm:$0xff]
    %v82 = vld [vmem:[#allocation4 + $0x70] sm:$0xff]
    %v83 = vld [vmem:[#allocation4 + $0x78] sm:$0xff]
    %v84 = vld [vmem:[#allocation4 + $0x80] sm:$0xff]
    %v85 = vld [vmem:[#allocation4 + $0x88] sm:$0xff]
    %v86 = vld [vmem:[#allocation4 + $0x90] sm:$0xff]
    %v87 = vld [vmem:[#allocation4 + $0x98] sm:$0xff]
    %v88 = vld [vmem:[#allocation4 + $0xa0] sm:$0xff]
    %v89 = vld [vmem:[#allocation4 + $0xa8] sm:$0xff]
    %v90 = vld [vmem:[#allocation4 + $0xb0] sm:$0xff]
    %v91 = vld [vmem:[#allocation4 + $0xb8] sm:$0xff]
    %v92 = vld [vmem:[#allocation4 + $0xc0] sm:$0xff]
    %v93 = vld [vmem:[#allocation4 + $0xc8] sm:$0xff]
    %v94 = vld [vmem:[#allocation4 + $0xd0] sm:$0xff]
    %v95 = vld [vmem:[#allocation4 + $0xd8] sm:$0xff]
    %v96 = vld [vmem:[#allocation4 + $0xe0] sm:$0xff]
    %v97 = vld [vmem:[#allocation4 + $0xe8] sm:$0xff]
    %v98 = vld [vmem:[#allocation4 + $0xf0] sm:$0xff]
    %v99 = vld [vmem:[#allocation4 + $0xf8] sm:$0xff]
    %v100 = vld [vmem:[#allocation4 + $0x100] sm:$0xff]
    %v101 = vld [vmem:[#allocation4 + $0x108] sm:$0xff]
    %v102 = vld [vmem:[#allocation4 + $0x110] sm:$0xff]
    %v103 = vld [vmem:[#allocation4 + $0x118] sm:$0xff]
    %v104 = vld [vmem:[#allocation4 + $0x120] sm:$0xff]
    %v105 = vld [vmem:[#allocation4 + $0x128] sm:$0xff]
    %v106 = vld [vmem:[#allocation4 + $0x130] sm:$0xff]
    %v107 = vld [vmem:[#allocation4 + $0x138] sm:$0xff]
    %v108 = vld [vmem:[#allocation4 + $0x140] sm:$0xff]
    %v109 = vld [vmem:[#allocation4 + $0x148] sm:$0xff]
    %v110 = vld [vmem:[#allocation4 + $0x150] sm:$0xff]
    %v111 = vld [vmem:[#allocation4 + $0x158] sm:$0xff]
    %v112 = vld [vmem:[#allocation4 + $0x160] sm:$0xff]
    %v113 = vld [vmem:[#allocation4 + $0x168] sm:$0xff]
    %v114 = vld [vmem:[#allocation4 + $0x170] sm:$0xff]
    %v115 = vld [vmem:[#allocation4 + $0x178] sm:$0xff]
    %v116 = vld [vmem:[#allocation4 + $0x180] sm:$0xff]
    %v117 = vld [vmem:[#allocation4 + $0x188] sm:$0xff]
    %v118 = vld [vmem:[#allocation4 + $0x190] sm:$0xff]
    %v119 = vld [vmem:[#allocation4 + $0x198] sm:$0xff]
    %v120 = vld [vmem:[#allocation4 + $0x1a0] sm:$0xff]
    %v121 = vld [vmem:[#allocation4 + $0x1a8] sm:$0xff]
    %v122 = vld [vmem:[#allocation4 + $0x1b0] sm:$0xff]
    %v123 = vld [vmem:[#allocation4 + $0x1b8] sm:$0xff]
    %v124 = vld [vmem:[#allocation4 + $0x1c0] sm:$0xff]
    %v125 = vld [vmem:[#allocation4 + $0x1c8] sm:$0xff]
    %v126 = vld [vmem:[#allocation4 + $0x1d0] sm:$0xff]
    %v127 = vld [vmem:[#allocation4 + $0x1d8] sm:$0xff]
    %v128 = vld [vmem:[#allocation4 + $0x1e0] sm:$0xff]
    %v129 = vld [vmem:[#allocation4 + $0x1e8] sm:$0xff]
    %v130 = vld [vmem:[#allocation4 + $0x1f0] sm:$0xff]
    %v131 = vld [vmem:[#allocation4 + $0x1f8] sm:$0xff]
    %s132 = scalar_lea.vmem [#allocation4], 512
    %v133 = vld [vmem:[%s132] sm:$0xff]
    %v134 = vld [vmem:[%s132 + $0x8] sm:$0xff]
    %v135 = vld [vmem:[%s132 + $0x10] sm:$0xff]
    %v136 = vld [vmem:[%s132 + $0x18] sm:$0xff]
    %v137 = vld [vmem:[%s132 + $0x20] sm:$0xff]
    %v138 = vld [vmem:[%s132 + $0x28] sm:$0xff]
    %v139 = vld [vmem:[%s132 + $0x30] sm:$0xff]
    %v140 = vld [vmem:[%s132 + $0x38] sm:$0xff]
    %v141 = vld [vmem:[%s132 + $0x40] sm:$0xff]
    %v142 = vld [vmem:[%s132 + $0x48] sm:$0xff]
    %v143 = vld [vmem:[%s132 + $0x50] sm:$0xff]
    %v144 = vld [vmem:[%s132 + $0x58] sm:$0xff]
    %v145 = vld [vmem:[%s132 + $0x60] sm:$0xff]
    %v146 = vld [vmem:[%s132 + $0x68] sm:$0xff]
    %v147 = vld [vmem:[%s132 + $0x70] sm:$0xff]
    %v148 = vld [vmem:[%s132 + $0x78] sm:$0xff]
    %v149 = vld [vmem:[%s132 + $0x80] sm:$0xff]
    %v150 = vld [vmem:[%s132 + $0x88] sm:$0xff]
    %v151 = vld [vmem:[%s132 + $0x90] sm:$0xff]
    %v152 = vld [vmem:[%s132 + $0x98] sm:$0xff]
    %v153 = vld [vmem:[%s132 + $0xa0] sm:$0xff]
    %v154 = vld [vmem:[%s132 + $0xa8] sm:$0xff]
    %v155 = vld [vmem:[%s132 + $0xb0] sm:$0xff]
    %v156 = vld [vmem:[%s132 + $0xb8] sm:$0xff]
    %v157 = vld [vmem:[%s132 + $0xc0] sm:$0xff]
    %v158 = vld [vmem:[%s132 + $0xc8] sm:$0xff]
    %v159 = vld [vmem:[%s132 + $0xd0] sm:$0xff]
    %v160 = vld [vmem:[%s132 + $0xd8] sm:$0xff]
    %v161 = vld [vmem:[%s132 + $0xe0] sm:$0xff]
    %v162 = vld [vmem:[%s132 + $0xe8] sm:$0xff]
    %v163 = vld [vmem:[%s132 + $0xf0] sm:$0xff]
    %v164 = vld [vmem:[%s132 + $0xf8] sm:$0xff]
    %v165 = vld [vmem:[%s132 + $0x100] sm:$0xff]
    %v166 = vld [vmem:[%s132 + $0x108] sm:$0xff]
    %v167 = vld [vmem:[%s132 + $0x110] sm:$0xff]
    %v168 = vld [vmem:[%s132 + $0x118] sm:$0xff]
    %v169 = vld [vmem:[%s132 + $0x120] sm:$0xff]
    %v170 = vld [vmem:[%s132 + $0x128] sm:$0xff]
    %v171 = vld [vmem:[%s132 + $0x130] sm:$0xff]
    %v172 = vld [vmem:[%s132 + $0x138] sm:$0xff]
    %v173 = vld [vmem:[%s132 + $0x140] sm:$0xff]
    %v174 = vld [vmem:[%s132 + $0x148] sm:$0xff]
    %v175 = vld [vmem:[%s132 + $0x150] sm:$0xff]
    %v176 = vld [vmem:[%s132 + $0x158] sm:$0xff]
    %v177 = vld [vmem:[%s132 + $0x160] sm:$0xff]
    %v178 = vld [vmem:[%s132 + $0x168] sm:$0xff]
    %v179 = vld [vmem:[%s132 + $0x170] sm:$0xff]
    %v180 = vld [vmem:[%s132 + $0x178] sm:$0xff]
    %v181 = vld [vmem:[%s132 + $0x180] sm:$0xff]
    %v182 = vld [vmem:[%s132 + $0x188] sm:$0xff]
    %v183 = vld [vmem:[%s132 + $0x190] sm:$0xff]
    %v184 = vld [vmem:[%s132 + $0x198] sm:$0xff]
    %v185 = vld [vmem:[%s132 + $0x1a0] sm:$0xff]
    %v186 = vld [vmem:[%s132 + $0x1a8] sm:$0xff]
    %v187 = vld [vmem:[%s132 + $0x1b0] sm:$0xff]
    %v188 = vld [vmem:[%s132 + $0x1b8] sm:$0xff]
    %v189 = vld [vmem:[%s132 + $0x1c0] sm:$0xff]
    %v190 = vld [vmem:[%s132 + $0x1c8] sm:$0xff]
    %v191 = vld [vmem:[%s132 + $0x1d0] sm:$0xff]
    %v192 = vld [vmem:[%s132 + $0x1d8] sm:$0xff]
    %v193 = vld [vmem:[%s132 + $0x1e0] sm:$0xff]
    %v194 = vld [vmem:[%s132 + $0x1e8] sm:$0xff]
    %v195 = vld [vmem:[%s132 + $0x1f0] sm:$0xff]
    %v196 = vld [vmem:[%s132 + $0x1f8] sm:$0xff]
    %v197 = vld [vmem:[%s7] sm:$0xf]
    %s198 = scalar_lea.vmem %s7, 4
    %v199 = vld [vmem:[%s198] sm:$0xf]
    %v200 = vld [vmem:[%s2] sm:$0xff]
    %s201 = scalar_lea.vmem %s2, 8
    %v202 = vld [vmem:[%s201] sm:$0xff]
    %v203 = vld [vmem:[%s3] sm:$0xff]
    %s204 = scalar_lea.vmem %s3, 8
    %v205 = vld [vmem:[%s204] sm:$0xff]
    %s206 = sld [smem:[#allocation3]]
    %p207 = scmp.ne.s32.totalorder %s206, 0
    %s208 = scalar_select %p207, 1, 0
    %s209 = scvt.s32.f32 %s208
    %v210 = vld [vmem:[%s1] sm:$0xff]
    %v211 = vstv %s209
    %v212 = vmul.f32 %v211, %v210
    %s213 = ssub.f32 1.0, %s209
    %v214 = vstv %s213
    %v215 = vmul.f32 %v214, 0.0
    %v216 = vadd.f32 %v212, %v215
    %v217 = vpack.c.bf16 %v216, %v216
    %v219 = vperm.slane %v67, 0
    %v237 = vunpack.c.l.b16 %v51
    %v238 = vunpack.c.l.b16 %v52
    %v239 = vunpack.c.l.b16 %v53
    %v240 = vunpack.c.l.b16 %v54
    %v241 = vunpack.c.l.b16 %v55
    %v242 = vunpack.c.l.b16 %v56
    %v243 = vunpack.c.l.b16 %v57
    %v244 = vunpack.c.l.b16 %v58
    %v245 = vunpack.c.l.b16 %v59
    %v246 = vunpack.c.l.b16 %v60
    %v247 = vunpack.c.l.b16 %v61
    %v248 = vunpack.c.l.b16 %v62
    %v249 = vunpack.c.l.b16 %v63
    %v250 = vunpack.c.l.b16 %v64
    %v251 = vunpack.c.l.b16 %v65
    %v252 = vunpack.c.l.b16 %v66
    %v253 = vpack.c.b16 %v238, %v237
    %v254 = vpack.c.b16 %v240, %v239
    %v255 = vpack.c.b16 %v242, %v241
    %v256 = vpack.c.b16 %v244, %v243
    %v257 = vpack.c.b16 %v246, %v245
    %v258 = vpack.c.b16 %v248, %v247
    %v259 = vpack.c.b16 %v250, %v249
    %v260 = vpack.c.b16 %v252, %v251
    %269 = vmatpush.bf16.msra.mxu0 %v260
    %270 = vmatpush.bf16.msra.mxu0 %v259
    %271 = vmatpush.bf16.msra.mxu0 %v258
    %272 = vmatpush.bf16.msra.mxu0 %v257
    %273 = vmatpush.bf16.msra.mxu0 %v256
    %274 = vmatpush.bf16.msra.mxu0 %v255
    %275 = vmatpush.bf16.msra.mxu0 %v254
    %276 = vmatpush.bf16.msra.mxu0 %v253
    %277 = vmatmul.bf16.gmra.mxu0 %v217
    %v278 = vpop.f32.mrf.mxu0
    %v279 = vadd.f32 %v219, %v278
    %v280 = vpop.f32.mrf.mxu0
    %281 = vdwg.mxu0
    %v282 = vmax.f32 %v279, 0.0
    %v283 = vpack.c.bf16 %v282, %v282
    %v284 = vpack.c.bf16 %v200, %v200
    %v286 = vperm.slane %v197, 0
    %v287 = vperm.slane %v197, 1
    %v288 = vperm.slane %v197, 2
    %v289 = vperm.slane %v197, 3
    %v358 = vunpack.c.l.b16 %v68
    %v359 = vunpack.c.h.b16 %v68
    %v360 = vunpack.c.l.b16 %v69
    %v361 = vunpack.c.h.b16 %v69
    %v362 = vunpack.c.l.b16 %v70
    %v363 = vunpack.c.h.b16 %v70
    %v364 = vunpack.c.l.b16 %v71
    %v365 = vunpack.c.h.b16 %v71
    %v366 = vunpack.c.l.b16 %v72
    %v367 = vunpack.c.h.b16 %v72
    %v368 = vunpack.c.l.b16 %v73
    %v369 = vunpack.c.h.b16 %v73
    %v370 = vunpack.c.l.b16 %v74
    %v371 = vunpack.c.h.b16 %v74
    %v372 = vunpack.c.l.b16 %v75
    %v373 = vunpack.c.h.b16 %v75
    %v374 = vunpack.c.l.b16 %v76
    %v375 = vunpack.c.h.b16 %v76
    %v376 = vunpack.c.l.b16 %v77
    %v377 = vunpack.c.h.b16 %v77
    %v378 = vunpack.c.l.b16 %v78
    %v379 = vunpack.c.h.b16 %v78
    %v380 = vunpack.c.l.b16 %v79
    %v381 = vunpack.c.h.b16 %v79
    %v382 = vunpack.c.l.b16 %v80
    %v383 = vunpack.c.h.b16 %v80
    %v384 = vunpack.c.l.b16 %v81
    %v385 = vunpack.c.h.b16 %v81
    %v386 = vunpack.c.l.b16 %v82
    %v387 = vunpack.c.h.b16 %v82
    %v388 = vunpack.c.l.b16 %v83
    %v389 = vunpack.c.h.b16 %v83
    %v390 = vunpack.c.l.b16 %v84
    %v391 = vunpack.c.h.b16 %v84
    %v392 = vunpack.c.l.b16 %v85
    %v393 = vunpack.c.h.b16 %v85
    %v394 = vunpack.c.l.b16 %v86
    %v395 = vunpack.c.h.b16 %v86
    %v396 = vunpack.c.l.b16 %v87
    %v397 = vunpack.c.h.b16 %v87
    %v398 = vunpack.c.l.b16 %v88
    %v399 = vunpack.c.h.b16 %v88
    %v400 = vunpack.c.l.b16 %v89
    %v401 = vunpack.c.h.b16 %v89
    %v402 = vunpack.c.l.b16 %v90
    %v403 = vunpack.c.h.b16 %v90
    %v404 = vunpack.c.l.b16 %v91
    %v405 = vunpack.c.h.b16 %v91
    %v406 = vunpack.c.l.b16 %v92
    %v407 = vunpack.c.h.b16 %v92
    %v408 = vunpack.c.l.b16 %v93
    %v409 = vunpack.c.h.b16 %v93
    %v410 = vunpack.c.l.b16 %v94
    %v411 = vunpack.c.h.b16 %v94
    %v412 = vunpack.c.l.b16 %v95
    %v413 = vunpack.c.h.b16 %v95
    %v414 = vunpack.c.l.b16 %v96
    %v415 = vunpack.c.h.b16 %v96
    %v416 = vunpack.c.l.b16 %v97
    %v417 = vunpack.c.h.b16 %v97
    %v418 = vunpack.c.l.b16 %v98
    %v419 = vunpack.c.h.b16 %v98
    %v420 = vunpack.c.l.b16 %v99
    %v421 = vunpack.c.h.b16 %v99
    %v422 = vunpack.c.l.b16 %v100
    %v423 = vunpack.c.h.b16 %v100
    %v424 = vunpack.c.l.b16 %v101
    %v425 = vunpack.c.h.b16 %v101
    %v426 = vunpack.c.l.b16 %v102
    %v427 = vunpack.c.h.b16 %v102
    %v428 = vunpack.c.l.b16 %v103
    %v429 = vunpack.c.h.b16 %v103
    %v430 = vunpack.c.l.b16 %v104
    %v431 = vunpack.c.h.b16 %v104
    %v432 = vunpack.c.l.b16 %v105
    %v433 = vunpack.c.h.b16 %v105
    %v434 = vunpack.c.l.b16 %v106
    %v435 = vunpack.c.h.b16 %v106
    %v436 = vunpack.c.l.b16 %v107
    %v437 = vunpack.c.h.b16 %v107
    %v438 = vunpack.c.l.b16 %v108
    %v439 = vunpack.c.h.b16 %v108
    %v440 = vunpack.c.l.b16 %v109
    %v441 = vunpack.c.h.b16 %v109
    %v442 = vunpack.c.l.b16 %v110
    %v443 = vunpack.c.h.b16 %v110
    %v444 = vunpack.c.l.b16 %v111
    %v445 = vunpack.c.h.b16 %v111
    %v446 = vunpack.c.l.b16 %v112
    %v447 = vunpack.c.h.b16 %v112
    %v448 = vunpack.c.l.b16 %v113
    %v449 = vunpack.c.h.b16 %v113
    %v450 = vunpack.c.l.b16 %v114
    %v451 = vunpack.c.h.b16 %v114
    %v452 = vunpack.c.l.b16 %v115
    %v453 = vunpack.c.h.b16 %v115
    %v454 = vunpack.c.l.b16 %v116
    %v455 = vunpack.c.h.b16 %v116
    %v456 = vunpack.c.l.b16 %v117
    %v457 = vunpack.c.h.b16 %v117
    %v458 = vunpack.c.l.b16 %v118
    %v459 = vunpack.c.h.b16 %v118
    %v460 = vunpack.c.l.b16 %v119
    %v461 = vunpack.c.h.b16 %v119
    %v462 = vunpack.c.l.b16 %v120
    %v463 = vunpack.c.h.b16 %v120
    %v464 = vunpack.c.l.b16 %v121
    %v465 = vunpack.c.h.b16 %v121
    %v466 = vunpack.c.l.b16 %v122
    %v467 = vunpack.c.h.b16 %v122
    %v468 = vunpack.c.l.b16 %v123
    %v469 = vunpack.c.h.b16 %v123
    %v470 = vunpack.c.l.b16 %v124
    %v471 = vunpack.c.h.b16 %v124
    %v472 = vunpack.c.l.b16 %v125
    %v473 = vunpack.c.h.b16 %v125
    %v474 = vunpack.c.l.b16 %v126
    %v475 = vunpack.c.h.b16 %v126
    %v476 = vunpack.c.l.b16 %v127
    %v477 = vunpack.c.h.b16 %v127
    %v478 = vunpack.c.l.b16 %v128
    %v479 = vunpack.c.h.b16 %v128
    %v480 = vunpack.c.l.b16 %v129
    %v481 = vunpack.c.h.b16 %v129
    %v482 = vunpack.c.l.b16 %v130
    %v483 = vunpack.c.h.b16 %v130
    %v484 = vunpack.c.l.b16 %v131
    %v485 = vunpack.c.h.b16 %v131
    %v486 = vpack.c.b16 %v362, %v358
    %v487 = vpack.c.b16 %v363, %v359
    %v488 = vpack.c.b16 %v364, %v360
    %v489 = vpack.c.b16 %v365, %v361
    %v490 = vpack.c.b16 %v370, %v366
    %v491 = vpack.c.b16 %v371, %v367
    %v492 = vpack.c.b16 %v372, %v368
    %v493 = vpack.c.b16 %v373, %v369
    %v494 = vpack.c.b16 %v378, %v374
    %v495 = vpack.c.b16 %v379, %v375
    %v496 = vpack.c.b16 %v380, %v376
    %v497 = vpack.c.b16 %v381, %v377
    %v498 = vpack.c.b16 %v386, %v382
    %v499 = vpack.c.b16 %v387, %v383
    %v500 = vpack.c.b16 %v388, %v384
    %v501 = vpack.c.b16 %v389, %v385
    %v502 = vpack.c.b16 %v394, %v390
    %v503 = vpack.c.b16 %v395, %v391
    %v504 = vpack.c.b16 %v396, %v392
    %v505 = vpack.c.b16 %v397, %v393
    %v506 = vpack.c.b16 %v402, %v398
    %v507 = vpack.c.b16 %v403, %v399
    %v508 = vpack.c.b16 %v404, %v400
    %v509 = vpack.c.b16 %v405, %v401
    %v510 = vpack.c.b16 %v410, %v406
    %v511 = vpack.c.b16 %v411, %v407
    %v512 = vpack.c.b16 %v412, %v408
    %v513 = vpack.c.b16 %v413, %v409
    %v514 = vpack.c.b16 %v418, %v414
    %v515 = vpack.c.b16 %v419, %v415
    %v516 = vpack.c.b16 %v420, %v416
    %v517 = vpack.c.b16 %v421, %v417
    %v518 = vpack.c.b16 %v426, %v422
    %v519 = vpack.c.b16 %v427, %v423
    %v520 = vpack.c.b16 %v428, %v424
    %v521 = vpack.c.b16 %v429, %v425
    %v522 = vpack.c.b16 %v434, %v430
    %v523 = vpack.c.b16 %v435, %v431
    %v524 = vpack.c.b16 %v436, %v432
    %v525 = vpack.c.b16 %v437, %v433
    %v526 = vpack.c.b16 %v442, %v438
    %v527 = vpack.c.b16 %v443, %v439
    %v528 = vpack.c.b16 %v444, %v440
    %v529 = vpack.c.b16 %v445, %v441
    %v530 = vpack.c.b16 %v450, %v446
    %v531 = vpack.c.b16 %v451, %v447
    %v532 = vpack.c.b16 %v452, %v448
    %v533 = vpack.c.b16 %v453, %v449
    %v534 = vpack.c.b16 %v458, %v454
    %v535 = vpack.c.b16 %v459, %v455
    %v536 = vpack.c.b16 %v460, %v456
    %v537 = vpack.c.b16 %v461, %v457
    %v538 = vpack.c.b16 %v466, %v462
    %v539 = vpack.c.b16 %v467, %v463
    %v540 = vpack.c.b16 %v468, %v464
    %v541 = vpack.c.b16 %v469, %v465
    %v542 = vpack.c.b16 %v474, %v470
    %v543 = vpack.c.b16 %v475, %v471
    %v544 = vpack.c.b16 %v476, %v472
    %v545 = vpack.c.b16 %v477, %v473
    %v546 = vpack.c.b16 %v482, %v478
    %v547 = vpack.c.b16 %v483, %v479
    %v548 = vpack.c.b16 %v484, %v480
    %v549 = vpack.c.b16 %v485, %v481
    %614 = vmatpush.bf16.msra.mxu0 %v514
    %615 = vmatpush.bf16.msra.mxu0 %v510
    %616 = vmatpush.bf16.msra.mxu0 %v506
    %617 = vmatpush.bf16.msra.mxu0 %v502
    %618 = vmatpush.bf16.msra.mxu0 %v498
    %619 = vmatpush.bf16.msra.mxu0 %v494
    %620 = vmatpush.bf16.msra.mxu0 %v490
    %621 = vmatpush.bf16.msra.mxu0 %v486
    %622 = vmatmul.bf16.gmra.mxu0 %v283
    %v623 = vpop.f32.mrf.mxu0
    %v624 = vadd.f32 %v286, %v623
    %v625 = vpop.f32.mrf.mxu0
    %626 = vdwg.mxu0
    %627 = vmatpush.bf16.msra.mxu0 %v546
    %628 = vmatpush.bf16.msra.mxu0 %v542
    %629 = vmatpush.bf16.msra.mxu0 %v538
    %630 = vmatpush.bf16.msra.mxu0 %v534
    %631 = vmatpush.bf16.msra.mxu0 %v530
    %632 = vmatpush.bf16.msra.mxu0 %v526
    %633 = vmatpush.bf16.msra.mxu0 %v522
    %634 = vmatpush.bf16.msra.mxu0 %v518
    %635 = vmatmul.bf16.gmra.mxu0 %v284
    %v636 = vpop.f32.mrf.mxu0
    %v637 = vadd.f32 %v624, %v636
    %v638 = vpop.f32.mrf.mxu0
    %639 = vdwg.mxu0
    %640 = vmatpush.bf16.msra.mxu0 %v515
    %641 = vmatpush.bf16.msra.mxu0 %v511
    %642 = vmatpush.bf16.msra.mxu0 %v507
    %643 = vmatpush.bf16.msra.mxu0 %v503
    %644 = vmatpush.bf16.msra.mxu0 %v499
    %645 = vmatpush.bf16.msra.mxu0 %v495
    %646 = vmatpush.bf16.msra.mxu0 %v491
    %647 = vmatpush.bf16.msra.mxu0 %v487
    %648 = vmatmul.bf16.gmra.mxu0 %v283
    %v649 = vpop.f32.mrf.mxu0
    %v650 = vadd.f32 %v287, %v649
    %v651 = vpop.f32.mrf.mxu0
    %652 = vdwg.mxu0
    %653 = vmatpush.bf16.msra.mxu0 %v547
    %654 = vmatpush.bf16.msra.mxu0 %v543
    %655 = vmatpush.bf16.msra.mxu0 %v539
    %656 = vmatpush.bf16.msra.mxu0 %v535
    %657 = vmatpush.bf16.msra.mxu0 %v531
    %658 = vmatpush.bf16.msra.mxu0 %v527
    %659 = vmatpush.bf16.msra.mxu0 %v523
    %660 = vmatpush.bf16.msra.mxu0 %v519
    %661 = vmatmul.bf16.gmra.mxu0 %v284
    %v662 = vpop.f32.mrf.mxu0
    %v663 = vadd.f32 %v650, %v662
    %v664 = vpop.f32.mrf.mxu0
    %665 = vdwg.mxu0
    %666 = vmatpush.bf16.msra.mxu0 %v516
    %667 = vmatpush.bf16.msra.mxu0 %v512
    %668 = vmatpush.bf16.msra.mxu0 %v508
    %669 = vmatpush.bf16.msra.mxu0 %v504
    %670 = vmatpush.bf16.msra.mxu0 %v500
    %671 = vmatpush.bf16.msra.mxu0 %v496
    %672 = vmatpush.bf16.msra.mxu0 %v492
    %673 = vmatpush.bf16.msra.mxu0 %v488
    %674 = vmatmul.bf16.gmra.mxu0 %v283
    %v675 = vpop.f32.mrf.mxu0
    %v676 = vadd.f32 %v288, %v675
    %v677 = vpop.f32.mrf.mxu0
    %678 = vdwg.mxu0
    %679 = vmatpush.bf16.msra.mxu0 %v548
    %680 = vmatpush.bf16.msra.mxu0 %v544
    %681 = vmatpush.bf16.msra.mxu0 %v540
    %682 = vmatpush.bf16.msra.mxu0 %v536
    %683 = vmatpush.bf16.msra.mxu0 %v532
    %684 = vmatpush.bf16.msra.mxu0 %v528
    %685 = vmatpush.bf16.msra.mxu0 %v524
    %686 = vmatpush.bf16.msra.mxu0 %v520
    %687 = vmatmul.bf16.gmra.mxu0 %v284
    %v688 = vpop.f32.mrf.mxu0
    %v689 = vadd.f32 %v676, %v688
    %v690 = vpop.f32.mrf.mxu0
    %691 = vdwg.mxu0
    %692 = vmatpush.bf16.msra.mxu0 %v517
    %693 = vmatpush.bf16.msra.mxu0 %v513
    %694 = vmatpush.bf16.msra.mxu0 %v509
    %695 = vmatpush.bf16.msra.mxu0 %v505
    %696 = vmatpush.bf16.msra.mxu0 %v501
    %697 = vmatpush.bf16.msra.mxu0 %v497
    %698 = vmatpush.bf16.msra.mxu0 %v493
    %699 = vmatpush.bf16.msra.mxu0 %v489
    %700 = vmatmul.bf16.gmra.mxu0 %v283
    %v701 = vpop.f32.mrf.mxu0
    %v702 = vadd.f32 %v289, %v701
    %v703 = vpop.f32.mrf.mxu0
    %704 = vdwg.mxu0
    %705 = vmatpush.bf16.msra.mxu0 %v549
    %706 = vmatpush.bf16.msra.mxu0 %v545
    %707 = vmatpush.bf16.msra.mxu0 %v541
    %708 = vmatpush.bf16.msra.mxu0 %v537
    %709 = vmatpush.bf16.msra.mxu0 %v533
    %710 = vmatpush.bf16.msra.mxu0 %v529
    %711 = vmatpush.bf16.msra.mxu0 %v525
    %712 = vmatpush.bf16.msra.mxu0 %v521
    %713 = vmatmul.bf16.gmra.mxu0 %v284
    %v714 = vpop.f32.mrf.mxu0
    %v715 = vadd.f32 %v702, %v714
    %v716 = vpop.f32.mrf.mxu0
    %717 = vdwg.mxu0
    %v718 = vmul.f32 %v637, 0.5
    %v719 = vtanh.pop %v718
    %v720 = vmul.f32 %v719, 0.5
    %v721 = vadd.f32 %v720, 0.5
    %v722 = vmul.f32 %v663, 0.5
    %v723 = vtanh.pop %v722
    %v724 = vmul.f32 %v723, 0.5
    %v725 = vadd.f32 %v724, 0.5
    %v726 = vtanh.pop %v689
    %v727 = vmul.f32 %v715, 0.5
    %v728 = vtanh.pop %v727
    %v729 = vmul.f32 %v728, 0.5
    %v730 = vadd.f32 %v729, 0.5
    %v731 = vmul.f32 %v725, %v203
    %v732 = vmul.f32 %v721, %v726
    %v733 = vadd.f32 %v731, %v732
    %v734 = vtanh.pop %v733
    %v735 = vmul.f32 %v730, %v734
    %v736 = vpack.c.bf16 %v735, %v735
    %v737 = vpack.c.bf16 %v202, %v202
    %v739 = vperm.slane %v199, 0
    %v740 = vperm.slane %v199, 1
    %v741 = vperm.slane %v199, 2
    %v742 = vperm.slane %v199, 3
    %v811 = vunpack.c.l.b16 %v133
    %v812 = vunpack.c.h.b16 %v133
    %v813 = vunpack.c.l.b16 %v134
    %v814 = vunpack.c.h.b16 %v134
    %v815 = vunpack.c.l.b16 %v135
    %v816 = vunpack.c.h.b16 %v135
    %v817 = vunpack.c.l.b16 %v136
    %v818 = vunpack.c.h.b16 %v136
    %v819 = vunpack.c.l.b16 %v137
    %v820 = vunpack.c.h.b16 %v137
    %v821 = vunpack.c.l.b16 %v138
    %v822 = vunpack.c.h.b16 %v138
    %v823 = vunpack.c.l.b16 %v139
    %v824 = vunpack.c.h.b16 %v139
    %v825 = vunpack.c.l.b16 %v140
    %v826 = vunpack.c.h.b16 %v140
    %v827 = vunpack.c.l.b16 %v141
    %v828 = vunpack.c.h.b16 %v141
    %v829 = vunpack.c.l.b16 %v142
    %v830 = vunpack.c.h.b16 %v142
    %v831 = vunpack.c.l.b16 %v143
    %v832 = vunpack.c.h.b16 %v143
    %v833 = vunpack.c.l.b16 %v144
    %v834 = vunpack.c.h.b16 %v144
    %v835 = vunpack.c.l.b16 %v145
    %v836 = vunpack.c.h.b16 %v145
    %v837 = vunpack.c.l.b16 %v146
    %v838 = vunpack.c.h.b16 %v146
    %v839 = vunpack.c.l.b16 %v147
    %v840 = vunpack.c.h.b16 %v147
    %v841 = vunpack.c.l.b16 %v148
    %v842 = vunpack.c.h.b16 %v148
    %v843 = vunpack.c.l.b16 %v149
    %v844 = vunpack.c.h.b16 %v149
    %v845 = vunpack.c.l.b16 %v150
    %v846 = vunpack.c.h.b16 %v150
    %v847 = vunpack.c.l.b16 %v151
    %v848 = vunpack.c.h.b16 %v151
    %v849 = vunpack.c.l.b16 %v152
    %v850 = vunpack.c.h.b16 %v152
    %v851 = vunpack.c.l.b16 %v153
    %v852 = vunpack.c.h.b16 %v153
    %v853 = vunpack.c.l.b16 %v154
    %v854 = vunpack.c.h.b16 %v154
    %v855 = vunpack.c.l.b16 %v155
    %v856 = vunpack.c.h.b16 %v155
    %v857 = vunpack.c.l.b16 %v156
    %v858 = vunpack.c.h.b16 %v156
    %v859 = vunpack.c.l.b16 %v157
    %v860 = vunpack.c.h.b16 %v157
    %v861 = vunpack.c.l.b16 %v158
    %v862 = vunpack.c.h.b16 %v158
    %v863 = vunpack.c.l.b16 %v159
    %v864 = vunpack.c.h.b16 %v159
    %v865 = vunpack.c.l.b16 %v160
    %v866 = vunpack.c.h.b16 %v160
    %v867 = vunpack.c.l.b16 %v161
    %v868 = vunpack.c.h.b16 %v161
    %v869 = vunpack.c.l.b16 %v162
    %v870 = vunpack.c.h.b16 %v162
    %v871 = vunpack.c.l.b16 %v163
    %v872 = vunpack.c.h.b16 %v163
    %v873 = vunpack.c.l.b16 %v164
    %v874 = vunpack.c.h.b16 %v164
    %v875 = vunpack.c.l.b16 %v165
    %v876 = vunpack.c.h.b16 %v165
    %v877 = vunpack.c.l.b16 %v166
    %v878 = vunpack.c.h.b16 %v166
    %v879 = vunpack.c.l.b16 %v167
    %v880 = vunpack.c.h.b16 %v167
    %v881 = vunpack.c.l.b16 %v168
    %v882 = vunpack.c.h.b16 %v168
    %v883 = vunpack.c.l.b16 %v169
    %v884 = vunpack.c.h.b16 %v169
    %v885 = vunpack.c.l.b16 %v170
    %v886 = vunpack.c.h.b16 %v170
    %v887 = vunpack.c.l.b16 %v171
    %v888 = vunpack.c.h.b16 %v171
    %v889 = vunpack.c.l.b16 %v172
    %v890 = vunpack.c.h.b16 %v172
    %v891 = vunpack.c.l.b16 %v173
    %v892 = vunpack.c.h.b16 %v173
    %v893 = vunpack.c.l.b16 %v174
    %v894 = vunpack.c.h.b16 %v174
    %v895 = vunpack.c.l.b16 %v175
    %v896 = vunpack.c.h.b16 %v175
    %v897 = vunpack.c.l.b16 %v176
    %v898 = vunpack.c.h.b16 %v176
    %v899 = vunpack.c.l.b16 %v177
    %v900 = vunpack.c.h.b16 %v177
    %v901 = vunpack.c.l.b16 %v178
    %v902 = vunpack.c.h.b16 %v178
    %v903 = vunpack.c.l.b16 %v179
    %v904 = vunpack.c.h.b16 %v179
    %v905 = vunpack.c.l.b16 %v180
    %v906 = vunpack.c.h.b16 %v180
    %v907 = vunpack.c.l.b16 %v181
    %v908 = vunpack.c.h.b16 %v181
    %v909 = vunpack.c.l.b16 %v182
    %v910 = vunpack.c.h.b16 %v182
    %v911 = vunpack.c.l.b16 %v183
    %v912 = vunpack.c.h.b16 %v183
    %v913 = vunpack.c.l.b16 %v184
    %v914 = vunpack.c.h.b16 %v184
    %v915 = vunpack.c.l.b16 %v185
    %v916 = vunpack.c.h.b16 %v185
    %v917 = vunpack.c.l.b16 %v186
    %v918 = vunpack.c.h.b16 %v186
    %v919 = vunpack.c.l.b16 %v187
    %v920 = vunpack.c.h.b16 %v187
    %v921 = vunpack.c.l.b16 %v188
    %v922 = vunpack.c.h.b16 %v188
    %v923 = vunpack.c.l.b16 %v189
    %v924 = vunpack.c.h.b16 %v189
    %v925 = vunpack.c.l.b16 %v190
    %v926 = vunpack.c.h.b16 %v190
    %v927 = vunpack.c.l.b16 %v191
    %v928 = vunpack.c.h.b16 %v191
    %v929 = vunpack.c.l.b16 %v192
    %v930 = vunpack.c.h.b16 %v192
    %v931 = vunpack.c.l.b16 %v193
    %v932 = vunpack.c.h.b16 %v193
    %v933 = vunpack.c.l.b16 %v194
    %v934 = vunpack.c.h.b16 %v194
    %v935 = vunpack.c.l.b16 %v195
    %v936 = vunpack.c.h.b16 %v195
    %v937 = vunpack.c.l.b16 %v196
    %v938 = vunpack.c.h.b16 %v196
    %v939 = vpack.c.b16 %v815, %v811
    %v940 = vpack.c.b16 %v816, %v812
    %v941 = vpack.c.b16 %v817, %v813
    %v942 = vpack.c.b16 %v818, %v814
    %v943 = vpack.c.b16 %v823, %v819
    %v944 = vpack.c.b16 %v824, %v820
    %v945 = vpack.c.b16 %v825, %v821
    %v946 = vpack.c.b16 %v826, %v822
    %v947 = vpack.c.b16 %v831, %v827
    %v948 = vpack.c.b16 %v832, %v828
    %v949 = vpack.c.b16 %v833, %v829
    %v950 = vpack.c.b16 %v834, %v830
    %v951 = vpack.c.b16 %v839, %v835
    %v952 = vpack.c.b16 %v840, %v836
    %v953 = vpack.c.b16 %v841, %v837
    %v954 = vpack.c.b16 %v842, %v838
    %v955 = vpack.c.b16 %v847, %v843
    %v956 = vpack.c.b16 %v848, %v844
    %v957 = vpack.c.b16 %v849, %v845
    %v958 = vpack.c.b16 %v850, %v846
    %v959 = vpack.c.b16 %v855, %v851
    %v960 = vpack.c.b16 %v856, %v852
    %v961 = vpack.c.b16 %v857, %v853
    %v962 = vpack.c.b16 %v858, %v854
    %v963 = vpack.c.b16 %v863, %v859
    %v964 = vpack.c.b16 %v864, %v860
    %v965 = vpack.c.b16 %v865, %v861
    %v966 = vpack.c.b16 %v866, %v862
    %v967 = vpack.c.b16 %v871, %v867
    %v968 = vpack.c.b16 %v872, %v868
    %v969 = vpack.c.b16 %v873, %v869
    %v970 = vpack.c.b16 %v874, %v870
    %v971 = vpack.c.b16 %v879, %v875
    %v972 = vpack.c.b16 %v880, %v876
    %v973 = vpack.c.b16 %v881, %v877
    %v974 = vpack.c.b16 %v882, %v878
    %v975 = vpack.c.b16 %v887, %v883
    %v976 = vpack.c.b16 %v888, %v884
    %v977 = vpack.c.b16 %v889, %v885
    %v978 = vpack.c.b16 %v890, %v886
    %v979 = vpack.c.b16 %v895, %v891
    %v980 = vpack.c.b16 %v896, %v892
    %v981 = vpack.c.b16 %v897, %v893
    %v982 = vpack.c.b16 %v898, %v894
    %v983 = vpack.c.b16 %v903, %v899
    %v984 = vpack.c.b16 %v904, %v900
    %v985 = vpack.c.b16 %v905, %v901
    %v986 = vpack.c.b16 %v906, %v902
    %v987 = vpack.c.b16 %v911, %v907
    %v988 = vpack.c.b16 %v912, %v908
    %v989 = vpack.c.b16 %v913, %v909
    %v990 = vpack.c.b16 %v914, %v910
    %v991 = vpack.c.b16 %v919, %v915
    %v992 = vpack.c.b16 %v920, %v916
    %v993 = vpack.c.b16 %v921, %v917
    %v994 = vpack.c.b16 %v922, %v918
    %v995 = vpack.c.b16 %v927, %v923
    %v996 = vpack.c.b16 %v928, %v924
    %v997 = vpack.c.b16 %v929, %v925
    %v998 = vpack.c.b16 %v930, %v926
    %v999 = vpack.c.b16 %v935, %v931
    %v1000 = vpack.c.b16 %v936, %v932
    %v1001 = vpack.c.b16 %v937, %v933
    %v1002 = vpack.c.b16 %v938, %v934
    %1067 = vmatpush.bf16.msra.mxu0 %v967
    %1068 = vmatpush.bf16.msra.mxu0 %v963
    %1069 = vmatpush.bf16.msra.mxu0 %v959
    %1070 = vmatpush.bf16.msra.mxu0 %v955
    %1071 = vmatpush.bf16.msra.mxu0 %v951
    %1072 = vmatpush.bf16.msra.mxu0 %v947
    %1073 = vmatpush.bf16.msra.mxu0 %v943
    %1074 = vmatpush.bf16.msra.mxu0 %v939
    %1075 = vmatmul.bf16.gmra.mxu0 %v736
    %v1076 = vpop.f32.mrf.mxu0
    %v1077 = vadd.f32 %v739, %v1076
    %v1078 = vpop.f32.mrf.mxu0
    %1079 = vdwg.mxu0
    %1080 = vmatpush.bf16.msra.mxu0 %v999
    %1081 = vmatpush.bf16.msra.mxu0 %v995
    %1082 = vmatpush.bf16.msra.mxu0 %v991
    %1083 = vmatpush.bf16.msra.mxu0 %v987
    %1084 = vmatpush.bf16.msra.mxu0 %v983
    %1085 = vmatpush.bf16.msra.mxu0 %v979
    %1086 = vmatpush.bf16.msra.mxu0 %v975
    %1087 = vmatpush.bf16.msra.mxu0 %v971
    %1088 = vmatmul.bf16.gmra.mxu0 %v737
    %v1089 = vpop.f32.mrf.mxu0
    %v1090 = vadd.f32 %v1077, %v1089
    %v1091 = vpop.f32.mrf.mxu0
    %1092 = vdwg.mxu0
    %1093 = vmatpush.bf16.msra.mxu0 %v968
    %1094 = vmatpush.bf16.msra.mxu0 %v964
    %1095 = vmatpush.bf16.msra.mxu0 %v960
    %1096 = vmatpush.bf16.msra.mxu0 %v956
    %1097 = vmatpush.bf16.msra.mxu0 %v952
    %1098 = vmatpush.bf16.msra.mxu0 %v948
    %1099 = vmatpush.bf16.msra.mxu0 %v944
    %1100 = vmatpush.bf16.msra.mxu0 %v940
    %1101 = vmatmul.bf16.gmra.mxu0 %v736
    %v1102 = vpop.f32.mrf.mxu0
    %v1103 = vadd.f32 %v740, %v1102
    %v1104 = vpop.f32.mrf.mxu0
    %1105 = vdwg.mxu0
    %1106 = vmatpush.bf16.msra.mxu0 %v1000
    %1107 = vmatpush.bf16.msra.mxu0 %v996
    %1108 = vmatpush.bf16.msra.mxu0 %v992
    %1109 = vmatpush.bf16.msra.mxu0 %v988
    %1110 = vmatpush.bf16.msra.mxu0 %v984
    %1111 = vmatpush.bf16.msra.mxu0 %v980
    %1112 = vmatpush.bf16.msra.mxu0 %v976
    %1113 = vmatpush.bf16.msra.mxu0 %v972
    %1114 = vmatmul.bf16.gmra.mxu0 %v737
    %v1115 = vpop.f32.mrf.mxu0
    %v1116 = vadd.f32 %v1103, %v1115
    %v1117 = vpop.f32.mrf.mxu0
    %1118 = vdwg.mxu0
    %1119 = vmatpush.bf16.msra.mxu0 %v969
    %1120 = vmatpush.bf16.msra.mxu0 %v965
    %1121 = vmatpush.bf16.msra.mxu0 %v961
    %1122 = vmatpush.bf16.msra.mxu0 %v957
    %1123 = vmatpush.bf16.msra.mxu0 %v953
    %1124 = vmatpush.bf16.msra.mxu0 %v949
    %1125 = vmatpush.bf16.msra.mxu0 %v945
    %1126 = vmatpush.bf16.msra.mxu0 %v941
    %1127 = vmatmul.bf16.gmra.mxu0 %v736
    %v1128 = vpop.f32.mrf.mxu0
    %v1129 = vadd.f32 %v741, %v1128
    %v1130 = vpop.f32.mrf.mxu0
    %1131 = vdwg.mxu0
    %1132 = vmatpush.bf16.msra.mxu0 %v1001
    %1133 = vmatpush.bf16.msra.mxu0 %v997
    %1134 = vmatpush.bf16.msra.mxu0 %v993
    %1135 = vmatpush.bf16.msra.mxu0 %v989
    %1136 = vmatpush.bf16.msra.mxu0 %v985
    %1137 = vmatpush.bf16.msra.mxu0 %v981
    %1138 = vmatpush.bf16.msra.mxu0 %v977
    %1139 = vmatpush.bf16.msra.mxu0 %v973
    %1140 = vmatmul.bf16.gmra.mxu0 %v737
    %v1141 = vpop.f32.mrf.mxu0
    %v1142 = vadd.f32 %v1129, %v1141
    %v1143 = vpop.f32.mrf.mxu0
    %1144 = vdwg.mxu0
    %1145 = vmatpush.bf16.msra.mxu0 %v970
    %1146 = vmatpush.bf16.msra.mxu0 %v966
    %1147 = vmatpush.bf16.msra.mxu0 %v962
    %1148 = vmatpush.bf16.msra.mxu0 %v958
    %1149 = vmatpush.bf16.msra.mxu0 %v954
    %1150 = vmatpush.bf16.msra.mxu0 %v950
    %1151 = vmatpush.bf16.msra.mxu0 %v946
    %1152 = vmatpush.bf16.msra.mxu0 %v942
    %1153 = vmatmul.bf16.gmra.mxu0 %v736
    %v1154 = vpop.f32.mrf.mxu0
    %v1155 = vadd.f32 %v742, %v1154
    %v1156 = vpop.f32.mrf.mxu0
    %1157 = vdwg.mxu0
    %1158 = vmatpush.bf16.msra.mxu0 %v1002
    %1159 = vmatpush.bf16.msra.mxu0 %v998
    %1160 = vmatpush.bf16.msra.mxu0 %v994
    %1161 = vmatpush.bf16.msra.mxu0 %v990
    %1162 = vmatpush.bf16.msra.mxu0 %v986
    %1163 = vmatpush.bf16.msra.mxu0 %v982
    %1164 = vmatpush.bf16.msra.mxu0 %v978
    %1165 = vmatpush.bf16.msra.mxu0 %v974
    %1166 = vmatmul.bf16.gmra.mxu0 %v737
    %v1167 = vpop.f32.mrf.mxu0
    %v1168 = vadd.f32 %v1155, %v1167
    %v1169 = vpop.f32.mrf.mxu0
    %1170 = vdwg.mxu0
    %v1171 = vmul.f32 %v1090, 0.5
    %v1172 = vtanh.pop %v1171
    %v1173 = vmul.f32 %v1172, 0.5
    %v1174 = vadd.f32 %v1173, 0.5
    %v1175 = vmul.f32 %v1116, 0.5
    %v1176 = vtanh.pop %v1175
    %v1177 = vmul.f32 %v1176, 0.5
    %v1178 = vadd.f32 %v1177, 0.5
    %v1179 = vtanh.pop %v1142
    %v1180 = vmul.f32 %v1168, 0.5
    %v1181 = vtanh.pop %v1180
    %v1182 = vmul.f32 %v1181, 0.5
    %v1183 = vadd.f32 %v1182, 0.5
    %v1184 = vmul.f32 %v1178, %v205
    %v1185 = vmul.f32 %v1174, %v1179
    %v1186 = vadd.f32 %v1184, %v1185
    %v1187 = vtanh.pop %v1186
    %v1188 = vmul.f32 %v1183, %v1187
    %1189 = vst [vmem:[%s8] sm:$0xff] %v1188
    %s1190 = sld [smem:[#allocation3 + $0x1]]
    %p1191 = scmp.ne.s32.totalorder %s1190, 0
    %s1192 = scalar_select %p1191, 1, 0
    %s1193 = scvt.s32.f32 %s1192
    %s1194 = scalar_lea.vmem %s1, 8
    %v1195 = vld [vmem:[%s1194] sm:$0xff]
    %v1196 = vstv %s1193
    %v1197 = vmul.f32 %v1196, %v1195
    %s1198 = ssub.f32 1.0, %s1193
    %v1199 = vstv %s1198
    %v1200 = vmul.f32 %v1199, %v1188
    %v1201 = vadd.f32 %v1197, %v1200
    %v1202 = vpack.c.bf16 %v1201, %v1201
    %1203 = vmatpush.bf16.msra.mxu0 %v260
    %1204 = vmatpush.bf16.msra.mxu0 %v259
    %1205 = vmatpush.bf16.msra.mxu0 %v258
    %1206 = vmatpush.bf16.msra.mxu0 %v257
    %1207 = vmatpush.bf16.msra.mxu0 %v256
    %1208 = vmatpush.bf16.msra.mxu0 %v255
    %1209 = vmatpush.bf16.msra.mxu0 %v254
    %1210 = vmatpush.bf16.msra.mxu0 %v253
    %1211 = vmatmul.bf16.gmra.mxu0 %v1202
    %v1212 = vpop.f32.mrf.mxu0
    %v1213 = vadd.f32 %v219, %v1212
    %v1214 = vpop.f32.mrf.mxu0
    %1215 = vdwg.mxu0
    %v1216 = vmax.f32 %v1213, 0.0
    %v1217 = vpack.c.bf16 %v1216, %v1216
    %1218 = vmatpush.bf16.msra.mxu0 %v514
    %1219 = vmatpush.bf16.msra.mxu0 %v510
    %1220 = vmatpush.bf16.msra.mxu0 %v506
    %1221 = vmatpush.bf16.msra.mxu0 %v502
    %1222 = vmatpush.bf16.msra.mxu0 %v498
    %1223 = vmatpush.bf16.msra.mxu0 %v494
    %1224 = vmatpush.bf16.msra.mxu0 %v490
    %1225 = vmatpush.bf16.msra.mxu0 %v486
    %1226 = vmatmul.bf16.gmra.mxu0 %v1217
    %v1227 = vpop.f32.mrf.mxu0
    %v1228 = vadd.f32 %v286, %v1227
    %v1229 = vpop.f32.mrf.mxu0
    %1230 = vdwg.mxu0
    %1231 = vmatpush.bf16.msra.mxu0 %v546
    %1232 = vmatpush.bf16.msra.mxu0 %v542
    %1233 = vmatpush.bf16.msra.mxu0 %v538
    %1234 = vmatpush.bf16.msra.mxu0 %v534
    %1235 = vmatpush.bf16.msra.mxu0 %v530
    %1236 = vmatpush.bf16.msra.mxu0 %v526
    %1237 = vmatpush.bf16.msra.mxu0 %v522
    %1238 = vmatpush.bf16.msra.mxu0 %v518
    %1239 = vmatmul.bf16.gmra.mxu0 %v736
    %v1240 = vpop.f32.mrf.mxu0
    %v1241 = vadd.f32 %v1228, %v1240
    %v1242 = vpop.f32.mrf.mxu0
    %1243 = vdwg.mxu0
    %1244 = vmatpush.bf16.msra.mxu0 %v515
    %1245 = vmatpush.bf16.msra.mxu0 %v511
    %1246 = vmatpush.bf16.msra.mxu0 %v507
    %1247 = vmatpush.bf16.msra.mxu0 %v503
    %1248 = vmatpush.bf16.msra.mxu0 %v499
    %1249 = vmatpush.bf16.msra.mxu0 %v495
    %1250 = vmatpush.bf16.msra.mxu0 %v491
    %1251 = vmatpush.bf16.msra.mxu0 %v487
    %1252 = vmatmul.bf16.gmra.mxu0 %v1217
    %v1253 = vpop.f32.mrf.mxu0
    %v1254 = vadd.f32 %v287, %v1253
    %v1255 = vpop.f32.mrf.mxu0
    %1256 = vdwg.mxu0
    %1257 = vmatpush.bf16.msra.mxu0 %v547
    %1258 = vmatpush.bf16.msra.mxu0 %v543
    %1259 = vmatpush.bf16.msra.mxu0 %v539
    %1260 = vmatpush.bf16.msra.mxu0 %v535
    %1261 = vmatpush.bf16.msra.mxu0 %v531
    %1262 = vmatpush.bf16.msra.mxu0 %v527
    %1263 = vmatpush.bf16.msra.mxu0 %v523
    %1264 = vmatpush.bf16.msra.mxu0 %v519
    %1265 = vmatmul.bf16.gmra.mxu0 %v736
    %v1266 = vpop.f32.mrf.mxu0
    %v1267 = vadd.f32 %v1254, %v1266
    %v1268 = vpop.f32.mrf.mxu0
    %1269 = vdwg.mxu0
    %1270 = vmatpush.bf16.msra.mxu0 %v516
    %1271 = vmatpush.bf16.msra.mxu0 %v512
    %1272 = vmatpush.bf16.msra.mxu0 %v508
    %1273 = vmatpush.bf16.msra.mxu0 %v504
    %1274 = vmatpush.bf16.msra.mxu0 %v500
    %1275 = vmatpush.bf16.msra.mxu0 %v496
    %1276 = vmatpush.bf16.msra.mxu0 %v492
    %1277 = vmatpush.bf16.msra.mxu0 %v488
    %1278 = vmatmul.bf16.gmra.mxu0 %v1217
    %v1279 = vpop.f32.mrf.mxu0
    %v1280 = vadd.f32 %v288, %v1279
    %v1281 = vpop.f32.mrf.mxu0
    %1282 = vdwg.mxu0
    %1283 = vmatpush.bf16.msra.mxu0 %v548
    %1284 = vmatpush.bf16.msra.mxu0 %v544
    %1285 = vmatpush.bf16.msra.mxu0 %v540
    %1286 = vmatpush.bf16.msra.mxu0 %v536
    %1287 = vmatpush.bf16.msra.mxu0 %v532
    %1288 = vmatpush.bf16.msra.mxu0 %v528
    %1289 = vmatpush.bf16.msra.mxu0 %v524
    %1290 = vmatpush.bf16.msra.mxu0 %v520
    %1291 = vmatmul.bf16.gmra.mxu0 %v736
    %v1292 = vpop.f32.mrf.mxu0
    %v1293 = vadd.f32 %v1280, %v1292
    %v1294 = vpop.f32.mrf.mxu0
    %1295 = vdwg.mxu0
    %1296 = vmatpush.bf16.msra.mxu0 %v517
    %1297 = vmatpush.bf16.msra.mxu0 %v513
    %1298 = vmatpush.bf16.msra.mxu0 %v509
    %1299 = vmatpush.bf16.msra.mxu0 %v505
    %1300 = vmatpush.bf16.msra.mxu0 %v501
    %1301 = vmatpush.bf16.msra.mxu0 %v497
    %1302 = vmatpush.bf16.msra.mxu0 %v493
    %1303 = vmatpush.bf16.msra.mxu0 %v489
    %1304 = vmatmul.bf16.gmra.mxu0 %v1217
    %v1305 = vpop.f32.mrf.mxu0
    %v1306 = vadd.f32 %v289, %v1305
    %v1307 = vpop.f32.mrf.mxu0
    %1308 = vdwg.mxu0
    %1309 = vmatpush.bf16.msra.mxu0 %v549
    %1310 = vmatpush.bf16.msra.mxu0 %v545
    %1311 = vmatpush.bf16.msra.mxu0 %v541
    %1312 = vmatpush.bf16.msra.mxu0 %v537
    %1313 = vmatpush.bf16.msra.mxu0 %v533
    %1314 = vmatpush.bf16.msra.mxu0 %v529
    %1315 = vmatpush.bf16.msra.mxu0 %v525
    %1316 = vmatpush.bf16.msra.mxu0 %v521
    %1317 = vmatmul.bf16.gmra.mxu0 %v736
    %v1318 = vpop.f32.mrf.mxu0
    %v1319 = vadd.f32 %v1306, %v1318
    %v1320 = vpop.f32.mrf.mxu0
    %1321 = vdwg.mxu0
    %v1322 = vmul.f32 %v1241, 0.5
    %v1323 = vtanh.pop %v1322
    %v1324 = vmul.f32 %v1323, 0.5
    %v1325 = vadd.f32 %v1324, 0.5
    %v1326 = vmul.f32 %v1267, 0.5
    %v1327 = vtanh.pop %v1326
    %v1328 = vmul.f32 %v1327, 0.5
    %v1329 = vadd.f32 %v1328, 0.5
    %v1330 = vtanh.pop %v1293
    %v1331 = vmul.f32 %v1319, 0.5
    %v1332 = vtanh.pop %v1331
    %v1333 = vmul.f32 %v1332, 0.5
    %v1334 = vadd.f32 %v1333, 0.5
    %v1335 = vmul.f32 %v1329, %v733
    %v1336 = vmul.f32 %v1325, %v1330
    %v1337 = vadd.f32 %v1335, %v1336
    %v1338 = vtanh.pop %v1337
    %v1339 = vmul.f32 %v1334, %v1338
    %v1340 = vpack.c.bf16 %v1339, %v1339
    %v1341 = vpack.c.bf16 %v1188, %v1188
    %1342 = vmatpush.bf16.msra.mxu0 %v967
    %1343 = vmatpush.bf16.msra.mxu0 %v963
    %1344 = vmatpush.bf16.msra.mxu0 %v959
    %1345 = vmatpush.bf16.msra.mxu0 %v955
    %1346 = vmatpush.bf16.msra.mxu0 %v951
    %1347 = vmatpush.bf16.msra.mxu0 %v947
    %1348 = vmatpush.bf16.msra.mxu0 %v943
    %1349 = vmatpush.bf16.msra.mxu0 %v939
    %1350 = vmatmul.bf16.gmra.mxu0 %v1340
    %v1351 = vpop.f32.mrf.mxu0
    %v1352 = vadd.f32 %v739, %v1351
    %v1353 = vpop.f32.mrf.mxu0
    %1354 = vdwg.mxu0
    %1355 = vmatpush.bf16.msra.mxu0 %v999
    %1356 = vmatpush.bf16.msra.mxu0 %v995
    %1357 = vmatpush.bf16.msra.mxu0 %v991
    %1358 = vmatpush.bf16.msra.mxu0 %v987
    %1359 = vmatpush.bf16.msra.mxu0 %v983
    %1360 = vmatpush.bf16.msra.mxu0 %v979
    %1361 = vmatpush.bf16.msra.mxu0 %v975
    %1362 = vmatpush.bf16.msra.mxu0 %v971
    %1363 = vmatmul.bf16.gmra.mxu0 %v1341
    %v1364 = vpop.f32.mrf.mxu0
    %v1365 = vadd.f32 %v1352, %v1364
    %v1366 = vpop.f32.mrf.mxu0
    %1367 = vdwg.mxu0
    %1368 = vmatpush.bf16.msra.mxu0 %v968
    %1369 = vmatpush.bf16.msra.mxu0 %v964
    %1370 = vmatpush.bf16.msra.mxu0 %v960
    %1371 = vmatpush.bf16.msra.mxu0 %v956
    %1372 = vmatpush.bf16.msra.mxu0 %v952
    %1373 = vmatpush.bf16.msra.mxu0 %v948
    %1374 = vmatpush.bf16.msra.mxu0 %v944
    %1375 = vmatpush.bf16.msra.mxu0 %v940
    %1376 = vmatmul.bf16.gmra.mxu0 %v1340
    %v1377 = vpop.f32.mrf.mxu0
    %v1378 = vadd.f32 %v740, %v1377
    %v1379 = vpop.f32.mrf.mxu0
    %1380 = vdwg.mxu0
    %1381 = vmatpush.bf16.msra.mxu0 %v1000
    %1382 = vmatpush.bf16.msra.mxu0 %v996
    %1383 = vmatpush.bf16.msra.mxu0 %v992
    %1384 = vmatpush.bf16.msra.mxu0 %v988
    %1385 = vmatpush.bf16.msra.mxu0 %v984
    %1386 = vmatpush.bf16.msra.mxu0 %v980
    %1387 = vmatpush.bf16.msra.mxu0 %v976
    %1388 = vmatpush.bf16.msra.mxu0 %v972
    %1389 = vmatmul.bf16.gmra.mxu0 %v1341
    %v1390 = vpop.f32.mrf.mxu0
    %v1391 = vadd.f32 %v1378, %v1390
    %v1392 = vpop.f32.mrf.mxu0
    %1393 = vdwg.mxu0
    %1394 = vmatpush.bf16.msra.mxu0 %v969
    %1395 = vmatpush.bf16.msra.mxu0 %v965
    %1396 = vmatpush.bf16.msra.mxu0 %v961
    %1397 = vmatpush.bf16.msra.mxu0 %v957
    %1398 = vmatpush.bf16.msra.mxu0 %v953
    %1399 = vmatpush.bf16.msra.mxu0 %v949
    %1400 = vmatpush.bf16.msra.mxu0 %v945
    %1401 = vmatpush.bf16.msra.mxu0 %v941
    %1402 = vmatmul.bf16.gmra.mxu0 %v1340
    %v1403 = vpop.f32.mrf.mxu0
    %v1404 = vadd.f32 %v741, %v1403
    %v1405 = vpop.f32.mrf.mxu0
    %1406 = vdwg.mxu0
    %1407 = vmatpush.bf16.msra.mxu0 %v1001
    %1408 = vmatpush.bf16.msra.mxu0 %v997
    %1409 = vmatpush.bf16.msra.mxu0 %v993
    %1410 = vmatpush.bf16.msra.mxu0 %v989
    %1411 = vmatpush.bf16.msra.mxu0 %v985
    %1412 = vmatpush.bf16.msra.mxu0 %v981
    %1413 = vmatpush.bf16.msra.mxu0 %v977
    %1414 = vmatpush.bf16.msra.mxu0 %v973
    %1415 = vmatmul.bf16.gmra.mxu0 %v1341
    %v1416 = vpop.f32.mrf.mxu0
    %v1417 = vadd.f32 %v1404, %v1416
    %v1418 = vpop.f32.mrf.mxu0
    %1419 = vdwg.mxu0
    %1420 = vmatpush.bf16.msra.mxu0 %v970
    %1421 = vmatpush.bf16.msra.mxu0 %v966
    %1422 = vmatpush.bf16.msra.mxu0 %v962
    %1423 = vmatpush.bf16.msra.mxu0 %v958
    %1424 = vmatpush.bf16.msra.mxu0 %v954
    %1425 = vmatpush.bf16.msra.mxu0 %v950
    %1426 = vmatpush.bf16.msra.mxu0 %v946
    %1427 = vmatpush.bf16.msra.mxu0 %v942
    %1428 = vmatmul.bf16.gmra.mxu0 %v1340
    %v1429 = vpop.f32.mrf.mxu0
    %v1430 = vadd.f32 %v742, %v1429
    %v1431 = vpop.f32.mrf.mxu0
    %1432 = vdwg.mxu0
    %1433 = vmatpush.bf16.msra.mxu0 %v1002
    %1434 = vmatpush.bf16.msra.mxu0 %v998
    %1435 = vmatpush.bf16.msra.mxu0 %v994
    %1436 = vmatpush.bf16.msra.mxu0 %v990
    %1437 = vmatpush.bf16.msra.mxu0 %v986
    %1438 = vmatpush.bf16.msra.mxu0 %v982
    %1439 = vmatpush.bf16.msra.mxu0 %v978
    %1440 = vmatpush.bf16.msra.mxu0 %v974
    %1441 = vmatmul.bf16.gmra.mxu0 %v1341
    %v1442 = vpop.f32.mrf.mxu0
    %v1443 = vadd.f32 %v1430, %v1442
    %v1444 = vpop.f32.mrf.mxu0
    %1445 = vdwg.mxu0
    %v1446 = vmul.f32 %v1365, 0.5
    %v1447 = vtanh.pop %v1446
    %v1448 = vmul.f32 %v1447, 0.5
    %v1449 = vadd.f32 %v1448, 0.5
    %v1450 = vmul.f32 %v1391, 0.5
    %v1451 = vtanh.pop %v1450
    %v1452 = vmul.f32 %v1451, 0.5
    %v1453 = vadd.f32 %v1452, 0.5
    %v1454 = vtanh.pop %v1417
    %v1455 = vmul.f32 %v1443, 0.5
    %v1456 = vtanh.pop %v1455
    %v1457 = vmul.f32 %v1456, 0.5
    %v1458 = vadd.f32 %v1457, 0.5
    %v1459 = vmul.f32 %v1453, %v1186
    %v1460 = vmul.f32 %v1449, %v1454
    %v1461 = vadd.f32 %v1459, %v1460
    %v1462 = vtanh.pop %v1461
    %v1463 = vmul.f32 %v1458, %v1462
    %s1464 = scalar_lea.vmem %s8, 8
    %1465 = vst [vmem:[%s1464] sm:$0xff] %v1463
    %s1466 = sld [smem:[#allocation3 + $0x2]]
    %p1467 = scmp.ne.s32.totalorder %s1466, 0
    %s1468 = scalar_select %p1467, 1, 0
    %s1469 = scvt.s32.f32 %s1468
    %s1470 = scalar_lea.vmem %s1, 16
    %v1471 = vld [vmem:[%s1470] sm:$0xff]
    %v1472 = vstv %s1469
    %v1473 = vmul.f32 %v1472, %v1471
    %s1474 = ssub.f32 1.0, %s1469
    %v1475 = vstv %s1474
    %v1476 = vmul.f32 %v1475, %v1463
    %v1477 = vadd.f32 %v1473, %v1476
    %v1478 = vpack.c.bf16 %v1477, %v1477
    %1479 = vmatpush.bf16.msra.mxu0 %v260
    %1480 = vmatpush.bf16.msra.mxu0 %v259
    %1481 = vmatpush.bf16.msra.mxu0 %v258
    %1482 = vmatpush.bf16.msra.mxu0 %v257
    %1483 = vmatpush.bf16.msra.mxu0 %v256
    %1484 = vmatpush.bf16.msra.mxu0 %v255
    %1485 = vmatpush.bf16.msra.mxu0 %v254
    %1486 = vmatpush.bf16.msra.mxu0 %v253
    %1487 = vmatmul.bf16.gmra.mxu0 %v1478
    %v1488 = vpop.f32.mrf.mxu0
    %v1489 = vadd.f32 %v219, %v1488
    %v1490 = vpop.f32.mrf.mxu0
    %1491 = vdwg.mxu0
    %v1492 = vmax.f32 %v1489, 0.0
    %v1493 = vpack.c.bf16 %v1492, %v1492
    %1494 = vmatpush.bf16.msra.mxu0 %v514
    %1495 = vmatpush.bf16.msra.mxu0 %v510
    %1496 = vmatpush.bf16.msra.mxu0 %v506
    %1497 = vmatpush.bf16.msra.mxu0 %v502
    %1498 = vmatpush.bf16.msra.mxu0 %v498
    %1499 = vmatpush.bf16.msra.mxu0 %v494
    %1500 = vmatpush.bf16.msra.mxu0 %v490
    %1501 = vmatpush.bf16.msra.mxu0 %v486
    %1502 = vmatmul.bf16.gmra.mxu0 %v1493
    %v1503 = vpop.f32.mrf.mxu0
    %v1504 = vadd.f32 %v286, %v1503
    %v1505 = vpop.f32.mrf.mxu0
    %1506 = vdwg.mxu0
    %1507 = vmatpush.bf16.msra.mxu0 %v546
    %1508 = vmatpush.bf16.msra.mxu0 %v542
    %1509 = vmatpush.bf16.msra.mxu0 %v538
    %1510 = vmatpush.bf16.msra.mxu0 %v534
    %1511 = vmatpush.bf16.msra.mxu0 %v530
    %1512 = vmatpush.bf16.msra.mxu0 %v526
    %1513 = vmatpush.bf16.msra.mxu0 %v522
    %1514 = vmatpush.bf16.msra.mxu0 %v518
    %1515 = vmatmul.bf16.gmra.mxu0 %v1340
    %v1516 = vpop.f32.mrf.mxu0
    %v1517 = vadd.f32 %v1504, %v1516
    %v1518 = vpop.f32.mrf.mxu0
    %1519 = vdwg.mxu0
    %1520 = vmatpush.bf16.msra.mxu0 %v515
    %1521 = vmatpush.bf16.msra.mxu0 %v511
    %1522 = vmatpush.bf16.msra.mxu0 %v507
    %1523 = vmatpush.bf16.msra.mxu0 %v503
    %1524 = vmatpush.bf16.msra.mxu0 %v499
    %1525 = vmatpush.bf16.msra.mxu0 %v495
    %1526 = vmatpush.bf16.msra.mxu0 %v491
    %1527 = vmatpush.bf16.msra.mxu0 %v487
    %1528 = vmatmul.bf16.gmra.mxu0 %v1493
    %v1529 = vpop.f32.mrf.mxu0
    %v1530 = vadd.f32 %v287, %v1529
    %v1531 = vpop.f32.mrf.mxu0
    %1532 = vdwg.mxu0
    %1533 = vmatpush.bf16.msra.mxu0 %v547
    %1534 = vmatpush.bf16.msra.mxu0 %v543
    %1535 = vmatpush.bf16.msra.mxu0 %v539
    %1536 = vmatpush.bf16.msra.mxu0 %v535
    %1537 = vmatpush.bf16.msra.mxu0 %v531
    %1538 = vmatpush.bf16.msra.mxu0 %v527
    %1539 = vmatpush.bf16.msra.mxu0 %v523
    %1540 = vmatpush.bf16.msra.mxu0 %v519
    %1541 = vmatmul.bf16.gmra.mxu0 %v1340
    %v1542 = vpop.f32.mrf.mxu0
    %v1543 = vadd.f32 %v1530, %v1542
    %v1544 = vpop.f32.mrf.mxu0
    %1545 = vdwg.mxu0
    %1546 = vmatpush.bf16.msra.mxu0 %v516
    %1547 = vmatpush.bf16.msra.mxu0 %v512
    %1548 = vmatpush.bf16.msra.mxu0 %v508
    %1549 = vmatpush.bf16.msra.mxu0 %v504
    %1550 = vmatpush.bf16.msra.mxu0 %v500
    %1551 = vmatpush.bf16.msra.mxu0 %v496
    %1552 = vmatpush.bf16.msra.mxu0 %v492
    %1553 = vmatpush.bf16.msra.mxu0 %v488
    %1554 = vmatmul.bf16.gmra.mxu0 %v1493
    %v1555 = vpop.f32.mrf.mxu0
    %v1556 = vadd.f32 %v288, %v1555
    %v1557 = vpop.f32.mrf.mxu0
    %1558 = vdwg.mxu0
    %1559 = vmatpush.bf16.msra.mxu0 %v548
    %1560 = vmatpush.bf16.msra.mxu0 %v544
    %1561 = vmatpush.bf16.msra.mxu0 %v540
    %1562 = vmatpush.bf16.msra.mxu0 %v536
    %1563 = vmatpush.bf16.msra.mxu0 %v532
    %1564 = vmatpush.bf16.msra.mxu0 %v528
    %1565 = vmatpush.bf16.msra.mxu0 %v524
    %1566 = vmatpush.bf16.msra.mxu0 %v520
    %1567 = vmatmul.bf16.gmra.mxu0 %v1340
    %v1568 = vpop.f32.mrf.mxu0
    %v1569 = vadd.f32 %v1556, %v1568
    %v1570 = vpop.f32.mrf.mxu0
    %1571 = vdwg.mxu0
    %1572 = vmatpush.bf16.msra.mxu0 %v517
    %1573 = vmatpush.bf16.msra.mxu0 %v513
    %1574 = vmatpush.bf16.msra.mxu0 %v509
    %1575 = vmatpush.bf16.msra.mxu0 %v505
    %1576 = vmatpush.bf16.msra.mxu0 %v501
    %1577 = vmatpush.bf16.msra.mxu0 %v497
    %1578 = vmatpush.bf16.msra.mxu0 %v493
    %1579 = vmatpush.bf16.msra.mxu0 %v489
    %1580 = vmatmul.bf16.gmra.mxu0 %v1493
    %v1581 = vpop.f32.mrf.mxu0
    %v1582 = vadd.f32 %v289, %v1581
    %v1583 = vpop.f32.mrf.mxu0
    %1584 = vdwg.mxu0
    %1585 = vmatpush.bf16.msra.mxu0 %v549
    %1586 = vmatpush.bf16.msra.mxu0 %v545
    %1587 = vmatpush.bf16.msra.mxu0 %v541
    %1588 = vmatpush.bf16.msra.mxu0 %v537
    %1589 = vmatpush.bf16.msra.mxu0 %v533
    %1590 = vmatpush.bf16.msra.mxu0 %v529
    %1591 = vmatpush.bf16.msra.mxu0 %v525
    %1592 = vmatpush.bf16.msra.mxu0 %v521
    %1593 = vmatmul.bf16.gmra.mxu0 %v1340
    %v1594 = vpop.f32.mrf.mxu0
    %v1595 = vadd.f32 %v1582, %v1594
    %v1596 = vpop.f32.mrf.mxu0
    %1597 = vdwg.mxu0
    %v1598 = vmul.f32 %v1517, 0.5
    %v1599 = vtanh.pop %v1598
    %v1600 = vmul.f32 %v1599, 0.5
    %v1601 = vadd.f32 %v1600, 0.5
    %v1602 = vmul.f32 %v1543, 0.5
    %v1603 = vtanh.pop %v1602
    %v1604 = vmul.f32 %v1603, 0.5
    %v1605 = vadd.f32 %v1604, 0.5
    %v1606 = vtanh.pop %v1569
    %v1607 = vmul.f32 %v1595, 0.5
    %v1608 = vtanh.pop %v1607
    %v1609 = vmul.f32 %v1608, 0.5
    %v1610 = vadd.f32 %v1609, 0.5
    %v1611 = vmul.f32 %v1605, %v1337
    %v1612 = vmul.f32 %v1601, %v1606
    %v1613 = vadd.f32 %v1611, %v1612
    %v1614 = vtanh.pop %v1613
    %v1615 = vmul.f32 %v1610, %v1614
    %v1616 = vpack.c.bf16 %v1615, %v1615
    %v1617 = vpack.c.bf16 %v1463, %v1463
    %1618 = vmatpush.bf16.msra.mxu0 %v967
    %1619 = vmatpush.bf16.msra.mxu0 %v963
    %1620 = vmatpush.bf16.msra.mxu0 %v959
    %1621 = vmatpush.bf16.msra.mxu0 %v955
    %1622 = vmatpush.bf16.msra.mxu0 %v951
    %1623 = vmatpush.bf16.msra.mxu0 %v947
    %1624 = vmatpush.bf16.msra.mxu0 %v943
    %1625 = vmatpush.bf16.msra.mxu0 %v939
    %1626 = vmatmul.bf16.gmra.mxu0 %v1616
    %v1627 = vpop.f32.mrf.mxu0
    %v1628 = vadd.f32 %v739, %v1627
    %v1629 = vpop.f32.mrf.mxu0
    %1630 = vdwg.mxu0
    %1631 = vmatpush.bf16.msra.mxu0 %v999
    %1632 = vmatpush.bf16.msra.mxu0 %v995
    %1633 = vmatpush.bf16.msra.mxu0 %v991
    %1634 = vmatpush.bf16.msra.mxu0 %v987
    %1635 = vmatpush.bf16.msra.mxu0 %v983
    %1636 = vmatpush.bf16.msra.mxu0 %v979
    %1637 = vmatpush.bf16.msra.mxu0 %v975
    %1638 = vmatpush.bf16.msra.mxu0 %v971
    %1639 = vmatmul.bf16.gmra.mxu0 %v1617
    %v1640 = vpop.f32.mrf.mxu0
    %v1641 = vadd.f32 %v1628, %v1640
    %v1642 = vpop.f32.mrf.mxu0
    %1643 = vdwg.mxu0
    %1644 = vmatpush.bf16.msra.mxu0 %v968
    %1645 = vmatpush.bf16.msra.mxu0 %v964
    %1646 = vmatpush.bf16.msra.mxu0 %v960
    %1647 = vmatpush.bf16.msra.mxu0 %v956
    %1648 = vmatpush.bf16.msra.mxu0 %v952
    %1649 = vmatpush.bf16.msra.mxu0 %v948
    %1650 = vmatpush.bf16.msra.mxu0 %v944
    %1651 = vmatpush.bf16.msra.mxu0 %v940
    %1652 = vmatmul.bf16.gmra.mxu0 %v1616
    %v1653 = vpop.f32.mrf.mxu0
    %v1654 = vadd.f32 %v740, %v1653
    %v1655 = vpop.f32.mrf.mxu0
    %1656 = vdwg.mxu0
    %1657 = vmatpush.bf16.msra.mxu0 %v1000
    %1658 = vmatpush.bf16.msra.mxu0 %v996
    %1659 = vmatpush.bf16.msra.mxu0 %v992
    %1660 = vmatpush.bf16.msra.mxu0 %v988
    %1661 = vmatpush.bf16.msra.mxu0 %v984
    %1662 = vmatpush.bf16.msra.mxu0 %v980
    %1663 = vmatpush.bf16.msra.mxu0 %v976
    %1664 = vmatpush.bf16.msra.mxu0 %v972
    %1665 = vmatmul.bf16.gmra.mxu0 %v1617
    %v1666 = vpop.f32.mrf.mxu0
    %v1667 = vadd.f32 %v1654, %v1666
    %v1668 = vpop.f32.mrf.mxu0
    %1669 = vdwg.mxu0
    %1670 = vmatpush.bf16.msra.mxu0 %v969
    %1671 = vmatpush.bf16.msra.mxu0 %v965
    %1672 = vmatpush.bf16.msra.mxu0 %v961
    %1673 = vmatpush.bf16.msra.mxu0 %v957
    %1674 = vmatpush.bf16.msra.mxu0 %v953
    %1675 = vmatpush.bf16.msra.mxu0 %v949
    %1676 = vmatpush.bf16.msra.mxu0 %v945
    %1677 = vmatpush.bf16.msra.mxu0 %v941
    %1678 = vmatmul.bf16.gmra.mxu0 %v1616
    %v1679 = vpop.f32.mrf.mxu0
    %v1680 = vadd.f32 %v741, %v1679
    %v1681 = vpop.f32.mrf.mxu0
    %1682 = vdwg.mxu0
    %1683 = vmatpush.bf16.msra.mxu0 %v1001
    %1684 = vmatpush.bf16.msra.mxu0 %v997
    %1685 = vmatpush.bf16.msra.mxu0 %v993
    %1686 = vmatpush.bf16.msra.mxu0 %v989
    %1687 = vmatpush.bf16.msra.mxu0 %v985
    %1688 = vmatpush.bf16.msra.mxu0 %v981
    %1689 = vmatpush.bf16.msra.mxu0 %v977
    %1690 = vmatpush.bf16.msra.mxu0 %v973
    %1691 = vmatmul.bf16.gmra.mxu0 %v1617
    %v1692 = vpop.f32.mrf.mxu0
    %v1693 = vadd.f32 %v1680, %v1692
    %v1694 = vpop.f32.mrf.mxu0
    %1695 = vdwg.mxu0
    %1696 = vmatpush.bf16.msra.mxu0 %v970
    %1697 = vmatpush.bf16.msra.mxu0 %v966
    %1698 = vmatpush.bf16.msra.mxu0 %v962
    %1699 = vmatpush.bf16.msra.mxu0 %v958
    %1700 = vmatpush.bf16.msra.mxu0 %v954
    %1701 = vmatpush.bf16.msra.mxu0 %v950
    %1702 = vmatpush.bf16.msra.mxu0 %v946
    %1703 = vmatpush.bf16.msra.mxu0 %v942
    %1704 = vmatmul.bf16.gmra.mxu0 %v1616
    %v1705 = vpop.f32.mrf.mxu0
    %v1706 = vadd.f32 %v742, %v1705
    %v1707 = vpop.f32.mrf.mxu0
    %1708 = vdwg.mxu0
    %1709 = vmatpush.bf16.msra.mxu0 %v1002
    %1710 = vmatpush.bf16.msra.mxu0 %v998
    %1711 = vmatpush.bf16.msra.mxu0 %v994
    %1712 = vmatpush.bf16.msra.mxu0 %v990
    %1713 = vmatpush.bf16.msra.mxu0 %v986
    %1714 = vmatpush.bf16.msra.mxu0 %v982
    %1715 = vmatpush.bf16.msra.mxu0 %v978
    %1716 = vmatpush.bf16.msra.mxu0 %v974
    %1717 = vmatmul.bf16.gmra.mxu0 %v1617
    %v1718 = vpop.f32.mrf.mxu0
    %v1719 = vadd.f32 %v1706, %v1718
    %v1720 = vpop.f32.mrf.mxu0
    %1721 = vdwg.mxu0
    %v1722 = vmul.f32 %v1641, 0.5
    %v1723 = vtanh.pop %v1722
    %v1724 = vmul.f32 %v1723, 0.5
    %v1725 = vadd.f32 %v1724, 0.5
    %v1726 = vmul.f32 %v1667, 0.5
    %v1727 = vtanh.pop %v1726
    %v1728 = vmul.f32 %v1727, 0.5
    %v1729 = vadd.f32 %v1728, 0.5
    %v1730 = vtanh.pop %v1693
    %v1731 = vmul.f32 %v1719, 0.5
    %v1732 = vtanh.pop %v1731
    %v1733 = vmul.f32 %v1732, 0.5
    %v1734 = vadd.f32 %v1733, 0.5
    %v1735 = vmul.f32 %v1729, %v1461
    %v1736 = vmul.f32 %v1725, %v1730
    %v1737 = vadd.f32 %v1735, %v1736
    %v1738 = vtanh.pop %v1737
    %v1739 = vmul.f32 %v1734, %v1738
    %s1740 = scalar_lea.vmem %s8, 16
    %1741 = vst [vmem:[%s1740] sm:$0xff] %v1739
    %s1742 = sld [smem:[#allocation3 + $0x3]]
    %p1743 = scmp.ne.s32.totalorder %s1742, 0
    %s1744 = scalar_select %p1743, 1, 0
    %s1745 = scvt.s32.f32 %s1744
    %s1746 = scalar_lea.vmem %s1, 24
    %v1747 = vld [vmem:[%s1746] sm:$0xff]
    %v1748 = vstv %s1745
    %v1749 = vmul.f32 %v1748, %v1747
    %s1750 = ssub.f32 1.0, %s1745
    %v1751 = vstv %s1750
    %v1752 = vmul.f32 %v1751, %v1739
    %v1753 = vadd.f32 %v1749, %v1752
    %v1754 = vpack.c.bf16 %v1753, %v1753
    %1755 = vmatpush.bf16.msra.mxu0 %v260
    %1756 = vmatpush.bf16.msra.mxu0 %v259
    %1757 = vmatpush.bf16.msra.mxu0 %v258
    %1758 = vmatpush.bf16.msra.mxu0 %v257
    %1759 = vmatpush.bf16.msra.mxu0 %v256
    %1760 = vmatpush.bf16.msra.mxu0 %v255
    %1761 = vmatpush.bf16.msra.mxu0 %v254
    %1762 = vmatpush.bf16.msra.mxu0 %v253
    %1763 = vmatmul.bf16.gmra.mxu0 %v1754
    %v1764 = vpop.f32.mrf.mxu0
    %v1765 = vadd.f32 %v219, %v1764
    %v1766 = vpop.f32.mrf.mxu0
    %1767 = vdwg.mxu0
    %v1768 = vmax.f32 %v1765, 0.0
    %v1769 = vpack.c.bf16 %v1768, %v1768
    %1770 = vmatpush.bf16.msra.mxu0 %v514
    %1771 = vmatpush.bf16.msra.mxu0 %v510
    %1772 = vmatpush.bf16.msra.mxu0 %v506
    %1773 = vmatpush.bf16.msra.mxu0 %v502
    %1774 = vmatpush.bf16.msra.mxu0 %v498
    %1775 = vmatpush.bf16.msra.mxu0 %v494
    %1776 = vmatpush.bf16.msra.mxu0 %v490
    %1777 = vmatpush.bf16.msra.mxu0 %v486
    %1778 = vmatmul.bf16.gmra.mxu0 %v1769
    %v1779 = vpop.f32.mrf.mxu0
    %v1780 = vadd.f32 %v286, %v1779
    %v1781 = vpop.f32.mrf.mxu0
    %1782 = vdwg.mxu0
    %1783 = vmatpush.bf16.msra.mxu0 %v546
    %1784 = vmatpush.bf16.msra.mxu0 %v542
    %1785 = vmatpush.bf16.msra.mxu0 %v538
    %1786 = vmatpush.bf16.msra.mxu0 %v534
    %1787 = vmatpush.bf16.msra.mxu0 %v530
    %1788 = vmatpush.bf16.msra.mxu0 %v526
    %1789 = vmatpush.bf16.msra.mxu0 %v522
    %1790 = vmatpush.bf16.msra.mxu0 %v518
    %1791 = vmatmul.bf16.gmra.mxu0 %v1616
    %v1792 = vpop.f32.mrf.mxu0
    %v1793 = vadd.f32 %v1780, %v1792
    %v1794 = vpop.f32.mrf.mxu0
    %1795 = vdwg.mxu0
    %1796 = vmatpush.bf16.msra.mxu0 %v515
    %1797 = vmatpush.bf16.msra.mxu0 %v511
    %1798 = vmatpush.bf16.msra.mxu0 %v507
    %1799 = vmatpush.bf16.msra.mxu0 %v503
    %1800 = vmatpush.bf16.msra.mxu0 %v499
    %1801 = vmatpush.bf16.msra.mxu0 %v495
    %1802 = vmatpush.bf16.msra.mxu0 %v491
    %1803 = vmatpush.bf16.msra.mxu0 %v487
    %1804 = vmatmul.bf16.gmra.mxu0 %v1769
    %v1805 = vpop.f32.mrf.mxu0
    %v1806 = vadd.f32 %v287, %v1805
    %v1807 = vpop.f32.mrf.mxu0
    %1808 = vdwg.mxu0
    %1809 = vmatpush.bf16.msra.mxu0 %v547
    %1810 = vmatpush.bf16.msra.mxu0 %v543
    %1811 = vmatpush.bf16.msra.mxu0 %v539
    %1812 = vmatpush.bf16.msra.mxu0 %v535
    %1813 = vmatpush.bf16.msra.mxu0 %v531
    %1814 = vmatpush.bf16.msra.mxu0 %v527
    %1815 = vmatpush.bf16.msra.mxu0 %v523
    %1816 = vmatpush.bf16.msra.mxu0 %v519
    %1817 = vmatmul.bf16.gmra.mxu0 %v1616
    %v1818 = vpop.f32.mrf.mxu0
    %v1819 = vadd.f32 %v1806, %v1818
    %v1820 = vpop.f32.mrf.mxu0
    %1821 = vdwg.mxu0
    %1822 = vmatpush.bf16.msra.mxu0 %v516
    %1823 = vmatpush.bf16.msra.mxu0 %v512
    %1824 = vmatpush.bf16.msra.mxu0 %v508
    %1825 = vmatpush.bf16.msra.mxu0 %v504
    %1826 = vmatpush.bf16.msra.mxu0 %v500
    %1827 = vmatpush.bf16.msra.mxu0 %v496
    %1828 = vmatpush.bf16.msra.mxu0 %v492
    %1829 = vmatpush.bf16.msra.mxu0 %v488
    %1830 = vmatmul.bf16.gmra.mxu0 %v1769
    %v1831 = vpop.f32.mrf.mxu0
    %v1832 = vadd.f32 %v288, %v1831
    %v1833 = vpop.f32.mrf.mxu0
    %1834 = vdwg.mxu0
    %1835 = vmatpush.bf16.msra.mxu0 %v548
    %1836 = vmatpush.bf16.msra.mxu0 %v544
    %1837 = vmatpush.bf16.msra.mxu0 %v540
    %1838 = vmatpush.bf16.msra.mxu0 %v536
    %1839 = vmatpush.bf16.msra.mxu0 %v532
    %1840 = vmatpush.bf16.msra.mxu0 %v528
    %1841 = vmatpush.bf16.msra.mxu0 %v524
    %1842 = vmatpush.bf16.msra.mxu0 %v520
    %1843 = vmatmul.bf16.gmra.mxu0 %v1616
    %v1844 = vpop.f32.mrf.mxu0
    %v1845 = vadd.f32 %v1832, %v1844
    %v1846 = vpop.f32.mrf.mxu0
    %1847 = vdwg.mxu0
    %1848 = vmatpush.bf16.msra.mxu0 %v517
    %1849 = vmatpush.bf16.msra.mxu0 %v513
    %1850 = vmatpush.bf16.msra.mxu0 %v509
    %1851 = vmatpush.bf16.msra.mxu0 %v505
    %1852 = vmatpush.bf16.msra.mxu0 %v501
    %1853 = vmatpush.bf16.msra.mxu0 %v497
    %1854 = vmatpush.bf16.msra.mxu0 %v493
    %1855 = vmatpush.bf16.msra.mxu0 %v489
    %1856 = vmatmul.bf16.gmra.mxu0 %v1769
    %v1857 = vpop.f32.mrf.mxu0
    %v1858 = vadd.f32 %v289, %v1857
    %v1859 = vpop.f32.mrf.mxu0
    %1860 = vdwg.mxu0
    %1861 = vmatpush.bf16.msra.mxu0 %v549
    %1862 = vmatpush.bf16.msra.mxu0 %v545
    %1863 = vmatpush.bf16.msra.mxu0 %v541
    %1864 = vmatpush.bf16.msra.mxu0 %v537
    %1865 = vmatpush.bf16.msra.mxu0 %v533
    %1866 = vmatpush.bf16.msra.mxu0 %v529
    %1867 = vmatpush.bf16.msra.mxu0 %v525
    %1868 = vmatpush.bf16.msra.mxu0 %v521
    %1869 = vmatmul.bf16.gmra.mxu0 %v1616
    %v1870 = vpop.f32.mrf.mxu0
    %v1871 = vadd.f32 %v1858, %v1870
    %v1872 = vpop.f32.mrf.mxu0
    %1873 = vdwg.mxu0
    %v1874 = vmul.f32 %v1793, 0.5
    %v1875 = vtanh.pop %v1874
    %v1876 = vmul.f32 %v1875, 0.5
    %v1877 = vadd.f32 %v1876, 0.5
    %v1878 = vmul.f32 %v1819, 0.5
    %v1879 = vtanh.pop %v1878
    %v1880 = vmul.f32 %v1879, 0.5
    %v1881 = vadd.f32 %v1880, 0.5
    %v1882 = vtanh.pop %v1845
    %v1883 = vmul.f32 %v1871, 0.5
    %v1884 = vtanh.pop %v1883
    %v1885 = vmul.f32 %v1884, 0.5
    %v1886 = vadd.f32 %v1885, 0.5
    %v1887 = vmul.f32 %v1881, %v1613
    %v1888 = vmul.f32 %v1877, %v1882
    %v1889 = vadd.f32 %v1887, %v1888
    %v1890 = vtanh.pop %v1889
    %v1891 = vmul.f32 %v1886, %v1890
    %v1892 = vpack.c.bf16 %v1891, %v1891
    %v1893 = vpack.c.bf16 %v1739, %v1739
    %1894 = vmatpush.bf16.msra.mxu0 %v967
    %1895 = vmatpush.bf16.msra.mxu0 %v963
    %1896 = vmatpush.bf16.msra.mxu0 %v959
    %1897 = vmatpush.bf16.msra.mxu0 %v955
    %1898 = vmatpush.bf16.msra.mxu0 %v951
    %1899 = vmatpush.bf16.msra.mxu0 %v947
    %1900 = vmatpush.bf16.msra.mxu0 %v943
    %1901 = vmatpush.bf16.msra.mxu0 %v939
    %1902 = vmatmul.bf16.gmra.mxu0 %v1892
    %v1903 = vpop.f32.mrf.mxu0
    %v1904 = vadd.f32 %v739, %v1903
    %v1905 = vpop.f32.mrf.mxu0
    %1906 = vdwg.mxu0
    %1907 = vmatpush.bf16.msra.mxu0 %v999
    %1908 = vmatpush.bf16.msra.mxu0 %v995
    %1909 = vmatpush.bf16.msra.mxu0 %v991
    %1910 = vmatpush.bf16.msra.mxu0 %v987
    %1911 = vmatpush.bf16.msra.mxu0 %v983
    %1912 = vmatpush.bf16.msra.mxu0 %v979
    %1913 = vmatpush.bf16.msra.mxu0 %v975
    %1914 = vmatpush.bf16.msra.mxu0 %v971
    %1915 = vmatmul.bf16.gmra.mxu0 %v1893
    %v1916 = vpop.f32.mrf.mxu0
    %v1917 = vadd.f32 %v1904, %v1916
    %v1918 = vpop.f32.mrf.mxu0
    %1919 = vdwg.mxu0
    %1920 = vmatpush.bf16.msra.mxu0 %v968
    %1921 = vmatpush.bf16.msra.mxu0 %v964
    %1922 = vmatpush.bf16.msra.mxu0 %v960
    %1923 = vmatpush.bf16.msra.mxu0 %v956
    %1924 = vmatpush.bf16.msra.mxu0 %v952
    %1925 = vmatpush.bf16.msra.mxu0 %v948
    %1926 = vmatpush.bf16.msra.mxu0 %v944
    %1927 = vmatpush.bf16.msra.mxu0 %v940
    %1928 = vmatmul.bf16.gmra.mxu0 %v1892
    %v1929 = vpop.f32.mrf.mxu0
    %v1930 = vadd.f32 %v740, %v1929
    %v1931 = vpop.f32.mrf.mxu0
    %1932 = vdwg.mxu0
    %1933 = vmatpush.bf16.msra.mxu0 %v1000
    %1934 = vmatpush.bf16.msra.mxu0 %v996
    %1935 = vmatpush.bf16.msra.mxu0 %v992
    %1936 = vmatpush.bf16.msra.mxu0 %v988
    %1937 = vmatpush.bf16.msra.mxu0 %v984
    %1938 = vmatpush.bf16.msra.mxu0 %v980
    %1939 = vmatpush.bf16.msra.mxu0 %v976
    %1940 = vmatpush.bf16.msra.mxu0 %v972
    %1941 = vmatmul.bf16.gmra.mxu0 %v1893
    %v1942 = vpop.f32.mrf.mxu0
    %v1943 = vadd.f32 %v1930, %v1942
    %v1944 = vpop.f32.mrf.mxu0
    %1945 = vdwg.mxu0
    %1946 = vmatpush.bf16.msra.mxu0 %v969
    %1947 = vmatpush.bf16.msra.mxu0 %v965
    %1948 = vmatpush.bf16.msra.mxu0 %v961
    %1949 = vmatpush.bf16.msra.mxu0 %v957
    %1950 = vmatpush.bf16.msra.mxu0 %v953
    %1951 = vmatpush.bf16.msra.mxu0 %v949
    %1952 = vmatpush.bf16.msra.mxu0 %v945
    %1953 = vmatpush.bf16.msra.mxu0 %v941
    %1954 = vmatmul.bf16.gmra.mxu0 %v1892
    %v1955 = vpop.f32.mrf.mxu0
    %v1956 = vadd.f32 %v741, %v1955
    %v1957 = vpop.f32.mrf.mxu0
    %1958 = vdwg.mxu0
    %1959 = vmatpush.bf16.msra.mxu0 %v1001
    %1960 = vmatpush.bf16.msra.mxu0 %v997
    %1961 = vmatpush.bf16.msra.mxu0 %v993
    %1962 = vmatpush.bf16.msra.mxu0 %v989
    %1963 = vmatpush.bf16.msra.mxu0 %v985
    %1964 = vmatpush.bf16.msra.mxu0 %v981
    %1965 = vmatpush.bf16.msra.mxu0 %v977
    %1966 = vmatpush.bf16.msra.mxu0 %v973
    %1967 = vmatmul.bf16.gmra.mxu0 %v1893
    %v1968 = vpop.f32.mrf.mxu0
    %v1969 = vadd.f32 %v1956, %v1968
    %v1970 = vpop.f32.mrf.mxu0
    %1971 = vdwg.mxu0
    %1972 = vmatpush.bf16.msra.mxu0 %v970
    %1973 = vmatpush.bf16.msra.mxu0 %v966
    %1974 = vmatpush.bf16.msra.mxu0 %v962
    %1975 = vmatpush.bf16.msra.mxu0 %v958
    %1976 = vmatpush.bf16.msra.mxu0 %v954
    %1977 = vmatpush.bf16.msra.mxu0 %v950
    %1978 = vmatpush.bf16.msra.mxu0 %v946
    %1979 = vmatpush.bf16.msra.mxu0 %v942
    %1980 = vmatmul.bf16.gmra.mxu0 %v1892
    %v1981 = vpop.f32.mrf.mxu0
    %v1982 = vadd.f32 %v742, %v1981
    %v1983 = vpop.f32.mrf.mxu0
    %1984 = vdwg.mxu0
    %1985 = vmatpush.bf16.msra.mxu0 %v1002
    %1986 = vmatpush.bf16.msra.mxu0 %v998
    %1987 = vmatpush.bf16.msra.mxu0 %v994
    %1988 = vmatpush.bf16.msra.mxu0 %v990
    %1989 = vmatpush.bf16.msra.mxu0 %v986
    %1990 = vmatpush.bf16.msra.mxu0 %v982
    %1991 = vmatpush.bf16.msra.mxu0 %v978
    %1992 = vmatpush.bf16.msra.mxu0 %v974
    %1993 = vmatmul.bf16.gmra.mxu0 %v1893
    %v1994 = vpop.f32.mrf.mxu0
    %v1995 = vadd.f32 %v1982, %v1994
    %v1996 = vpop.f32.mrf.mxu0
    %1997 = vdwg.mxu0
    %v1998 = vmul.f32 %v1917, 0.5
    %v1999 = vtanh.pop %v1998
    %v2000 = vmul.f32 %v1999, 0.5
    %v2001 = vadd.f32 %v2000, 0.5
    %v2002 = vmul.f32 %v1943, 0.5
    %v2003 = vtanh.pop %v2002
    %v2004 = vmul.f32 %v2003, 0.5
    %v2005 = vadd.f32 %v2004, 0.5
    %v2006 = vtanh.pop %v1969
    %v2007 = vmul.f32 %v1995, 0.5
    %v2008 = vtanh.pop %v2007
    %v2009 = vmul.f32 %v2008, 0.5
    %v2010 = vadd.f32 %v2009, 0.5
    %v2011 = vmul.f32 %v2005, %v1737
    %v2012 = vmul.f32 %v2001, %v2006
    %v2013 = vadd.f32 %v2011, %v2012
    %v2014 = vtanh.pop %v2013
    %v2015 = vmul.f32 %v2010, %v2014
    %s2016 = scalar_lea.vmem %s8, 24
    %2017 = vst [vmem:[%s2016] sm:$0xff] %v2015
    %s2018 = sld [smem:[#allocation3 + $0x4]]
    %p2019 = scmp.ne.s32.totalorder %s2018, 0
    %s2020 = scalar_select %p2019, 1, 0
    %s2021 = scvt.s32.f32 %s2020
    %s2022 = scalar_lea.vmem %s1, 32
    %v2023 = vld [vmem:[%s2022] sm:$0xff]
    %v2024 = vstv %s2021
    %v2025 = vmul.f32 %v2024, %v2023
    %s2026 = ssub.f32 1.0, %s2021
    %v2027 = vstv %s2026
    %v2028 = vmul.f32 %v2027, %v2015
    %v2029 = vadd.f32 %v2025, %v2028
    %v2030 = vpack.c.bf16 %v2029, %v2029
    %2031 = vmatpush.bf16.msra.mxu0 %v260
    %2032 = vmatpush.bf16.msra.mxu0 %v259
    %2033 = vmatpush.bf16.msra.mxu0 %v258
    %2034 = vmatpush.bf16.msra.mxu0 %v257
    %2035 = vmatpush.bf16.msra.mxu0 %v256
    %2036 = vmatpush.bf16.msra.mxu0 %v255
    %2037 = vmatpush.bf16.msra.mxu0 %v254
    %2038 = vmatpush.bf16.msra.mxu0 %v253
    %2039 = vmatmul.bf16.gmra.mxu0 %v2030
    %v2040 = vpop.f32.mrf.mxu0
    %v2041 = vadd.f32 %v219, %v2040
    %v2042 = vpop.f32.mrf.mxu0
    %2043 = vdwg.mxu0
    %v2044 = vmax.f32 %v2041, 0.0
    %v2045 = vpack.c.bf16 %v2044, %v2044
    %2046 = vmatpush.bf16.msra.mxu0 %v514
    %2047 = vmatpush.bf16.msra.mxu0 %v510
    %2048 = vmatpush.bf16.msra.mxu0 %v506
    %2049 = vmatpush.bf16.msra.mxu0 %v502
    %2050 = vmatpush.bf16.msra.mxu0 %v498
    %2051 = vmatpush.bf16.msra.mxu0 %v494
    %2052 = vmatpush.bf16.msra.mxu0 %v490
    %2053 = vmatpush.bf16.msra.mxu0 %v486
    %2054 = vmatmul.bf16.gmra.mxu0 %v2045
    %v2055 = vpop.f32.mrf.mxu0
    %v2056 = vadd.f32 %v286, %v2055
    %v2057 = vpop.f32.mrf.mxu0
    %2058 = vdwg.mxu0
    %2059 = vmatpush.bf16.msra.mxu0 %v546
    %2060 = vmatpush.bf16.msra.mxu0 %v542
    %2061 = vmatpush.bf16.msra.mxu0 %v538
    %2062 = vmatpush.bf16.msra.mxu0 %v534
    %2063 = vmatpush.bf16.msra.mxu0 %v530
    %2064 = vmatpush.bf16.msra.mxu0 %v526
    %2065 = vmatpush.bf16.msra.mxu0 %v522
    %2066 = vmatpush.bf16.msra.mxu0 %v518
    %2067 = vmatmul.bf16.gmra.mxu0 %v1892
    %v2068 = vpop.f32.mrf.mxu0
    %v2069 = vadd.f32 %v2056, %v2068
    %v2070 = vpop.f32.mrf.mxu0
    %2071 = vdwg.mxu0
    %2072 = vmatpush.bf16.msra.mxu0 %v515
    %2073 = vmatpush.bf16.msra.mxu0 %v511
    %2074 = vmatpush.bf16.msra.mxu0 %v507
    %2075 = vmatpush.bf16.msra.mxu0 %v503
    %2076 = vmatpush.bf16.msra.mxu0 %v499
    %2077 = vmatpush.bf16.msra.mxu0 %v495
    %2078 = vmatpush.bf16.msra.mxu0 %v491
    %2079 = vmatpush.bf16.msra.mxu0 %v487
    %2080 = vmatmul.bf16.gmra.mxu0 %v2045
    %v2081 = vpop.f32.mrf.mxu0
    %v2082 = vadd.f32 %v287, %v2081
    %v2083 = vpop.f32.mrf.mxu0
    %2084 = vdwg.mxu0
    %2085 = vmatpush.bf16.msra.mxu0 %v547
    %2086 = vmatpush.bf16.msra.mxu0 %v543
    %2087 = vmatpush.bf16.msra.mxu0 %v539
    %2088 = vmatpush.bf16.msra.mxu0 %v535
    %2089 = vmatpush.bf16.msra.mxu0 %v531
    %2090 = vmatpush.bf16.msra.mxu0 %v527
    %2091 = vmatpush.bf16.msra.mxu0 %v523
    %2092 = vmatpush.bf16.msra.mxu0 %v519
    %2093 = vmatmul.bf16.gmra.mxu0 %v1892
    %v2094 = vpop.f32.mrf.mxu0
    %v2095 = vadd.f32 %v2082, %v2094
    %v2096 = vpop.f32.mrf.mxu0
    %2097 = vdwg.mxu0
    %2098 = vmatpush.bf16.msra.mxu0 %v516
    %2099 = vmatpush.bf16.msra.mxu0 %v512
    %2100 = vmatpush.bf16.msra.mxu0 %v508
    %2101 = vmatpush.bf16.msra.mxu0 %v504
    %2102 = vmatpush.bf16.msra.mxu0 %v500
    %2103 = vmatpush.bf16.msra.mxu0 %v496
    %2104 = vmatpush.bf16.msra.mxu0 %v492
    %2105 = vmatpush.bf16.msra.mxu0 %v488
    %2106 = vmatmul.bf16.gmra.mxu0 %v2045
    %v2107 = vpop.f32.mrf.mxu0
    %v2108 = vadd.f32 %v288, %v2107
    %v2109 = vpop.f32.mrf.mxu0
    %2110 = vdwg.mxu0
    %2111 = vmatpush.bf16.msra.mxu0 %v548
    %2112 = vmatpush.bf16.msra.mxu0 %v544
    %2113 = vmatpush.bf16.msra.mxu0 %v540
    %2114 = vmatpush.bf16.msra.mxu0 %v536
    %2115 = vmatpush.bf16.msra.mxu0 %v532
    %2116 = vmatpush.bf16.msra.mxu0 %v528
    %2117 = vmatpush.bf16.msra.mxu0 %v524
    %2118 = vmatpush.bf16.msra.mxu0 %v520
    %2119 = vmatmul.bf16.gmra.mxu0 %v1892
    %v2120 = vpop.f32.mrf.mxu0
    %v2121 = vadd.f32 %v2108, %v2120
    %v2122 = vpop.f32.mrf.mxu0
    %2123 = vdwg.mxu0
    %2124 = vmatpush.bf16.msra.mxu0 %v517
    %2125 = vmatpush.bf16.msra.mxu0 %v513
    %2126 = vmatpush.bf16.msra.mxu0 %v509
    %2127 = vmatpush.bf16.msra.mxu0 %v505
    %2128 = vmatpush.bf16.msra.mxu0 %v501
    %2129 = vmatpush.bf16.msra.mxu0 %v497
    %2130 = vmatpush.bf16.msra.mxu0 %v493
    %2131 = vmatpush.bf16.msra.mxu0 %v489
    %2132 = vmatmul.bf16.gmra.mxu0 %v2045
    %v2133 = vpop.f32.mrf.mxu0
    %v2134 = vadd.f32 %v289, %v2133
    %v2135 = vpop.f32.mrf.mxu0
    %2136 = vdwg.mxu0
    %2137 = vmatpush.bf16.msra.mxu0 %v549
    %2138 = vmatpush.bf16.msra.mxu0 %v545
    %2139 = vmatpush.bf16.msra.mxu0 %v541
    %2140 = vmatpush.bf16.msra.mxu0 %v537
    %2141 = vmatpush.bf16.msra.mxu0 %v533
    %2142 = vmatpush.bf16.msra.mxu0 %v529
    %2143 = vmatpush.bf16.msra.mxu0 %v525
    %2144 = vmatpush.bf16.msra.mxu0 %v521
    %2145 = vmatmul.bf16.gmra.mxu0 %v1892
    %v2146 = vpop.f32.mrf.mxu0
    %v2147 = vadd.f32 %v2134, %v2146
    %v2148 = vpop.f32.mrf.mxu0
    %2149 = vdwg.mxu0
    %v2150 = vmul.f32 %v2069, 0.5
    %v2151 = vtanh.pop %v2150
    %v2152 = vmul.f32 %v2151, 0.5
    %v2153 = vadd.f32 %v2152, 0.5
    %v2154 = vmul.f32 %v2095, 0.5
    %v2155 = vtanh.pop %v2154
    %v2156 = vmul.f32 %v2155, 0.5
    %v2157 = vadd.f32 %v2156, 0.5
    %v2158 = vtanh.pop %v2121
    %v2159 = vmul.f32 %v2147, 0.5
    %v2160 = vtanh.pop %v2159
    %v2161 = vmul.f32 %v2160, 0.5
    %v2162 = vadd.f32 %v2161, 0.5
    %v2163 = vmul.f32 %v2157, %v1889
    %v2164 = vmul.f32 %v2153, %v2158
    %v2165 = vadd.f32 %v2163, %v2164
    %v2166 = vtanh.pop %v2165
    %v2167 = vmul.f32 %v2162, %v2166
    %v2168 = vpack.c.bf16 %v2167, %v2167
    %v2169 = vpack.c.bf16 %v2015, %v2015
    %2170 = vmatpush.bf16.msra.mxu0 %v967
    %2171 = vmatpush.bf16.msra.mxu0 %v963
    %2172 = vmatpush.bf16.msra.mxu0 %v959
    %2173 = vmatpush.bf16.msra.mxu0 %v955
    %2174 = vmatpush.bf16.msra.mxu0 %v951
    %2175 = vmatpush.bf16.msra.mxu0 %v947
    %2176 = vmatpush.bf16.msra.mxu0 %v943
    %2177 = vmatpush.bf16.msra.mxu0 %v939
    %2178 = vmatmul.bf16.gmra.mxu0 %v2168
    %v2179 = vpop.f32.mrf.mxu0
    %v2180 = vadd.f32 %v739, %v2179
    %v2181 = vpop.f32.mrf.mxu0
    %2182 = vdwg.mxu0
    %2183 = vmatpush.bf16.msra.mxu0 %v999
    %2184 = vmatpush.bf16.msra.mxu0 %v995
    %2185 = vmatpush.bf16.msra.mxu0 %v991
    %2186 = vmatpush.bf16.msra.mxu0 %v987
    %2187 = vmatpush.bf16.msra.mxu0 %v983
    %2188 = vmatpush.bf16.msra.mxu0 %v979
    %2189 = vmatpush.bf16.msra.mxu0 %v975
    %2190 = vmatpush.bf16.msra.mxu0 %v971
    %2191 = vmatmul.bf16.gmra.mxu0 %v2169
    %v2192 = vpop.f32.mrf.mxu0
    %v2193 = vadd.f32 %v2180, %v2192
    %v2194 = vpop.f32.mrf.mxu0
    %2195 = vdwg.mxu0
    %2196 = vmatpush.bf16.msra.mxu0 %v968
    %2197 = vmatpush.bf16.msra.mxu0 %v964
    %2198 = vmatpush.bf16.msra.mxu0 %v960
    %2199 = vmatpush.bf16.msra.mxu0 %v956
    %2200 = vmatpush.bf16.msra.mxu0 %v952
    %2201 = vmatpush.bf16.msra.mxu0 %v948
    %2202 = vmatpush.bf16.msra.mxu0 %v944
    %2203 = vmatpush.bf16.msra.mxu0 %v940
    %2204 = vmatmul.bf16.gmra.mxu0 %v2168
    %v2205 = vpop.f32.mrf.mxu0
    %v2206 = vadd.f32 %v740, %v2205
    %v2207 = vpop.f32.mrf.mxu0
    %2208 = vdwg.mxu0
    %2209 = vmatpush.bf16.msra.mxu0 %v1000
    %2210 = vmatpush.bf16.msra.mxu0 %v996
    %2211 = vmatpush.bf16.msra.mxu0 %v992
    %2212 = vmatpush.bf16.msra.mxu0 %v988
    %2213 = vmatpush.bf16.msra.mxu0 %v984
    %2214 = vmatpush.bf16.msra.mxu0 %v980
    %2215 = vmatpush.bf16.msra.mxu0 %v976
    %2216 = vmatpush.bf16.msra.mxu0 %v972
    %2217 = vmatmul.bf16.gmra.mxu0 %v2169
    %v2218 = vpop.f32.mrf.mxu0
    %v2219 = vadd.f32 %v2206, %v2218
    %v2220 = vpop.f32.mrf.mxu0
    %2221 = vdwg.mxu0
    %2222 = vmatpush.bf16.msra.mxu0 %v969
    %2223 = vmatpush.bf16.msra.mxu0 %v965
    %2224 = vmatpush.bf16.msra.mxu0 %v961
    %2225 = vmatpush.bf16.msra.mxu0 %v957
    %2226 = vmatpush.bf16.msra.mxu0 %v953
    %2227 = vmatpush.bf16.msra.mxu0 %v949
    %2228 = vmatpush.bf16.msra.mxu0 %v945
    %2229 = vmatpush.bf16.msra.mxu0 %v941
    %2230 = vmatmul.bf16.gmra.mxu0 %v2168
    %v2231 = vpop.f32.mrf.mxu0
    %v2232 = vadd.f32 %v741, %v2231
    %v2233 = vpop.f32.mrf.mxu0
    %2234 = vdwg.mxu0
    %2235 = vmatpush.bf16.msra.mxu0 %v1001
    %2236 = vmatpush.bf16.msra.mxu0 %v997
    %2237 = vmatpush.bf16.msra.mxu0 %v993
    %2238 = vmatpush.bf16.msra.mxu0 %v989
    %2239 = vmatpush.bf16.msra.mxu0 %v985
    %2240 = vmatpush.bf16.msra.mxu0 %v981
    %2241 = vmatpush.bf16.msra.mxu0 %v977
    %2242 = vmatpush.bf16.msra.mxu0 %v973
    %2243 = vmatmul.bf16.gmra.mxu0 %v2169
    %v2244 = vpop.f32.mrf.mxu0
    %v2245 = vadd.f32 %v2232, %v2244
    %v2246 = vpop.f32.mrf.mxu0
    %2247 = vdwg.mxu0
    %2248 = vmatpush.bf16.msra.mxu0 %v970
    %2249 = vmatpush.bf16.msra.mxu0 %v966
    %2250 = vmatpush.bf16.msra.mxu0 %v962
    %2251 = vmatpush.bf16.msra.mxu0 %v958
    %2252 = vmatpush.bf16.msra.mxu0 %v954
    %2253 = vmatpush.bf16.msra.mxu0 %v950
    %2254 = vmatpush.bf16.msra.mxu0 %v946
    %2255 = vmatpush.bf16.msra.mxu0 %v942
    %2256 = vmatmul.bf16.gmra.mxu0 %v2168
    %v2257 = vpop.f32.mrf.mxu0
    %v2258 = vadd.f32 %v742, %v2257
    %v2259 = vpop.f32.mrf.mxu0
    %2260 = vdwg.mxu0
    %2261 = vmatpush.bf16.msra.mxu0 %v1002
    %2262 = vmatpush.bf16.msra.mxu0 %v998
    %2263 = vmatpush.bf16.msra.mxu0 %v994
    %2264 = vmatpush.bf16.msra.mxu0 %v990
    %2265 = vmatpush.bf16.msra.mxu0 %v986
    %2266 = vmatpush.bf16.msra.mxu0 %v982
    %2267 = vmatpush.bf16.msra.mxu0 %v978
    %2268 = vmatpush.bf16.msra.mxu0 %v974
    %2269 = vmatmul.bf16.gmra.mxu0 %v2169
    %v2270 = vpop.f32.mrf.mxu0
    %v2271 = vadd.f32 %v2258, %v2270
    %v2272 = vpop.f32.mrf.mxu0
    %2273 = vdwg.mxu0
    %v2274 = vmul.f32 %v2193, 0.5
    %v2275 = vtanh.pop %v2274
    %v2276 = vmul.f32 %v2275, 0.5
    %v2277 = vadd.f32 %v2276, 0.5
    %v2278 = vmul.f32 %v2219, 0.5
    %v2279 = vtanh.pop %v2278
    %v2280 = vmul.f32 %v2279, 0.5
    %v2281 = vadd.f32 %v2280, 0.5
    %v2282 = vtanh.pop %v2245
    %v2283 = vmul.f32 %v2271, 0.5
    %v2284 = vtanh.pop %v2283
    %v2285 = vmul.f32 %v2284, 0.5
    %v2286 = vadd.f32 %v2285, 0.5
    %v2287 = vmul.f32 %v2281, %v2013
    %v2288 = vmul.f32 %v2277, %v2282
    %v2289 = vadd.f32 %v2287, %v2288
    %v2290 = vtanh.pop %v2289
    %v2291 = vmul.f32 %v2286, %v2290
    %s2292 = scalar_lea.vmem %s8, 32
    %2293 = vst [vmem:[%s2292] sm:$0xff] %v2291
    %s2294 = sld [smem:[#allocation3 + $0x5]]
    %p2295 = scmp.ne.s32.totalorder %s2294, 0
    %s2296 = scalar_select %p2295, 1, 0
    %s2297 = scvt.s32.f32 %s2296
    %s2298 = scalar_lea.vmem %s1, 40
    %v2299 = vld [vmem:[%s2298] sm:$0xff]
    %v2300 = vstv %s2297
    %v2301 = vmul.f32 %v2300, %v2299
    %s2302 = ssub.f32 1.0, %s2297
    %v2303 = vstv %s2302
    %v2304 = vmul.f32 %v2303, %v2291
    %v2305 = vadd.f32 %v2301, %v2304
    %v2306 = vpack.c.bf16 %v2305, %v2305
    %2307 = vmatpush.bf16.msra.mxu0 %v260
    %2308 = vmatpush.bf16.msra.mxu0 %v259
    %2309 = vmatpush.bf16.msra.mxu0 %v258
    %2310 = vmatpush.bf16.msra.mxu0 %v257
    %2311 = vmatpush.bf16.msra.mxu0 %v256
    %2312 = vmatpush.bf16.msra.mxu0 %v255
    %2313 = vmatpush.bf16.msra.mxu0 %v254
    %2314 = vmatpush.bf16.msra.mxu0 %v253
    %2315 = vmatmul.bf16.gmra.mxu0 %v2306
    %v2316 = vpop.f32.mrf.mxu0
    %v2317 = vadd.f32 %v219, %v2316
    %v2318 = vpop.f32.mrf.mxu0
    %2319 = vdwg.mxu0
    %v2320 = vmax.f32 %v2317, 0.0
    %v2321 = vpack.c.bf16 %v2320, %v2320
    %2322 = vmatpush.bf16.msra.mxu0 %v514
    %2323 = vmatpush.bf16.msra.mxu0 %v510
    %2324 = vmatpush.bf16.msra.mxu0 %v506
    %2325 = vmatpush.bf16.msra.mxu0 %v502
    %2326 = vmatpush.bf16.msra.mxu0 %v498
    %2327 = vmatpush.bf16.msra.mxu0 %v494
    %2328 = vmatpush.bf16.msra.mxu0 %v490
    %2329 = vmatpush.bf16.msra.mxu0 %v486
    %2330 = vmatmul.bf16.gmra.mxu0 %v2321
    %v2331 = vpop.f32.mrf.mxu0
    %v2332 = vadd.f32 %v286, %v2331
    %v2333 = vpop.f32.mrf.mxu0
    %2334 = vdwg.mxu0
    %2335 = vmatpush.bf16.msra.mxu0 %v546
    %2336 = vmatpush.bf16.msra.mxu0 %v542
    %2337 = vmatpush.bf16.msra.mxu0 %v538
    %2338 = vmatpush.bf16.msra.mxu0 %v534
    %2339 = vmatpush.bf16.msra.mxu0 %v530
    %2340 = vmatpush.bf16.msra.mxu0 %v526
    %2341 = vmatpush.bf16.msra.mxu0 %v522
    %2342 = vmatpush.bf16.msra.mxu0 %v518
    %2343 = vmatmul.bf16.gmra.mxu0 %v2168
    %v2344 = vpop.f32.mrf.mxu0
    %v2345 = vadd.f32 %v2332, %v2344
    %v2346 = vpop.f32.mrf.mxu0
    %2347 = vdwg.mxu0
    %2348 = vmatpush.bf16.msra.mxu0 %v515
    %2349 = vmatpush.bf16.msra.mxu0 %v511
    %2350 = vmatpush.bf16.msra.mxu0 %v507
    %2351 = vmatpush.bf16.msra.mxu0 %v503
    %2352 = vmatpush.bf16.msra.mxu0 %v499
    %2353 = vmatpush.bf16.msra.mxu0 %v495
    %2354 = vmatpush.bf16.msra.mxu0 %v491
    %2355 = vmatpush.bf16.msra.mxu0 %v487
    %2356 = vmatmul.bf16.gmra.mxu0 %v2321
    %v2357 = vpop.f32.mrf.mxu0
    %v2358 = vadd.f32 %v287, %v2357
    %v2359 = vpop.f32.mrf.mxu0
    %2360 = vdwg.mxu0
    %2361 = vmatpush.bf16.msra.mxu0 %v547
    %2362 = vmatpush.bf16.msra.mxu0 %v543
    %2363 = vmatpush.bf16.msra.mxu0 %v539
    %2364 = vmatpush.bf16.msra.mxu0 %v535
    %2365 = vmatpush.bf16.msra.mxu0 %v531
    %2366 = vmatpush.bf16.msra.mxu0 %v527
    %2367 = vmatpush.bf16.msra.mxu0 %v523
    %2368 = vmatpush.bf16.msra.mxu0 %v519
    %2369 = vmatmul.bf16.gmra.mxu0 %v2168
    %v2370 = vpop.f32.mrf.mxu0
    %v2371 = vadd.f32 %v2358, %v2370
    %v2372 = vpop.f32.mrf.mxu0
    %2373 = vdwg.mxu0
    %2374 = vmatpush.bf16.msra.mxu0 %v516
    %2375 = vmatpush.bf16.msra.mxu0 %v512
    %2376 = vmatpush.bf16.msra.mxu0 %v508
    %2377 = vmatpush.bf16.msra.mxu0 %v504
    %2378 = vmatpush.bf16.msra.mxu0 %v500
    %2379 = vmatpush.bf16.msra.mxu0 %v496
    %2380 = vmatpush.bf16.msra.mxu0 %v492
    %2381 = vmatpush.bf16.msra.mxu0 %v488
    %2382 = vmatmul.bf16.gmra.mxu0 %v2321
    %v2383 = vpop.f32.mrf.mxu0
    %v2384 = vadd.f32 %v288, %v2383
    %v2385 = vpop.f32.mrf.mxu0
    %2386 = vdwg.mxu0
    %2387 = vmatpush.bf16.msra.mxu0 %v548
    %2388 = vmatpush.bf16.msra.mxu0 %v544
    %2389 = vmatpush.bf16.msra.mxu0 %v540
    %2390 = vmatpush.bf16.msra.mxu0 %v536
    %2391 = vmatpush.bf16.msra.mxu0 %v532
    %2392 = vmatpush.bf16.msra.mxu0 %v528
    %2393 = vmatpush.bf16.msra.mxu0 %v524
    %2394 = vmatpush.bf16.msra.mxu0 %v520
    %2395 = vmatmul.bf16.gmra.mxu0 %v2168
    %v2396 = vpop.f32.mrf.mxu0
    %v2397 = vadd.f32 %v2384, %v2396
    %v2398 = vpop.f32.mrf.mxu0
    %2399 = vdwg.mxu0
    %2400 = vmatpush.bf16.msra.mxu0 %v517
    %2401 = vmatpush.bf16.msra.mxu0 %v513
    %2402 = vmatpush.bf16.msra.mxu0 %v509
    %2403 = vmatpush.bf16.msra.mxu0 %v505
    %2404 = vmatpush.bf16.msra.mxu0 %v501
    %2405 = vmatpush.bf16.msra.mxu0 %v497
    %2406 = vmatpush.bf16.msra.mxu0 %v493
    %2407 = vmatpush.bf16.msra.mxu0 %v489
    %2408 = vmatmul.bf16.gmra.mxu0 %v2321
    %v2409 = vpop.f32.mrf.mxu0
    %v2410 = vadd.f32 %v289, %v2409
    %v2411 = vpop.f32.mrf.mxu0
    %2412 = vdwg.mxu0
    %2413 = vmatpush.bf16.msra.mxu0 %v549
    %2414 = vmatpush.bf16.msra.mxu0 %v545
    %2415 = vmatpush.bf16.msra.mxu0 %v541
    %2416 = vmatpush.bf16.msra.mxu0 %v537
    %2417 = vmatpush.bf16.msra.mxu0 %v533
    %2418 = vmatpush.bf16.msra.mxu0 %v529
    %2419 = vmatpush.bf16.msra.mxu0 %v525
    %2420 = vmatpush.bf16.msra.mxu0 %v521
    %2421 = vmatmul.bf16.gmra.mxu0 %v2168
    %v2422 = vpop.f32.mrf.mxu0
    %v2423 = vadd.f32 %v2410, %v2422
    %v2424 = vpop.f32.mrf.mxu0
    %2425 = vdwg.mxu0
    %v2426 = vmul.f32 %v2345, 0.5
    %v2427 = vtanh.pop %v2426
    %v2428 = vmul.f32 %v2427, 0.5
    %v2429 = vadd.f32 %v2428, 0.5
    %v2430 = vmul.f32 %v2371, 0.5
    %v2431 = vtanh.pop %v2430
    %v2432 = vmul.f32 %v2431, 0.5
    %v2433 = vadd.f32 %v2432, 0.5
    %v2434 = vtanh.pop %v2397
    %v2435 = vmul.f32 %v2423, 0.5
    %v2436 = vtanh.pop %v2435
    %v2437 = vmul.f32 %v2436, 0.5
    %v2438 = vadd.f32 %v2437, 0.5
    %v2439 = vmul.f32 %v2433, %v2165
    %v2440 = vmul.f32 %v2429, %v2434
    %v2441 = vadd.f32 %v2439, %v2440
    %v2442 = vtanh.pop %v2441
    %v2443 = vmul.f32 %v2438, %v2442
    %v2444 = vpack.c.bf16 %v2443, %v2443
    %v2445 = vpack.c.bf16 %v2291, %v2291
    %2446 = vmatpush.bf16.msra.mxu0 %v967
    %2447 = vmatpush.bf16.msra.mxu0 %v963
    %2448 = vmatpush.bf16.msra.mxu0 %v959
    %2449 = vmatpush.bf16.msra.mxu0 %v955
    %2450 = vmatpush.bf16.msra.mxu0 %v951
    %2451 = vmatpush.bf16.msra.mxu0 %v947
    %2452 = vmatpush.bf16.msra.mxu0 %v943
    %2453 = vmatpush.bf16.msra.mxu0 %v939
    %2454 = vmatmul.bf16.gmra.mxu0 %v2444
    %v2455 = vpop.f32.mrf.mxu0
    %v2456 = vadd.f32 %v739, %v2455
    %v2457 = vpop.f32.mrf.mxu0
    %2458 = vdwg.mxu0
    %2459 = vmatpush.bf16.msra.mxu0 %v999
    %2460 = vmatpush.bf16.msra.mxu0 %v995
    %2461 = vmatpush.bf16.msra.mxu0 %v991
    %2462 = vmatpush.bf16.msra.mxu0 %v987
    %2463 = vmatpush.bf16.msra.mxu0 %v983
    %2464 = vmatpush.bf16.msra.mxu0 %v979
    %2465 = vmatpush.bf16.msra.mxu0 %v975
    %2466 = vmatpush.bf16.msra.mxu0 %v971
    %2467 = vmatmul.bf16.gmra.mxu0 %v2445
    %v2468 = vpop.f32.mrf.mxu0
    %v2469 = vadd.f32 %v2456, %v2468
    %v2470 = vpop.f32.mrf.mxu0
    %2471 = vdwg.mxu0
    %2472 = vmatpush.bf16.msra.mxu0 %v968
    %2473 = vmatpush.bf16.msra.mxu0 %v964
    %2474 = vmatpush.bf16.msra.mxu0 %v960
    %2475 = vmatpush.bf16.msra.mxu0 %v956
    %2476 = vmatpush.bf16.msra.mxu0 %v952
    %2477 = vmatpush.bf16.msra.mxu0 %v948
    %2478 = vmatpush.bf16.msra.mxu0 %v944
    %2479 = vmatpush.bf16.msra.mxu0 %v940
    %2480 = vmatmul.bf16.gmra.mxu0 %v2444
    %v2481 = vpop.f32.mrf.mxu0
    %v2482 = vadd.f32 %v740, %v2481
    %v2483 = vpop.f32.mrf.mxu0
    %2484 = vdwg.mxu0
    %2485 = vmatpush.bf16.msra.mxu0 %v1000
    %2486 = vmatpush.bf16.msra.mxu0 %v996
    %2487 = vmatpush.bf16.msra.mxu0 %v992
    %2488 = vmatpush.bf16.msra.mxu0 %v988
    %2489 = vmatpush.bf16.msra.mxu0 %v984
    %2490 = vmatpush.bf16.msra.mxu0 %v980
    %2491 = vmatpush.bf16.msra.mxu0 %v976
    %2492 = vmatpush.bf16.msra.mxu0 %v972
    %2493 = vmatmul.bf16.gmra.mxu0 %v2445
    %v2494 = vpop.f32.mrf.mxu0
    %v2495 = vadd.f32 %v2482, %v2494
    %v2496 = vpop.f32.mrf.mxu0
    %2497 = vdwg.mxu0
    %2498 = vmatpush.bf16.msra.mxu0 %v969
    %2499 = vmatpush.bf16.msra.mxu0 %v965
    %2500 = vmatpush.bf16.msra.mxu0 %v961
    %2501 = vmatpush.bf16.msra.mxu0 %v957
    %2502 = vmatpush.bf16.msra.mxu0 %v953
    %2503 = vmatpush.bf16.msra.mxu0 %v949
    %2504 = vmatpush.bf16.msra.mxu0 %v945
    %2505 = vmatpush.bf16.msra.mxu0 %v941
    %2506 = vmatmul.bf16.gmra.mxu0 %v2444
    %v2507 = vpop.f32.mrf.mxu0
    %v2508 = vadd.f32 %v741, %v2507
    %v2509 = vpop.f32.mrf.mxu0
    %2510 = vdwg.mxu0
    %2511 = vmatpush.bf16.msra.mxu0 %v1001
    %2512 = vmatpush.bf16.msra.mxu0 %v997
    %2513 = vmatpush.bf16.msra.mxu0 %v993
    %2514 = vmatpush.bf16.msra.mxu0 %v989
    %2515 = vmatpush.bf16.msra.mxu0 %v985
    %2516 = vmatpush.bf16.msra.mxu0 %v981
    %2517 = vmatpush.bf16.msra.mxu0 %v977
    %2518 = vmatpush.bf16.msra.mxu0 %v973
    %2519 = vmatmul.bf16.gmra.mxu0 %v2445
    %v2520 = vpop.f32.mrf.mxu0
    %v2521 = vadd.f32 %v2508, %v2520
    %v2522 = vpop.f32.mrf.mxu0
    %2523 = vdwg.mxu0
    %2524 = vmatpush.bf16.msra.mxu0 %v970
    %2525 = vmatpush.bf16.msra.mxu0 %v966
    %2526 = vmatpush.bf16.msra.mxu0 %v962
    %2527 = vmatpush.bf16.msra.mxu0 %v958
    %2528 = vmatpush.bf16.msra.mxu0 %v954
    %2529 = vmatpush.bf16.msra.mxu0 %v950
    %2530 = vmatpush.bf16.msra.mxu0 %v946
    %2531 = vmatpush.bf16.msra.mxu0 %v942
    %2532 = vmatmul.bf16.gmra.mxu0 %v2444
    %v2533 = vpop.f32.mrf.mxu0
    %v2534 = vadd.f32 %v742, %v2533
    %v2535 = vpop.f32.mrf.mxu0
    %2536 = vdwg.mxu0
    %2537 = vmatpush.bf16.msra.mxu0 %v1002
    %2538 = vmatpush.bf16.msra.mxu0 %v998
    %2539 = vmatpush.bf16.msra.mxu0 %v994
    %2540 = vmatpush.bf16.msra.mxu0 %v990
    %2541 = vmatpush.bf16.msra.mxu0 %v986
    %2542 = vmatpush.bf16.msra.mxu0 %v982
    %2543 = vmatpush.bf16.msra.mxu0 %v978
    %2544 = vmatpush.bf16.msra.mxu0 %v974
    %2545 = vmatmul.bf16.gmra.mxu0 %v2445
    %v2546 = vpop.f32.mrf.mxu0
    %v2547 = vadd.f32 %v2534, %v2546
    %v2548 = vpop.f32.mrf.mxu0
    %2549 = vdwg.mxu0
    %v2550 = vmul.f32 %v2469, 0.5
    %v2551 = vtanh.pop %v2550
    %v2552 = vmul.f32 %v2551, 0.5
    %v2553 = vadd.f32 %v2552, 0.5
    %v2554 = vmul.f32 %v2495, 0.5
    %v2555 = vtanh.pop %v2554
    %v2556 = vmul.f32 %v2555, 0.5
    %v2557 = vadd.f32 %v2556, 0.5
    %v2558 = vtanh.pop %v2521
    %v2559 = vmul.f32 %v2547, 0.5
    %v2560 = vtanh.pop %v2559
    %v2561 = vmul.f32 %v2560, 0.5
    %v2562 = vadd.f32 %v2561, 0.5
    %v2563 = vmul.f32 %v2557, %v2289
    %v2564 = vmul.f32 %v2553, %v2558
    %v2565 = vadd.f32 %v2563, %v2564
    %v2566 = vtanh.pop %v2565
    %v2567 = vmul.f32 %v2562, %v2566
    %s2568 = scalar_lea.vmem %s8, 40
    %2569 = vst [vmem:[%s2568] sm:$0xff] %v2567
    // Predicated region
    $region34: #{seq2seq_head_forward.6} parent=1 // pred_check
      _
    $region35: #{seq2seq_head_forward.6} parent=1 // pred_check_branch
      %2571 = sbr.rel (0) target = $region37
    $region36: #{seq2seq_head_forward.6} parent=1 // pred_region
      _
    $region37: #{seq2seq_head_forward.6} parent=1 // pred_fallthru
      _
    // Predicated region
    $region38: #{seq2seq_head_forward.6} parent=1 // pred_check
      _
    $region39: #{seq2seq_head_forward.6} parent=1 // pred_check_branch
      %2573 = sbr.rel (0) target = $region41
    $region40: #{seq2seq_head_forward.6} parent=1 // pred_region
      _
    $region41: #{seq2seq_head_forward.6} parent=1 // pred_fallthru
      _
    %2574 = vsyncpa [#allocation5], 1

</llo_original>
